<compile_context>
chip_gen: v6e
topology: v6e:2x2x1
jax: 0.10.0
libtpu: 0.0.40
codegen_flags: <defaults>
</compile_context>

<pallas_src>
import math
from functools import partial

import numpy as np
import jax
import jax.numpy as jnp
from jax.experimental import pallas as pl
from jax.experimental.pallas import tpu as pltpu


def _cdiv(a, b):
    return -(-a // b)


# ---------------- filter design (plain numpy parameter setup) ----------------

def _hz_to_erb(hz):
    EarQ = 9.26449
    minBW = 24.7
    return hz / EarQ + minBW


def design_gammatone_fir(freq, samplerate, order=4, numtaps=32,
                         band_width_factor=1.0):
    freq = float(freq)
    samplerate = float(samplerate)
    assert 0 < freq < samplerate / 2
    t = np.arange(numtaps) / samplerate
    bw = 1.019 * _hz_to_erb(freq) * band_width_factor
    b = t ** (order - 1) * np.exp(-2 * np.pi * bw * t)
    b *= np.cos(2 * np.pi * freq * t)
    scale_factor = 2 * (2 * np.pi * bw) ** order
    scale_factor /= float(math.factorial(order - 1))
    scale_factor /= samplerate
    b *= scale_factor
    return b.astype(np.float32)          # torch.Tensor(b) -> float32


# ---------------- band-Toeplitz weights (built ONCE at construction) ---------

def _build_band_weights(filter_bank, tm):
    """W of shape (2, tm, F*tm) with W[s, q, f*tm + m] = brev_f[s*tm + q - m]
    for 0 <= s*tm + q - m < L (else 0), so that for every output tile g:
        y[g*tm + m] = sum_q xpad[g*tm + q]     * W[0, q, m]
                    + sum_q xpad[(g+1)*tm + q] * W[1, q, m]."""
    fb = np.asarray(filter_bank, dtype=np.float32)
    F_, L = fb.shape
    # visible assertion: the two-tile window only covers overlaps of L-1 <= tm
    assert L - 1 <= tm, "time tile must cover the filter overlap (L-1 <= TM)"
    brev = fb[:, ::-1]                                   # (F, L)
    p = np.arange(2 * tm)[:, None]                       # (2*tm, 1)
    m = np.arange(tm)[None, :]                           # (1, tm)
    d = p - m
    valid = (d >= 0) & (d < L)
    Wf = np.where(valid[None], brev[:, np.clip(d, 0, L - 1)], 0.0)   # (F, 2tm, tm)
    W = np.transpose(Wf, (1, 0, 2)).reshape(2 * tm, F_ * tm)         # (2tm, F*tm)
    return np.ascontiguousarray(W.reshape(2, tm, F_ * tm)).astype(np.float32)


# ---------------- Pallas kernel ----------------------------------------------

def _fir_band_kernel(xm_ref, xo_ref, w_ref, o_ref, *, num_filters, tm, tr, kwin):
    # xm_ref: (tr, K*tm)    non-overlapping chunk = padded-signal tiles [tK, tK+K)
    # xo_ref: (tr, tm)      overlap tile tK+K (first tile of the next chunk)
    # w_ref : (2, tm, F*tm) resident band-Toeplitz weights, all filters fused
    # o_ref : (F, tr, K*tm) output tiles for every filter (final layout)
    xm = xm_ref[...]
    xo = xo_ref[...]
    # Stack the K windows along the matmul M dimension.  Every piece is a
    # vreg-aligned (tr, tm) slice, so this is sublane stacking (no lane concat,
    # no (tr, 2*tm) temp).
    a = jnp.concatenate([xm[:, j * tm:(j + 1) * tm] for j in range(kwin)],
                        axis=0)                                       # (K*tr, tm)
    b = jnp.concatenate(
        [xm[:, (j + 1) * tm:(j + 2) * tm] for j in range(kwin - 1)] + [xo],
        axis=0)                                                       # (K*tr, tm)
    # Two dots on the static halves of W (replaces concat + single dot).
    y = (jnp.dot(a, w_ref[0], preferred_element_type=jnp.float32) +
         jnp.dot(b, w_ref[1], preferred_element_type=jnp.float32))   # (K*tr, F*tm)
    # Scatter the K row-blocks back to lane-position; every store is a full
    # 128-lane (unmasked) vreg-aligned store into the final output layout.
    for f in range(num_filters):
        for j in range(kwin):
            o_ref[f, :, j * tm:(j + 1) * tm] = y[j * tr:(j + 1) * tr,
                                                 f * tm:(f + 1) * tm]


@partial(jax.jit,
         static_argnames=("numtaps", "num_filters", "tm", "tr", "kwin",
                          "single_buffer_w"))
def _forward(x, W, *, numtaps, num_filters, tm, tr, kwin, single_buffer_w):
    B, C, N = x.shape
    L = numtaps
    F_ = num_filters
    K = kwin
    M = N + L - 1                     # full-convolution length
    R = B * C
    Rpad = _cdiv(R, tr) * tr
    T = _cdiv(M, tm)                  # valid output time tiles
    TG = _cdiv(T, K)                  # grid steps along time (K tiles each)
    T_pad = TG * K
    Mpad = T_pad * tm
    width = (TG + 1) * K * tm         # the overlap tile of the last step exists

    # module semantics: flip time axis, zero-pad (front L-1 for the "full"
    # convolution, back/rows for tiling).  One fused XLA copy over the small
    # input tensor.
    # TODO(synk): the flip stays a wrapper-side XLA op instead of being folded
    # into reversed kernel-side indexing.
    xf = jnp.flip(x, axis=-1).astype(W.dtype).reshape(R, N)
    x_rows = jnp.pad(xf, ((0, Rpad - R), (L - 1, width - (L - 1) - N)))

    w_spec_kwargs = {}
    if single_buffer_w:
        # constant index_map -> never re-fetched, so one VMEM copy is enough
        w_spec_kwargs["pipeline_mode"] = pl.Buffered(1)
    w_spec = pl.BlockSpec((2, tm, F_ * tm), lambda r, t: (0, 0, 0),
                          **w_spec_kwargs)

    out = pl.pallas_call(
        partial(_fir_band_kernel, num_filters=F_, tm=tm, tr=tr, kwin=K),
        out_shape=jax.ShapeDtypeStruct((F_, Rpad, Mpad), jnp.float32),
        grid=(Rpad // tr, TG),
        in_specs=[
            pl.BlockSpec((tr, K * tm), lambda r, t: (r, t)),         # main chunk
            pl.BlockSpec((tr, tm), lambda r, t: (r, (t + 1) * K)),   # overlap tile
            w_spec,                                                  # resident W
        ],
        out_specs=pl.BlockSpec((F_, tr, K * tm), lambda r, t: (0, r, t)),
        compiler_params=pltpu.CompilerParams(
            dimension_semantics=("parallel", "parallel")),
    )(x_rows, x_rows, W)

    # strip row/time padding; return stacked (F, B, C, M) = the reference list.
    return out[:, :R, :M].reshape(F_, B, C, M)


# ---------------- "module": builds filters/weights once, reuses them ---------

class GammatoneFilterbankTPU:
    """Pallas-TPU GammatoneFilterbank.  __call__(x) with x (B, C, N) returns
    the stacked (F, B, C, N + numtaps - 1) float32 array; out[f] corresponds to
    the f-th list entry returned by the PyTorch module's forward."""

    def __init__(self, center_frequencies, samplerate, ftype="fir", numtaps=32,
                 order=4, band_width_factor=1.0, time_tile=128, mxu_rows=256,
                 compute_dtype=jnp.float32):
        if str(ftype).lower() != "fir":
            raise NotImplementedError("only ftype='fir' is supported")
        self.numtaps = int(numtaps)
        self.time_tile = int(time_tile)   # keep 128: larger TM inflates band waste & W
        self.mxu_rows = int(mxu_rows)     # target matmul M-dim per grid step
        self.compute_dtype = compute_dtype
        self.filter_bank = np.stack(
            [design_gammatone_fir(fc, samplerate, order=order,
                                  numtaps=self.numtaps,
                                  band_width_factor=band_width_factor)
             for fc in center_frequencies], axis=0)                  # (F, L)
        self.num_filters = self.filter_bank.shape[0]
        # non-trainable -> band-Toeplitz weights built exactly once
        self.W = jnp.asarray(
            _build_band_weights(self.filter_bank, self.time_tile),
            dtype=compute_dtype)
        self._w_single_buffer = None      # decided by a one-time probe

    def _plan(self, x_shape):
        """Pick (row_tile, windows_per_step) so matmul-M ~ mxu_rows:
        large B*C -> grow the row tile (up to 256); small B*C -> stack K time
        windows per grid step (re-balanced to minimize time padding)."""
        B, C, N = x_shape
        R = B * C
        rg = 8 if np.dtype(self.compute_dtype).itemsize >= 4 else 16
        rpad = _cdiv(R, rg) * rg
        tr = rpad if rpad <= self.mxu_rows else self.mxu_rows
        T = _cdiv(N + self.numtaps - 1, self.time_tile)
        k_req = max(1, _cdiv(self.mxu_rows, tr))
        k0 = min(k_req, T)
        tg = _cdiv(T, k0)
        kwin = _cdiv(T, tg)
        return tr, kwin

    def _static(self, x_shape):
        tr, kwin = self._plan(x_shape)
        return dict(numtaps=self.numtaps, num_filters=self.num_filters,
                    tm=self.time_tile, tr=tr, kwin=kwin)

    def __call__(self, x):
        static = self._static(x.shape)
        if self._w_single_buffer is None:
            # Probe pl.Buffered(1) (single-buffered resident weight) once; fall
            # back to default double-buffering if this build rejects it.
            try:
                out = _forward(x, self.W, **static, single_buffer_w=True)
                jax.block_until_ready(out)
                self._w_single_buffer = True
                return out
            except Exception:
                self._w_single_buffer = False
        return _forward(x, self.W, **static,
                        single_buffer_w=self._w_single_buffer)


# ---------------- demo / self-check ------------------------------------------

if __name__ == "__main__":
    center_frequencies = [500.0, 1000.0, 2000.0, 4000.0]
    samplerate = 16000.0
    numtaps = 32

    # Input: (B, C, N).  C=1 (the reference conv1d uses a (1,1,L) weight);
    # N = 8000 samples = 0.5 s of 16 kHz audio (exercises the K-window
    # stacking path and a multi-step parallel grid).
    B, C, N = 2, 1, 8000
    key = jax.random.PRNGKey(0)
    x = jax.random.normal(key, (B, C, N), dtype=jnp.float32)

    # Reference: full linear convolution of the flipped signal (== fft_conv).
    M = N + numtaps - 1
    x_np = np.asarray(x, dtype=np.float64)
    xf_np = x_np[..., ::-1]

    # f32 path (tolerance sized for the TPU MXU's reduced-precision f32 passes
    # over ~64k output samples) and bf16 path (halved DMA / native MXU rate).
    for dtype, rtol, atol in ((jnp.float32, 1e-2, 3e-3),
                              (jnp.bfloat16, 5e-2, 1e-2)):
        bank = GammatoneFilterbankTPU(center_frequencies, samplerate,
                                      numtaps=numtaps, compute_dtype=dtype)
        out = jax.block_until_ready(bank(x))          # (F, B, C, M)
        assert out.shape == (len(center_frequencies), B, C, M)
        fb = bank.filter_bank.astype(np.float64)
        for f in range(len(center_frequencies)):
            ref = np.stack([
                np.stack([np.convolve(xf_np[bb, cc], fb[f], mode="full")
                          for cc in range(C)])
                for bb in range(B)])
            np.testing.assert_allclose(np.asarray(out[f], dtype=np.float64),
                                       ref, rtol=rtol, atol=atol)

    print("KERNEL_OK")
</pallas_src>

<mosaic_0001>
module attributes {stable_mosaic.version = 11 : i64} {
  func.func @_fir_band_kernel(%arg0: i32, %arg1: i32, %arg2: memref<8x4096xf32, #tpu.memory_space<vmem>>, %arg3: memref<8x128xf32, #tpu.memory_space<vmem>>, %arg4: memref<2x128x512xf32, #tpu.memory_space<vmem>>, %arg5: memref<4x8x4096xf32, #tpu.memory_space<vmem>>) attributes {dimension_semantics = [#tpu.dimension_semantics<parallel>, #tpu.dimension_semantics<parallel>], iteration_bounds = array<i64: 1, 2>, scalar_prefetch = 0 : i64, scratch_operands = 0 : i64, tpu.core_type = #tpu.core_type<tc>, window_params = [{transform_indices = @transform_0, window_bounds = array<i64: 8, 4096>}, {transform_indices = @transform_1, window_bounds = array<i64: 8, 128>}, {pipeline_mode = #tpu.pipeline_mode<synchronous>, transform_indices = @transform_2, window_bounds = array<i64: 2, 128, 512>}, {transform_indices = @transform_3, window_bounds = array<i64: 4, 8, 4096>}]} {
    %c0 = arith.constant 0 : index
    %c0_0 = arith.constant 0 : index
    %0 = vector.load %arg2[%c0, %c0_0] : memref<8x4096xf32, #tpu.memory_space<vmem>>, vector<8x4096xf32>
    %c0_1 = arith.constant 0 : index
    %c0_2 = arith.constant 0 : index
    %1 = vector.load %arg3[%c0_1, %c0_2] : memref<8x128xf32, #tpu.memory_space<vmem>>, vector<8x128xf32>
    %2 = vector.extract_strided_slice %0 {offsets = [0, 0], sizes = [8, 128], strides = [1, 1]} : vector<8x4096xf32> to vector<8x128xf32>
    %3 = vector.extract_strided_slice %0 {offsets = [0, 128], sizes = [8, 128], strides = [1, 1]} : vector<8x4096xf32> to vector<8x128xf32>
    %4 = vector.extract_strided_slice %0 {offsets = [0, 256], sizes = [8, 128], strides = [1, 1]} : vector<8x4096xf32> to vector<8x128xf32>
    %5 = vector.extract_strided_slice %0 {offsets = [0, 384], sizes = [8, 128], strides = [1, 1]} : vector<8x4096xf32> to vector<8x128xf32>
    %6 = vector.extract_strided_slice %0 {offsets = [0, 512], sizes = [8, 128], strides = [1, 1]} : vector<8x4096xf32> to vector<8x128xf32>
    %7 = vector.extract_strided_slice %0 {offsets = [0, 640], sizes = [8, 128], strides = [1, 1]} : vector<8x4096xf32> to vector<8x128xf32>
    %8 = vector.extract_strided_slice %0 {offsets = [0, 768], sizes = [8, 128], strides = [1, 1]} : vector<8x4096xf32> to vector<8x128xf32>
    %9 = vector.extract_strided_slice %0 {offsets = [0, 896], sizes = [8, 128], strides = [1, 1]} : vector<8x4096xf32> to vector<8x128xf32>
    %10 = vector.extract_strided_slice %0 {offsets = [0, 1024], sizes = [8, 128], strides = [1, 1]} : vector<8x4096xf32> to vector<8x128xf32>
    %11 = vector.extract_strided_slice %0 {offsets = [0, 1152], sizes = [8, 128], strides = [1, 1]} : vector<8x4096xf32> to vector<8x128xf32>
    %12 = vector.extract_strided_slice %0 {offsets = [0, 1280], sizes = [8, 128], strides = [1, 1]} : vector<8x4096xf32> to vector<8x128xf32>
    %13 = vector.extract_strided_slice %0 {offsets = [0, 1408], sizes = [8, 128], strides = [1, 1]} : vector<8x4096xf32> to vector<8x128xf32>
    %14 = vector.extract_strided_slice %0 {offsets = [0, 1536], sizes = [8, 128], strides = [1, 1]} : vector<8x4096xf32> to vector<8x128xf32>
    %15 = vector.extract_strided_slice %0 {offsets = [0, 1664], sizes = [8, 128], strides = [1, 1]} : vector<8x4096xf32> to vector<8x128xf32>
    %16 = vector.extract_strided_slice %0 {offsets = [0, 1792], sizes = [8, 128], strides = [1, 1]} : vector<8x4096xf32> to vector<8x128xf32>
    %17 = vector.extract_strided_slice %0 {offsets = [0, 1920], sizes = [8, 128], strides = [1, 1]} : vector<8x4096xf32> to vector<8x128xf32>
    %18 = vector.extract_strided_slice %0 {offsets = [0, 2048], sizes = [8, 128], strides = [1, 1]} : vector<8x4096xf32> to vector<8x128xf32>
    %19 = vector.extract_strided_slice %0 {offsets = [0, 2176], sizes = [8, 128], strides = [1, 1]} : vector<8x4096xf32> to vector<8x128xf32>
    %20 = vector.extract_strided_slice %0 {offsets = [0, 2304], sizes = [8, 128], strides = [1, 1]} : vector<8x4096xf32> to vector<8x128xf32>
    %21 = vector.extract_strided_slice %0 {offsets = [0, 2432], sizes = [8, 128], strides = [1, 1]} : vector<8x4096xf32> to vector<8x128xf32>
    %22 = vector.extract_strided_slice %0 {offsets = [0, 2560], sizes = [8, 128], strides = [1, 1]} : vector<8x4096xf32> to vector<8x128xf32>
    %23 = vector.extract_strided_slice %0 {offsets = [0, 2688], sizes = [8, 128], strides = [1, 1]} : vector<8x4096xf32> to vector<8x128xf32>
    %24 = vector.extract_strided_slice %0 {offsets = [0, 2816], sizes = [8, 128], strides = [1, 1]} : vector<8x4096xf32> to vector<8x128xf32>
    %25 = vector.extract_strided_slice %0 {offsets = [0, 2944], sizes = [8, 128], strides = [1, 1]} : vector<8x4096xf32> to vector<8x128xf32>
    %26 = vector.extract_strided_slice %0 {offsets = [0, 3072], sizes = [8, 128], strides = [1, 1]} : vector<8x4096xf32> to vector<8x128xf32>
    %27 = vector.extract_strided_slice %0 {offsets = [0, 3200], sizes = [8, 128], strides = [1, 1]} : vector<8x4096xf32> to vector<8x128xf32>
    %28 = vector.extract_strided_slice %0 {offsets = [0, 3328], sizes = [8, 128], strides = [1, 1]} : vector<8x4096xf32> to vector<8x128xf32>
    %29 = vector.extract_strided_slice %0 {offsets = [0, 3456], sizes = [8, 128], strides = [1, 1]} : vector<8x4096xf32> to vector<8x128xf32>
    %30 = vector.extract_strided_slice %0 {offsets = [0, 3584], sizes = [8, 128], strides = [1, 1]} : vector<8x4096xf32> to vector<8x128xf32>
    %31 = vector.extract_strided_slice %0 {offsets = [0, 3712], sizes = [8, 128], strides = [1, 1]} : vector<8x4096xf32> to vector<8x128xf32>
    %32 = vector.extract_strided_slice %0 {offsets = [0, 3840], sizes = [8, 128], strides = [1, 1]} : vector<8x4096xf32> to vector<8x128xf32>
    %33 = vector.extract_strided_slice %0 {offsets = [0, 3968], sizes = [8, 128], strides = [1, 1]} : vector<8x4096xf32> to vector<8x128xf32>
    %34 = tpu.concatenate %2, %3, %4, %5, %6, %7, %8, %9, %10, %11, %12, %13, %14, %15, %16, %17 in 0 : vector<8x128xf32>, vector<8x128xf32>, vector<8x128xf32>, vector<8x128xf32>, vector<8x128xf32>, vector<8x128xf32>, vector<8x128xf32>, vector<8x128xf32>, vector<8x128xf32>, vector<8x128xf32>, vector<8x128xf32>, vector<8x128xf32>, vector<8x128xf32>, vector<8x128xf32>, vector<8x128xf32>, vector<8x128xf32> -> vector<128x128xf32>
    %35 = tpu.concatenate %18, %19, %20, %21, %22, %23, %24, %25, %26, %27, %28, %29, %30, %31, %32, %33 in 0 : vector<8x128xf32>, vector<8x128xf32>, vector<8x128xf32>, vector<8x128xf32>, vector<8x128xf32>, vector<8x128xf32>, vector<8x128xf32>, vector<8x128xf32>, vector<8x128xf32>, vector<8x128xf32>, vector<8x128xf32>, vector<8x128xf32>, vector<8x128xf32>, vector<8x128xf32>, vector<8x128xf32>, vector<8x128xf32> -> vector<128x128xf32>
    %36 = tpu.concatenate %34, %35 in 0 : vector<128x128xf32>, vector<128x128xf32> -> vector<256x128xf32>
    %37 = vector.extract_strided_slice %0 {offsets = [0, 128], sizes = [8, 128], strides = [1, 1]} : vector<8x4096xf32> to vector<8x128xf32>
    %38 = vector.extract_strided_slice %0 {offsets = [0, 256], sizes = [8, 128], strides = [1, 1]} : vector<8x4096xf32> to vector<8x128xf32>
    %39 = vector.extract_strided_slice %0 {offsets = [0, 384], sizes = [8, 128], strides = [1, 1]} : vector<8x4096xf32> to vector<8x128xf32>
    %40 = vector.extract_strided_slice %0 {offsets = [0, 512], sizes = [8, 128], strides = [1, 1]} : vector<8x4096xf32> to vector<8x128xf32>
    %41 = vector.extract_strided_slice %0 {offsets = [0, 640], sizes = [8, 128], strides = [1, 1]} : vector<8x4096xf32> to vector<8x128xf32>
    %42 = vector.extract_strided_slice %0 {offsets = [0, 768], sizes = [8, 128], strides = [1, 1]} : vector<8x4096xf32> to vector<8x128xf32>
    %43 = vector.extract_strided_slice %0 {offsets = [0, 896], sizes = [8, 128], strides = [1, 1]} : vector<8x4096xf32> to vector<8x128xf32>
    %44 = vector.extract_strided_slice %0 {offsets = [0, 1024], sizes = [8, 128], strides = [1, 1]} : vector<8x4096xf32> to vector<8x128xf32>
    %45 = vector.extract_strided_slice %0 {offsets = [0, 1152], sizes = [8, 128], strides = [1, 1]} : vector<8x4096xf32> to vector<8x128xf32>
    %46 = vector.extract_strided_slice %0 {offsets = [0, 1280], sizes = [8, 128], strides = [1, 1]} : vector<8x4096xf32> to vector<8x128xf32>
    %47 = vector.extract_strided_slice %0 {offsets = [0, 1408], sizes = [8, 128], strides = [1, 1]} : vector<8x4096xf32> to vector<8x128xf32>
    %48 = vector.extract_strided_slice %0 {offsets = [0, 1536], sizes = [8, 128], strides = [1, 1]} : vector<8x4096xf32> to vector<8x128xf32>
    %49 = vector.extract_strided_slice %0 {offsets = [0, 1664], sizes = [8, 128], strides = [1, 1]} : vector<8x4096xf32> to vector<8x128xf32>
    %50 = vector.extract_strided_slice %0 {offsets = [0, 1792], sizes = [8, 128], strides = [1, 1]} : vector<8x4096xf32> to vector<8x128xf32>
    %51 = vector.extract_strided_slice %0 {offsets = [0, 1920], sizes = [8, 128], strides = [1, 1]} : vector<8x4096xf32> to vector<8x128xf32>
    %52 = vector.extract_strided_slice %0 {offsets = [0, 2048], sizes = [8, 128], strides = [1, 1]} : vector<8x4096xf32> to vector<8x128xf32>
    %53 = vector.extract_strided_slice %0 {offsets = [0, 2176], sizes = [8, 128], strides = [1, 1]} : vector<8x4096xf32> to vector<8x128xf32>
    %54 = vector.extract_strided_slice %0 {offsets = [0, 2304], sizes = [8, 128], strides = [1, 1]} : vector<8x4096xf32> to vector<8x128xf32>
    %55 = vector.extract_strided_slice %0 {offsets = [0, 2432], sizes = [8, 128], strides = [1, 1]} : vector<8x4096xf32> to vector<8x128xf32>
    %56 = vector.extract_strided_slice %0 {offsets = [0, 2560], sizes = [8, 128], strides = [1, 1]} : vector<8x4096xf32> to vector<8x128xf32>
    %57 = vector.extract_strided_slice %0 {offsets = [0, 2688], sizes = [8, 128], strides = [1, 1]} : vector<8x4096xf32> to vector<8x128xf32>
    %58 = vector.extract_strided_slice %0 {offsets = [0, 2816], sizes = [8, 128], strides = [1, 1]} : vector<8x4096xf32> to vector<8x128xf32>
    %59 = vector.extract_strided_slice %0 {offsets = [0, 2944], sizes = [8, 128], strides = [1, 1]} : vector<8x4096xf32> to vector<8x128xf32>
    %60 = vector.extract_strided_slice %0 {offsets = [0, 3072], sizes = [8, 128], strides = [1, 1]} : vector<8x4096xf32> to vector<8x128xf32>
    %61 = vector.extract_strided_slice %0 {offsets = [0, 3200], sizes = [8, 128], strides = [1, 1]} : vector<8x4096xf32> to vector<8x128xf32>
    %62 = vector.extract_strided_slice %0 {offsets = [0, 3328], sizes = [8, 128], strides = [1, 1]} : vector<8x4096xf32> to vector<8x128xf32>
    %63 = vector.extract_strided_slice %0 {offsets = [0, 3456], sizes = [8, 128], strides = [1, 1]} : vector<8x4096xf32> to vector<8x128xf32>
    %64 = vector.extract_strided_slice %0 {offsets = [0, 3584], sizes = [8, 128], strides = [1, 1]} : vector<8x4096xf32> to vector<8x128xf32>
    %65 = vector.extract_strided_slice %0 {offsets = [0, 3712], sizes = [8, 128], strides = [1, 1]} : vector<8x4096xf32> to vector<8x128xf32>
    %66 = vector.extract_strided_slice %0 {offsets = [0, 3840], sizes = [8, 128], strides = [1, 1]} : vector<8x4096xf32> to vector<8x128xf32>
    %67 = vector.extract_strided_slice %0 {offsets = [0, 3968], sizes = [8, 128], strides = [1, 1]} : vector<8x4096xf32> to vector<8x128xf32>
    %68 = tpu.concatenate %37, %38, %39, %40, %41, %42, %43, %44, %45, %46, %47, %48, %49, %50, %51, %52 in 0 : vector<8x128xf32>, vector<8x128xf32>, vector<8x128xf32>, vector<8x128xf32>, vector<8x128xf32>, vector<8x128xf32>, vector<8x128xf32>, vector<8x128xf32>, vector<8x128xf32>, vector<8x128xf32>, vector<8x128xf32>, vector<8x128xf32>, vector<8x128xf32>, vector<8x128xf32>, vector<8x128xf32>, vector<8x128xf32> -> vector<128x128xf32>
    %69 = tpu.concatenate %53, %54, %55, %56, %57, %58, %59, %60, %61, %62, %63, %64, %65, %66, %67, %1 in 0 : vector<8x128xf32>, vector<8x128xf32>, vector<8x128xf32>, vector<8x128xf32>, vector<8x128xf32>, vector<8x128xf32>, vector<8x128xf32>, vector<8x128xf32>, vector<8x128xf32>, vector<8x128xf32>, vector<8x128xf32>, vector<8x128xf32>, vector<8x128xf32>, vector<8x128xf32>, vector<8x128xf32>, vector<8x128xf32> -> vector<128x128xf32>
    %70 = tpu.concatenate %68, %69 in 0 : vector<128x128xf32>, vector<128x128xf32> -> vector<256x128xf32>
    %c0_3 = arith.constant 0 : index
    %c0_4 = arith.constant 0 : index
    %c0_5 = arith.constant 0 : index
    %71 = vector.load %arg4[%c0_3, %c0_4, %c0_5] : memref<2x128x512xf32, #tpu.memory_space<vmem>>, vector<1x128x512xf32>
    %72 = vector.shape_cast %71 : vector<1x128x512xf32> to vector<128x512xf32>
    %cst = arith.constant dense<0.000000e+00> : vector<256x512xf32>
    %73 = tpu.matmul %36, %72, %cst {dimension_numbers = #tpu.dot_dimension_numbers<[1], [0], [0], [1], [0, 0, 1, 1], [], []>} : vector<256x128xf32>, vector<128x512xf32>, vector<256x512xf32> -> vector<256x512xf32>
    %c1 = arith.constant 1 : index
    %c0_6 = arith.constant 0 : index
    %c0_7 = arith.constant 0 : index
    %74 = vector.load %arg4[%c1, %c0_6, %c0_7] : memref<2x128x512xf32, #tpu.memory_space<vmem>>, vector<1x128x512xf32>
    %75 = vector.shape_cast %74 : vector<1x128x512xf32> to vector<128x512xf32>
    %cst_8 = arith.constant dense<0.000000e+00> : vector<256x512xf32>
    %76 = tpu.matmul %70, %75, %cst_8 {dimension_numbers = #tpu.dot_dimension_numbers<[1], [0], [0], [1], [0, 0, 1, 1], [], []>} : vector<256x128xf32>, vector<128x512xf32>, vector<256x512xf32> -> vector<256x512xf32>
    %77 = arith.addf %73, %76 : vector<256x512xf32>
    %78 = vector.extract_strided_slice %77 {offsets = [0, 0], sizes = [8, 128], strides = [1, 1]} : vector<256x512xf32> to vector<8x128xf32>
    %c0_9 = arith.constant 0 : index
    %c0_10 = arith.constant 0 : index
    %c0_11 = arith.constant 0 : index
    %79 = vector.load %arg5[%c0_9, %c0_10, %c0_11] : memref<4x8x4096xf32, #tpu.memory_space<vmem>>, vector<1x8x128xf32>
    %80 = vector.shape_cast %79 : vector<1x8x128xf32> to vector<8x128xf32>
    %81 = vector.shape_cast %78 : vector<8x128xf32> to vector<1x8x128xf32>
    tpu.vector_store %arg5[%c0_9, %c0_10, %c0_11], %81 {strides = array<i32>} : memref<4x8x4096xf32, #tpu.memory_space<vmem>>, vector<1x8x128xf32>,
    %82 = vector.extract_strided_slice %77 {offsets = [8, 0], sizes = [8, 128], strides = [1, 1]} : vector<256x512xf32> to vector<8x128xf32>
    %c0_12 = arith.constant 0 : index
    %c0_13 = arith.constant 0 : index
    %c128 = arith.constant 128 : index
    %83 = vector.load %arg5[%c0_12, %c0_13, %c128] : memref<4x8x4096xf32, #tpu.memory_space<vmem>>, vector<1x8x128xf32>
    %84 = vector.shape_cast %83 : vector<1x8x128xf32> to vector<8x128xf32>
    %85 = vector.shape_cast %82 : vector<8x128xf32> to vector<1x8x128xf32>
    tpu.vector_store %arg5[%c0_12, %c0_13, %c128], %85 {strides = array<i32>} : memref<4x8x4096xf32, #tpu.memory_space<vmem>>, vector<1x8x128xf32>,
    %86 = vector.extract_strided_slice %77 {offsets = [16, 0], sizes = [8, 128], strides = [1, 1]} : vector<256x512xf32> to vector<8x128xf32>
    %c0_14 = arith.constant 0 : index
    %c0_15 = arith.constant 0 : index
    %c256 = arith.constant 256 : index
    %87 = vector.load %arg5[%c0_14, %c0_15, %c256] : memref<4x8x4096xf32, #tpu.memory_space<vmem>>, vector<1x8x128xf32>
    %88 = vector.shape_cast %87 : vector<1x8x128xf32> to vector<8x128xf32>
    %89 = vector.shape_cast %86 : vector<8x128xf32> to vector<1x8x128xf32>
    tpu.vector_store %arg5[%c0_14, %c0_15, %c256], %89 {strides = array<i32>} : memref<4x8x4096xf32, #tpu.memory_space<vmem>>, vector<1x8x128xf32>,
    %90 = vector.extract_strided_slice %77 {offsets = [24, 0], sizes = [8, 128], strides = [1, 1]} : vector<256x512xf32> to vector<8x128xf32>
    %c0_16 = arith.constant 0 : index
    %c0_17 = arith.constant 0 : index
    %c384 = arith.constant 384 : index
    %91 = vector.load %arg5[%c0_16, %c0_17, %c384] : memref<4x8x4096xf32, #tpu.memory_space<vmem>>, vector<1x8x128xf32>
    %92 = vector.shape_cast %91 : vector<1x8x128xf32> to vector<8x128xf32>
    %93 = vector.shape_cast %90 : vector<8x128xf32> to vector<1x8x128xf32>
    tpu.vector_store %arg5[%c0_16, %c0_17, %c384], %93 {strides = array<i32>} : memref<4x8x4096xf32, #tpu.memory_space<vmem>>, vector<1x8x128xf32>,
    %94 = vector.extract_strided_slice %77 {offsets = [32, 0], sizes = [8, 128], strides = [1, 1]} : vector<256x512xf32> to vector<8x128xf32>
    %c0_18 = arith.constant 0 : index
    %c0_19 = arith.constant 0 : index
    %c512 = arith.constant 512 : index
    %95 = vector.load %arg5[%c0_18, %c0_19, %c512] : memref<4x8x4096xf32, #tpu.memory_space<vmem>>, vector<1x8x128xf32>
    %96 = vector.shape_cast %95 : vector<1x8x128xf32> to vector<8x128xf32>
    %97 = vector.shape_cast %94 : vector<8x128xf32> to vector<1x8x128xf32>
    tpu.vector_store %arg5[%c0_18, %c0_19, %c512], %97 {strides = array<i32>} : memref<4x8x4096xf32, #tpu.memory_space<vmem>>, vector<1x8x128xf32>,
    %98 = vector.extract_strided_slice %77 {offsets = [40, 0], sizes = [8, 128], strides = [1, 1]} : vector<256x512xf32> to vector<8x128xf32>
    %c0_20 = arith.constant 0 : index
    %c0_21 = arith.constant 0 : index
    %c640 = arith.constant 640 : index
    %99 = vector.load %arg5[%c0_20, %c0_21, %c640] : memref<4x8x4096xf32, #tpu.memory_space<vmem>>, vector<1x8x128xf32>
    %100 = vector.shape_cast %99 : vector<1x8x128xf32> to vector<8x128xf32>
    %101 = vector.shape_cast %98 : vector<8x128xf32> to vector<1x8x128xf32>
    tpu.vector_store %arg5[%c0_20, %c0_21, %c640], %101 {strides = array<i32>} : memref<4x8x4096xf32, #tpu.memory_space<vmem>>, vector<1x8x128xf32>,
    %102 = vector.extract_strided_slice %77 {offsets = [48, 0], sizes = [8, 128], strides = [1, 1]} : vector<256x512xf32> to vector<8x128xf32>
    %c0_22 = arith.constant 0 : index
    %c0_23 = arith.constant 0 : index
    %c768 = arith.constant 768 : index
    %103 = vector.load %arg5[%c0_22, %c0_23, %c768] : memref<4x8x4096xf32, #tpu.memory_space<vmem>>, vector<1x8x128xf32>
    %104 = vector.shape_cast %103 : vector<1x8x128xf32> to vector<8x128xf32>
    %105 = vector.shape_cast %102 : vector<8x128xf32> to vector<1x8x128xf32>
    tpu.vector_store %arg5[%c0_22, %c0_23, %c768], %105 {strides = array<i32>} : memref<4x8x4096xf32, #tpu.memory_space<vmem>>, vector<1x8x128xf32>,
    %106 = vector.extract_strided_slice %77 {offsets = [56, 0], sizes = [8, 128], strides = [1, 1]} : vector<256x512xf32> to vector<8x128xf32>
    %c0_24 = arith.constant 0 : index
    %c0_25 = arith.constant 0 : index
    %c896 = arith.constant 896 : index
    %107 = vector.load %arg5[%c0_24, %c0_25, %c896] : memref<4x8x4096xf32, #tpu.memory_space<vmem>>, vector<1x8x128xf32>
    %108 = vector.shape_cast %107 : vector<1x8x128xf32> to vector<8x128xf32>
    %109 = vector.shape_cast %106 : vector<8x128xf32> to vector<1x8x128xf32>
    tpu.vector_store %arg5[%c0_24, %c0_25, %c896], %109 {strides = array<i32>} : memref<4x8x4096xf32, #tpu.memory_space<vmem>>, vector<1x8x128xf32>,
    %110 = vector.extract_strided_slice %77 {offsets = [64, 0], sizes = [8, 128], strides = [1, 1]} : vector<256x512xf32> to vector<8x128xf32>
    %c0_26 = arith.constant 0 : index
    %c0_27 = arith.constant 0 : index
    %c1024 = arith.constant 1024 : index
    %111 = vector.load %arg5[%c0_26, %c0_27, %c1024] : memref<4x8x4096xf32, #tpu.memory_space<vmem>>, vector<1x8x128xf32>
    %112 = vector.shape_cast %111 : vector<1x8x128xf32> to vector<8x128xf32>
    %113 = vector.shape_cast %110 : vector<8x128xf32> to vector<1x8x128xf32>
    tpu.vector_store %arg5[%c0_26, %c0_27, %c1024], %113 {strides = array<i32>} : memref<4x8x4096xf32, #tpu.memory_space<vmem>>, vector<1x8x128xf32>,
    %114 = vector.extract_strided_slice %77 {offsets = [72, 0], sizes = [8, 128], strides = [1, 1]} : vector<256x512xf32> to vector<8x128xf32>
    %c0_28 = arith.constant 0 : index
    %c0_29 = arith.constant 0 : index
    %c1152 = arith.constant 1152 : index
    %115 = vector.load %arg5[%c0_28, %c0_29, %c1152] : memref<4x8x4096xf32, #tpu.memory_space<vmem>>, vector<1x8x128xf32>
    %116 = vector.shape_cast %115 : vector<1x8x128xf32> to vector<8x128xf32>
    %117 = vector.shape_cast %114 : vector<8x128xf32> to vector<1x8x128xf32>
    tpu.vector_store %arg5[%c0_28, %c0_29, %c1152], %117 {strides = array<i32>} : memref<4x8x4096xf32, #tpu.memory_space<vmem>>, vector<1x8x128xf32>,
    %118 = vector.extract_strided_slice %77 {offsets = [80, 0], sizes = [8, 128], strides = [1, 1]} : vector<256x512xf32> to vector<8x128xf32>
    %c0_30 = arith.constant 0 : index
    %c0_31 = arith.constant 0 : index
    %c1280 = arith.constant 1280 : index
    %119 = vector.load %arg5[%c0_30, %c0_31, %c1280] : memref<4x8x4096xf32, #tpu.memory_space<vmem>>, vector<1x8x128xf32>
    %120 = vector.shape_cast %119 : vector<1x8x128xf32> to vector<8x128xf32>
    %121 = vector.shape_cast %118 : vector<8x128xf32> to vector<1x8x128xf32>
    tpu.vector_store %arg5[%c0_30, %c0_31, %c1280], %121 {strides = array<i32>} : memref<4x8x4096xf32, #tpu.memory_space<vmem>>, vector<1x8x128xf32>,
    %122 = vector.extract_strided_slice %77 {offsets = [88, 0], sizes = [8, 128], strides = [1, 1]} : vector<256x512xf32> to vector<8x128xf32>
    %c0_32 = arith.constant 0 : index
    %c0_33 = arith.constant 0 : index
    %c1408 = arith.constant 1408 : index
    %123 = vector.load %arg5[%c0_32, %c0_33, %c1408] : memref<4x8x4096xf32, #tpu.memory_space<vmem>>, vector<1x8x128xf32>
    %124 = vector.shape_cast %123 : vector<1x8x128xf32> to vector<8x128xf32>
    %125 = vector.shape_cast %122 : vector<8x128xf32> to vector<1x8x128xf32>
    tpu.vector_store %arg5[%c0_32, %c0_33, %c1408], %125 {strides = array<i32>} : memref<4x8x4096xf32, #tpu.memory_space<vmem>>, vector<1x8x128xf32>,
    %126 = vector.extract_strided_slice %77 {offsets = [96, 0], sizes = [8, 128], strides = [1, 1]} : vector<256x512xf32> to vector<8x128xf32>
    %c0_34 = arith.constant 0 : index
    %c0_35 = arith.constant 0 : index
    %c1536 = arith.constant 1536 : index
    %127 = vector.load %arg5[%c0_34, %c0_35, %c1536] : memref<4x8x4096xf32, #tpu.memory_space<vmem>>, vector<1x8x128xf32>
    %128 = vector.shape_cast %127 : vector<1x8x128xf32> to vector<8x128xf32>
    %129 = vector.shape_cast %126 : vector<8x128xf32> to vector<1x8x128xf32>
    tpu.vector_store %arg5[%c0_34, %c0_35, %c1536], %129 {strides = array<i32>} : memref<4x8x4096xf32, #tpu.memory_space<vmem>>, vector<1x8x128xf32>,
    %130 = vector.extract_strided_slice %77 {offsets = [104, 0], sizes = [8, 128], strides = [1, 1]} : vector<256x512xf32> to vector<8x128xf32>
    %c0_36 = arith.constant 0 : index
    %c0_37 = arith.constant 0 : index
    %c1664 = arith.constant 1664 : index
    %131 = vector.load %arg5[%c0_36, %c0_37, %c1664] : memref<4x8x4096xf32, #tpu.memory_space<vmem>>, vector<1x8x128xf32>
    %132 = vector.shape_cast %131 : vector<1x8x128xf32> to vector<8x128xf32>
    %133 = vector.shape_cast %130 : vector<8x128xf32> to vector<1x8x128xf32>
    tpu.vector_store %arg5[%c0_36, %c0_37, %c1664], %133 {strides = array<i32>} : memref<4x8x4096xf32, #tpu.memory_space<vmem>>, vector<1x8x128xf32>,
    %134 = vector.extract_strided_slice %77 {offsets = [112, 0], sizes = [8, 128], strides = [1, 1]} : vector<256x512xf32> to vector<8x128xf32>
    %c0_38 = arith.constant 0 : index
    %c0_39 = arith.constant 0 : index
    %c1792 = arith.constant 1792 : index
    %135 = vector.load %arg5[%c0_38, %c0_39, %c1792] : memref<4x8x4096xf32, #tpu.memory_space<vmem>>, vector<1x8x128xf32>
    %136 = vector.shape_cast %135 : vector<1x8x128xf32> to vector<8x128xf32>
    %137 = vector.shape_cast %134 : vector<8x128xf32> to vector<1x8x128xf32>
    tpu.vector_store %arg5[%c0_38, %c0_39, %c1792], %137 {strides = array<i32>} : memref<4x8x4096xf32, #tpu.memory_space<vmem>>, vector<1x8x128xf32>,
    %138 = vector.extract_strided_slice %77 {offsets = [120, 0], sizes = [8, 128], strides = [1, 1]} : vector<256x512xf32> to vector<8x128xf32>
    %c0_40 = arith.constant 0 : index
    %c0_41 = arith.constant 0 : index
    %c1920 = arith.constant 1920 : index
    %139 = vector.load %arg5[%c0_40, %c0_41, %c1920] : memref<4x8x4096xf32, #tpu.memory_space<vmem>>, vector<1x8x128xf32>
    %140 = vector.shape_cast %139 : vector<1x8x128xf32> to vector<8x128xf32>
    %141 = vector.shape_cast %138 : vector<8x128xf32> to vector<1x8x128xf32>
    tpu.vector_store %arg5[%c0_40, %c0_41, %c1920], %141 {strides = array<i32>} : memref<4x8x4096xf32, #tpu.memory_space<vmem>>, vector<1x8x128xf32>,
    %142 = vector.extract_strided_slice %77 {offsets = [128, 0], sizes = [8, 128], strides = [1, 1]} : vector<256x512xf32> to vector<8x128xf32>
    %c0_42 = arith.constant 0 : index
    %c0_43 = arith.constant 0 : index
    %c2048 = arith.constant 2048 : index
    %143 = vector.load %arg5[%c0_42, %c0_43, %c2048] : memref<4x8x4096xf32, #tpu.memory_space<vmem>>, vector<1x8x128xf32>
    %144 = vector.shape_cast %143 : vector<1x8x128xf32> to vector<8x128xf32>
    %145 = vector.shape_cast %142 : vector<8x128xf32> to vector<1x8x128xf32>
    tpu.vector_store %arg5[%c0_42, %c0_43, %c2048], %145 {strides = array<i32>} : memref<4x8x4096xf32, #tpu.memory_space<vmem>>, vector<1x8x128xf32>,
    %146 = vector.extract_strided_slice %77 {offsets = [136, 0], sizes = [8, 128], strides = [1, 1]} : vector<256x512xf32> to vector<8x128xf32>
    %c0_44 = arith.constant 0 : index
    %c0_45 = arith.constant 0 : index
    %c2176 = arith.constant 2176 : index
    %147 = vector.load %arg5[%c0_44, %c0_45, %c2176] : memref<4x8x4096xf32, #tpu.memory_space<vmem>>, vector<1x8x128xf32>
    %148 = vector.shape_cast %147 : vector<1x8x128xf32> to vector<8x128xf32>
    %149 = vector.shape_cast %146 : vector<8x128xf32> to vector<1x8x128xf32>
    tpu.vector_store %arg5[%c0_44, %c0_45, %c2176], %149 {strides = array<i32>} : memref<4x8x4096xf32, #tpu.memory_space<vmem>>, vector<1x8x128xf32>,
    %150 = vector.extract_strided_slice %77 {offsets = [144, 0], sizes = [8, 128], strides = [1, 1]} : vector<256x512xf32> to vector<8x128xf32>
    %c0_46 = arith.constant 0 : index
    %c0_47 = arith.constant 0 : index
    %c2304 = arith.constant 2304 : index
    %151 = vector.load %arg5[%c0_46, %c0_47, %c2304] : memref<4x8x4096xf32, #tpu.memory_space<vmem>>, vector<1x8x128xf32>
    %152 = vector.shape_cast %151 : vector<1x8x128xf32> to vector<8x128xf32>
    %153 = vector.shape_cast %150 : vector<8x128xf32> to vector<1x8x128xf32>
    tpu.vector_store %arg5[%c0_46, %c0_47, %c2304], %153 {strides = array<i32>} : memref<4x8x4096xf32, #tpu.memory_space<vmem>>, vector<1x8x128xf32>,
    %154 = vector.extract_strided_slice %77 {offsets = [152, 0], sizes = [8, 128], strides = [1, 1]} : vector<256x512xf32> to vector<8x128xf32>
    %c0_48 = arith.constant 0 : index
    %c0_49 = arith.constant 0 : index
    %c2432 = arith.constant 2432 : index
    %155 = vector.load %arg5[%c0_48, %c0_49, %c2432] : memref<4x8x4096xf32, #tpu.memory_space<vmem>>, vector<1x8x128xf32>
    %156 = vector.shape_cast %155 : vector<1x8x128xf32> to vector<8x128xf32>
    %157 = vector.shape_cast %154 : vector<8x128xf32> to vector<1x8x128xf32>
    tpu.vector_store %arg5[%c0_48, %c0_49, %c2432], %157 {strides = array<i32>} : memref<4x8x4096xf32, #tpu.memory_space<vmem>>, vector<1x8x128xf32>,
    %158 = vector.extract_strided_slice %77 {offsets = [160, 0], sizes = [8, 128], strides = [1, 1]} : vector<256x512xf32> to vector<8x128xf32>
    %c0_50 = arith.constant 0 : index
    %c0_51 = arith.constant 0 : index
    %c2560 = arith.constant 2560 : index
    %159 = vector.load %arg5[%c0_50, %c0_51, %c2560] : memref<4x8x4096xf32, #tpu.memory_space<vmem>>, vector<1x8x128xf32>
    %160 = vector.shape_cast %159 : vector<1x8x128xf32> to vector<8x128xf32>
    %161 = vector.shape_cast %158 : vector<8x128xf32> to vector<1x8x128xf32>
    tpu.vector_store %arg5[%c0_50, %c0_51, %c2560], %161 {strides = array<i32>} : memref<4x8x4096xf32, #tpu.memory_space<vmem>>, vector<1x8x128xf32>,
    %162 = vector.extract_strided_slice %77 {offsets = [168, 0], sizes = [8, 128], strides = [1, 1]} : vector<256x512xf32> to vector<8x128xf32>
    %c0_52 = arith.constant 0 : index
    %c0_53 = arith.constant 0 : index
    %c2688 = arith.constant 2688 : index
    %163 = vector.load %arg5[%c0_52, %c0_53, %c2688] : memref<4x8x4096xf32, #tpu.memory_space<vmem>>, vector<1x8x128xf32>
    %164 = vector.shape_cast %163 : vector<1x8x128xf32> to vector<8x128xf32>
    %165 = vector.shape_cast %162 : vector<8x128xf32> to vector<1x8x128xf32>
    tpu.vector_store %arg5[%c0_52, %c0_53, %c2688], %165 {strides = array<i32>} : memref<4x8x4096xf32, #tpu.memory_space<vmem>>, vector<1x8x128xf32>,
    %166 = vector.extract_strided_slice %77 {offsets = [176, 0], sizes = [8, 128], strides = [1, 1]} : vector<256x512xf32> to vector<8x128xf32>
    %c0_54 = arith.constant 0 : index
    %c0_55 = arith.constant 0 : index
    %c2816 = arith.constant 2816 : index
    %167 = vector.load %arg5[%c0_54, %c0_55, %c2816] : memref<4x8x4096xf32, #tpu.memory_space<vmem>>, vector<1x8x128xf32>
    %168 = vector.shape_cast %167 : vector<1x8x128xf32> to vector<8x128xf32>
    %169 = vector.shape_cast %166 : vector<8x128xf32> to vector<1x8x128xf32>
    tpu.vector_store %arg5[%c0_54, %c0_55, %c2816], %169 {strides = array<i32>} : memref<4x8x4096xf32, #tpu.memory_space<vmem>>, vector<1x8x128xf32>,
    %170 = vector.extract_strided_slice %77 {offsets = [184, 0], sizes = [8, 128], strides = [1, 1]} : vector<256x512xf32> to vector<8x128xf32>
    %c0_56 = arith.constant 0 : index
    %c0_57 = arith.constant 0 : index
    %c2944 = arith.constant 2944 : index
    %171 = vector.load %arg5[%c0_56, %c0_57, %c2944] : memref<4x8x4096xf32, #tpu.memory_space<vmem>>, vector<1x8x128xf32>
    %172 = vector.shape_cast %171 : vector<1x8x128xf32> to vector<8x128xf32>
    %173 = vector.shape_cast %170 : vector<8x128xf32> to vector<1x8x128xf32>
    tpu.vector_store %arg5[%c0_56, %c0_57, %c2944], %173 {strides = array<i32>} : memref<4x8x4096xf32, #tpu.memory_space<vmem>>, vector<1x8x128xf32>,
    %174 = vector.extract_strided_slice %77 {offsets = [192, 0], sizes = [8, 128], strides = [1, 1]} : vector<256x512xf32> to vector<8x128xf32>
    %c0_58 = arith.constant 0 : index
    %c0_59 = arith.constant 0 : index
    %c3072 = arith.constant 3072 : index
    %175 = vector.load %arg5[%c0_58, %c0_59, %c3072] : memref<4x8x4096xf32, #tpu.memory_space<vmem>>, vector<1x8x128xf32>
    %176 = vector.shape_cast %175 : vector<1x8x128xf32> to vector<8x128xf32>
    %177 = vector.shape_cast %174 : vector<8x128xf32> to vector<1x8x128xf32>
    tpu.vector_store %arg5[%c0_58, %c0_59, %c3072], %177 {strides = array<i32>} : memref<4x8x4096xf32, #tpu.memory_space<vmem>>, vector<1x8x128xf32>,
    %178 = vector.extract_strided_slice %77 {offsets = [200, 0], sizes = [8, 128], strides = [1, 1]} : vector<256x512xf32> to vector<8x128xf32>
    %c0_60 = arith.constant 0 : index
    %c0_61 = arith.constant 0 : index
    %c3200 = arith.constant 3200 : index
    %179 = vector.load %arg5[%c0_60, %c0_61, %c3200] : memref<4x8x4096xf32, #tpu.memory_space<vmem>>, vector<1x8x128xf32>
    %180 = vector.shape_cast %179 : vector<1x8x128xf32> to vector<8x128xf32>
    %181 = vector.shape_cast %178 : vector<8x128xf32> to vector<1x8x128xf32>
    tpu.vector_store %arg5[%c0_60, %c0_61, %c3200], %181 {strides = array<i32>} : memref<4x8x4096xf32, #tpu.memory_space<vmem>>, vector<1x8x128xf32>,
    %182 = vector.extract_strided_slice %77 {offsets = [208, 0], sizes = [8, 128], strides = [1, 1]} : vector<256x512xf32> to vector<8x128xf32>
    %c0_62 = arith.constant 0 : index
    %c0_63 = arith.constant 0 : index
    %c3328 = arith.constant 3328 : index
    %183 = vector.load %arg5[%c0_62, %c0_63, %c3328] : memref<4x8x4096xf32, #tpu.memory_space<vmem>>, vector<1x8x128xf32>
    %184 = vector.shape_cast %183 : vector<1x8x128xf32> to vector<8x128xf32>
    %185 = vector.shape_cast %182 : vector<8x128xf32> to vector<1x8x128xf32>
    tpu.vector_store %arg5[%c0_62, %c0_63, %c3328], %185 {strides = array<i32>} : memref<4x8x4096xf32, #tpu.memory_space<vmem>>, vector<1x8x128xf32>,
    %186 = vector.extract_strided_slice %77 {offsets = [216, 0], sizes = [8, 128], strides = [1, 1]} : vector<256x512xf32> to vector<8x128xf32>
    %c0_64 = arith.constant 0 : index
    %c0_65 = arith.constant 0 : index
    %c3456 = arith.constant 3456 : index
    %187 = vector.load %arg5[%c0_64, %c0_65, %c3456] : memref<4x8x4096xf32, #tpu.memory_space<vmem>>, vector<1x8x128xf32>
    %188 = vector.shape_cast %187 : vector<1x8x128xf32> to vector<8x128xf32>
    %189 = vector.shape_cast %186 : vector<8x128xf32> to vector<1x8x128xf32>
    tpu.vector_store %arg5[%c0_64, %c0_65, %c3456], %189 {strides = array<i32>} : memref<4x8x4096xf32, #tpu.memory_space<vmem>>, vector<1x8x128xf32>,
    %190 = vector.extract_strided_slice %77 {offsets = [224, 0], sizes = [8, 128], strides = [1, 1]} : vector<256x512xf32> to vector<8x128xf32>
    %c0_66 = arith.constant 0 : index
    %c0_67 = arith.constant 0 : index
    %c3584 = arith.constant 3584 : index
    %191 = vector.load %arg5[%c0_66, %c0_67, %c3584] : memref<4x8x4096xf32, #tpu.memory_space<vmem>>, vector<1x8x128xf32>
    %192 = vector.shape_cast %191 : vector<1x8x128xf32> to vector<8x128xf32>
    %193 = vector.shape_cast %190 : vector<8x128xf32> to vector<1x8x128xf32>
    tpu.vector_store %arg5[%c0_66, %c0_67, %c3584], %193 {strides = array<i32>} : memref<4x8x4096xf32, #tpu.memory_space<vmem>>, vector<1x8x128xf32>,
    %194 = vector.extract_strided_slice %77 {offsets = [232, 0], sizes = [8, 128], strides = [1, 1]} : vector<256x512xf32> to vector<8x128xf32>
    %c0_68 = arith.constant 0 : index
    %c0_69 = arith.constant 0 : index
    %c3712 = arith.constant 3712 : index
    %195 = vector.load %arg5[%c0_68, %c0_69, %c3712] : memref<4x8x4096xf32, #tpu.memory_space<vmem>>, vector<1x8x128xf32>
    %196 = vector.shape_cast %195 : vector<1x8x128xf32> to vector<8x128xf32>
    %197 = vector.shape_cast %194 : vector<8x128xf32> to vector<1x8x128xf32>
    tpu.vector_store %arg5[%c0_68, %c0_69, %c3712], %197 {strides = array<i32>} : memref<4x8x4096xf32, #tpu.memory_space<vmem>>, vector<1x8x128xf32>,
    %198 = vector.extract_strided_slice %77 {offsets = [240, 0], sizes = [8, 128], strides = [1, 1]} : vector<256x512xf32> to vector<8x128xf32>
    %c0_70 = arith.constant 0 : index
    %c0_71 = arith.constant 0 : index
    %c3840 = arith.constant 3840 : index
    %199 = vector.load %arg5[%c0_70, %c0_71, %c3840] : memref<4x8x4096xf32, #tpu.memory_space<vmem>>, vector<1x8x128xf32>
    %200 = vector.shape_cast %199 : vector<1x8x128xf32> to vector<8x128xf32>
    %201 = vector.shape_cast %198 : vector<8x128xf32> to vector<1x8x128xf32>
    tpu.vector_store %arg5[%c0_70, %c0_71, %c3840], %201 {strides = array<i32>} : memref<4x8x4096xf32, #tpu.memory_space<vmem>>, vector<1x8x128xf32>,
    %202 = vector.extract_strided_slice %77 {offsets = [248, 0], sizes = [8, 128], strides = [1, 1]} : vector<256x512xf32> to vector<8x128xf32>
    %c0_72 = arith.constant 0 : index
    %c0_73 = arith.constant 0 : index
    %c3968 = arith.constant 3968 : index
    %203 = vector.load %arg5[%c0_72, %c0_73, %c3968] : memref<4x8x4096xf32, #tpu.memory_space<vmem>>, vector<1x8x128xf32>
    %204 = vector.shape_cast %203 : vector<1x8x128xf32> to vector<8x128xf32>
    %205 = vector.shape_cast %202 : vector<8x128xf32> to vector<1x8x128xf32>
    tpu.vector_store %arg5[%c0_72, %c0_73, %c3968], %205 {strides = array<i32>} : memref<4x8x4096xf32, #tpu.memory_space<vmem>>, vector<1x8x128xf32>,
    %206 = vector.extract_strided_slice %77 {offsets = [0, 128], sizes = [8, 128], strides = [1, 1]} : vector<256x512xf32> to vector<8x128xf32>
    %c1_74 = arith.constant 1 : index
    %c0_75 = arith.constant 0 : index
    %c0_76 = arith.constant 0 : index
    %207 = vector.load %arg5[%c1_74, %c0_75, %c0_76] : memref<4x8x4096xf32, #tpu.memory_space<vmem>>, vector<1x8x128xf32>
    %208 = vector.shape_cast %207 : vector<1x8x128xf32> to vector<8x128xf32>
    %209 = vector.shape_cast %206 : vector<8x128xf32> to vector<1x8x128xf32>
    tpu.vector_store %arg5[%c1_74, %c0_75, %c0_76], %209 {strides = array<i32>} : memref<4x8x4096xf32, #tpu.memory_space<vmem>>, vector<1x8x128xf32>,
    %210 = vector.extract_strided_slice %77 {offsets = [8, 128], sizes = [8, 128], strides = [1, 1]} : vector<256x512xf32> to vector<8x128xf32>
    %c1_77 = arith.constant 1 : index
    %c0_78 = arith.constant 0 : index
    %c128_79 = arith.constant 128 : index
    %211 = vector.load %arg5[%c1_77, %c0_78, %c128_79] : memref<4x8x4096xf32, #tpu.memory_space<vmem>>, vector<1x8x128xf32>
    %212 = vector.shape_cast %211 : vector<1x8x128xf32> to vector<8x128xf32>
    %213 = vector.shape_cast %210 : vector<8x128xf32> to vector<1x8x128xf32>
    tpu.vector_store %arg5[%c1_77, %c0_78, %c128_79], %213 {strides = array<i32>} : memref<4x8x4096xf32, #tpu.memory_space<vmem>>, vector<1x8x128xf32>,
    %214 = vector.extract_strided_slice %77 {offsets = [16, 128], sizes = [8, 128], strides = [1, 1]} : vector<256x512xf32> to vector<8x128xf32>
    %c1_80 = arith.constant 1 : index
    %c0_81 = arith.constant 0 : index
    %c256_82 = arith.constant 256 : index
    %215 = vector.load %arg5[%c1_80, %c0_81, %c256_82] : memref<4x8x4096xf32, #tpu.memory_space<vmem>>, vector<1x8x128xf32>
    %216 = vector.shape_cast %215 : vector<1x8x128xf32> to vector<8x128xf32>
    %217 = vector.shape_cast %214 : vector<8x128xf32> to vector<1x8x128xf32>
    tpu.vector_store %arg5[%c1_80, %c0_81, %c256_82], %217 {strides = array<i32>} : memref<4x8x4096xf32, #tpu.memory_space<vmem>>, vector<1x8x128xf32>,
    %218 = vector.extract_strided_slice %77 {offsets = [24, 128], sizes = [8, 128], strides = [1, 1]} : vector<256x512xf32> to vector<8x128xf32>
    %c1_83 = arith.constant 1 : index
    %c0_84 = arith.constant 0 : index
    %c384_85 = arith.constant 384 : index
    %219 = vector.load %arg5[%c1_83, %c0_84, %c384_85] : memref<4x8x4096xf32, #tpu.memory_space<vmem>>, vector<1x8x128xf32>
    %220 = vector.shape_cast %219 : vector<1x8x128xf32> to vector<8x128xf32>
    %221 = vector.shape_cast %218 : vector<8x128xf32> to vector<1x8x128xf32>
    tpu.vector_store %arg5[%c1_83, %c0_84, %c384_85], %221 {strides = array<i32>} : memref<4x8x4096xf32, #tpu.memory_space<vmem>>, vector<1x8x128xf32>,
    %222 = vector.extract_strided_slice %77 {offsets = [32, 128], sizes = [8, 128], strides = [1, 1]} : vector<256x512xf32> to vector<8x128xf32>
    %c1_86 = arith.constant 1 : index
    %c0_87 = arith.constant 0 : index
    %c512_88 = arith.constant 512 : index
    %223 = vector.load %arg5[%c1_86, %c0_87, %c512_88] : memref<4x8x4096xf32, #tpu.memory_space<vmem>>, vector<1x8x128xf32>
    %224 = vector.shape_cast %223 : vector<1x8x128xf32> to vector<8x128xf32>
    %225 = vector.shape_cast %222 : vector<8x128xf32> to vector<1x8x128xf32>
    tpu.vector_store %arg5[%c1_86, %c0_87, %c512_88], %225 {strides = array<i32>} : memref<4x8x4096xf32, #tpu.memory_space<vmem>>, vector<1x8x128xf32>,
    %226 = vector.extract_strided_slice %77 {offsets = [40, 128], sizes = [8, 128], strides = [1, 1]} : vector<256x512xf32> to vector<8x128xf32>
    %c1_89 = arith.constant 1 : index
    %c0_90 = arith.constant 0 : index
    %c640_91 = arith.constant 640 : index
    %227 = vector.load %arg5[%c1_89, %c0_90, %c640_91] : memref<4x8x4096xf32, #tpu.memory_space<vmem>>, vector<1x8x128xf32>
    %228 = vector.shape_cast %227 : vector<1x8x128xf32> to vector<8x128xf32>
    %229 = vector.shape_cast %226 : vector<8x128xf32> to vector<1x8x128xf32>
    tpu.vector_store %arg5[%c1_89, %c0_90, %c640_91], %229 {strides = array<i32>} : memref<4x8x4096xf32, #tpu.memory_space<vmem>>, vector<1x8x128xf32>,
    %230 = vector.extract_strided_slice %77 {offsets = [48, 128], sizes = [8, 128], strides = [1, 1]} : vector<256x512xf32> to vector<8x128xf32>
    %c1_92 = arith.constant 1 : index
    %c0_93 = arith.constant 0 : index
    %c768_94 = arith.constant 768 : index
    %231 = vector.load %arg5[%c1_92, %c0_93, %c768_94] : memref<4x8x4096xf32, #tpu.memory_space<vmem>>, vector<1x8x128xf32>
    %232 = vector.shape_cast %231 : vector<1x8x128xf32> to vector<8x128xf32>
    %233 = vector.shape_cast %230 : vector<8x128xf32> to vector<1x8x128xf32>
    tpu.vector_store %arg5[%c1_92, %c0_93, %c768_94], %233 {strides = array<i32>} : memref<4x8x4096xf32, #tpu.memory_space<vmem>>, vector<1x8x128xf32>,
    %234 = vector.extract_strided_slice %77 {offsets = [56, 128], sizes = [8, 128], strides = [1, 1]} : vector<256x512xf32> to vector<8x128xf32>
    %c1_95 = arith.constant 1 : index
    %c0_96 = arith.constant 0 : index
    %c896_97 = arith.constant 896 : index
    %235 = vector.load %arg5[%c1_95, %c0_96, %c896_97] : memref<4x8x4096xf32, #tpu.memory_space<vmem>>, vector<1x8x128xf32>
    %236 = vector.shape_cast %235 : vector<1x8x128xf32> to vector<8x128xf32>
    %237 = vector.shape_cast %234 : vector<8x128xf32> to vector<1x8x128xf32>
    tpu.vector_store %arg5[%c1_95, %c0_96, %c896_97], %237 {strides = array<i32>} : memref<4x8x4096xf32, #tpu.memory_space<vmem>>, vector<1x8x128xf32>,
    %238 = vector.extract_strided_slice %77 {offsets = [64, 128], sizes = [8, 128], strides = [1, 1]} : vector<256x512xf32> to vector<8x128xf32>
    %c1_98 = arith.constant 1 : index
    %c0_99 = arith.constant 0 : index
    %c1024_100 = arith.constant 1024 : index
    %239 = vector.load %arg5[%c1_98, %c0_99, %c1024_100] : memref<4x8x4096xf32, #tpu.memory_space<vmem>>, vector<1x8x128xf32>
    %240 = vector.shape_cast %239 : vector<1x8x128xf32> to vector<8x128xf32>
    %241 = vector.shape_cast %238 : vector<8x128xf32> to vector<1x8x128xf32>
    tpu.vector_store %arg5[%c1_98, %c0_99, %c1024_100], %241 {strides = array<i32>} : memref<4x8x4096xf32, #tpu.memory_space<vmem>>, vector<1x8x128xf32>,
    %242 = vector.extract_strided_slice %77 {offsets = [72, 128], sizes = [8, 128], strides = [1, 1]} : vector<256x512xf32> to vector<8x128xf32>
    %c1_101 = arith.constant 1 : index
    %c0_102 = arith.constant 0 : index
    %c1152_103 = arith.constant 1152 : index
    %243 = vector.load %arg5[%c1_101, %c0_102, %c1152_103] : memref<4x8x4096xf32, #tpu.memory_space<vmem>>, vector<1x8x128xf32>
    %244 = vector.shape_cast %243 : vector<1x8x128xf32> to vector<8x128xf32>
    %245 = vector.shape_cast %242 : vector<8x128xf32> to vector<1x8x128xf32>
    tpu.vector_store %arg5[%c1_101, %c0_102, %c1152_103], %245 {strides = array<i32>} : memref<4x8x4096xf32, #tpu.memory_space<vmem>>, vector<1x8x128xf32>,
    %246 = vector.extract_strided_slice %77 {offsets = [80, 128], sizes = [8, 128], strides = [1, 1]} : vector<256x512xf32> to vector<8x128xf32>
    %c1_104 = arith.constant 1 : index
    %c0_105 = arith.constant 0 : index
    %c1280_106 = arith.constant 1280 : index
    %247 = vector.load %arg5[%c1_104, %c0_105, %c1280_106] : memref<4x8x4096xf32, #tpu.memory_space<vmem>>, vector<1x8x128xf32>
    %248 = vector.shape_cast %247 : vector<1x8x128xf32> to vector<8x128xf32>
    %249 = vector.shape_cast %246 : vector<8x128xf32> to vector<1x8x128xf32>
    tpu.vector_store %arg5[%c1_104, %c0_105, %c1280_106], %249 {strides = array<i32>} : memref<4x8x4096xf32, #tpu.memory_space<vmem>>, vector<1x8x128xf32>,
    %250 = vector.extract_strided_slice %77 {offsets = [88, 128], sizes = [8, 128], strides = [1, 1]} : vector<256x512xf32> to vector<8x128xf32>
    %c1_107 = arith.constant 1 : index
    %c0_108 = arith.constant 0 : index
    %c1408_109 = arith.constant 1408 : index
    %251 = vector.load %arg5[%c1_107, %c0_108, %c1408_109] : memref<4x8x4096xf32, #tpu.memory_space<vmem>>, vector<1x8x128xf32>
    %252 = vector.shape_cast %251 : vector<1x8x128xf32> to vector<8x128xf32>
    %253 = vector.shape_cast %250 : vector<8x128xf32> to vector<1x8x128xf32>
    tpu.vector_store %arg5[%c1_107, %c0_108, %c1408_109], %253 {strides = array<i32>} : memref<4x8x4096xf32, #tpu.memory_space<vmem>>, vector<1x8x128xf32>,
    %254 = vector.extract_strided_slice %77 {offsets = [96, 128], sizes = [8, 128], strides = [1, 1]} : vector<256x512xf32> to vector<8x128xf32>
    %c1_110 = arith.constant 1 : index
    %c0_111 = arith.constant 0 : index
    %c1536_112 = arith.constant 1536 : index
    %255 = vector.load %arg5[%c1_110, %c0_111, %c1536_112] : memref<4x8x4096xf32, #tpu.memory_space<vmem>>, vector<1x8x128xf32>
    %256 = vector.shape_cast %255 : vector<1x8x128xf32> to vector<8x128xf32>
    %257 = vector.shape_cast %254 : vector<8x128xf32> to vector<1x8x128xf32>
    tpu.vector_store %arg5[%c1_110, %c0_111, %c1536_112], %257 {strides = array<i32>} : memref<4x8x4096xf32, #tpu.memory_space<vmem>>, vector<1x8x128xf32>,
    %258 = vector.extract_strided_slice %77 {offsets = [104, 128], sizes = [8, 128], strides = [1, 1]} : vector<256x512xf32> to vector<8x128xf32>
    %c1_113 = arith.constant 1 : index
    %c0_114 = arith.constant 0 : index
    %c1664_115 = arith.constant 1664 : index
    %259 = vector.load %arg5[%c1_113, %c0_114, %c1664_115] : memref<4x8x4096xf32, #tpu.memory_space<vmem>>, vector<1x8x128xf32>
    %260 = vector.shape_cast %259 : vector<1x8x128xf32> to vector<8x128xf32>
    %261 = vector.shape_cast %258 : vector<8x128xf32> to vector<1x8x128xf32>
    tpu.vector_store %arg5[%c1_113, %c0_114, %c1664_115], %261 {strides = array<i32>} : memref<4x8x4096xf32, #tpu.memory_space<vmem>>, vector<1x8x128xf32>,
    %262 = vector.extract_strided_slice %77 {offsets = [112, 128], sizes = [8, 128], strides = [1, 1]} : vector<256x512xf32> to vector<8x128xf32>
    %c1_116 = arith.constant 1 : index
    %c0_117 = arith.constant 0 : index
    %c1792_118 = arith.constant 1792 : index
    %263 = vector.load %arg5[%c1_116, %c0_117, %c1792_118] : memref<4x8x4096xf32, #tpu.memory_space<vmem>>, vector<1x8x128xf32>
    %264 = vector.shape_cast %263 : vector<1x8x128xf32> to vector<8x128xf32>
    %265 = vector.shape_cast %262 : vector<8x128xf32> to vector<1x8x128xf32>
    tpu.vector_store %arg5[%c1_116, %c0_117, %c1792_118], %265 {strides = array<i32>} : memref<4x8x4096xf32, #tpu.memory_space<vmem>>, vector<1x8x128xf32>,
    %266 = vector.extract_strided_slice %77 {offsets = [120, 128], sizes = [8, 128], strides = [1, 1]} : vector<256x512xf32> to vector<8x128xf32>
    %c1_119 = arith.constant 1 : index
    %c0_120 = arith.constant 0 : index
    %c1920_121 = arith.constant 1920 : index
    %267 = vector.load %arg5[%c1_119, %c0_120, %c1920_121] : memref<4x8x4096xf32, #tpu.memory_space<vmem>>, vector<1x8x128xf32>
    %268 = vector.shape_cast %267 : vector<1x8x128xf32> to vector<8x128xf32>
    %269 = vector.shape_cast %266 : vector<8x128xf32> to vector<1x8x128xf32>
    tpu.vector_store %arg5[%c1_119, %c0_120, %c1920_121], %269 {strides = array<i32>} : memref<4x8x4096xf32, #tpu.memory_space<vmem>>, vector<1x8x128xf32>,
    %270 = vector.extract_strided_slice %77 {offsets = [128, 128], sizes = [8, 128], strides = [1, 1]} : vector<256x512xf32> to vector<8x128xf32>
    %c1_122 = arith.constant 1 : index
    %c0_123 = arith.constant 0 : index
    %c2048_124 = arith.constant 2048 : index
    %271 = vector.load %arg5[%c1_122, %c0_123, %c2048_124] : memref<4x8x4096xf32, #tpu.memory_space<vmem>>, vector<1x8x128xf32>
    %272 = vector.shape_cast %271 : vector<1x8x128xf32> to vector<8x128xf32>
    %273 = vector.shape_cast %270 : vector<8x128xf32> to vector<1x8x128xf32>
    tpu.vector_store %arg5[%c1_122, %c0_123, %c2048_124], %273 {strides = array<i32>} : memref<4x8x4096xf32, #tpu.memory_space<vmem>>, vector<1x8x128xf32>,
    %274 = vector.extract_strided_slice %77 {offsets = [136, 128], sizes = [8, 128], strides = [1, 1]} : vector<256x512xf32> to vector<8x128xf32>
    %c1_125 = arith.constant 1 : index
    %c0_126 = arith.constant 0 : index
    %c2176_127 = arith.constant 2176 : index
    %275 = vector.load %arg5[%c1_125, %c0_126, %c2176_127] : memref<4x8x4096xf32, #tpu.memory_space<vmem>>, vector<1x8x128xf32>
    %276 = vector.shape_cast %275 : vector<1x8x128xf32> to vector<8x128xf32>
    %277 = vector.shape_cast %274 : vector<8x128xf32> to vector<1x8x128xf32>
    tpu.vector_store %arg5[%c1_125, %c0_126, %c2176_127], %277 {strides = array<i32>} : memref<4x8x4096xf32, #tpu.memory_space<vmem>>, vector<1x8x128xf32>,
    %278 = vector.extract_strided_slice %77 {offsets = [144, 128], sizes = [8, 128], strides = [1, 1]} : vector<256x512xf32> to vector<8x128xf32>
    %c1_128 = arith.constant 1 : index
    %c0_129 = arith.constant 0 : index
    %c2304_130 = arith.constant 2304 : index
    %279 = vector.load %arg5[%c1_128, %c0_129, %c2304_130] : memref<4x8x4096xf32, #tpu.memory_space<vmem>>, vector<1x8x128xf32>
    %280 = vector.shape_cast %279 : vector<1x8x128xf32> to vector<8x128xf32>
    %281 = vector.shape_cast %278 : vector<8x128xf32> to vector<1x8x128xf32>
    tpu.vector_store %arg5[%c1_128, %c0_129, %c2304_130], %281 {strides = array<i32>} : memref<4x8x4096xf32, #tpu.memory_space<vmem>>, vector<1x8x128xf32>,
    %282 = vector.extract_strided_slice %77 {offsets = [152, 128], sizes = [8, 128], strides = [1, 1]} : vector<256x512xf32> to vector<8x128xf32>
    %c1_131 = arith.constant 1 : index
    %c0_132 = arith.constant 0 : index
    %c2432_133 = arith.constant 2432 : index
    %283 = vector.load %arg5[%c1_131, %c0_132, %c2432_133] : memref<4x8x4096xf32, #tpu.memory_space<vmem>>, vector<1x8x128xf32>
    %284 = vector.shape_cast %283 : vector<1x8x128xf32> to vector<8x128xf32>
    %285 = vector.shape_cast %282 : vector<8x128xf32> to vector<1x8x128xf32>
    tpu.vector_store %arg5[%c1_131, %c0_132, %c2432_133], %285 {strides = array<i32>} : memref<4x8x4096xf32, #tpu.memory_space<vmem>>, vector<1x8x128xf32>,
    %286 = vector.extract_strided_slice %77 {offsets = [160, 128], sizes = [8, 128], strides = [1, 1]} : vector<256x512xf32> to vector<8x128xf32>
    %c1_134 = arith.constant 1 : index
    %c0_135 = arith.constant 0 : index
    %c2560_136 = arith.constant 2560 : index
    %287 = vector.load %arg5[%c1_134, %c0_135, %c2560_136] : memref<4x8x4096xf32, #tpu.memory_space<vmem>>, vector<1x8x128xf32>
    %288 = vector.shape_cast %287 : vector<1x8x128xf32> to vector<8x128xf32>
    %289 = vector.shape_cast %286 : vector<8x128xf32> to vector<1x8x128xf32>
    tpu.vector_store %arg5[%c1_134, %c0_135, %c2560_136], %289 {strides = array<i32>} : memref<4x8x4096xf32, #tpu.memory_space<vmem>>, vector<1x8x128xf32>,
    %290 = vector.extract_strided_slice %77 {offsets = [168, 128], sizes = [8, 128], strides = [1, 1]} : vector<256x512xf32> to vector<8x128xf32>
    %c1_137 = arith.constant 1 : index
    %c0_138 = arith.constant 0 : index
    %c2688_139 = arith.constant 2688 : index
    %291 = vector.load %arg5[%c1_137, %c0_138, %c2688_139] : memref<4x8x4096xf32, #tpu.memory_space<vmem>>, vector<1x8x128xf32>
    %292 = vector.shape_cast %291 : vector<1x8x128xf32> to vector<8x128xf32>
    %293 = vector.shape_cast %290 : vector<8x128xf32> to vector<1x8x128xf32>
    tpu.vector_store %arg5[%c1_137, %c0_138, %c2688_139], %293 {strides = array<i32>} : memref<4x8x4096xf32, #tpu.memory_space<vmem>>, vector<1x8x128xf32>,
    %294 = vector.extract_strided_slice %77 {offsets = [176, 128], sizes = [8, 128], strides = [1, 1]} : vector<256x512xf32> to vector<8x128xf32>
    %c1_140 = arith.constant 1 : index
    %c0_141 = arith.constant 0 : index
    %c2816_142 = arith.constant 2816 : index
    %295 = vector.load %arg5[%c1_140, %c0_141, %c2816_142] : memref<4x8x4096xf32, #tpu.memory_space<vmem>>, vector<1x8x128xf32>
    %296 = vector.shape_cast %295 : vector<1x8x128xf32> to vector<8x128xf32>
    %297 = vector.shape_cast %294 : vector<8x128xf32> to vector<1x8x128xf32>
    tpu.vector_store %arg5[%c1_140, %c0_141, %c2816_142], %297 {strides = array<i32>} : memref<4x8x4096xf32, #tpu.memory_space<vmem>>, vector<1x8x128xf32>,
    %298 = vector.extract_strided_slice %77 {offsets = [184, 128], sizes = [8, 128], strides = [1, 1]} : vector<256x512xf32> to vector<8x128xf32>
    %c1_143 = arith.constant 1 : index
    %c0_144 = arith.constant 0 : index
    %c2944_145 = arith.constant 2944 : index
    %299 = vector.load %arg5[%c1_143, %c0_144, %c2944_145] : memref<4x8x4096xf32, #tpu.memory_space<vmem>>, vector<1x8x128xf32>
    %300 = vector.shape_cast %299 : vector<1x8x128xf32> to vector<8x128xf32>
    %301 = vector.shape_cast %298 : vector<8x128xf32> to vector<1x8x128xf32>
    tpu.vector_store %arg5[%c1_143, %c0_144, %c2944_145], %301 {strides = array<i32>} : memref<4x8x4096xf32, #tpu.memory_space<vmem>>, vector<1x8x128xf32>,
    %302 = vector.extract_strided_slice %77 {offsets = [192, 128], sizes = [8, 128], strides = [1, 1]} : vector<256x512xf32> to vector<8x128xf32>
    %c1_146 = arith.constant 1 : index
    %c0_147 = arith.constant 0 : index
    %c3072_148 = arith.constant 3072 : index
    %303 = vector.load %arg5[%c1_146, %c0_147, %c3072_148] : memref<4x8x4096xf32, #tpu.memory_space<vmem>>, vector<1x8x128xf32>
    %304 = vector.shape_cast %303 : vector<1x8x128xf32> to vector<8x128xf32>
    %305 = vector.shape_cast %302 : vector<8x128xf32> to vector<1x8x128xf32>
    tpu.vector_store %arg5[%c1_146, %c0_147, %c3072_148], %305 {strides = array<i32>} : memref<4x8x4096xf32, #tpu.memory_space<vmem>>, vector<1x8x128xf32>,
    %306 = vector.extract_strided_slice %77 {offsets = [200, 128], sizes = [8, 128], strides = [1, 1]} : vector<256x512xf32> to vector<8x128xf32>
    %c1_149 = arith.constant 1 : index
    %c0_150 = arith.constant 0 : index
    %c3200_151 = arith.constant 3200 : index
    %307 = vector.load %arg5[%c1_149, %c0_150, %c3200_151] : memref<4x8x4096xf32, #tpu.memory_space<vmem>>, vector<1x8x128xf32>
    %308 = vector.shape_cast %307 : vector<1x8x128xf32> to vector<8x128xf32>
    %309 = vector.shape_cast %306 : vector<8x128xf32> to vector<1x8x128xf32>
    tpu.vector_store %arg5[%c1_149, %c0_150, %c3200_151], %309 {strides = array<i32>} : memref<4x8x4096xf32, #tpu.memory_space<vmem>>, vector<1x8x128xf32>,
    %310 = vector.extract_strided_slice %77 {offsets = [208, 128], sizes = [8, 128], strides = [1, 1]} : vector<256x512xf32> to vector<8x128xf32>
    %c1_152 = arith.constant 1 : index
    %c0_153 = arith.constant 0 : index
    %c3328_154 = arith.constant 3328 : index
    %311 = vector.load %arg5[%c1_152, %c0_153, %c3328_154] : memref<4x8x4096xf32, #tpu.memory_space<vmem>>, vector<1x8x128xf32>
    %312 = vector.shape_cast %311 : vector<1x8x128xf32> to vector<8x128xf32>
    %313 = vector.shape_cast %310 : vector<8x128xf32> to vector<1x8x128xf32>
    tpu.vector_store %arg5[%c1_152, %c0_153, %c3328_154], %313 {strides = array<i32>} : memref<4x8x4096xf32, #tpu.memory_space<vmem>>, vector<1x8x128xf32>,
    %314 = vector.extract_strided_slice %77 {offsets = [216, 128], sizes = [8, 128], strides = [1, 1]} : vector<256x512xf32> to vector<8x128xf32>
    %c1_155 = arith.constant 1 : index
    %c0_156 = arith.constant 0 : index
    %c3456_157 = arith.constant 3456 : index
    %315 = vector.load %arg5[%c1_155, %c0_156, %c3456_157] : memref<4x8x4096xf32, #tpu.memory_space<vmem>>, vector<1x8x128xf32>
    %316 = vector.shape_cast %315 : vector<1x8x128xf32> to vector<8x128xf32>
    %317 = vector.shape_cast %314 : vector<8x128xf32> to vector<1x8x128xf32>
    tpu.vector_store %arg5[%c1_155, %c0_156, %c3456_157], %317 {strides = array<i32>} : memref<4x8x4096xf32, #tpu.memory_space<vmem>>, vector<1x8x128xf32>,
    %318 = vector.extract_strided_slice %77 {offsets = [224, 128], sizes = [8, 128], strides = [1, 1]} : vector<256x512xf32> to vector<8x128xf32>
    %c1_158 = arith.constant 1 : index
    %c0_159 = arith.constant 0 : index
    %c3584_160 = arith.constant 3584 : index
    %319 = vector.load %arg5[%c1_158, %c0_159, %c3584_160] : memref<4x8x4096xf32, #tpu.memory_space<vmem>>, vector<1x8x128xf32>
    %320 = vector.shape_cast %319 : vector<1x8x128xf32> to vector<8x128xf32>
    %321 = vector.shape_cast %318 : vector<8x128xf32> to vector<1x8x128xf32>
    tpu.vector_store %arg5[%c1_158, %c0_159, %c3584_160], %321 {strides = array<i32>} : memref<4x8x4096xf32, #tpu.memory_space<vmem>>, vector<1x8x128xf32>,
    %322 = vector.extract_strided_slice %77 {offsets = [232, 128], sizes = [8, 128], strides = [1, 1]} : vector<256x512xf32> to vector<8x128xf32>
    %c1_161 = arith.constant 1 : index
    %c0_162 = arith.constant 0 : index
    %c3712_163 = arith.constant 3712 : index
    %323 = vector.load %arg5[%c1_161, %c0_162, %c3712_163] : memref<4x8x4096xf32, #tpu.memory_space<vmem>>, vector<1x8x128xf32>
    %324 = vector.shape_cast %323 : vector<1x8x128xf32> to vector<8x128xf32>
    %325 = vector.shape_cast %322 : vector<8x128xf32> to vector<1x8x128xf32>
    tpu.vector_store %arg5[%c1_161, %c0_162, %c3712_163], %325 {strides = array<i32>} : memref<4x8x4096xf32, #tpu.memory_space<vmem>>, vector<1x8x128xf32>,
    %326 = vector.extract_strided_slice %77 {offsets = [240, 128], sizes = [8, 128], strides = [1, 1]} : vector<256x512xf32> to vector<8x128xf32>
    %c1_164 = arith.constant 1 : index
    %c0_165 = arith.constant 0 : index
    %c3840_166 = arith.constant 3840 : index
    %327 = vector.load %arg5[%c1_164, %c0_165, %c3840_166] : memref<4x8x4096xf32, #tpu.memory_space<vmem>>, vector<1x8x128xf32>
    %328 = vector.shape_cast %327 : vector<1x8x128xf32> to vector<8x128xf32>
    %329 = vector.shape_cast %326 : vector<8x128xf32> to vector<1x8x128xf32>
    tpu.vector_store %arg5[%c1_164, %c0_165, %c3840_166], %329 {strides = array<i32>} : memref<4x8x4096xf32, #tpu.memory_space<vmem>>, vector<1x8x128xf32>,
    %330 = vector.extract_strided_slice %77 {offsets = [248, 128], sizes = [8, 128], strides = [1, 1]} : vector<256x512xf32> to vector<8x128xf32>
    %c1_167 = arith.constant 1 : index
    %c0_168 = arith.constant 0 : index
    %c3968_169 = arith.constant 3968 : index
    %331 = vector.load %arg5[%c1_167, %c0_168, %c3968_169] : memref<4x8x4096xf32, #tpu.memory_space<vmem>>, vector<1x8x128xf32>
    %332 = vector.shape_cast %331 : vector<1x8x128xf32> to vector<8x128xf32>
    %333 = vector.shape_cast %330 : vector<8x128xf32> to vector<1x8x128xf32>
    tpu.vector_store %arg5[%c1_167, %c0_168, %c3968_169], %333 {strides = array<i32>} : memref<4x8x4096xf32, #tpu.memory_space<vmem>>, vector<1x8x128xf32>,
    %334 = vector.extract_strided_slice %77 {offsets = [0, 256], sizes = [8, 128], strides = [1, 1]} : vector<256x512xf32> to vector<8x128xf32>
    %c2 = arith.constant 2 : index
    %c0_170 = arith.constant 0 : index
    %c0_171 = arith.constant 0 : index
    %335 = vector.load %arg5[%c2, %c0_170, %c0_171] : memref<4x8x4096xf32, #tpu.memory_space<vmem>>, vector<1x8x128xf32>
    %336 = vector.shape_cast %335 : vector<1x8x128xf32> to vector<8x128xf32>
    %337 = vector.shape_cast %334 : vector<8x128xf32> to vector<1x8x128xf32>
    tpu.vector_store %arg5[%c2, %c0_170, %c0_171], %337 {strides = array<i32>} : memref<4x8x4096xf32, #tpu.memory_space<vmem>>, vector<1x8x128xf32>,
    %338 = vector.extract_strided_slice %77 {offsets = [8, 256], sizes = [8, 128], strides = [1, 1]} : vector<256x512xf32> to vector<8x128xf32>
    %c2_172 = arith.constant 2 : index
    %c0_173 = arith.constant 0 : index
    %c128_174 = arith.constant 128 : index
    %339 = vector.load %arg5[%c2_172, %c0_173, %c128_174] : memref<4x8x4096xf32, #tpu.memory_space<vmem>>, vector<1x8x128xf32>
    %340 = vector.shape_cast %339 : vector<1x8x128xf32> to vector<8x128xf32>
    %341 = vector.shape_cast %338 : vector<8x128xf32> to vector<1x8x128xf32>
    tpu.vector_store %arg5[%c2_172, %c0_173, %c128_174], %341 {strides = array<i32>} : memref<4x8x4096xf32, #tpu.memory_space<vmem>>, vector<1x8x128xf32>,
    %342 = vector.extract_strided_slice %77 {offsets = [16, 256], sizes = [8, 128], strides = [1, 1]} : vector<256x512xf32> to vector<8x128xf32>
    %c2_175 = arith.constant 2 : index
    %c0_176 = arith.constant 0 : index
    %c256_177 = arith.constant 256 : index
    %343 = vector.load %arg5[%c2_175, %c0_176, %c256_177] : memref<4x8x4096xf32, #tpu.memory_space<vmem>>, vector<1x8x128xf32>
    %344 = vector.shape_cast %343 : vector<1x8x128xf32> to vector<8x128xf32>
    %345 = vector.shape_cast %342 : vector<8x128xf32> to vector<1x8x128xf32>
    tpu.vector_store %arg5[%c2_175, %c0_176, %c256_177], %345 {strides = array<i32>} : memref<4x8x4096xf32, #tpu.memory_space<vmem>>, vector<1x8x128xf32>,
    %346 = vector.extract_strided_slice %77 {offsets = [24, 256], sizes = [8, 128], strides = [1, 1]} : vector<256x512xf32> to vector<8x128xf32>
    %c2_178 = arith.constant 2 : index
    %c0_179 = arith.constant 0 : index
    %c384_180 = arith.constant 384 : index
    %347 = vector.load %arg5[%c2_178, %c0_179, %c384_180] : memref<4x8x4096xf32, #tpu.memory_space<vmem>>, vector<1x8x128xf32>
    %348 = vector.shape_cast %347 : vector<1x8x128xf32> to vector<8x128xf32>
    %349 = vector.shape_cast %346 : vector<8x128xf32> to vector<1x8x128xf32>
    tpu.vector_store %arg5[%c2_178, %c0_179, %c384_180], %349 {strides = array<i32>} : memref<4x8x4096xf32, #tpu.memory_space<vmem>>, vector<1x8x128xf32>,
    %350 = vector.extract_strided_slice %77 {offsets = [32, 256], sizes = [8, 128], strides = [1, 1]} : vector<256x512xf32> to vector<8x128xf32>
    %c2_181 = arith.constant 2 : index
    %c0_182 = arith.constant 0 : index
    %c512_183 = arith.constant 512 : index
    %351 = vector.load %arg5[%c2_181, %c0_182, %c512_183] : memref<4x8x4096xf32, #tpu.memory_space<vmem>>, vector<1x8x128xf32>
    %352 = vector.shape_cast %351 : vector<1x8x128xf32> to vector<8x128xf32>
    %353 = vector.shape_cast %350 : vector<8x128xf32> to vector<1x8x128xf32>
    tpu.vector_store %arg5[%c2_181, %c0_182, %c512_183], %353 {strides = array<i32>} : memref<4x8x4096xf32, #tpu.memory_space<vmem>>, vector<1x8x128xf32>,
    %354 = vector.extract_strided_slice %77 {offsets = [40, 256], sizes = [8, 128], strides = [1, 1]} : vector<256x512xf32> to vector<8x128xf32>
    %c2_184 = arith.constant 2 : index
    %c0_185 = arith.constant 0 : index
    %c640_186 = arith.constant 640 : index
    %355 = vector.load %arg5[%c2_184, %c0_185, %c640_186] : memref<4x8x4096xf32, #tpu.memory_space<vmem>>, vector<1x8x128xf32>
    %356 = vector.shape_cast %355 : vector<1x8x128xf32> to vector<8x128xf32>
    %357 = vector.shape_cast %354 : vector<8x128xf32> to vector<1x8x128xf32>
    tpu.vector_store %arg5[%c2_184, %c0_185, %c640_186], %357 {strides = array<i32>} : memref<4x8x4096xf32, #tpu.memory_space<vmem>>, vector<1x8x128xf32>,
    %358 = vector.extract_strided_slice %77 {offsets = [48, 256], sizes = [8, 128], strides = [1, 1]} : vector<256x512xf32> to vector<8x128xf32>
    %c2_187 = arith.constant 2 : index
    %c0_188 = arith.constant 0 : index
    %c768_189 = arith.constant 768 : index
    %359 = vector.load %arg5[%c2_187, %c0_188, %c768_189] : memref<4x8x4096xf32, #tpu.memory_space<vmem>>, vector<1x8x128xf32>
    %360 = vector.shape_cast %359 : vector<1x8x128xf32> to vector<8x128xf32>
    %361 = vector.shape_cast %358 : vector<8x128xf32> to vector<1x8x128xf32>
    tpu.vector_store %arg5[%c2_187, %c0_188, %c768_189], %361 {strides = array<i32>} : memref<4x8x4096xf32, #tpu.memory_space<vmem>>, vector<1x8x128xf32>,
    %362 = vector.extract_strided_slice %77 {offsets = [56, 256], sizes = [8, 128], strides = [1, 1]} : vector<256x512xf32> to vector<8x128xf32>
    %c2_190 = arith.constant 2 : index
    %c0_191 = arith.constant 0 : index
    %c896_192 = arith.constant 896 : index
    %363 = vector.load %arg5[%c2_190, %c0_191, %c896_192] : memref<4x8x4096xf32, #tpu.memory_space<vmem>>, vector<1x8x128xf32>
    %364 = vector.shape_cast %363 : vector<1x8x128xf32> to vector<8x128xf32>
    %365 = vector.shape_cast %362 : vector<8x128xf32> to vector<1x8x128xf32>
    tpu.vector_store %arg5[%c2_190, %c0_191, %c896_192], %365 {strides = array<i32>} : memref<4x8x4096xf32, #tpu.memory_space<vmem>>, vector<1x8x128xf32>,
    %366 = vector.extract_strided_slice %77 {offsets = [64, 256], sizes = [8, 128], strides = [1, 1]} : vector<256x512xf32> to vector<8x128xf32>
    %c2_193 = arith.constant 2 : index
    %c0_194 = arith.constant 0 : index
    %c1024_195 = arith.constant 1024 : index
    %367 = vector.load %arg5[%c2_193, %c0_194, %c1024_195] : memref<4x8x4096xf32, #tpu.memory_space<vmem>>, vector<1x8x128xf32>
    %368 = vector.shape_cast %367 : vector<1x8x128xf32> to vector<8x128xf32>
    %369 = vector.shape_cast %366 : vector<8x128xf32> to vector<1x8x128xf32>
    tpu.vector_store %arg5[%c2_193, %c0_194, %c1024_195], %369 {strides = array<i32>} : memref<4x8x4096xf32, #tpu.memory_space<vmem>>, vector<1x8x128xf32>,
    %370 = vector.extract_strided_slice %77 {offsets = [72, 256], sizes = [8, 128], strides = [1, 1]} : vector<256x512xf32> to vector<8x128xf32>
    %c2_196 = arith.constant 2 : index
    %c0_197 = arith.constant 0 : index
    %c1152_198 = arith.constant 1152 : index
    %371 = vector.load %arg5[%c2_196, %c0_197, %c1152_198] : memref<4x8x4096xf32, #tpu.memory_space<vmem>>, vector<1x8x128xf32>
    %372 = vector.shape_cast %371 : vector<1x8x128xf32> to vector<8x128xf32>
    %373 = vector.shape_cast %370 : vector<8x128xf32> to vector<1x8x128xf32>
    tpu.vector_store %arg5[%c2_196, %c0_197, %c1152_198], %373 {strides = array<i32>} : memref<4x8x4096xf32, #tpu.memory_space<vmem>>, vector<1x8x128xf32>,
    %374 = vector.extract_strided_slice %77 {offsets = [80, 256], sizes = [8, 128], strides = [1, 1]} : vector<256x512xf32> to vector<8x128xf32>
    %c2_199 = arith.constant 2 : index
    %c0_200 = arith.constant 0 : index
    %c1280_201 = arith.constant 1280 : index
    %375 = vector.load %arg5[%c2_199, %c0_200, %c1280_201] : memref<4x8x4096xf32, #tpu.memory_space<vmem>>, vector<1x8x128xf32>
    %376 = vector.shape_cast %375 : vector<1x8x128xf32> to vector<8x128xf32>
    %377 = vector.shape_cast %374 : vector<8x128xf32> to vector<1x8x128xf32>
    tpu.vector_store %arg5[%c2_199, %c0_200, %c1280_201], %377 {strides = array<i32>} : memref<4x8x4096xf32, #tpu.memory_space<vmem>>, vector<1x8x128xf32>,
    %378 = vector.extract_strided_slice %77 {offsets = [88, 256], sizes = [8, 128], strides = [1, 1]} : vector<256x512xf32> to vector<8x128xf32>
    %c2_202 = arith.constant 2 : index
    %c0_203 = arith.constant 0 : index
    %c1408_204 = arith.constant 1408 : index
    %379 = vector.load %arg5[%c2_202, %c0_203, %c1408_204] : memref<4x8x4096xf32, #tpu.memory_space<vmem>>, vector<1x8x128xf32>
    %380 = vector.shape_cast %379 : vector<1x8x128xf32> to vector<8x128xf32>
    %381 = vector.shape_cast %378 : vector<8x128xf32> to vector<1x8x128xf32>
    tpu.vector_store %arg5[%c2_202, %c0_203, %c1408_204], %381 {strides = array<i32>} : memref<4x8x4096xf32, #tpu.memory_space<vmem>>, vector<1x8x128xf32>,
    %382 = vector.extract_strided_slice %77 {offsets = [96, 256], sizes = [8, 128], strides = [1, 1]} : vector<256x512xf32> to vector<8x128xf32>
    %c2_205 = arith.constant 2 : index
    %c0_206 = arith.constant 0 : index
    %c1536_207 = arith.constant 1536 : index
    %383 = vector.load %arg5[%c2_205, %c0_206, %c1536_207] : memref<4x8x4096xf32, #tpu.memory_space<vmem>>, vector<1x8x128xf32>
    %384 = vector.shape_cast %383 : vector<1x8x128xf32> to vector<8x128xf32>
    %385 = vector.shape_cast %382 : vector<8x128xf32> to vector<1x8x128xf32>
    tpu.vector_store %arg5[%c2_205, %c0_206, %c1536_207], %385 {strides = array<i32>} : memref<4x8x4096xf32, #tpu.memory_space<vmem>>, vector<1x8x128xf32>,
    %386 = vector.extract_strided_slice %77 {offsets = [104, 256], sizes = [8, 128], strides = [1, 1]} : vector<256x512xf32> to vector<8x128xf32>
    %c2_208 = arith.constant 2 : index
    %c0_209 = arith.constant 0 : index
    %c1664_210 = arith.constant 1664 : index
    %387 = vector.load %arg5[%c2_208, %c0_209, %c1664_210] : memref<4x8x4096xf32, #tpu.memory_space<vmem>>, vector<1x8x128xf32>
    %388 = vector.shape_cast %387 : vector<1x8x128xf32> to vector<8x128xf32>
    %389 = vector.shape_cast %386 : vector<8x128xf32> to vector<1x8x128xf32>
    tpu.vector_store %arg5[%c2_208, %c0_209, %c1664_210], %389 {strides = array<i32>} : memref<4x8x4096xf32, #tpu.memory_space<vmem>>, vector<1x8x128xf32>,
    %390 = vector.extract_strided_slice %77 {offsets = [112, 256], sizes = [8, 128], strides = [1, 1]} : vector<256x512xf32> to vector<8x128xf32>
    %c2_211 = arith.constant 2 : index
    %c0_212 = arith.constant 0 : index
    %c1792_213 = arith.constant 1792 : index
    %391 = vector.load %arg5[%c2_211, %c0_212, %c1792_213] : memref<4x8x4096xf32, #tpu.memory_space<vmem>>, vector<1x8x128xf32>
    %392 = vector.shape_cast %391 : vector<1x8x128xf32> to vector<8x128xf32>
    %393 = vector.shape_cast %390 : vector<8x128xf32> to vector<1x8x128xf32>
    tpu.vector_store %arg5[%c2_211, %c0_212, %c1792_213], %393 {strides = array<i32>} : memref<4x8x4096xf32, #tpu.memory_space<vmem>>, vector<1x8x128xf32>,
    %394 = vector.extract_strided_slice %77 {offsets = [120, 256], sizes = [8, 128], strides = [1, 1]} : vector<256x512xf32> to vector<8x128xf32>
    %c2_214 = arith.constant 2 : index
    %c0_215 = arith.constant 0 : index
    %c1920_216 = arith.constant 1920 : index
    %395 = vector.load %arg5[%c2_214, %c0_215, %c1920_216] : memref<4x8x4096xf32, #tpu.memory_space<vmem>>, vector<1x8x128xf32>
    %396 = vector.shape_cast %395 : vector<1x8x128xf32> to vector<8x128xf32>
    %397 = vector.shape_cast %394 : vector<8x128xf32> to vector<1x8x128xf32>
    tpu.vector_store %arg5[%c2_214, %c0_215, %c1920_216], %397 {strides = array<i32>} : memref<4x8x4096xf32, #tpu.memory_space<vmem>>, vector<1x8x128xf32>,
    %398 = vector.extract_strided_slice %77 {offsets = [128, 256], sizes = [8, 128], strides = [1, 1]} : vector<256x512xf32> to vector<8x128xf32>
    %c2_217 = arith.constant 2 : index
    %c0_218 = arith.constant 0 : index
    %c2048_219 = arith.constant 2048 : index
    %399 = vector.load %arg5[%c2_217, %c0_218, %c2048_219] : memref<4x8x4096xf32, #tpu.memory_space<vmem>>, vector<1x8x128xf32>
    %400 = vector.shape_cast %399 : vector<1x8x128xf32> to vector<8x128xf32>
    %401 = vector.shape_cast %398 : vector<8x128xf32> to vector<1x8x128xf32>
    tpu.vector_store %arg5[%c2_217, %c0_218, %c2048_219], %401 {strides = array<i32>} : memref<4x8x4096xf32, #tpu.memory_space<vmem>>, vector<1x8x128xf32>,
    %402 = vector.extract_strided_slice %77 {offsets = [136, 256], sizes = [8, 128], strides = [1, 1]} : vector<256x512xf32> to vector<8x128xf32>
    %c2_220 = arith.constant 2 : index
    %c0_221 = arith.constant 0 : index
    %c2176_222 = arith.constant 2176 : index
    %403 = vector.load %arg5[%c2_220, %c0_221, %c2176_222] : memref<4x8x4096xf32, #tpu.memory_space<vmem>>, vector<1x8x128xf32>
    %404 = vector.shape_cast %403 : vector<1x8x128xf32> to vector<8x128xf32>
    %405 = vector.shape_cast %402 : vector<8x128xf32> to vector<1x8x128xf32>
    tpu.vector_store %arg5[%c2_220, %c0_221, %c2176_222], %405 {strides = array<i32>} : memref<4x8x4096xf32, #tpu.memory_space<vmem>>, vector<1x8x128xf32>,
    %406 = vector.extract_strided_slice %77 {offsets = [144, 256], sizes = [8, 128], strides = [1, 1]} : vector<256x512xf32> to vector<8x128xf32>
    %c2_223 = arith.constant 2 : index
    %c0_224 = arith.constant 0 : index
    %c2304_225 = arith.constant 2304 : index
    %407 = vector.load %arg5[%c2_223, %c0_224, %c2304_225] : memref<4x8x4096xf32, #tpu.memory_space<vmem>>, vector<1x8x128xf32>
    %408 = vector.shape_cast %407 : vector<1x8x128xf32> to vector<8x128xf32>
    %409 = vector.shape_cast %406 : vector<8x128xf32> to vector<1x8x128xf32>
    tpu.vector_store %arg5[%c2_223, %c0_224, %c2304_225], %409 {strides = array<i32>} : memref<4x8x4096xf32, #tpu.memory_space<vmem>>, vector<1x8x128xf32>,
    %410 = vector.extract_strided_slice %77 {offsets = [152, 256], sizes = [8, 128], strides = [1, 1]} : vector<256x512xf32> to vector<8x128xf32>
    %c2_226 = arith.constant 2 : index
    %c0_227 = arith.constant 0 : index
    %c2432_228 = arith.constant 2432 : index
    %411 = vector.load %arg5[%c2_226, %c0_227, %c2432_228] : memref<4x8x4096xf32, #tpu.memory_space<vmem>>, vector<1x8x128xf32>
    %412 = vector.shape_cast %411 : vector<1x8x128xf32> to vector<8x128xf32>
    %413 = vector.shape_cast %410 : vector<8x128xf32> to vector<1x8x128xf32>
    tpu.vector_store %arg5[%c2_226, %c0_227, %c2432_228], %413 {strides = array<i32>} : memref<4x8x4096xf32, #tpu.memory_space<vmem>>, vector<1x8x128xf32>,
    %414 = vector.extract_strided_slice %77 {offsets = [160, 256], sizes = [8, 128], strides = [1, 1]} : vector<256x512xf32> to vector<8x128xf32>
    %c2_229 = arith.constant 2 : index
    %c0_230 = arith.constant 0 : index
    %c2560_231 = arith.constant 2560 : index
    %415 = vector.load %arg5[%c2_229, %c0_230, %c2560_231] : memref<4x8x4096xf32, #tpu.memory_space<vmem>>, vector<1x8x128xf32>
    %416 = vector.shape_cast %415 : vector<1x8x128xf32> to vector<8x128xf32>
    %417 = vector.shape_cast %414 : vector<8x128xf32> to vector<1x8x128xf32>
    tpu.vector_store %arg5[%c2_229, %c0_230, %c2560_231], %417 {strides = array<i32>} : memref<4x8x4096xf32, #tpu.memory_space<vmem>>, vector<1x8x128xf32>,
    %418 = vector.extract_strided_slice %77 {offsets = [168, 256], sizes = [8, 128], strides = [1, 1]} : vector<256x512xf32> to vector<8x128xf32>
    %c2_232 = arith.constant 2 : index
    %c0_233 = arith.constant 0 : index
    %c2688_234 = arith.constant 2688 : index
    %419 = vector.load %arg5[%c2_232, %c0_233, %c2688_234] : memref<4x8x4096xf32, #tpu.memory_space<vmem>>, vector<1x8x128xf32>
    %420 = vector.shape_cast %419 : vector<1x8x128xf32> to vector<8x128xf32>
    %421 = vector.shape_cast %418 : vector<8x128xf32> to vector<1x8x128xf32>
    tpu.vector_store %arg5[%c2_232, %c0_233, %c2688_234], %421 {strides = array<i32>} : memref<4x8x4096xf32, #tpu.memory_space<vmem>>, vector<1x8x128xf32>,
    %422 = vector.extract_strided_slice %77 {offsets = [176, 256], sizes = [8, 128], strides = [1, 1]} : vector<256x512xf32> to vector<8x128xf32>
    %c2_235 = arith.constant 2 : index
    %c0_236 = arith.constant 0 : index
    %c2816_237 = arith.constant 2816 : index
    %423 = vector.load %arg5[%c2_235, %c0_236, %c2816_237] : memref<4x8x4096xf32, #tpu.memory_space<vmem>>, vector<1x8x128xf32>
    %424 = vector.shape_cast %423 : vector<1x8x128xf32> to vector<8x128xf32>
    %425 = vector.shape_cast %422 : vector<8x128xf32> to vector<1x8x128xf32>
    tpu.vector_store %arg5[%c2_235, %c0_236, %c2816_237], %425 {strides = array<i32>} : memref<4x8x4096xf32, #tpu.memory_space<vmem>>, vector<1x8x128xf32>,
    %426 = vector.extract_strided_slice %77 {offsets = [184, 256], sizes = [8, 128], strides = [1, 1]} : vector<256x512xf32> to vector<8x128xf32>
    %c2_238 = arith.constant 2 : index
    %c0_239 = arith.constant 0 : index
    %c2944_240 = arith.constant 2944 : index
    %427 = vector.load %arg5[%c2_238, %c0_239, %c2944_240] : memref<4x8x4096xf32, #tpu.memory_space<vmem>>, vector<1x8x128xf32>
    %428 = vector.shape_cast %427 : vector<1x8x128xf32> to vector<8x128xf32>
    %429 = vector.shape_cast %426 : vector<8x128xf32> to vector<1x8x128xf32>
    tpu.vector_store %arg5[%c2_238, %c0_239, %c2944_240], %429 {strides = array<i32>} : memref<4x8x4096xf32, #tpu.memory_space<vmem>>, vector<1x8x128xf32>,
    %430 = vector.extract_strided_slice %77 {offsets = [192, 256], sizes = [8, 128], strides = [1, 1]} : vector<256x512xf32> to vector<8x128xf32>
    %c2_241 = arith.constant 2 : index
    %c0_242 = arith.constant 0 : index
    %c3072_243 = arith.constant 3072 : index
    %431 = vector.load %arg5[%c2_241, %c0_242, %c3072_243] : memref<4x8x4096xf32, #tpu.memory_space<vmem>>, vector<1x8x128xf32>
    %432 = vector.shape_cast %431 : vector<1x8x128xf32> to vector<8x128xf32>
    %433 = vector.shape_cast %430 : vector<8x128xf32> to vector<1x8x128xf32>
    tpu.vector_store %arg5[%c2_241, %c0_242, %c3072_243], %433 {strides = array<i32>} : memref<4x8x4096xf32, #tpu.memory_space<vmem>>, vector<1x8x128xf32>,
    %434 = vector.extract_strided_slice %77 {offsets = [200, 256], sizes = [8, 128], strides = [1, 1]} : vector<256x512xf32> to vector<8x128xf32>
    %c2_244 = arith.constant 2 : index
    %c0_245 = arith.constant 0 : index
    %c3200_246 = arith.constant 3200 : index
    %435 = vector.load %arg5[%c2_244, %c0_245, %c3200_246] : memref<4x8x4096xf32, #tpu.memory_space<vmem>>, vector<1x8x128xf32>
    %436 = vector.shape_cast %435 : vector<1x8x128xf32> to vector<8x128xf32>
    %437 = vector.shape_cast %434 : vector<8x128xf32> to vector<1x8x128xf32>
    tpu.vector_store %arg5[%c2_244, %c0_245, %c3200_246], %437 {strides = array<i32>} : memref<4x8x4096xf32, #tpu.memory_space<vmem>>, vector<1x8x128xf32>,
    %438 = vector.extract_strided_slice %77 {offsets = [208, 256], sizes = [8, 128], strides = [1, 1]} : vector<256x512xf32> to vector<8x128xf32>
    %c2_247 = arith.constant 2 : index
    %c0_248 = arith.constant 0 : index
    %c3328_249 = arith.constant 3328 : index
    %439 = vector.load %arg5[%c2_247, %c0_248, %c3328_249] : memref<4x8x4096xf32, #tpu.memory_space<vmem>>, vector<1x8x128xf32>
    %440 = vector.shape_cast %439 : vector<1x8x128xf32> to vector<8x128xf32>
    %441 = vector.shape_cast %438 : vector<8x128xf32> to vector<1x8x128xf32>
    tpu.vector_store %arg5[%c2_247, %c0_248, %c3328_249], %441 {strides = array<i32>} : memref<4x8x4096xf32, #tpu.memory_space<vmem>>, vector<1x8x128xf32>,
    %442 = vector.extract_strided_slice %77 {offsets = [216, 256], sizes = [8, 128], strides = [1, 1]} : vector<256x512xf32> to vector<8x128xf32>
    %c2_250 = arith.constant 2 : index
    %c0_251 = arith.constant 0 : index
    %c3456_252 = arith.constant 3456 : index
    %443 = vector.load %arg5[%c2_250, %c0_251, %c3456_252] : memref<4x8x4096xf32, #tpu.memory_space<vmem>>, vector<1x8x128xf32>
    %444 = vector.shape_cast %443 : vector<1x8x128xf32> to vector<8x128xf32>
    %445 = vector.shape_cast %442 : vector<8x128xf32> to vector<1x8x128xf32>
    tpu.vector_store %arg5[%c2_250, %c0_251, %c3456_252], %445 {strides = array<i32>} : memref<4x8x4096xf32, #tpu.memory_space<vmem>>, vector<1x8x128xf32>,
    %446 = vector.extract_strided_slice %77 {offsets = [224, 256], sizes = [8, 128], strides = [1, 1]} : vector<256x512xf32> to vector<8x128xf32>
    %c2_253 = arith.constant 2 : index
    %c0_254 = arith.constant 0 : index
    %c3584_255 = arith.constant 3584 : index
    %447 = vector.load %arg5[%c2_253, %c0_254, %c3584_255] : memref<4x8x4096xf32, #tpu.memory_space<vmem>>, vector<1x8x128xf32>
    %448 = vector.shape_cast %447 : vector<1x8x128xf32> to vector<8x128xf32>
    %449 = vector.shape_cast %446 : vector<8x128xf32> to vector<1x8x128xf32>
    tpu.vector_store %arg5[%c2_253, %c0_254, %c3584_255], %449 {strides = array<i32>} : memref<4x8x4096xf32, #tpu.memory_space<vmem>>, vector<1x8x128xf32>,
    %450 = vector.extract_strided_slice %77 {offsets = [232, 256], sizes = [8, 128], strides = [1, 1]} : vector<256x512xf32> to vector<8x128xf32>
    %c2_256 = arith.constant 2 : index
    %c0_257 = arith.constant 0 : index
    %c3712_258 = arith.constant 3712 : index
    %451 = vector.load %arg5[%c2_256, %c0_257, %c3712_258] : memref<4x8x4096xf32, #tpu.memory_space<vmem>>, vector<1x8x128xf32>
    %452 = vector.shape_cast %451 : vector<1x8x128xf32> to vector<8x128xf32>
    %453 = vector.shape_cast %450 : vector<8x128xf32> to vector<1x8x128xf32>
    tpu.vector_store %arg5[%c2_256, %c0_257, %c3712_258], %453 {strides = array<i32>} : memref<4x8x4096xf32, #tpu.memory_space<vmem>>, vector<1x8x128xf32>,
    %454 = vector.extract_strided_slice %77 {offsets = [240, 256], sizes = [8, 128], strides = [1, 1]} : vector<256x512xf32> to vector<8x128xf32>
    %c2_259 = arith.constant 2 : index
    %c0_260 = arith.constant 0 : index
    %c3840_261 = arith.constant 3840 : index
    %455 = vector.load %arg5[%c2_259, %c0_260, %c3840_261] : memref<4x8x4096xf32, #tpu.memory_space<vmem>>, vector<1x8x128xf32>
    %456 = vector.shape_cast %455 : vector<1x8x128xf32> to vector<8x128xf32>
    %457 = vector.shape_cast %454 : vector<8x128xf32> to vector<1x8x128xf32>
    tpu.vector_store %arg5[%c2_259, %c0_260, %c3840_261], %457 {strides = array<i32>} : memref<4x8x4096xf32, #tpu.memory_space<vmem>>, vector<1x8x128xf32>,
    %458 = vector.extract_strided_slice %77 {offsets = [248, 256], sizes = [8, 128], strides = [1, 1]} : vector<256x512xf32> to vector<8x128xf32>
    %c2_262 = arith.constant 2 : index
    %c0_263 = arith.constant 0 : index
    %c3968_264 = arith.constant 3968 : index
    %459 = vector.load %arg5[%c2_262, %c0_263, %c3968_264] : memref<4x8x4096xf32, #tpu.memory_space<vmem>>, vector<1x8x128xf32>
    %460 = vector.shape_cast %459 : vector<1x8x128xf32> to vector<8x128xf32>
    %461 = vector.shape_cast %458 : vector<8x128xf32> to vector<1x8x128xf32>
    tpu.vector_store %arg5[%c2_262, %c0_263, %c3968_264], %461 {strides = array<i32>} : memref<4x8x4096xf32, #tpu.memory_space<vmem>>, vector<1x8x128xf32>,
    %462 = vector.extract_strided_slice %77 {offsets = [0, 384], sizes = [8, 128], strides = [1, 1]} : vector<256x512xf32> to vector<8x128xf32>
    %c3 = arith.constant 3 : index
    %c0_265 = arith.constant 0 : index
    %c0_266 = arith.constant 0 : index
    %463 = vector.load %arg5[%c3, %c0_265, %c0_266] : memref<4x8x4096xf32, #tpu.memory_space<vmem>>, vector<1x8x128xf32>
    %464 = vector.shape_cast %463 : vector<1x8x128xf32> to vector<8x128xf32>
    %465 = vector.shape_cast %462 : vector<8x128xf32> to vector<1x8x128xf32>
    tpu.vector_store %arg5[%c3, %c0_265, %c0_266], %465 {strides = array<i32>} : memref<4x8x4096xf32, #tpu.memory_space<vmem>>, vector<1x8x128xf32>,
    %466 = vector.extract_strided_slice %77 {offsets = [8, 384], sizes = [8, 128], strides = [1, 1]} : vector<256x512xf32> to vector<8x128xf32>
    %c3_267 = arith.constant 3 : index
    %c0_268 = arith.constant 0 : index
    %c128_269 = arith.constant 128 : index
    %467 = vector.load %arg5[%c3_267, %c0_268, %c128_269] : memref<4x8x4096xf32, #tpu.memory_space<vmem>>, vector<1x8x128xf32>
    %468 = vector.shape_cast %467 : vector<1x8x128xf32> to vector<8x128xf32>
    %469 = vector.shape_cast %466 : vector<8x128xf32> to vector<1x8x128xf32>
    tpu.vector_store %arg5[%c3_267, %c0_268, %c128_269], %469 {strides = array<i32>} : memref<4x8x4096xf32, #tpu.memory_space<vmem>>, vector<1x8x128xf32>,
    %470 = vector.extract_strided_slice %77 {offsets = [16, 384], sizes = [8, 128], strides = [1, 1]} : vector<256x512xf32> to vector<8x128xf32>
    %c3_270 = arith.constant 3 : index
    %c0_271 = arith.constant 0 : index
    %c256_272 = arith.constant 256 : index
    %471 = vector.load %arg5[%c3_270, %c0_271, %c256_272] : memref<4x8x4096xf32, #tpu.memory_space<vmem>>, vector<1x8x128xf32>
    %472 = vector.shape_cast %471 : vector<1x8x128xf32> to vector<8x128xf32>
    %473 = vector.shape_cast %470 : vector<8x128xf32> to vector<1x8x128xf32>
    tpu.vector_store %arg5[%c3_270, %c0_271, %c256_272], %473 {strides = array<i32>} : memref<4x8x4096xf32, #tpu.memory_space<vmem>>, vector<1x8x128xf32>,
    %474 = vector.extract_strided_slice %77 {offsets = [24, 384], sizes = [8, 128], strides = [1, 1]} : vector<256x512xf32> to vector<8x128xf32>
    %c3_273 = arith.constant 3 : index
    %c0_274 = arith.constant 0 : index
    %c384_275 = arith.constant 384 : index
    %475 = vector.load %arg5[%c3_273, %c0_274, %c384_275] : memref<4x8x4096xf32, #tpu.memory_space<vmem>>, vector<1x8x128xf32>
    %476 = vector.shape_cast %475 : vector<1x8x128xf32> to vector<8x128xf32>
    %477 = vector.shape_cast %474 : vector<8x128xf32> to vector<1x8x128xf32>
    tpu.vector_store %arg5[%c3_273, %c0_274, %c384_275], %477 {strides = array<i32>} : memref<4x8x4096xf32, #tpu.memory_space<vmem>>, vector<1x8x128xf32>,
    %478 = vector.extract_strided_slice %77 {offsets = [32, 384], sizes = [8, 128], strides = [1, 1]} : vector<256x512xf32> to vector<8x128xf32>
    %c3_276 = arith.constant 3 : index
    %c0_277 = arith.constant 0 : index
    %c512_278 = arith.constant 512 : index
    %479 = vector.load %arg5[%c3_276, %c0_277, %c512_278] : memref<4x8x4096xf32, #tpu.memory_space<vmem>>, vector<1x8x128xf32>
    %480 = vector.shape_cast %479 : vector<1x8x128xf32> to vector<8x128xf32>
    %481 = vector.shape_cast %478 : vector<8x128xf32> to vector<1x8x128xf32>
    tpu.vector_store %arg5[%c3_276, %c0_277, %c512_278], %481 {strides = array<i32>} : memref<4x8x4096xf32, #tpu.memory_space<vmem>>, vector<1x8x128xf32>,
    %482 = vector.extract_strided_slice %77 {offsets = [40, 384], sizes = [8, 128], strides = [1, 1]} : vector<256x512xf32> to vector<8x128xf32>
    %c3_279 = arith.constant 3 : index
    %c0_280 = arith.constant 0 : index
    %c640_281 = arith.constant 640 : index
    %483 = vector.load %arg5[%c3_279, %c0_280, %c640_281] : memref<4x8x4096xf32, #tpu.memory_space<vmem>>, vector<1x8x128xf32>
    %484 = vector.shape_cast %483 : vector<1x8x128xf32> to vector<8x128xf32>
    %485 = vector.shape_cast %482 : vector<8x128xf32> to vector<1x8x128xf32>
    tpu.vector_store %arg5[%c3_279, %c0_280, %c640_281], %485 {strides = array<i32>} : memref<4x8x4096xf32, #tpu.memory_space<vmem>>, vector<1x8x128xf32>,
    %486 = vector.extract_strided_slice %77 {offsets = [48, 384], sizes = [8, 128], strides = [1, 1]} : vector<256x512xf32> to vector<8x128xf32>
    %c3_282 = arith.constant 3 : index
    %c0_283 = arith.constant 0 : index
    %c768_284 = arith.constant 768 : index
    %487 = vector.load %arg5[%c3_282, %c0_283, %c768_284] : memref<4x8x4096xf32, #tpu.memory_space<vmem>>, vector<1x8x128xf32>
    %488 = vector.shape_cast %487 : vector<1x8x128xf32> to vector<8x128xf32>
    %489 = vector.shape_cast %486 : vector<8x128xf32> to vector<1x8x128xf32>
    tpu.vector_store %arg5[%c3_282, %c0_283, %c768_284], %489 {strides = array<i32>} : memref<4x8x4096xf32, #tpu.memory_space<vmem>>, vector<1x8x128xf32>,
    %490 = vector.extract_strided_slice %77 {offsets = [56, 384], sizes = [8, 128], strides = [1, 1]} : vector<256x512xf32> to vector<8x128xf32>
    %c3_285 = arith.constant 3 : index
    %c0_286 = arith.constant 0 : index
    %c896_287 = arith.constant 896 : index
    %491 = vector.load %arg5[%c3_285, %c0_286, %c896_287] : memref<4x8x4096xf32, #tpu.memory_space<vmem>>, vector<1x8x128xf32>
    %492 = vector.shape_cast %491 : vector<1x8x128xf32> to vector<8x128xf32>
    %493 = vector.shape_cast %490 : vector<8x128xf32> to vector<1x8x128xf32>
    tpu.vector_store %arg5[%c3_285, %c0_286, %c896_287], %493 {strides = array<i32>} : memref<4x8x4096xf32, #tpu.memory_space<vmem>>, vector<1x8x128xf32>,
    %494 = vector.extract_strided_slice %77 {offsets = [64, 384], sizes = [8, 128], strides = [1, 1]} : vector<256x512xf32> to vector<8x128xf32>
    %c3_288 = arith.constant 3 : index
    %c0_289 = arith.constant 0 : index
    %c1024_290 = arith.constant 1024 : index
    %495 = vector.load %arg5[%c3_288, %c0_289, %c1024_290] : memref<4x8x4096xf32, #tpu.memory_space<vmem>>, vector<1x8x128xf32>
    %496 = vector.shape_cast %495 : vector<1x8x128xf32> to vector<8x128xf32>
    %497 = vector.shape_cast %494 : vector<8x128xf32> to vector<1x8x128xf32>
    tpu.vector_store %arg5[%c3_288, %c0_289, %c1024_290], %497 {strides = array<i32>} : memref<4x8x4096xf32, #tpu.memory_space<vmem>>, vector<1x8x128xf32>,
    %498 = vector.extract_strided_slice %77 {offsets = [72, 384], sizes = [8, 128], strides = [1, 1]} : vector<256x512xf32> to vector<8x128xf32>
    %c3_291 = arith.constant 3 : index
    %c0_292 = arith.constant 0 : index
    %c1152_293 = arith.constant 1152 : index
    %499 = vector.load %arg5[%c3_291, %c0_292, %c1152_293] : memref<4x8x4096xf32, #tpu.memory_space<vmem>>, vector<1x8x128xf32>
    %500 = vector.shape_cast %499 : vector<1x8x128xf32> to vector<8x128xf32>
    %501 = vector.shape_cast %498 : vector<8x128xf32> to vector<1x8x128xf32>
    tpu.vector_store %arg5[%c3_291, %c0_292, %c1152_293], %501 {strides = array<i32>} : memref<4x8x4096xf32, #tpu.memory_space<vmem>>, vector<1x8x128xf32>,
    %502 = vector.extract_strided_slice %77 {offsets = [80, 384], sizes = [8, 128], strides = [1, 1]} : vector<256x512xf32> to vector<8x128xf32>
    %c3_294 = arith.constant 3 : index
    %c0_295 = arith.constant 0 : index
    %c1280_296 = arith.constant 1280 : index
    %503 = vector.load %arg5[%c3_294, %c0_295, %c1280_296] : memref<4x8x4096xf32, #tpu.memory_space<vmem>>, vector<1x8x128xf32>
    %504 = vector.shape_cast %503 : vector<1x8x128xf32> to vector<8x128xf32>
    %505 = vector.shape_cast %502 : vector<8x128xf32> to vector<1x8x128xf32>
    tpu.vector_store %arg5[%c3_294, %c0_295, %c1280_296], %505 {strides = array<i32>} : memref<4x8x4096xf32, #tpu.memory_space<vmem>>, vector<1x8x128xf32>,
    %506 = vector.extract_strided_slice %77 {offsets = [88, 384], sizes = [8, 128], strides = [1, 1]} : vector<256x512xf32> to vector<8x128xf32>
    %c3_297 = arith.constant 3 : index
    %c0_298 = arith.constant 0 : index
    %c1408_299 = arith.constant 1408 : index
    %507 = vector.load %arg5[%c3_297, %c0_298, %c1408_299] : memref<4x8x4096xf32, #tpu.memory_space<vmem>>, vector<1x8x128xf32>
    %508 = vector.shape_cast %507 : vector<1x8x128xf32> to vector<8x128xf32>
    %509 = vector.shape_cast %506 : vector<8x128xf32> to vector<1x8x128xf32>
    tpu.vector_store %arg5[%c3_297, %c0_298, %c1408_299], %509 {strides = array<i32>} : memref<4x8x4096xf32, #tpu.memory_space<vmem>>, vector<1x8x128xf32>,
    %510 = vector.extract_strided_slice %77 {offsets = [96, 384], sizes = [8, 128], strides = [1, 1]} : vector<256x512xf32> to vector<8x128xf32>
    %c3_300 = arith.constant 3 : index
    %c0_301 = arith.constant 0 : index
    %c1536_302 = arith.constant 1536 : index
    %511 = vector.load %arg5[%c3_300, %c0_301, %c1536_302] : memref<4x8x4096xf32, #tpu.memory_space<vmem>>, vector<1x8x128xf32>
    %512 = vector.shape_cast %511 : vector<1x8x128xf32> to vector<8x128xf32>
    %513 = vector.shape_cast %510 : vector<8x128xf32> to vector<1x8x128xf32>
    tpu.vector_store %arg5[%c3_300, %c0_301, %c1536_302], %513 {strides = array<i32>} : memref<4x8x4096xf32, #tpu.memory_space<vmem>>, vector<1x8x128xf32>,
    %514 = vector.extract_strided_slice %77 {offsets = [104, 384], sizes = [8, 128], strides = [1, 1]} : vector<256x512xf32> to vector<8x128xf32>
    %c3_303 = arith.constant 3 : index
    %c0_304 = arith.constant 0 : index
    %c1664_305 = arith.constant 1664 : index
    %515 = vector.load %arg5[%c3_303, %c0_304, %c1664_305] : memref<4x8x4096xf32, #tpu.memory_space<vmem>>, vector<1x8x128xf32>
    %516 = vector.shape_cast %515 : vector<1x8x128xf32> to vector<8x128xf32>
    %517 = vector.shape_cast %514 : vector<8x128xf32> to vector<1x8x128xf32>
    tpu.vector_store %arg5[%c3_303, %c0_304, %c1664_305], %517 {strides = array<i32>} : memref<4x8x4096xf32, #tpu.memory_space<vmem>>, vector<1x8x128xf32>,
    %518 = vector.extract_strided_slice %77 {offsets = [112, 384], sizes = [8, 128], strides = [1, 1]} : vector<256x512xf32> to vector<8x128xf32>
    %c3_306 = arith.constant 3 : index
    %c0_307 = arith.constant 0 : index
    %c1792_308 = arith.constant 1792 : index
    %519 = vector.load %arg5[%c3_306, %c0_307, %c1792_308] : memref<4x8x4096xf32, #tpu.memory_space<vmem>>, vector<1x8x128xf32>
    %520 = vector.shape_cast %519 : vector<1x8x128xf32> to vector<8x128xf32>
    %521 = vector.shape_cast %518 : vector<8x128xf32> to vector<1x8x128xf32>
    tpu.vector_store %arg5[%c3_306, %c0_307, %c1792_308], %521 {strides = array<i32>} : memref<4x8x4096xf32, #tpu.memory_space<vmem>>, vector<1x8x128xf32>,
    %522 = vector.extract_strided_slice %77 {offsets = [120, 384], sizes = [8, 128], strides = [1, 1]} : vector<256x512xf32> to vector<8x128xf32>
    %c3_309 = arith.constant 3 : index
    %c0_310 = arith.constant 0 : index
    %c1920_311 = arith.constant 1920 : index
    %523 = vector.load %arg5[%c3_309, %c0_310, %c1920_311] : memref<4x8x4096xf32, #tpu.memory_space<vmem>>, vector<1x8x128xf32>
    %524 = vector.shape_cast %523 : vector<1x8x128xf32> to vector<8x128xf32>
    %525 = vector.shape_cast %522 : vector<8x128xf32> to vector<1x8x128xf32>
    tpu.vector_store %arg5[%c3_309, %c0_310, %c1920_311], %525 {strides = array<i32>} : memref<4x8x4096xf32, #tpu.memory_space<vmem>>, vector<1x8x128xf32>,
    %526 = vector.extract_strided_slice %77 {offsets = [128, 384], sizes = [8, 128], strides = [1, 1]} : vector<256x512xf32> to vector<8x128xf32>
    %c3_312 = arith.constant 3 : index
    %c0_313 = arith.constant 0 : index
    %c2048_314 = arith.constant 2048 : index
    %527 = vector.load %arg5[%c3_312, %c0_313, %c2048_314] : memref<4x8x4096xf32, #tpu.memory_space<vmem>>, vector<1x8x128xf32>
    %528 = vector.shape_cast %527 : vector<1x8x128xf32> to vector<8x128xf32>
    %529 = vector.shape_cast %526 : vector<8x128xf32> to vector<1x8x128xf32>
    tpu.vector_store %arg5[%c3_312, %c0_313, %c2048_314], %529 {strides = array<i32>} : memref<4x8x4096xf32, #tpu.memory_space<vmem>>, vector<1x8x128xf32>,
    %530 = vector.extract_strided_slice %77 {offsets = [136, 384], sizes = [8, 128], strides = [1, 1]} : vector<256x512xf32> to vector<8x128xf32>
    %c3_315 = arith.constant 3 : index
    %c0_316 = arith.constant 0 : index
    %c2176_317 = arith.constant 2176 : index
    %531 = vector.load %arg5[%c3_315, %c0_316, %c2176_317] : memref<4x8x4096xf32, #tpu.memory_space<vmem>>, vector<1x8x128xf32>
    %532 = vector.shape_cast %531 : vector<1x8x128xf32> to vector<8x128xf32>
    %533 = vector.shape_cast %530 : vector<8x128xf32> to vector<1x8x128xf32>
    tpu.vector_store %arg5[%c3_315, %c0_316, %c2176_317], %533 {strides = array<i32>} : memref<4x8x4096xf32, #tpu.memory_space<vmem>>, vector<1x8x128xf32>,
    %534 = vector.extract_strided_slice %77 {offsets = [144, 384], sizes = [8, 128], strides = [1, 1]} : vector<256x512xf32> to vector<8x128xf32>
    %c3_318 = arith.constant 3 : index
    %c0_319 = arith.constant 0 : index
    %c2304_320 = arith.constant 2304 : index
    %535 = vector.load %arg5[%c3_318, %c0_319, %c2304_320] : memref<4x8x4096xf32, #tpu.memory_space<vmem>>, vector<1x8x128xf32>
    %536 = vector.shape_cast %535 : vector<1x8x128xf32> to vector<8x128xf32>
    %537 = vector.shape_cast %534 : vector<8x128xf32> to vector<1x8x128xf32>
    tpu.vector_store %arg5[%c3_318, %c0_319, %c2304_320], %537 {strides = array<i32>} : memref<4x8x4096xf32, #tpu.memory_space<vmem>>, vector<1x8x128xf32>,
    %538 = vector.extract_strided_slice %77 {offsets = [152, 384], sizes = [8, 128], strides = [1, 1]} : vector<256x512xf32> to vector<8x128xf32>
    %c3_321 = arith.constant 3 : index
    %c0_322 = arith.constant 0 : index
    %c2432_323 = arith.constant 2432 : index
    %539 = vector.load %arg5[%c3_321, %c0_322, %c2432_323] : memref<4x8x4096xf32, #tpu.memory_space<vmem>>, vector<1x8x128xf32>
    %540 = vector.shape_cast %539 : vector<1x8x128xf32> to vector<8x128xf32>
    %541 = vector.shape_cast %538 : vector<8x128xf32> to vector<1x8x128xf32>
    tpu.vector_store %arg5[%c3_321, %c0_322, %c2432_323], %541 {strides = array<i32>} : memref<4x8x4096xf32, #tpu.memory_space<vmem>>, vector<1x8x128xf32>,
    %542 = vector.extract_strided_slice %77 {offsets = [160, 384], sizes = [8, 128], strides = [1, 1]} : vector<256x512xf32> to vector<8x128xf32>
    %c3_324 = arith.constant 3 : index
    %c0_325 = arith.constant 0 : index
    %c2560_326 = arith.constant 2560 : index
    %543 = vector.load %arg5[%c3_324, %c0_325, %c2560_326] : memref<4x8x4096xf32, #tpu.memory_space<vmem>>, vector<1x8x128xf32>
    %544 = vector.shape_cast %543 : vector<1x8x128xf32> to vector<8x128xf32>
    %545 = vector.shape_cast %542 : vector<8x128xf32> to vector<1x8x128xf32>
    tpu.vector_store %arg5[%c3_324, %c0_325, %c2560_326], %545 {strides = array<i32>} : memref<4x8x4096xf32, #tpu.memory_space<vmem>>, vector<1x8x128xf32>,
    %546 = vector.extract_strided_slice %77 {offsets = [168, 384], sizes = [8, 128], strides = [1, 1]} : vector<256x512xf32> to vector<8x128xf32>
    %c3_327 = arith.constant 3 : index
    %c0_328 = arith.constant 0 : index
    %c2688_329 = arith.constant 2688 : index
    %547 = vector.load %arg5[%c3_327, %c0_328, %c2688_329] : memref<4x8x4096xf32, #tpu.memory_space<vmem>>, vector<1x8x128xf32>
    %548 = vector.shape_cast %547 : vector<1x8x128xf32> to vector<8x128xf32>
    %549 = vector.shape_cast %546 : vector<8x128xf32> to vector<1x8x128xf32>
    tpu.vector_store %arg5[%c3_327, %c0_328, %c2688_329], %549 {strides = array<i32>} : memref<4x8x4096xf32, #tpu.memory_space<vmem>>, vector<1x8x128xf32>,
    %550 = vector.extract_strided_slice %77 {offsets = [176, 384], sizes = [8, 128], strides = [1, 1]} : vector<256x512xf32> to vector<8x128xf32>
    %c3_330 = arith.constant 3 : index
    %c0_331 = arith.constant 0 : index
    %c2816_332 = arith.constant 2816 : index
    %551 = vector.load %arg5[%c3_330, %c0_331, %c2816_332] : memref<4x8x4096xf32, #tpu.memory_space<vmem>>, vector<1x8x128xf32>
    %552 = vector.shape_cast %551 : vector<1x8x128xf32> to vector<8x128xf32>
    %553 = vector.shape_cast %550 : vector<8x128xf32> to vector<1x8x128xf32>
    tpu.vector_store %arg5[%c3_330, %c0_331, %c2816_332], %553 {strides = array<i32>} : memref<4x8x4096xf32, #tpu.memory_space<vmem>>, vector<1x8x128xf32>,
    %554 = vector.extract_strided_slice %77 {offsets = [184, 384], sizes = [8, 128], strides = [1, 1]} : vector<256x512xf32> to vector<8x128xf32>
    %c3_333 = arith.constant 3 : index
    %c0_334 = arith.constant 0 : index
    %c2944_335 = arith.constant 2944 : index
    %555 = vector.load %arg5[%c3_333, %c0_334, %c2944_335] : memref<4x8x4096xf32, #tpu.memory_space<vmem>>, vector<1x8x128xf32>
    %556 = vector.shape_cast %555 : vector<1x8x128xf32> to vector<8x128xf32>
    %557 = vector.shape_cast %554 : vector<8x128xf32> to vector<1x8x128xf32>
    tpu.vector_store %arg5[%c3_333, %c0_334, %c2944_335], %557 {strides = array<i32>} : memref<4x8x4096xf32, #tpu.memory_space<vmem>>, vector<1x8x128xf32>,
    %558 = vector.extract_strided_slice %77 {offsets = [192, 384], sizes = [8, 128], strides = [1, 1]} : vector<256x512xf32> to vector<8x128xf32>
    %c3_336 = arith.constant 3 : index
    %c0_337 = arith.constant 0 : index
    %c3072_338 = arith.constant 3072 : index
    %559 = vector.load %arg5[%c3_336, %c0_337, %c3072_338] : memref<4x8x4096xf32, #tpu.memory_space<vmem>>, vector<1x8x128xf32>
    %560 = vector.shape_cast %559 : vector<1x8x128xf32> to vector<8x128xf32>
    %561 = vector.shape_cast %558 : vector<8x128xf32> to vector<1x8x128xf32>
    tpu.vector_store %arg5[%c3_336, %c0_337, %c3072_338], %561 {strides = array<i32>} : memref<4x8x4096xf32, #tpu.memory_space<vmem>>, vector<1x8x128xf32>,
    %562 = vector.extract_strided_slice %77 {offsets = [200, 384], sizes = [8, 128], strides = [1, 1]} : vector<256x512xf32> to vector<8x128xf32>
    %c3_339 = arith.constant 3 : index
    %c0_340 = arith.constant 0 : index
    %c3200_341 = arith.constant 3200 : index
    %563 = vector.load %arg5[%c3_339, %c0_340, %c3200_341] : memref<4x8x4096xf32, #tpu.memory_space<vmem>>, vector<1x8x128xf32>
    %564 = vector.shape_cast %563 : vector<1x8x128xf32> to vector<8x128xf32>
    %565 = vector.shape_cast %562 : vector<8x128xf32> to vector<1x8x128xf32>
    tpu.vector_store %arg5[%c3_339, %c0_340, %c3200_341], %565 {strides = array<i32>} : memref<4x8x4096xf32, #tpu.memory_space<vmem>>, vector<1x8x128xf32>,
    %566 = vector.extract_strided_slice %77 {offsets = [208, 384], sizes = [8, 128], strides = [1, 1]} : vector<256x512xf32> to vector<8x128xf32>
    %c3_342 = arith.constant 3 : index
    %c0_343 = arith.constant 0 : index
    %c3328_344 = arith.constant 3328 : index
    %567 = vector.load %arg5[%c3_342, %c0_343, %c3328_344] : memref<4x8x4096xf32, #tpu.memory_space<vmem>>, vector<1x8x128xf32>
    %568 = vector.shape_cast %567 : vector<1x8x128xf32> to vector<8x128xf32>
    %569 = vector.shape_cast %566 : vector<8x128xf32> to vector<1x8x128xf32>
    tpu.vector_store %arg5[%c3_342, %c0_343, %c3328_344], %569 {strides = array<i32>} : memref<4x8x4096xf32, #tpu.memory_space<vmem>>, vector<1x8x128xf32>,
    %570 = vector.extract_strided_slice %77 {offsets = [216, 384], sizes = [8, 128], strides = [1, 1]} : vector<256x512xf32> to vector<8x128xf32>
    %c3_345 = arith.constant 3 : index
    %c0_346 = arith.constant 0 : index
    %c3456_347 = arith.constant 3456 : index
    %571 = vector.load %arg5[%c3_345, %c0_346, %c3456_347] : memref<4x8x4096xf32, #tpu.memory_space<vmem>>, vector<1x8x128xf32>
    %572 = vector.shape_cast %571 : vector<1x8x128xf32> to vector<8x128xf32>
    %573 = vector.shape_cast %570 : vector<8x128xf32> to vector<1x8x128xf32>
    tpu.vector_store %arg5[%c3_345, %c0_346, %c3456_347], %573 {strides = array<i32>} : memref<4x8x4096xf32, #tpu.memory_space<vmem>>, vector<1x8x128xf32>,
    %574 = vector.extract_strided_slice %77 {offsets = [224, 384], sizes = [8, 128], strides = [1, 1]} : vector<256x512xf32> to vector<8x128xf32>
    %c3_348 = arith.constant 3 : index
    %c0_349 = arith.constant 0 : index
    %c3584_350 = arith.constant 3584 : index
    %575 = vector.load %arg5[%c3_348, %c0_349, %c3584_350] : memref<4x8x4096xf32, #tpu.memory_space<vmem>>, vector<1x8x128xf32>
    %576 = vector.shape_cast %575 : vector<1x8x128xf32> to vector<8x128xf32>
    %577 = vector.shape_cast %574 : vector<8x128xf32> to vector<1x8x128xf32>
    tpu.vector_store %arg5[%c3_348, %c0_349, %c3584_350], %577 {strides = array<i32>} : memref<4x8x4096xf32, #tpu.memory_space<vmem>>, vector<1x8x128xf32>,
    %578 = vector.extract_strided_slice %77 {offsets = [232, 384], sizes = [8, 128], strides = [1, 1]} : vector<256x512xf32> to vector<8x128xf32>
    %c3_351 = arith.constant 3 : index
    %c0_352 = arith.constant 0 : index
    %c3712_353 = arith.constant 3712 : index
    %579 = vector.load %arg5[%c3_351, %c0_352, %c3712_353] : memref<4x8x4096xf32, #tpu.memory_space<vmem>>, vector<1x8x128xf32>
    %580 = vector.shape_cast %579 : vector<1x8x128xf32> to vector<8x128xf32>
    %581 = vector.shape_cast %578 : vector<8x128xf32> to vector<1x8x128xf32>
    tpu.vector_store %arg5[%c3_351, %c0_352, %c3712_353], %581 {strides = array<i32>} : memref<4x8x4096xf32, #tpu.memory_space<vmem>>, vector<1x8x128xf32>,
    %582 = vector.extract_strided_slice %77 {offsets = [240, 384], sizes = [8, 128], strides = [1, 1]} : vector<256x512xf32> to vector<8x128xf32>
    %c3_354 = arith.constant 3 : index
    %c0_355 = arith.constant 0 : index
    %c3840_356 = arith.constant 3840 : index
    %583 = vector.load %arg5[%c3_354, %c0_355, %c3840_356] : memref<4x8x4096xf32, #tpu.memory_space<vmem>>, vector<1x8x128xf32>
    %584 = vector.shape_cast %583 : vector<1x8x128xf32> to vector<8x128xf32>
    %585 = vector.shape_cast %582 : vector<8x128xf32> to vector<1x8x128xf32>
    tpu.vector_store %arg5[%c3_354, %c0_355, %c3840_356], %585 {strides = array<i32>} : memref<4x8x4096xf32, #tpu.memory_space<vmem>>, vector<1x8x128xf32>,
    %586 = vector.extract_strided_slice %77 {offsets = [248, 384], sizes = [8, 128], strides = [1, 1]} : vector<256x512xf32> to vector<8x128xf32>
    %c3_357 = arith.constant 3 : index
    %c0_358 = arith.constant 0 : index
    %c3968_359 = arith.constant 3968 : index
    %587 = vector.load %arg5[%c3_357, %c0_358, %c3968_359] : memref<4x8x4096xf32, #tpu.memory_space<vmem>>, vector<1x8x128xf32>
    %588 = vector.shape_cast %587 : vector<1x8x128xf32> to vector<8x128xf32>
    %589 = vector.shape_cast %586 : vector<8x128xf32> to vector<1x8x128xf32>
    tpu.vector_store %arg5[%c3_357, %c0_358, %c3968_359], %589 {strides = array<i32>} : memref<4x8x4096xf32, #tpu.memory_space<vmem>>, vector<1x8x128xf32>,
    return
  }
  func.func @transform_0(%arg0: i32, %arg1: i32) -> (i32, i32) {
    %c0_i32 = arith.constant 0 : i32
    return %arg0, %arg1 : i32, i32
  }
  func.func @transform_1(%arg0: i32, %arg1: i32) -> (i32, i32) {
    %c1_i32 = arith.constant 1 : i32
    %0 = arith.addi %arg1, %c1_i32 : i32
    %c32_i32 = arith.constant 32 : i32
    %1 = arith.muli %0, %c32_i32 : i32
    %c0_i32 = arith.constant 0 : i32
    return %arg0, %1 : i32, i32
  }
  func.func @transform_2(%arg0: i32, %arg1: i32) -> (i32, i32, i32) {
    %c0_i32 = arith.constant 0 : i32
    %c0_i32_0 = arith.constant 0 : i32
    %c0_i32_1 = arith.constant 0 : i32
    %c0_i32_2 = arith.constant 0 : i32
    return %c0_i32, %c0_i32_0, %c0_i32_1 : i32, i32, i32
  }
  func.func @transform_3(%arg0: i32, %arg1: i32) -> (i32, i32, i32) {
    %c0_i32 = arith.constant 0 : i32
    %c0_i32_0 = arith.constant 0 : i32
    return %c0_i32, %arg0, %arg1 : i32, i32, i32
  }
}

module attributes {stable_mosaic.version = 11 : i64} {
  func.func @_fir_band_kernel(%arg0: i32, %arg1: i32, %arg2: memref<8x4096xf32, #tpu.memory_space<vmem>>, %arg3: memref<8x128xf32, #tpu.memory_space<vmem>>, %arg4: memref<2x128x512xf32, #tpu.memory_space<vmem>>, %arg5: memref<4x8x4096xf32, #tpu.memory_space<vmem>>) attributes {dimension_semantics = [#tpu.dimension_semantics<parallel>, #tpu.dimension_semantics<parallel>], iteration_bounds = array<i64: 1, 2>, scalar_prefetch = 0 : i64, scratch_operands = 0 : i64, tpu.core_type = #tpu.core_type<tc>, window_params = [{transform_indices = @transform_0, window_bounds = array<i64: 8, 4096>}, {transform_indices = @transform_1, window_bounds = array<i64: 8, 128>}, {pipeline_mode = #tpu.pipeline_mode<synchronous>, transform_indices = @transform_2, window_bounds = array<i64: 2, 128, 512>}, {transform_indices = @transform_3, window_bounds = array<i64: 4, 8, 4096>}]} {
    %c0 = arith.constant 0 : index
    %c0_0 = arith.constant 0 : index
    %0 = vector.load %arg2[%c0, %c0_0] : memref<8x4096xf32, #tpu.memory_space<vmem>>, vector<8x4096xf32>
    %c0_1 = arith.constant 0 : index
    %c0_2 = arith.constant 0 : index
    %1 = vector.load %arg3[%c0_1, %c0_2] : memref<8x128xf32, #tpu.memory_space<vmem>>, vector<8x128xf32>
    %2 = vector.extract_strided_slice %0 {offsets = [0, 0], sizes = [8, 128], strides = [1, 1]} : vector<8x4096xf32> to vector<8x128xf32>
    %3 = vector.extract_strided_slice %0 {offsets = [0, 128], sizes = [8, 128], strides = [1, 1]} : vector<8x4096xf32> to vector<8x128xf32>
    %4 = vector.extract_strided_slice %0 {offsets = [0, 256], sizes = [8, 128], strides = [1, 1]} : vector<8x4096xf32> to vector<8x128xf32>
    %5 = vector.extract_strided_slice %0 {offsets = [0, 384], sizes = [8, 128], strides = [1, 1]} : vector<8x4096xf32> to vector<8x128xf32>
    %6 = vector.extract_strided_slice %0 {offsets = [0, 512], sizes = [8, 128], strides = [1, 1]} : vector<8x4096xf32> to vector<8x128xf32>
    %7 = vector.extract_strided_slice %0 {offsets = [0, 640], sizes = [8, 128], strides = [1, 1]} : vector<8x4096xf32> to vector<8x128xf32>
    %8 = vector.extract_strided_slice %0 {offsets = [0, 768], sizes = [8, 128], strides = [1, 1]} : vector<8x4096xf32> to vector<8x128xf32>
    %9 = vector.extract_strided_slice %0 {offsets = [0, 896], sizes = [8, 128], strides = [1, 1]} : vector<8x4096xf32> to vector<8x128xf32>
    %10 = vector.extract_strided_slice %0 {offsets = [0, 1024], sizes = [8, 128], strides = [1, 1]} : vector<8x4096xf32> to vector<8x128xf32>
    %11 = vector.extract_strided_slice %0 {offsets = [0, 1152], sizes = [8, 128], strides = [1, 1]} : vector<8x4096xf32> to vector<8x128xf32>
    %12 = vector.extract_strided_slice %0 {offsets = [0, 1280], sizes = [8, 128], strides = [1, 1]} : vector<8x4096xf32> to vector<8x128xf32>
    %13 = vector.extract_strided_slice %0 {offsets = [0, 1408], sizes = [8, 128], strides = [1, 1]} : vector<8x4096xf32> to vector<8x128xf32>
    %14 = vector.extract_strided_slice %0 {offsets = [0, 1536], sizes = [8, 128], strides = [1, 1]} : vector<8x4096xf32> to vector<8x128xf32>
    %15 = vector.extract_strided_slice %0 {offsets = [0, 1664], sizes = [8, 128], strides = [1, 1]} : vector<8x4096xf32> to vector<8x128xf32>
    %16 = vector.extract_strided_slice %0 {offsets = [0, 1792], sizes = [8, 128], strides = [1, 1]} : vector<8x4096xf32> to vector<8x128xf32>
    %17 = vector.extract_strided_slice %0 {offsets = [0, 1920], sizes = [8, 128], strides = [1, 1]} : vector<8x4096xf32> to vector<8x128xf32>
    %18 = vector.extract_strided_slice %0 {offsets = [0, 2048], sizes = [8, 128], strides = [1, 1]} : vector<8x4096xf32> to vector<8x128xf32>
    %19 = vector.extract_strided_slice %0 {offsets = [0, 2176], sizes = [8, 128], strides = [1, 1]} : vector<8x4096xf32> to vector<8x128xf32>
    %20 = vector.extract_strided_slice %0 {offsets = [0, 2304], sizes = [8, 128], strides = [1, 1]} : vector<8x4096xf32> to vector<8x128xf32>
    %21 = vector.extract_strided_slice %0 {offsets = [0, 2432], sizes = [8, 128], strides = [1, 1]} : vector<8x4096xf32> to vector<8x128xf32>
    %22 = vector.extract_strided_slice %0 {offsets = [0, 2560], sizes = [8, 128], strides = [1, 1]} : vector<8x4096xf32> to vector<8x128xf32>
    %23 = vector.extract_strided_slice %0 {offsets = [0, 2688], sizes = [8, 128], strides = [1, 1]} : vector<8x4096xf32> to vector<8x128xf32>
    %24 = vector.extract_strided_slice %0 {offsets = [0, 2816], sizes = [8, 128], strides = [1, 1]} : vector<8x4096xf32> to vector<8x128xf32>
    %25 = vector.extract_strided_slice %0 {offsets = [0, 2944], sizes = [8, 128], strides = [1, 1]} : vector<8x4096xf32> to vector<8x128xf32>
    %26 = vector.extract_strided_slice %0 {offsets = [0, 3072], sizes = [8, 128], strides = [1, 1]} : vector<8x4096xf32> to vector<8x128xf32>
    %27 = vector.extract_strided_slice %0 {offsets = [0, 3200], sizes = [8, 128], strides = [1, 1]} : vector<8x4096xf32> to vector<8x128xf32>
    %28 = vector.extract_strided_slice %0 {offsets = [0, 3328], sizes = [8, 128], strides = [1, 1]} : vector<8x4096xf32> to vector<8x128xf32>
    %29 = vector.extract_strided_slice %0 {offsets = [0, 3456], sizes = [8, 128], strides = [1, 1]} : vector<8x4096xf32> to vector<8x128xf32>
    %30 = vector.extract_strided_slice %0 {offsets = [0, 3584], sizes = [8, 128], strides = [1, 1]} : vector<8x4096xf32> to vector<8x128xf32>
    %31 = vector.extract_strided_slice %0 {offsets = [0, 3712], sizes = [8, 128], strides = [1, 1]} : vector<8x4096xf32> to vector<8x128xf32>
    %32 = vector.extract_strided_slice %0 {offsets = [0, 3840], sizes = [8, 128], strides = [1, 1]} : vector<8x4096xf32> to vector<8x128xf32>
    %33 = vector.extract_strided_slice %0 {offsets = [0, 3968], sizes = [8, 128], strides = [1, 1]} : vector<8x4096xf32> to vector<8x128xf32>
    %34 = tpu.concatenate %2, %3, %4, %5, %6, %7, %8, %9, %10, %11, %12, %13, %14, %15, %16, %17 in 0 : vector<8x128xf32>, vector<8x128xf32>, vector<8x128xf32>, vector<8x128xf32>, vector<8x128xf32>, vector<8x128xf32>, vector<8x128xf32>, vector<8x128xf32>, vector<8x128xf32>, vector<8x128xf32>, vector<8x128xf32>, vector<8x128xf32>, vector<8x128xf32>, vector<8x128xf32>, vector<8x128xf32>, vector<8x128xf32> -> vector<128x128xf32>
    %35 = tpu.concatenate %18, %19, %20, %21, %22, %23, %24, %25, %26, %27, %28, %29, %30, %31, %32, %33 in 0 : vector<8x128xf32>, vector<8x128xf32>, vector<8x128xf32>, vector<8x128xf32>, vector<8x128xf32>, vector<8x128xf32>, vector<8x128xf32>, vector<8x128xf32>, vector<8x128xf32>, vector<8x128xf32>, vector<8x128xf32>, vector<8x128xf32>, vector<8x128xf32>, vector<8x128xf32>, vector<8x128xf32>, vector<8x128xf32> -> vector<128x128xf32>
    %36 = tpu.concatenate %34, %35 in 0 : vector<128x128xf32>, vector<128x128xf32> -> vector<256x128xf32>
    %37 = vector.extract_strided_slice %0 {offsets = [0, 128], sizes = [8, 128], strides = [1, 1]} : vector<8x4096xf32> to vector<8x128xf32>
    %38 = vector.extract_strided_slice %0 {offsets = [0, 256], sizes = [8, 128], strides = [1, 1]} : vector<8x4096xf32> to vector<8x128xf32>
    %39 = vector.extract_strided_slice %0 {offsets = [0, 384], sizes = [8, 128], strides = [1, 1]} : vector<8x4096xf32> to vector<8x128xf32>
    %40 = vector.extract_strided_slice %0 {offsets = [0, 512], sizes = [8, 128], strides = [1, 1]} : vector<8x4096xf32> to vector<8x128xf32>
    %41 = vector.extract_strided_slice %0 {offsets = [0, 640], sizes = [8, 128], strides = [1, 1]} : vector<8x4096xf32> to vector<8x128xf32>
    %42 = vector.extract_strided_slice %0 {offsets = [0, 768], sizes = [8, 128], strides = [1, 1]} : vector<8x4096xf32> to vector<8x128xf32>
    %43 = vector.extract_strided_slice %0 {offsets = [0, 896], sizes = [8, 128], strides = [1, 1]} : vector<8x4096xf32> to vector<8x128xf32>
    %44 = vector.extract_strided_slice %0 {offsets = [0, 1024], sizes = [8, 128], strides = [1, 1]} : vector<8x4096xf32> to vector<8x128xf32>
    %45 = vector.extract_strided_slice %0 {offsets = [0, 1152], sizes = [8, 128], strides = [1, 1]} : vector<8x4096xf32> to vector<8x128xf32>
    %46 = vector.extract_strided_slice %0 {offsets = [0, 1280], sizes = [8, 128], strides = [1, 1]} : vector<8x4096xf32> to vector<8x128xf32>
    %47 = vector.extract_strided_slice %0 {offsets = [0, 1408], sizes = [8, 128], strides = [1, 1]} : vector<8x4096xf32> to vector<8x128xf32>
    %48 = vector.extract_strided_slice %0 {offsets = [0, 1536], sizes = [8, 128], strides = [1, 1]} : vector<8x4096xf32> to vector<8x128xf32>
    %49 = vector.extract_strided_slice %0 {offsets = [0, 1664], sizes = [8, 128], strides = [1, 1]} : vector<8x4096xf32> to vector<8x128xf32>
    %50 = vector.extract_strided_slice %0 {offsets = [0, 1792], sizes = [8, 128], strides = [1, 1]} : vector<8x4096xf32> to vector<8x128xf32>
    %51 = vector.extract_strided_slice %0 {offsets = [0, 1920], sizes = [8, 128], strides = [1, 1]} : vector<8x4096xf32> to vector<8x128xf32>
    %52 = vector.extract_strided_slice %0 {offsets = [0, 2048], sizes = [8, 128], strides = [1, 1]} : vector<8x4096xf32> to vector<8x128xf32>
    %53 = vector.extract_strided_slice %0 {offsets = [0, 2176], sizes = [8, 128], strides = [1, 1]} : vector<8x4096xf32> to vector<8x128xf32>
    %54 = vector.extract_strided_slice %0 {offsets = [0, 2304], sizes = [8, 128], strides = [1, 1]} : vector<8x4096xf32> to vector<8x128xf32>
    %55 = vector.extract_strided_slice %0 {offsets = [0, 2432], sizes = [8, 128], strides = [1, 1]} : vector<8x4096xf32> to vector<8x128xf32>
    %56 = vector.extract_strided_slice %0 {offsets = [0, 2560], sizes = [8, 128], strides = [1, 1]} : vector<8x4096xf32> to vector<8x128xf32>
    %57 = vector.extract_strided_slice %0 {offsets = [0, 2688], sizes = [8, 128], strides = [1, 1]} : vector<8x4096xf32> to vector<8x128xf32>
    %58 = vector.extract_strided_slice %0 {offsets = [0, 2816], sizes = [8, 128], strides = [1, 1]} : vector<8x4096xf32> to vector<8x128xf32>
    %59 = vector.extract_strided_slice %0 {offsets = [0, 2944], sizes = [8, 128], strides = [1, 1]} : vector<8x4096xf32> to vector<8x128xf32>
    %60 = vector.extract_strided_slice %0 {offsets = [0, 3072], sizes = [8, 128], strides = [1, 1]} : vector<8x4096xf32> to vector<8x128xf32>
    %61 = vector.extract_strided_slice %0 {offsets = [0, 3200], sizes = [8, 128], strides = [1, 1]} : vector<8x4096xf32> to vector<8x128xf32>
    %62 = vector.extract_strided_slice %0 {offsets = [0, 3328], sizes = [8, 128], strides = [1, 1]} : vector<8x4096xf32> to vector<8x128xf32>
    %63 = vector.extract_strided_slice %0 {offsets = [0, 3456], sizes = [8, 128], strides = [1, 1]} : vector<8x4096xf32> to vector<8x128xf32>
    %64 = vector.extract_strided_slice %0 {offsets = [0, 3584], sizes = [8, 128], strides = [1, 1]} : vector<8x4096xf32> to vector<8x128xf32>
    %65 = vector.extract_strided_slice %0 {offsets = [0, 3712], sizes = [8, 128], strides = [1, 1]} : vector<8x4096xf32> to vector<8x128xf32>
    %66 = vector.extract_strided_slice %0 {offsets = [0, 3840], sizes = [8, 128], strides = [1, 1]} : vector<8x4096xf32> to vector<8x128xf32>
    %67 = vector.extract_strided_slice %0 {offsets = [0, 3968], sizes = [8, 128], strides = [1, 1]} : vector<8x4096xf32> to vector<8x128xf32>
    %68 = tpu.concatenate %37, %38, %39, %40, %41, %42, %43, %44, %45, %46, %47, %48, %49, %50, %51, %52 in 0 : vector<8x128xf32>, vector<8x128xf32>, vector<8x128xf32>, vector<8x128xf32>, vector<8x128xf32>, vector<8x128xf32>, vector<8x128xf32>, vector<8x128xf32>, vector<8x128xf32>, vector<8x128xf32>, vector<8x128xf32>, vector<8x128xf32>, vector<8x128xf32>, vector<8x128xf32>, vector<8x128xf32>, vector<8x128xf32> -> vector<128x128xf32>
    %69 = tpu.concatenate %53, %54, %55, %56, %57, %58, %59, %60, %61, %62, %63, %64, %65, %66, %67, %1 in 0 : vector<8x128xf32>, vector<8x128xf32>, vector<8x128xf32>, vector<8x128xf32>, vector<8x128xf32>, vector<8x128xf32>, vector<8x128xf32>, vector<8x128xf32>, vector<8x128xf32>, vector<8x128xf32>, vector<8x128xf32>, vector<8x128xf32>, vector<8x128xf32>, vector<8x128xf32>, vector<8x128xf32>, vector<8x128xf32> -> vector<128x128xf32>
    %70 = tpu.concatenate %68, %69 in 0 : vector<128x128xf32>, vector<128x128xf32> -> vector<256x128xf32>
    %c0_3 = arith.constant 0 : index
    %c0_4 = arith.constant 0 : index
    %c0_5 = arith.constant 0 : index
    %71 = vector.load %arg4[%c0_3, %c0_4, %c0_5] : memref<2x128x512xf32, #tpu.memory_space<vmem>>, vector<1x128x512xf32>
    %72 = vector.shape_cast %71 : vector<1x128x512xf32> to vector<128x512xf32>
    %cst = arith.constant dense<0.000000e+00> : vector<256x512xf32>
    %73 = tpu.matmul %36, %72, %cst {dimension_numbers = #tpu.dot_dimension_numbers<[1], [0], [0], [1], [0, 0, 1, 1], [], []>} : vector<256x128xf32>, vector<128x512xf32>, vector<256x512xf32> -> vector<256x512xf32>
    %c1 = arith.constant 1 : index
    %c0_6 = arith.constant 0 : index
    %c0_7 = arith.constant 0 : index
    %74 = vector.load %arg4[%c1, %c0_6, %c0_7] : memref<2x128x512xf32, #tpu.memory_space<vmem>>, vector<1x128x512xf32>
    %75 = vector.shape_cast %74 : vector<1x128x512xf32> to vector<128x512xf32>
    %cst_8 = arith.constant dense<0.000000e+00> : vector<256x512xf32>
    %76 = tpu.matmul %70, %75, %cst_8 {dimension_numbers = #tpu.dot_dimension_numbers<[1], [0], [0], [1], [0, 0, 1, 1], [], []>} : vector<256x128xf32>, vector<128x512xf32>, vector<256x512xf32> -> vector<256x512xf32>
    %77 = arith.addf %73, %76 : vector<256x512xf32>
    %78 = vector.extract_strided_slice %77 {offsets = [0, 0], sizes = [8, 128], strides = [1, 1]} : vector<256x512xf32> to vector<8x128xf32>
    %c0_9 = arith.constant 0 : index
    %c0_10 = arith.constant 0 : index
    %c0_11 = arith.constant 0 : index
    %79 = vector.load %arg5[%c0_9, %c0_10, %c0_11] : memref<4x8x4096xf32, #tpu.memory_space<vmem>>, vector<1x8x128xf32>
    %80 = vector.shape_cast %79 : vector<1x8x128xf32> to vector<8x128xf32>
    %81 = vector.shape_cast %78 : vector<8x128xf32> to vector<1x8x128xf32>
    tpu.vector_store %arg5[%c0_9, %c0_10, %c0_11], %81 {strides = array<i32>} : memref<4x8x4096xf32, #tpu.memory_space<vmem>>, vector<1x8x128xf32>,
    %82 = vector.extract_strided_slice %77 {offsets = [8, 0], sizes = [8, 128], strides = [1, 1]} : vector<256x512xf32> to vector<8x128xf32>
    %c0_12 = arith.constant 0 : index
    %c0_13 = arith.constant 0 : index
    %c128 = arith.constant 128 : index
    %83 = vector.load %arg5[%c0_12, %c0_13, %c128] : memref<4x8x4096xf32, #tpu.memory_space<vmem>>, vector<1x8x128xf32>
    %84 = vector.shape_cast %83 : vector<1x8x128xf32> to vector<8x128xf32>
    %85 = vector.shape_cast %82 : vector<8x128xf32> to vector<1x8x128xf32>
    tpu.vector_store %arg5[%c0_12, %c0_13, %c128], %85 {strides = array<i32>} : memref<4x8x4096xf32, #tpu.memory_space<vmem>>, vector<1x8x128xf32>,
    %86 = vector.extract_strided_slice %77 {offsets = [16, 0], sizes = [8, 128], strides = [1, 1]} : vector<256x512xf32> to vector<8x128xf32>
    %c0_14 = arith.constant 0 : index
    %c0_15 = arith.constant 0 : index
    %c256 = arith.constant 256 : index
    %87 = vector.load %arg5[%c0_14, %c0_15, %c256] : memref<4x8x4096xf32, #tpu.memory_space<vmem>>, vector<1x8x128xf32>
    %88 = vector.shape_cast %87 : vector<1x8x128xf32> to vector<8x128xf32>
    %89 = vector.shape_cast %86 : vector<8x128xf32> to vector<1x8x128xf32>
    tpu.vector_store %arg5[%c0_14, %c0_15, %c256], %89 {strides = array<i32>} : memref<4x8x4096xf32, #tpu.memory_space<vmem>>, vector<1x8x128xf32>,
    %90 = vector.extract_strided_slice %77 {offsets = [24, 0], sizes = [8, 128], strides = [1, 1]} : vector<256x512xf32> to vector<8x128xf32>
    %c0_16 = arith.constant 0 : index
    %c0_17 = arith.constant 0 : index
    %c384 = arith.constant 384 : index
    %91 = vector.load %arg5[%c0_16, %c0_17, %c384] : memref<4x8x4096xf32, #tpu.memory_space<vmem>>, vector<1x8x128xf32>
    %92 = vector.shape_cast %91 : vector<1x8x128xf32> to vector<8x128xf32>
    %93 = vector.shape_cast %90 : vector<8x128xf32> to vector<1x8x128xf32>
    tpu.vector_store %arg5[%c0_16, %c0_17, %c384], %93 {strides = array<i32>} : memref<4x8x4096xf32, #tpu.memory_space<vmem>>, vector<1x8x128xf32>,
    %94 = vector.extract_strided_slice %77 {offsets = [32, 0], sizes = [8, 128], strides = [1, 1]} : vector<256x512xf32> to vector<8x128xf32>
    %c0_18 = arith.constant 0 : index
    %c0_19 = arith.constant 0 : index
    %c512 = arith.constant 512 : index
    %95 = vector.load %arg5[%c0_18, %c0_19, %c512] : memref<4x8x4096xf32, #tpu.memory_space<vmem>>, vector<1x8x128xf32>
    %96 = vector.shape_cast %95 : vector<1x8x128xf32> to vector<8x128xf32>
    %97 = vector.shape_cast %94 : vector<8x128xf32> to vector<1x8x128xf32>
    tpu.vector_store %arg5[%c0_18, %c0_19, %c512], %97 {strides = array<i32>} : memref<4x8x4096xf32, #tpu.memory_space<vmem>>, vector<1x8x128xf32>,
    %98 = vector.extract_strided_slice %77 {offsets = [40, 0], sizes = [8, 128], strides = [1, 1]} : vector<256x512xf32> to vector<8x128xf32>
    %c0_20 = arith.constant 0 : index
    %c0_21 = arith.constant 0 : index
    %c640 = arith.constant 640 : index
    %99 = vector.load %arg5[%c0_20, %c0_21, %c640] : memref<4x8x4096xf32, #tpu.memory_space<vmem>>, vector<1x8x128xf32>
    %100 = vector.shape_cast %99 : vector<1x8x128xf32> to vector<8x128xf32>
    %101 = vector.shape_cast %98 : vector<8x128xf32> to vector<1x8x128xf32>
    tpu.vector_store %arg5[%c0_20, %c0_21, %c640], %101 {strides = array<i32>} : memref<4x8x4096xf32, #tpu.memory_space<vmem>>, vector<1x8x128xf32>,
    %102 = vector.extract_strided_slice %77 {offsets = [48, 0], sizes = [8, 128], strides = [1, 1]} : vector<256x512xf32> to vector<8x128xf32>
    %c0_22 = arith.constant 0 : index
    %c0_23 = arith.constant 0 : index
    %c768 = arith.constant 768 : index
    %103 = vector.load %arg5[%c0_22, %c0_23, %c768] : memref<4x8x4096xf32, #tpu.memory_space<vmem>>, vector<1x8x128xf32>
    %104 = vector.shape_cast %103 : vector<1x8x128xf32> to vector<8x128xf32>
    %105 = vector.shape_cast %102 : vector<8x128xf32> to vector<1x8x128xf32>
    tpu.vector_store %arg5[%c0_22, %c0_23, %c768], %105 {strides = array<i32>} : memref<4x8x4096xf32, #tpu.memory_space<vmem>>, vector<1x8x128xf32>,
    %106 = vector.extract_strided_slice %77 {offsets = [56, 0], sizes = [8, 128], strides = [1, 1]} : vector<256x512xf32> to vector<8x128xf32>
    %c0_24 = arith.constant 0 : index
    %c0_25 = arith.constant 0 : index
    %c896 = arith.constant 896 : index
    %107 = vector.load %arg5[%c0_24, %c0_25, %c896] : memref<4x8x4096xf32, #tpu.memory_space<vmem>>, vector<1x8x128xf32>
    %108 = vector.shape_cast %107 : vector<1x8x128xf32> to vector<8x128xf32>
    %109 = vector.shape_cast %106 : vector<8x128xf32> to vector<1x8x128xf32>
    tpu.vector_store %arg5[%c0_24, %c0_25, %c896], %109 {strides = array<i32>} : memref<4x8x4096xf32, #tpu.memory_space<vmem>>, vector<1x8x128xf32>,
    %110 = vector.extract_strided_slice %77 {offsets = [64, 0], sizes = [8, 128], strides = [1, 1]} : vector<256x512xf32> to vector<8x128xf32>
    %c0_26 = arith.constant 0 : index
    %c0_27 = arith.constant 0 : index
    %c1024 = arith.constant 1024 : index
    %111 = vector.load %arg5[%c0_26, %c0_27, %c1024] : memref<4x8x4096xf32, #tpu.memory_space<vmem>>, vector<1x8x128xf32>
    %112 = vector.shape_cast %111 : vector<1x8x128xf32> to vector<8x128xf32>
    %113 = vector.shape_cast %110 : vector<8x128xf32> to vector<1x8x128xf32>
    tpu.vector_store %arg5[%c0_26, %c0_27, %c1024], %113 {strides = array<i32>} : memref<4x8x4096xf32, #tpu.memory_space<vmem>>, vector<1x8x128xf32>,
    %114 = vector.extract_strided_slice %77 {offsets = [72, 0], sizes = [8, 128], strides = [1, 1]} : vector<256x512xf32> to vector<8x128xf32>
    %c0_28 = arith.constant 0 : index
    %c0_29 = arith.constant 0 : index
    %c1152 = arith.constant 1152 : index
    %115 = vector.load %arg5[%c0_28, %c0_29, %c1152] : memref<4x8x4096xf32, #tpu.memory_space<vmem>>, vector<1x8x128xf32>
    %116 = vector.shape_cast %115 : vector<1x8x128xf32> to vector<8x128xf32>
    %117 = vector.shape_cast %114 : vector<8x128xf32> to vector<1x8x128xf32>
    tpu.vector_store %arg5[%c0_28, %c0_29, %c1152], %117 {strides = array<i32>} : memref<4x8x4096xf32, #tpu.memory_space<vmem>>, vector<1x8x128xf32>,
    %118 = vector.extract_strided_slice %77 {offsets = [80, 0], sizes = [8, 128], strides = [1, 1]} : vector<256x512xf32> to vector<8x128xf32>
    %c0_30 = arith.constant 0 : index
    %c0_31 = arith.constant 0 : index
    %c1280 = arith.constant 1280 : index
    %119 = vector.load %arg5[%c0_30, %c0_31, %c1280] : memref<4x8x4096xf32, #tpu.memory_space<vmem>>, vector<1x8x128xf32>
    %120 = vector.shape_cast %119 : vector<1x8x128xf32> to vector<8x128xf32>
    %121 = vector.shape_cast %118 : vector<8x128xf32> to vector<1x8x128xf32>
    tpu.vector_store %arg5[%c0_30, %c0_31, %c1280], %121 {strides = array<i32>} : memref<4x8x4096xf32, #tpu.memory_space<vmem>>, vector<1x8x128xf32>,
    %122 = vector.extract_strided_slice %77 {offsets = [88, 0], sizes = [8, 128], strides = [1, 1]} : vector<256x512xf32> to vector<8x128xf32>
    %c0_32 = arith.constant 0 : index
    %c0_33 = arith.constant 0 : index
    %c1408 = arith.constant 1408 : index
    %123 = vector.load %arg5[%c0_32, %c0_33, %c1408] : memref<4x8x4096xf32, #tpu.memory_space<vmem>>, vector<1x8x128xf32>
    %124 = vector.shape_cast %123 : vector<1x8x128xf32> to vector<8x128xf32>
    %125 = vector.shape_cast %122 : vector<8x128xf32> to vector<1x8x128xf32>
    tpu.vector_store %arg5[%c0_32, %c0_33, %c1408], %125 {strides = array<i32>} : memref<4x8x4096xf32, #tpu.memory_space<vmem>>, vector<1x8x128xf32>,
    %126 = vector.extract_strided_slice %77 {offsets = [96, 0], sizes = [8, 128], strides = [1, 1]} : vector<256x512xf32> to vector<8x128xf32>
    %c0_34 = arith.constant 0 : index
    %c0_35 = arith.constant 0 : index
    %c1536 = arith.constant 1536 : index
    %127 = vector.load %arg5[%c0_34, %c0_35, %c1536] : memref<4x8x4096xf32, #tpu.memory_space<vmem>>, vector<1x8x128xf32>
    %128 = vector.shape_cast %127 : vector<1x8x128xf32> to vector<8x128xf32>
    %129 = vector.shape_cast %126 : vector<8x128xf32> to vector<1x8x128xf32>
    tpu.vector_store %arg5[%c0_34, %c0_35, %c1536], %129 {strides = array<i32>} : memref<4x8x4096xf32, #tpu.memory_space<vmem>>, vector<1x8x128xf32>,
    %130 = vector.extract_strided_slice %77 {offsets = [104, 0], sizes = [8, 128], strides = [1, 1]} : vector<256x512xf32> to vector<8x128xf32>
    %c0_36 = arith.constant 0 : index
    %c0_37 = arith.constant 0 : index
    %c1664 = arith.constant 1664 : index
    %131 = vector.load %arg5[%c0_36, %c0_37, %c1664] : memref<4x8x4096xf32, #tpu.memory_space<vmem>>, vector<1x8x128xf32>
    %132 = vector.shape_cast %131 : vector<1x8x128xf32> to vector<8x128xf32>
    %133 = vector.shape_cast %130 : vector<8x128xf32> to vector<1x8x128xf32>
    tpu.vector_store %arg5[%c0_36, %c0_37, %c1664], %133 {strides = array<i32>} : memref<4x8x4096xf32, #tpu.memory_space<vmem>>, vector<1x8x128xf32>,
    %134 = vector.extract_strided_slice %77 {offsets = [112, 0], sizes = [8, 128], strides = [1, 1]} : vector<256x512xf32> to vector<8x128xf32>
    %c0_38 = arith.constant 0 : index
    %c0_39 = arith.constant 0 : index
    %c1792 = arith.constant 1792 : index
    %135 = vector.load %arg5[%c0_38, %c0_39, %c1792] : memref<4x8x4096xf32, #tpu.memory_space<vmem>>, vector<1x8x128xf32>
    %136 = vector.shape_cast %135 : vector<1x8x128xf32> to vector<8x128xf32>
    %137 = vector.shape_cast %134 : vector<8x128xf32> to vector<1x8x128xf32>
    tpu.vector_store %arg5[%c0_38, %c0_39, %c1792], %137 {strides = array<i32>} : memref<4x8x4096xf32, #tpu.memory_space<vmem>>, vector<1x8x128xf32>,
    %138 = vector.extract_strided_slice %77 {offsets = [120, 0], sizes = [8, 128], strides = [1, 1]} : vector<256x512xf32> to vector<8x128xf32>
    %c0_40 = arith.constant 0 : index
    %c0_41 = arith.constant 0 : index
    %c1920 = arith.constant 1920 : index
    %139 = vector.load %arg5[%c0_40, %c0_41, %c1920] : memref<4x8x4096xf32, #tpu.memory_space<vmem>>, vector<1x8x128xf32>
    %140 = vector.shape_cast %139 : vector<1x8x128xf32> to vector<8x128xf32>
    %141 = vector.shape_cast %138 : vector<8x128xf32> to vector<1x8x128xf32>
    tpu.vector_store %arg5[%c0_40, %c0_41, %c1920], %141 {strides = array<i32>} : memref<4x8x4096xf32, #tpu.memory_space<vmem>>, vector<1x8x128xf32>,
    %142 = vector.extract_strided_slice %77 {offsets = [128, 0], sizes = [8, 128], strides = [1, 1]} : vector<256x512xf32> to vector<8x128xf32>
    %c0_42 = arith.constant 0 : index
    %c0_43 = arith.constant 0 : index
    %c2048 = arith.constant 2048 : index
    %143 = vector.load %arg5[%c0_42, %c0_43, %c2048] : memref<4x8x4096xf32, #tpu.memory_space<vmem>>, vector<1x8x128xf32>
    %144 = vector.shape_cast %143 : vector<1x8x128xf32> to vector<8x128xf32>
    %145 = vector.shape_cast %142 : vector<8x128xf32> to vector<1x8x128xf32>
    tpu.vector_store %arg5[%c0_42, %c0_43, %c2048], %145 {strides = array<i32>} : memref<4x8x4096xf32, #tpu.memory_space<vmem>>, vector<1x8x128xf32>,
    %146 = vector.extract_strided_slice %77 {offsets = [136, 0], sizes = [8, 128], strides = [1, 1]} : vector<256x512xf32> to vector<8x128xf32>
    %c0_44 = arith.constant 0 : index
    %c0_45 = arith.constant 0 : index
    %c2176 = arith.constant 2176 : index
    %147 = vector.load %arg5[%c0_44, %c0_45, %c2176] : memref<4x8x4096xf32, #tpu.memory_space<vmem>>, vector<1x8x128xf32>
    %148 = vector.shape_cast %147 : vector<1x8x128xf32> to vector<8x128xf32>
    %149 = vector.shape_cast %146 : vector<8x128xf32> to vector<1x8x128xf32>
    tpu.vector_store %arg5[%c0_44, %c0_45, %c2176], %149 {strides = array<i32>} : memref<4x8x4096xf32, #tpu.memory_space<vmem>>, vector<1x8x128xf32>,
    %150 = vector.extract_strided_slice %77 {offsets = [144, 0], sizes = [8, 128], strides = [1, 1]} : vector<256x512xf32> to vector<8x128xf32>
    %c0_46 = arith.constant 0 : index
    %c0_47 = arith.constant 0 : index
    %c2304 = arith.constant 2304 : index
    %151 = vector.load %arg5[%c0_46, %c0_47, %c2304] : memref<4x8x4096xf32, #tpu.memory_space<vmem>>, vector<1x8x128xf32>
    %152 = vector.shape_cast %151 : vector<1x8x128xf32> to vector<8x128xf32>
    %153 = vector.shape_cast %150 : vector<8x128xf32> to vector<1x8x128xf32>
    tpu.vector_store %arg5[%c0_46, %c0_47, %c2304], %153 {strides = array<i32>} : memref<4x8x4096xf32, #tpu.memory_space<vmem>>, vector<1x8x128xf32>,
    %154 = vector.extract_strided_slice %77 {offsets = [152, 0], sizes = [8, 128], strides = [1, 1]} : vector<256x512xf32> to vector<8x128xf32>
    %c0_48 = arith.constant 0 : index
    %c0_49 = arith.constant 0 : index
    %c2432 = arith.constant 2432 : index
    %155 = vector.load %arg5[%c0_48, %c0_49, %c2432] : memref<4x8x4096xf32, #tpu.memory_space<vmem>>, vector<1x8x128xf32>
    %156 = vector.shape_cast %155 : vector<1x8x128xf32> to vector<8x128xf32>
    %157 = vector.shape_cast %154 : vector<8x128xf32> to vector<1x8x128xf32>
    tpu.vector_store %arg5[%c0_48, %c0_49, %c2432], %157 {strides = array<i32>} : memref<4x8x4096xf32, #tpu.memory_space<vmem>>, vector<1x8x128xf32>,
    %158 = vector.extract_strided_slice %77 {offsets = [160, 0], sizes = [8, 128], strides = [1, 1]} : vector<256x512xf32> to vector<8x128xf32>
    %c0_50 = arith.constant 0 : index
    %c0_51 = arith.constant 0 : index
    %c2560 = arith.constant 2560 : index
    %159 = vector.load %arg5[%c0_50, %c0_51, %c2560] : memref<4x8x4096xf32, #tpu.memory_space<vmem>>, vector<1x8x128xf32>
    %160 = vector.shape_cast %159 : vector<1x8x128xf32> to vector<8x128xf32>
    %161 = vector.shape_cast %158 : vector<8x128xf32> to vector<1x8x128xf32>
    tpu.vector_store %arg5[%c0_50, %c0_51, %c2560], %161 {strides = array<i32>} : memref<4x8x4096xf32, #tpu.memory_space<vmem>>, vector<1x8x128xf32>,
    %162 = vector.extract_strided_slice %77 {offsets = [168, 0], sizes = [8, 128], strides = [1, 1]} : vector<256x512xf32> to vector<8x128xf32>
    %c0_52 = arith.constant 0 : index
    %c0_53 = arith.constant 0 : index
    %c2688 = arith.constant 2688 : index
    %163 = vector.load %arg5[%c0_52, %c0_53, %c2688] : memref<4x8x4096xf32, #tpu.memory_space<vmem>>, vector<1x8x128xf32>
    %164 = vector.shape_cast %163 : vector<1x8x128xf32> to vector<8x128xf32>
    %165 = vector.shape_cast %162 : vector<8x128xf32> to vector<1x8x128xf32>
    tpu.vector_store %arg5[%c0_52, %c0_53, %c2688], %165 {strides = array<i32>} : memref<4x8x4096xf32, #tpu.memory_space<vmem>>, vector<1x8x128xf32>,
    %166 = vector.extract_strided_slice %77 {offsets = [176, 0], sizes = [8, 128], strides = [1, 1]} : vector<256x512xf32> to vector<8x128xf32>
    %c0_54 = arith.constant 0 : index
    %c0_55 = arith.constant 0 : index
    %c2816 = arith.constant 2816 : index
    %167 = vector.load %arg5[%c0_54, %c0_55, %c2816] : memref<4x8x4096xf32, #tpu.memory_space<vmem>>, vector<1x8x128xf32>
    %168 = vector.shape_cast %167 : vector<1x8x128xf32> to vector<8x128xf32>
    %169 = vector.shape_cast %166 : vector<8x128xf32> to vector<1x8x128xf32>
    tpu.vector_store %arg5[%c0_54, %c0_55, %c2816], %169 {strides = array<i32>} : memref<4x8x4096xf32, #tpu.memory_space<vmem>>, vector<1x8x128xf32>,
    %170 = vector.extract_strided_slice %77 {offsets = [184, 0], sizes = [8, 128], strides = [1, 1]} : vector<256x512xf32> to vector<8x128xf32>
    %c0_56 = arith.constant 0 : index
    %c0_57 = arith.constant 0 : index
    %c2944 = arith.constant 2944 : index
    %171 = vector.load %arg5[%c0_56, %c0_57, %c2944] : memref<4x8x4096xf32, #tpu.memory_space<vmem>>, vector<1x8x128xf32>
    %172 = vector.shape_cast %171 : vector<1x8x128xf32> to vector<8x128xf32>
    %173 = vector.shape_cast %170 : vector<8x128xf32> to vector<1x8x128xf32>
    tpu.vector_store %arg5[%c0_56, %c0_57, %c2944], %173 {strides = array<i32>} : memref<4x8x4096xf32, #tpu.memory_space<vmem>>, vector<1x8x128xf32>,
    %174 = vector.extract_strided_slice %77 {offsets = [192, 0], sizes = [8, 128], strides = [1, 1]} : vector<256x512xf32> to vector<8x128xf32>
    %c0_58 = arith.constant 0 : index
    %c0_59 = arith.constant 0 : index
    %c3072 = arith.constant 3072 : index
    %175 = vector.load %arg5[%c0_58, %c0_59, %c3072] : memref<4x8x4096xf32, #tpu.memory_space<vmem>>, vector<1x8x128xf32>
    %176 = vector.shape_cast %175 : vector<1x8x128xf32> to vector<8x128xf32>
    %177 = vector.shape_cast %174 : vector<8x128xf32> to vector<1x8x128xf32>
    tpu.vector_store %arg5[%c0_58, %c0_59, %c3072], %177 {strides = array<i32>} : memref<4x8x4096xf32, #tpu.memory_space<vmem>>, vector<1x8x128xf32>,
    %178 = vector.extract_strided_slice %77 {offsets = [200, 0], sizes = [8, 128], strides = [1, 1]} : vector<256x512xf32> to vector<8x128xf32>
    %c0_60 = arith.constant 0 : index
    %c0_61 = arith.constant 0 : index
    %c3200 = arith.constant 3200 : index
    %179 = vector.load %arg5[%c0_60, %c0_61, %c3200] : memref<4x8x4096xf32, #tpu.memory_space<vmem>>, vector<1x8x128xf32>
    %180 = vector.shape_cast %179 : vector<1x8x128xf32> to vector<8x128xf32>
    %181 = vector.shape_cast %178 : vector<8x128xf32> to vector<1x8x128xf32>
    tpu.vector_store %arg5[%c0_60, %c0_61, %c3200], %181 {strides = array<i32>} : memref<4x8x4096xf32, #tpu.memory_space<vmem>>, vector<1x8x128xf32>,
    %182 = vector.extract_strided_slice %77 {offsets = [208, 0], sizes = [8, 128], strides = [1, 1]} : vector<256x512xf32> to vector<8x128xf32>
    %c0_62 = arith.constant 0 : index
    %c0_63 = arith.constant 0 : index
    %c3328 = arith.constant 3328 : index
    %183 = vector.load %arg5[%c0_62, %c0_63, %c3328] : memref<4x8x4096xf32, #tpu.memory_space<vmem>>, vector<1x8x128xf32>
    %184 = vector.shape_cast %183 : vector<1x8x128xf32> to vector<8x128xf32>
    %185 = vector.shape_cast %182 : vector<8x128xf32> to vector<1x8x128xf32>
    tpu.vector_store %arg5[%c0_62, %c0_63, %c3328], %185 {strides = array<i32>} : memref<4x8x4096xf32, #tpu.memory_space<vmem>>, vector<1x8x128xf32>,
    %186 = vector.extract_strided_slice %77 {offsets = [216, 0], sizes = [8, 128], strides = [1, 1]} : vector<256x512xf32> to vector<8x128xf32>
    %c0_64 = arith.constant 0 : index
    %c0_65 = arith.constant 0 : index
    %c3456 = arith.constant 3456 : index
    %187 = vector.load %arg5[%c0_64, %c0_65, %c3456] : memref<4x8x4096xf32, #tpu.memory_space<vmem>>, vector<1x8x128xf32>
    %188 = vector.shape_cast %187 : vector<1x8x128xf32> to vector<8x128xf32>
    %189 = vector.shape_cast %186 : vector<8x128xf32> to vector<1x8x128xf32>
    tpu.vector_store %arg5[%c0_64, %c0_65, %c3456], %189 {strides = array<i32>} : memref<4x8x4096xf32, #tpu.memory_space<vmem>>, vector<1x8x128xf32>,
    %190 = vector.extract_strided_slice %77 {offsets = [224, 0], sizes = [8, 128], strides = [1, 1]} : vector<256x512xf32> to vector<8x128xf32>
    %c0_66 = arith.constant 0 : index
    %c0_67 = arith.constant 0 : index
    %c3584 = arith.constant 3584 : index
    %191 = vector.load %arg5[%c0_66, %c0_67, %c3584] : memref<4x8x4096xf32, #tpu.memory_space<vmem>>, vector<1x8x128xf32>
    %192 = vector.shape_cast %191 : vector<1x8x128xf32> to vector<8x128xf32>
    %193 = vector.shape_cast %190 : vector<8x128xf32> to vector<1x8x128xf32>
    tpu.vector_store %arg5[%c0_66, %c0_67, %c3584], %193 {strides = array<i32>} : memref<4x8x4096xf32, #tpu.memory_space<vmem>>, vector<1x8x128xf32>,
    %194 = vector.extract_strided_slice %77 {offsets = [232, 0], sizes = [8, 128], strides = [1, 1]} : vector<256x512xf32> to vector<8x128xf32>
    %c0_68 = arith.constant 0 : index
    %c0_69 = arith.constant 0 : index
    %c3712 = arith.constant 3712 : index
    %195 = vector.load %arg5[%c0_68, %c0_69, %c3712] : memref<4x8x4096xf32, #tpu.memory_space<vmem>>, vector<1x8x128xf32>
    %196 = vector.shape_cast %195 : vector<1x8x128xf32> to vector<8x128xf32>
    %197 = vector.shape_cast %194 : vector<8x128xf32> to vector<1x8x128xf32>
    tpu.vector_store %arg5[%c0_68, %c0_69, %c3712], %197 {strides = array<i32>} : memref<4x8x4096xf32, #tpu.memory_space<vmem>>, vector<1x8x128xf32>,
    %198 = vector.extract_strided_slice %77 {offsets = [240, 0], sizes = [8, 128], strides = [1, 1]} : vector<256x512xf32> to vector<8x128xf32>
    %c0_70 = arith.constant 0 : index
    %c0_71 = arith.constant 0 : index
    %c3840 = arith.constant 3840 : index
    %199 = vector.load %arg5[%c0_70, %c0_71, %c3840] : memref<4x8x4096xf32, #tpu.memory_space<vmem>>, vector<1x8x128xf32>
    %200 = vector.shape_cast %199 : vector<1x8x128xf32> to vector<8x128xf32>
    %201 = vector.shape_cast %198 : vector<8x128xf32> to vector<1x8x128xf32>
    tpu.vector_store %arg5[%c0_70, %c0_71, %c3840], %201 {strides = array<i32>} : memref<4x8x4096xf32, #tpu.memory_space<vmem>>, vector<1x8x128xf32>,
    %202 = vector.extract_strided_slice %77 {offsets = [248, 0], sizes = [8, 128], strides = [1, 1]} : vector<256x512xf32> to vector<8x128xf32>
    %c0_72 = arith.constant 0 : index
    %c0_73 = arith.constant 0 : index
    %c3968 = arith.constant 3968 : index
    %203 = vector.load %arg5[%c0_72, %c0_73, %c3968] : memref<4x8x4096xf32, #tpu.memory_space<vmem>>, vector<1x8x128xf32>
    %204 = vector.shape_cast %203 : vector<1x8x128xf32> to vector<8x128xf32>
    %205 = vector.shape_cast %202 : vector<8x128xf32> to vector<1x8x128xf32>
    tpu.vector_store %arg5[%c0_72, %c0_73, %c3968], %205 {strides = array<i32>} : memref<4x8x4096xf32, #tpu.memory_space<vmem>>, vector<1x8x128xf32>,
    %206 = vector.extract_strided_slice %77 {offsets = [0, 128], sizes = [8, 128], strides = [1, 1]} : vector<256x512xf32> to vector<8x128xf32>
    %c1_74 = arith.constant 1 : index
    %c0_75 = arith.constant 0 : index
    %c0_76 = arith.constant 0 : index
    %207 = vector.load %arg5[%c1_74, %c0_75, %c0_76] : memref<4x8x4096xf32, #tpu.memory_space<vmem>>, vector<1x8x128xf32>
    %208 = vector.shape_cast %207 : vector<1x8x128xf32> to vector<8x128xf32>
    %209 = vector.shape_cast %206 : vector<8x128xf32> to vector<1x8x128xf32>
    tpu.vector_store %arg5[%c1_74, %c0_75, %c0_76], %209 {strides = array<i32>} : memref<4x8x4096xf32, #tpu.memory_space<vmem>>, vector<1x8x128xf32>,
    %210 = vector.extract_strided_slice %77 {offsets = [8, 128], sizes = [8, 128], strides = [1, 1]} : vector<256x512xf32> to vector<8x128xf32>
    %c1_77 = arith.constant 1 : index
    %c0_78 = arith.constant 0 : index
    %c128_79 = arith.constant 128 : index
    %211 = vector.load %arg5[%c1_77, %c0_78, %c128_79] : memref<4x8x4096xf32, #tpu.memory_space<vmem>>, vector<1x8x128xf32>
    %212 = vector.shape_cast %211 : vector<1x8x128xf32> to vector<8x128xf32>
    %213 = vector.shape_cast %210 : vector<8x128xf32> to vector<1x8x128xf32>
    tpu.vector_store %arg5[%c1_77, %c0_78, %c128_79], %213 {strides = array<i32>} : memref<4x8x4096xf32, #tpu.memory_space<vmem>>, vector<1x8x128xf32>,
    %214 = vector.extract_strided_slice %77 {offsets = [16, 128], sizes = [8, 128], strides = [1, 1]} : vector<256x512xf32> to vector<8x128xf32>
    %c1_80 = arith.constant 1 : index
    %c0_81 = arith.constant 0 : index
    %c256_82 = arith.constant 256 : index
    %215 = vector.load %arg5[%c1_80, %c0_81, %c256_82] : memref<4x8x4096xf32, #tpu.memory_space<vmem>>, vector<1x8x128xf32>
    %216 = vector.shape_cast %215 : vector<1x8x128xf32> to vector<8x128xf32>
    %217 = vector.shape_cast %214 : vector<8x128xf32> to vector<1x8x128xf32>
    tpu.vector_store %arg5[%c1_80, %c0_81, %c256_82], %217 {strides = array<i32>} : memref<4x8x4096xf32, #tpu.memory_space<vmem>>, vector<1x8x128xf32>,
    %218 = vector.extract_strided_slice %77 {offsets = [24, 128], sizes = [8, 128], strides = [1, 1]} : vector<256x512xf32> to vector<8x128xf32>
    %c1_83 = arith.constant 1 : index
    %c0_84 = arith.constant 0 : index
    %c384_85 = arith.constant 384 : index
    %219 = vector.load %arg5[%c1_83, %c0_84, %c384_85] : memref<4x8x4096xf32, #tpu.memory_space<vmem>>, vector<1x8x128xf32>
    %220 = vector.shape_cast %219 : vector<1x8x128xf32> to vector<8x128xf32>
    %221 = vector.shape_cast %218 : vector<8x128xf32> to vector<1x8x128xf32>
    tpu.vector_store %arg5[%c1_83, %c0_84, %c384_85], %221 {strides = array<i32>} : memref<4x8x4096xf32, #tpu.memory_space<vmem>>, vector<1x8x128xf32>,
    %222 = vector.extract_strided_slice %77 {offsets = [32, 128], sizes = [8, 128], strides = [1, 1]} : vector<256x512xf32> to vector<8x128xf32>
    %c1_86 = arith.constant 1 : index
    %c0_87 = arith.constant 0 : index
    %c512_88 = arith.constant 512 : index
    %223 = vector.load %arg5[%c1_86, %c0_87, %c512_88] : memref<4x8x4096xf32, #tpu.memory_space<vmem>>, vector<1x8x128xf32>
    %224 = vector.shape_cast %223 : vector<1x8x128xf32> to vector<8x128xf32>
    %225 = vector.shape_cast %222 : vector<8x128xf32> to vector<1x8x128xf32>
    tpu.vector_store %arg5[%c1_86, %c0_87, %c512_88], %225 {strides = array<i32>} : memref<4x8x4096xf32, #tpu.memory_space<vmem>>, vector<1x8x128xf32>,
    %226 = vector.extract_strided_slice %77 {offsets = [40, 128], sizes = [8, 128], strides = [1, 1]} : vector<256x512xf32> to vector<8x128xf32>
    %c1_89 = arith.constant 1 : index
    %c0_90 = arith.constant 0 : index
    %c640_91 = arith.constant 640 : index
    %227 = vector.load %arg5[%c1_89, %c0_90, %c640_91] : memref<4x8x4096xf32, #tpu.memory_space<vmem>>, vector<1x8x128xf32>
    %228 = vector.shape_cast %227 : vector<1x8x128xf32> to vector<8x128xf32>
    %229 = vector.shape_cast %226 : vector<8x128xf32> to vector<1x8x128xf32>
    tpu.vector_store %arg5[%c1_89, %c0_90, %c640_91], %229 {strides = array<i32>} : memref<4x8x4096xf32, #tpu.memory_space<vmem>>, vector<1x8x128xf32>,
    %230 = vector.extract_strided_slice %77 {offsets = [48, 128], sizes = [8, 128], strides = [1, 1]} : vector<256x512xf32> to vector<8x128xf32>
    %c1_92 = arith.constant 1 : index
    %c0_93 = arith.constant 0 : index
    %c768_94 = arith.constant 768 : index
    %231 = vector.load %arg5[%c1_92, %c0_93, %c768_94] : memref<4x8x4096xf32, #tpu.memory_space<vmem>>, vector<1x8x128xf32>
    %232 = vector.shape_cast %231 : vector<1x8x128xf32> to vector<8x128xf32>
    %233 = vector.shape_cast %230 : vector<8x128xf32> to vector<1x8x128xf32>
    tpu.vector_store %arg5[%c1_92, %c0_93, %c768_94], %233 {strides = array<i32>} : memref<4x8x4096xf32, #tpu.memory_space<vmem>>, vector<1x8x128xf32>,
    %234 = vector.extract_strided_slice %77 {offsets = [56, 128], sizes = [8, 128], strides = [1, 1]} : vector<256x512xf32> to vector<8x128xf32>
    %c1_95 = arith.constant 1 : index
    %c0_96 = arith.constant 0 : index
    %c896_97 = arith.constant 896 : index
    %235 = vector.load %arg5[%c1_95, %c0_96, %c896_97] : memref<4x8x4096xf32, #tpu.memory_space<vmem>>, vector<1x8x128xf32>
    %236 = vector.shape_cast %235 : vector<1x8x128xf32> to vector<8x128xf32>
    %237 = vector.shape_cast %234 : vector<8x128xf32> to vector<1x8x128xf32>
    tpu.vector_store %arg5[%c1_95, %c0_96, %c896_97], %237 {strides = array<i32>} : memref<4x8x4096xf32, #tpu.memory_space<vmem>>, vector<1x8x128xf32>,
    %238 = vector.extract_strided_slice %77 {offsets = [64, 128], sizes = [8, 128], strides = [1, 1]} : vector<256x512xf32> to vector<8x128xf32>
    %c1_98 = arith.constant 1 : index
    %c0_99 = arith.constant 0 : index
    %c1024_100 = arith.constant 1024 : index
    %239 = vector.load %arg5[%c1_98, %c0_99, %c1024_100] : memref<4x8x4096xf32, #tpu.memory_space<vmem>>, vector<1x8x128xf32>
    %240 = vector.shape_cast %239 : vector<1x8x128xf32> to vector<8x128xf32>
    %241 = vector.shape_cast %238 : vector<8x128xf32> to vector<1x8x128xf32>
    tpu.vector_store %arg5[%c1_98, %c0_99, %c1024_100], %241 {strides = array<i32>} : memref<4x8x4096xf32, #tpu.memory_space<vmem>>, vector<1x8x128xf32>,
    %242 = vector.extract_strided_slice %77 {offsets = [72, 128], sizes = [8, 128], strides = [1, 1]} : vector<256x512xf32> to vector<8x128xf32>
    %c1_101 = arith.constant 1 : index
    %c0_102 = arith.constant 0 : index
    %c1152_103 = arith.constant 1152 : index
    %243 = vector.load %arg5[%c1_101, %c0_102, %c1152_103] : memref<4x8x4096xf32, #tpu.memory_space<vmem>>, vector<1x8x128xf32>
    %244 = vector.shape_cast %243 : vector<1x8x128xf32> to vector<8x128xf32>
    %245 = vector.shape_cast %242 : vector<8x128xf32> to vector<1x8x128xf32>
    tpu.vector_store %arg5[%c1_101, %c0_102, %c1152_103], %245 {strides = array<i32>} : memref<4x8x4096xf32, #tpu.memory_space<vmem>>, vector<1x8x128xf32>,
    %246 = vector.extract_strided_slice %77 {offsets = [80, 128], sizes = [8, 128], strides = [1, 1]} : vector<256x512xf32> to vector<8x128xf32>
    %c1_104 = arith.constant 1 : index
    %c0_105 = arith.constant 0 : index
    %c1280_106 = arith.constant 1280 : index
    %247 = vector.load %arg5[%c1_104, %c0_105, %c1280_106] : memref<4x8x4096xf32, #tpu.memory_space<vmem>>, vector<1x8x128xf32>
    %248 = vector.shape_cast %247 : vector<1x8x128xf32> to vector<8x128xf32>
    %249 = vector.shape_cast %246 : vector<8x128xf32> to vector<1x8x128xf32>
    tpu.vector_store %arg5[%c1_104, %c0_105, %c1280_106], %249 {strides = array<i32>} : memref<4x8x4096xf32, #tpu.memory_space<vmem>>, vector<1x8x128xf32>,
    %250 = vector.extract_strided_slice %77 {offsets = [88, 128], sizes = [8, 128], strides = [1, 1]} : vector<256x512xf32> to vector<8x128xf32>
    %c1_107 = arith.constant 1 : index
    %c0_108 = arith.constant 0 : index
    %c1408_109 = arith.constant 1408 : index
    %251 = vector.load %arg5[%c1_107, %c0_108, %c1408_109] : memref<4x8x4096xf32, #tpu.memory_space<vmem>>, vector<1x8x128xf32>
    %252 = vector.shape_cast %251 : vector<1x8x128xf32> to vector<8x128xf32>
    %253 = vector.shape_cast %250 : vector<8x128xf32> to vector<1x8x128xf32>
    tpu.vector_store %arg5[%c1_107, %c0_108, %c1408_109], %253 {strides = array<i32>} : memref<4x8x4096xf32, #tpu.memory_space<vmem>>, vector<1x8x128xf32>,
    %254 = vector.extract_strided_slice %77 {offsets = [96, 128], sizes = [8, 128], strides = [1, 1]} : vector<256x512xf32> to vector<8x128xf32>
    %c1_110 = arith.constant 1 : index
    %c0_111 = arith.constant 0 : index
    %c1536_112 = arith.constant 1536 : index
    %255 = vector.load %arg5[%c1_110, %c0_111, %c1536_112] : memref<4x8x4096xf32, #tpu.memory_space<vmem>>, vector<1x8x128xf32>
    %256 = vector.shape_cast %255 : vector<1x8x128xf32> to vector<8x128xf32>
    %257 = vector.shape_cast %254 : vector<8x128xf32> to vector<1x8x128xf32>
    tpu.vector_store %arg5[%c1_110, %c0_111, %c1536_112], %257 {strides = array<i32>} : memref<4x8x4096xf32, #tpu.memory_space<vmem>>, vector<1x8x128xf32>,
    %258 = vector.extract_strided_slice %77 {offsets = [104, 128], sizes = [8, 128], strides = [1, 1]} : vector<256x512xf32> to vector<8x128xf32>
    %c1_113 = arith.constant 1 : index
    %c0_114 = arith.constant 0 : index
    %c1664_115 = arith.constant 1664 : index
    %259 = vector.load %arg5[%c1_113, %c0_114, %c1664_115] : memref<4x8x4096xf32, #tpu.memory_space<vmem>>, vector<1x8x128xf32>
    %260 = vector.shape_cast %259 : vector<1x8x128xf32> to vector<8x128xf32>
    %261 = vector.shape_cast %258 : vector<8x128xf32> to vector<1x8x128xf32>
    tpu.vector_store %arg5[%c1_113, %c0_114, %c1664_115], %261 {strides = array<i32>} : memref<4x8x4096xf32, #tpu.memory_space<vmem>>, vector<1x8x128xf32>,
    %262 = vector.extract_strided_slice %77 {offsets = [112, 128], sizes = [8, 128], strides = [1, 1]} : vector<256x512xf32> to vector<8x128xf32>
    %c1_116 = arith.constant 1 : index
    %c0_117 = arith.constant 0 : index
    %c1792_118 = arith.constant 1792 : index
    %263 = vector.load %arg5[%c1_116, %c0_117, %c1792_118] : memref<4x8x4096xf32, #tpu.memory_space<vmem>>, vector<1x8x128xf32>
    %264 = vector.shape_cast %263 : vector<1x8x128xf32> to vector<8x128xf32>
    %265 = vector.shape_cast %262 : vector<8x128xf32> to vector<1x8x128xf32>
    tpu.vector_store %arg5[%c1_116, %c0_117, %c1792_118], %265 {strides = array<i32>} : memref<4x8x4096xf32, #tpu.memory_space<vmem>>, vector<1x8x128xf32>,
    %266 = vector.extract_strided_slice %77 {offsets = [120, 128], sizes = [8, 128], strides = [1, 1]} : vector<256x512xf32> to vector<8x128xf32>
    %c1_119 = arith.constant 1 : index
    %c0_120 = arith.constant 0 : index
    %c1920_121 = arith.constant 1920 : index
    %267 = vector.load %arg5[%c1_119, %c0_120, %c1920_121] : memref<4x8x4096xf32, #tpu.memory_space<vmem>>, vector<1x8x128xf32>
    %268 = vector.shape_cast %267 : vector<1x8x128xf32> to vector<8x128xf32>
    %269 = vector.shape_cast %266 : vector<8x128xf32> to vector<1x8x128xf32>
    tpu.vector_store %arg5[%c1_119, %c0_120, %c1920_121], %269 {strides = array<i32>} : memref<4x8x4096xf32, #tpu.memory_space<vmem>>, vector<1x8x128xf32>,
    %270 = vector.extract_strided_slice %77 {offsets = [128, 128], sizes = [8, 128], strides = [1, 1]} : vector<256x512xf32> to vector<8x128xf32>
    %c1_122 = arith.constant 1 : index
    %c0_123 = arith.constant 0 : index
    %c2048_124 = arith.constant 2048 : index
    %271 = vector.load %arg5[%c1_122, %c0_123, %c2048_124] : memref<4x8x4096xf32, #tpu.memory_space<vmem>>, vector<1x8x128xf32>
    %272 = vector.shape_cast %271 : vector<1x8x128xf32> to vector<8x128xf32>
    %273 = vector.shape_cast %270 : vector<8x128xf32> to vector<1x8x128xf32>
    tpu.vector_store %arg5[%c1_122, %c0_123, %c2048_124], %273 {strides = array<i32>} : memref<4x8x4096xf32, #tpu.memory_space<vmem>>, vector<1x8x128xf32>,
    %274 = vector.extract_strided_slice %77 {offsets = [136, 128], sizes = [8, 128], strides = [1, 1]} : vector<256x512xf32> to vector<8x128xf32>
    %c1_125 = arith.constant 1 : index
    %c0_126 = arith.constant 0 : index
    %c2176_127 = arith.constant 2176 : index
    %275 = vector.load %arg5[%c1_125, %c0_126, %c2176_127] : memref<4x8x4096xf32, #tpu.memory_space<vmem>>, vector<1x8x128xf32>
    %276 = vector.shape_cast %275 : vector<1x8x128xf32> to vector<8x128xf32>
    %277 = vector.shape_cast %274 : vector<8x128xf32> to vector<1x8x128xf32>
    tpu.vector_store %arg5[%c1_125, %c0_126, %c2176_127], %277 {strides = array<i32>} : memref<4x8x4096xf32, #tpu.memory_space<vmem>>, vector<1x8x128xf32>,
    %278 = vector.extract_strided_slice %77 {offsets = [144, 128], sizes = [8, 128], strides = [1, 1]} : vector<256x512xf32> to vector<8x128xf32>
    %c1_128 = arith.constant 1 : index
    %c0_129 = arith.constant 0 : index
    %c2304_130 = arith.constant 2304 : index
    %279 = vector.load %arg5[%c1_128, %c0_129, %c2304_130] : memref<4x8x4096xf32, #tpu.memory_space<vmem>>, vector<1x8x128xf32>
    %280 = vector.shape_cast %279 : vector<1x8x128xf32> to vector<8x128xf32>
    %281 = vector.shape_cast %278 : vector<8x128xf32> to vector<1x8x128xf32>
    tpu.vector_store %arg5[%c1_128, %c0_129, %c2304_130], %281 {strides = array<i32>} : memref<4x8x4096xf32, #tpu.memory_space<vmem>>, vector<1x8x128xf32>,
    %282 = vector.extract_strided_slice %77 {offsets = [152, 128], sizes = [8, 128], strides = [1, 1]} : vector<256x512xf32> to vector<8x128xf32>
    %c1_131 = arith.constant 1 : index
    %c0_132 = arith.constant 0 : index
    %c2432_133 = arith.constant 2432 : index
    %283 = vector.load %arg5[%c1_131, %c0_132, %c2432_133] : memref<4x8x4096xf32, #tpu.memory_space<vmem>>, vector<1x8x128xf32>
    %284 = vector.shape_cast %283 : vector<1x8x128xf32> to vector<8x128xf32>
    %285 = vector.shape_cast %282 : vector<8x128xf32> to vector<1x8x128xf32>
    tpu.vector_store %arg5[%c1_131, %c0_132, %c2432_133], %285 {strides = array<i32>} : memref<4x8x4096xf32, #tpu.memory_space<vmem>>, vector<1x8x128xf32>,
    %286 = vector.extract_strided_slice %77 {offsets = [160, 128], sizes = [8, 128], strides = [1, 1]} : vector<256x512xf32> to vector<8x128xf32>
    %c1_134 = arith.constant 1 : index
    %c0_135 = arith.constant 0 : index
    %c2560_136 = arith.constant 2560 : index
    %287 = vector.load %arg5[%c1_134, %c0_135, %c2560_136] : memref<4x8x4096xf32, #tpu.memory_space<vmem>>, vector<1x8x128xf32>
    %288 = vector.shape_cast %287 : vector<1x8x128xf32> to vector<8x128xf32>
    %289 = vector.shape_cast %286 : vector<8x128xf32> to vector<1x8x128xf32>
    tpu.vector_store %arg5[%c1_134, %c0_135, %c2560_136], %289 {strides = array<i32>} : memref<4x8x4096xf32, #tpu.memory_space<vmem>>, vector<1x8x128xf32>,
    %290 = vector.extract_strided_slice %77 {offsets = [168, 128], sizes = [8, 128], strides = [1, 1]} : vector<256x512xf32> to vector<8x128xf32>
    %c1_137 = arith.constant 1 : index
    %c0_138 = arith.constant 0 : index
    %c2688_139 = arith.constant 2688 : index
    %291 = vector.load %arg5[%c1_137, %c0_138, %c2688_139] : memref<4x8x4096xf32, #tpu.memory_space<vmem>>, vector<1x8x128xf32>
    %292 = vector.shape_cast %291 : vector<1x8x128xf32> to vector<8x128xf32>
    %293 = vector.shape_cast %290 : vector<8x128xf32> to vector<1x8x128xf32>
    tpu.vector_store %arg5[%c1_137, %c0_138, %c2688_139], %293 {strides = array<i32>} : memref<4x8x4096xf32, #tpu.memory_space<vmem>>, vector<1x8x128xf32>,
    %294 = vector.extract_strided_slice %77 {offsets = [176, 128], sizes = [8, 128], strides = [1, 1]} : vector<256x512xf32> to vector<8x128xf32>
    %c1_140 = arith.constant 1 : index
    %c0_141 = arith.constant 0 : index
    %c2816_142 = arith.constant 2816 : index
    %295 = vector.load %arg5[%c1_140, %c0_141, %c2816_142] : memref<4x8x4096xf32, #tpu.memory_space<vmem>>, vector<1x8x128xf32>
    %296 = vector.shape_cast %295 : vector<1x8x128xf32> to vector<8x128xf32>
    %297 = vector.shape_cast %294 : vector<8x128xf32> to vector<1x8x128xf32>
    tpu.vector_store %arg5[%c1_140, %c0_141, %c2816_142], %297 {strides = array<i32>} : memref<4x8x4096xf32, #tpu.memory_space<vmem>>, vector<1x8x128xf32>,
    %298 = vector.extract_strided_slice %77 {offsets = [184, 128], sizes = [8, 128], strides = [1, 1]} : vector<256x512xf32> to vector<8x128xf32>
    %c1_143 = arith.constant 1 : index
    %c0_144 = arith.constant 0 : index
    %c2944_145 = arith.constant 2944 : index
    %299 = vector.load %arg5[%c1_143, %c0_144, %c2944_145] : memref<4x8x4096xf32, #tpu.memory_space<vmem>>, vector<1x8x128xf32>
    %300 = vector.shape_cast %299 : vector<1x8x128xf32> to vector<8x128xf32>
    %301 = vector.shape_cast %298 : vector<8x128xf32> to vector<1x8x128xf32>
    tpu.vector_store %arg5[%c1_143, %c0_144, %c2944_145], %301 {strides = array<i32>} : memref<4x8x4096xf32, #tpu.memory_space<vmem>>, vector<1x8x128xf32>,
    %302 = vector.extract_strided_slice %77 {offsets = [192, 128], sizes = [8, 128], strides = [1, 1]} : vector<256x512xf32> to vector<8x128xf32>
    %c1_146 = arith.constant 1 : index
    %c0_147 = arith.constant 0 : index
    %c3072_148 = arith.constant 3072 : index
    %303 = vector.load %arg5[%c1_146, %c0_147, %c3072_148] : memref<4x8x4096xf32, #tpu.memory_space<vmem>>, vector<1x8x128xf32>
    %304 = vector.shape_cast %303 : vector<1x8x128xf32> to vector<8x128xf32>
    %305 = vector.shape_cast %302 : vector<8x128xf32> to vector<1x8x128xf32>
    tpu.vector_store %arg5[%c1_146, %c0_147, %c3072_148], %305 {strides = array<i32>} : memref<4x8x4096xf32, #tpu.memory_space<vmem>>, vector<1x8x128xf32>,
    %306 = vector.extract_strided_slice %77 {offsets = [200, 128], sizes = [8, 128], strides = [1, 1]} : vector<256x512xf32> to vector<8x128xf32>
    %c1_149 = arith.constant 1 : index
    %c0_150 = arith.constant 0 : index
    %c3200_151 = arith.constant 3200 : index
    %307 = vector.load %arg5[%c1_149, %c0_150, %c3200_151] : memref<4x8x4096xf32, #tpu.memory_space<vmem>>, vector<1x8x128xf32>
    %308 = vector.shape_cast %307 : vector<1x8x128xf32> to vector<8x128xf32>
    %309 = vector.shape_cast %306 : vector<8x128xf32> to vector<1x8x128xf32>
    tpu.vector_store %arg5[%c1_149, %c0_150, %c3200_151], %309 {strides = array<i32>} : memref<4x8x4096xf32, #tpu.memory_space<vmem>>, vector<1x8x128xf32>,
    %310 = vector.extract_strided_slice %77 {offsets = [208, 128], sizes = [8, 128], strides = [1, 1]} : vector<256x512xf32> to vector<8x128xf32>
    %c1_152 = arith.constant 1 : index
    %c0_153 = arith.constant 0 : index
    %c3328_154 = arith.constant 3328 : index
    %311 = vector.load %arg5[%c1_152, %c0_153, %c3328_154] : memref<4x8x4096xf32, #tpu.memory_space<vmem>>, vector<1x8x128xf32>
    %312 = vector.shape_cast %311 : vector<1x8x128xf32> to vector<8x128xf32>
    %313 = vector.shape_cast %310 : vector<8x128xf32> to vector<1x8x128xf32>
    tpu.vector_store %arg5[%c1_152, %c0_153, %c3328_154], %313 {strides = array<i32>} : memref<4x8x4096xf32, #tpu.memory_space<vmem>>, vector<1x8x128xf32>,
    %314 = vector.extract_strided_slice %77 {offsets = [216, 128], sizes = [8, 128], strides = [1, 1]} : vector<256x512xf32> to vector<8x128xf32>
    %c1_155 = arith.constant 1 : index
    %c0_156 = arith.constant 0 : index
    %c3456_157 = arith.constant 3456 : index
    %315 = vector.load %arg5[%c1_155, %c0_156, %c3456_157] : memref<4x8x4096xf32, #tpu.memory_space<vmem>>, vector<1x8x128xf32>
    %316 = vector.shape_cast %315 : vector<1x8x128xf32> to vector<8x128xf32>
    %317 = vector.shape_cast %314 : vector<8x128xf32> to vector<1x8x128xf32>
    tpu.vector_store %arg5[%c1_155, %c0_156, %c3456_157], %317 {strides = array<i32>} : memref<4x8x4096xf32, #tpu.memory_space<vmem>>, vector<1x8x128xf32>,
    %318 = vector.extract_strided_slice %77 {offsets = [224, 128], sizes = [8, 128], strides = [1, 1]} : vector<256x512xf32> to vector<8x128xf32>
    %c1_158 = arith.constant 1 : index
    %c0_159 = arith.constant 0 : index
    %c3584_160 = arith.constant 3584 : index
    %319 = vector.load %arg5[%c1_158, %c0_159, %c3584_160] : memref<4x8x4096xf32, #tpu.memory_space<vmem>>, vector<1x8x128xf32>
    %320 = vector.shape_cast %319 : vector<1x8x128xf32> to vector<8x128xf32>
    %321 = vector.shape_cast %318 : vector<8x128xf32> to vector<1x8x128xf32>
    tpu.vector_store %arg5[%c1_158, %c0_159, %c3584_160], %321 {strides = array<i32>} : memref<4x8x4096xf32, #tpu.memory_space<vmem>>, vector<1x8x128xf32>,
    %322 = vector.extract_strided_slice %77 {offsets = [232, 128], sizes = [8, 128], strides = [1, 1]} : vector<256x512xf32> to vector<8x128xf32>
    %c1_161 = arith.constant 1 : index
    %c0_162 = arith.constant 0 : index
    %c3712_163 = arith.constant 3712 : index
    %323 = vector.load %arg5[%c1_161, %c0_162, %c3712_163] : memref<4x8x4096xf32, #tpu.memory_space<vmem>>, vector<1x8x128xf32>
    %324 = vector.shape_cast %323 : vector<1x8x128xf32> to vector<8x128xf32>
    %325 = vector.shape_cast %322 : vector<8x128xf32> to vector<1x8x128xf32>
    tpu.vector_store %arg5[%c1_161, %c0_162, %c3712_163], %325 {strides = array<i32>} : memref<4x8x4096xf32, #tpu.memory_space<vmem>>, vector<1x8x128xf32>,
    %326 = vector.extract_strided_slice %77 {offsets = [240, 128], sizes = [8, 128], strides = [1, 1]} : vector<256x512xf32> to vector<8x128xf32>
    %c1_164 = arith.constant 1 : index
    %c0_165 = arith.constant 0 : index
    %c3840_166 = arith.constant 3840 : index
    %327 = vector.load %arg5[%c1_164, %c0_165, %c3840_166] : memref<4x8x4096xf32, #tpu.memory_space<vmem>>, vector<1x8x128xf32>
    %328 = vector.shape_cast %327 : vector<1x8x128xf32> to vector<8x128xf32>
    %329 = vector.shape_cast %326 : vector<8x128xf32> to vector<1x8x128xf32>
    tpu.vector_store %arg5[%c1_164, %c0_165, %c3840_166], %329 {strides = array<i32>} : memref<4x8x4096xf32, #tpu.memory_space<vmem>>, vector<1x8x128xf32>,
    %330 = vector.extract_strided_slice %77 {offsets = [248, 128], sizes = [8, 128], strides = [1, 1]} : vector<256x512xf32> to vector<8x128xf32>
    %c1_167 = arith.constant 1 : index
    %c0_168 = arith.constant 0 : index
    %c3968_169 = arith.constant 3968 : index
    %331 = vector.load %arg5[%c1_167, %c0_168, %c3968_169] : memref<4x8x4096xf32, #tpu.memory_space<vmem>>, vector<1x8x128xf32>
    %332 = vector.shape_cast %331 : vector<1x8x128xf32> to vector<8x128xf32>
    %333 = vector.shape_cast %330 : vector<8x128xf32> to vector<1x8x128xf32>
    tpu.vector_store %arg5[%c1_167, %c0_168, %c3968_169], %333 {strides = array<i32>} : memref<4x8x4096xf32, #tpu.memory_space<vmem>>, vector<1x8x128xf32>,
    %334 = vector.extract_strided_slice %77 {offsets = [0, 256], sizes = [8, 128], strides = [1, 1]} : vector<256x512xf32> to vector<8x128xf32>
    %c2 = arith.constant 2 : index
    %c0_170 = arith.constant 0 : index
    %c0_171 = arith.constant 0 : index
    %335 = vector.load %arg5[%c2, %c0_170, %c0_171] : memref<4x8x4096xf32, #tpu.memory_space<vmem>>, vector<1x8x128xf32>
    %336 = vector.shape_cast %335 : vector<1x8x128xf32> to vector<8x128xf32>
    %337 = vector.shape_cast %334 : vector<8x128xf32> to vector<1x8x128xf32>
    tpu.vector_store %arg5[%c2, %c0_170, %c0_171], %337 {strides = array<i32>} : memref<4x8x4096xf32, #tpu.memory_space<vmem>>, vector<1x8x128xf32>,
    %338 = vector.extract_strided_slice %77 {offsets = [8, 256], sizes = [8, 128], strides = [1, 1]} : vector<256x512xf32> to vector<8x128xf32>
    %c2_172 = arith.constant 2 : index
    %c0_173 = arith.constant 0 : index
    %c128_174 = arith.constant 128 : index
    %339 = vector.load %arg5[%c2_172, %c0_173, %c128_174] : memref<4x8x4096xf32, #tpu.memory_space<vmem>>, vector<1x8x128xf32>
    %340 = vector.shape_cast %339 : vector<1x8x128xf32> to vector<8x128xf32>
    %341 = vector.shape_cast %338 : vector<8x128xf32> to vector<1x8x128xf32>
    tpu.vector_store %arg5[%c2_172, %c0_173, %c128_174], %341 {strides = array<i32>} : memref<4x8x4096xf32, #tpu.memory_space<vmem>>, vector<1x8x128xf32>,
    %342 = vector.extract_strided_slice %77 {offsets = [16, 256], sizes = [8, 128], strides = [1, 1]} : vector<256x512xf32> to vector<8x128xf32>
    %c2_175 = arith.constant 2 : index
    %c0_176 = arith.constant 0 : index
    %c256_177 = arith.constant 256 : index
    %343 = vector.load %arg5[%c2_175, %c0_176, %c256_177] : memref<4x8x4096xf32, #tpu.memory_space<vmem>>, vector<1x8x128xf32>
    %344 = vector.shape_cast %343 : vector<1x8x128xf32> to vector<8x128xf32>
    %345 = vector.shape_cast %342 : vector<8x128xf32> to vector<1x8x128xf32>
    tpu.vector_store %arg5[%c2_175, %c0_176, %c256_177], %345 {strides = array<i32>} : memref<4x8x4096xf32, #tpu.memory_space<vmem>>, vector<1x8x128xf32>,
    %346 = vector.extract_strided_slice %77 {offsets = [24, 256], sizes = [8, 128], strides = [1, 1]} : vector<256x512xf32> to vector<8x128xf32>
    %c2_178 = arith.constant 2 : index
    %c0_179 = arith.constant 0 : index
    %c384_180 = arith.constant 384 : index
    %347 = vector.load %arg5[%c2_178, %c0_179, %c384_180] : memref<4x8x4096xf32, #tpu.memory_space<vmem>>, vector<1x8x128xf32>
    %348 = vector.shape_cast %347 : vector<1x8x128xf32> to vector<8x128xf32>
    %349 = vector.shape_cast %346 : vector<8x128xf32> to vector<1x8x128xf32>
    tpu.vector_store %arg5[%c2_178, %c0_179, %c384_180], %349 {strides = array<i32>} : memref<4x8x4096xf32, #tpu.memory_space<vmem>>, vector<1x8x128xf32>,
    %350 = vector.extract_strided_slice %77 {offsets = [32, 256], sizes = [8, 128], strides = [1, 1]} : vector<256x512xf32> to vector<8x128xf32>
    %c2_181 = arith.constant 2 : index
    %c0_182 = arith.constant 0 : index
    %c512_183 = arith.constant 512 : index
    %351 = vector.load %arg5[%c2_181, %c0_182, %c512_183] : memref<4x8x4096xf32, #tpu.memory_space<vmem>>, vector<1x8x128xf32>
    %352 = vector.shape_cast %351 : vector<1x8x128xf32> to vector<8x128xf32>
    %353 = vector.shape_cast %350 : vector<8x128xf32> to vector<1x8x128xf32>
    tpu.vector_store %arg5[%c2_181, %c0_182, %c512_183], %353 {strides = array<i32>} : memref<4x8x4096xf32, #tpu.memory_space<vmem>>, vector<1x8x128xf32>,
    %354 = vector.extract_strided_slice %77 {offsets = [40, 256], sizes = [8, 128], strides = [1, 1]} : vector<256x512xf32> to vector<8x128xf32>
    %c2_184 = arith.constant 2 : index
    %c0_185 = arith.constant 0 : index
    %c640_186 = arith.constant 640 : index
    %355 = vector.load %arg5[%c2_184, %c0_185, %c640_186] : memref<4x8x4096xf32, #tpu.memory_space<vmem>>, vector<1x8x128xf32>
    %356 = vector.shape_cast %355 : vector<1x8x128xf32> to vector<8x128xf32>
    %357 = vector.shape_cast %354 : vector<8x128xf32> to vector<1x8x128xf32>
    tpu.vector_store %arg5[%c2_184, %c0_185, %c640_186], %357 {strides = array<i32>} : memref<4x8x4096xf32, #tpu.memory_space<vmem>>, vector<1x8x128xf32>,
    %358 = vector.extract_strided_slice %77 {offsets = [48, 256], sizes = [8, 128], strides = [1, 1]} : vector<256x512xf32> to vector<8x128xf32>
    %c2_187 = arith.constant 2 : index
    %c0_188 = arith.constant 0 : index
    %c768_189 = arith.constant 768 : index
    %359 = vector.load %arg5[%c2_187, %c0_188, %c768_189] : memref<4x8x4096xf32, #tpu.memory_space<vmem>>, vector<1x8x128xf32>
    %360 = vector.shape_cast %359 : vector<1x8x128xf32> to vector<8x128xf32>
    %361 = vector.shape_cast %358 : vector<8x128xf32> to vector<1x8x128xf32>
    tpu.vector_store %arg5[%c2_187, %c0_188, %c768_189], %361 {strides = array<i32>} : memref<4x8x4096xf32, #tpu.memory_space<vmem>>, vector<1x8x128xf32>,
    %362 = vector.extract_strided_slice %77 {offsets = [56, 256], sizes = [8, 128], strides = [1, 1]} : vector<256x512xf32> to vector<8x128xf32>
    %c2_190 = arith.constant 2 : index
    %c0_191 = arith.constant 0 : index
    %c896_192 = arith.constant 896 : index
    %363 = vector.load %arg5[%c2_190, %c0_191, %c896_192] : memref<4x8x4096xf32, #tpu.memory_space<vmem>>, vector<1x8x128xf32>
    %364 = vector.shape_cast %363 : vector<1x8x128xf32> to vector<8x128xf32>
    %365 = vector.shape_cast %362 : vector<8x128xf32> to vector<1x8x128xf32>
    tpu.vector_store %arg5[%c2_190, %c0_191, %c896_192], %365 {strides = array<i32>} : memref<4x8x4096xf32, #tpu.memory_space<vmem>>, vector<1x8x128xf32>,
    %366 = vector.extract_strided_slice %77 {offsets = [64, 256], sizes = [8, 128], strides = [1, 1]} : vector<256x512xf32> to vector<8x128xf32>
    %c2_193 = arith.constant 2 : index
    %c0_194 = arith.constant 0 : index
    %c1024_195 = arith.constant 1024 : index
    %367 = vector.load %arg5[%c2_193, %c0_194, %c1024_195] : memref<4x8x4096xf32, #tpu.memory_space<vmem>>, vector<1x8x128xf32>
    %368 = vector.shape_cast %367 : vector<1x8x128xf32> to vector<8x128xf32>
    %369 = vector.shape_cast %366 : vector<8x128xf32> to vector<1x8x128xf32>
    tpu.vector_store %arg5[%c2_193, %c0_194, %c1024_195], %369 {strides = array<i32>} : memref<4x8x4096xf32, #tpu.memory_space<vmem>>, vector<1x8x128xf32>,
    %370 = vector.extract_strided_slice %77 {offsets = [72, 256], sizes = [8, 128], strides = [1, 1]} : vector<256x512xf32> to vector<8x128xf32>
    %c2_196 = arith.constant 2 : index
    %c0_197 = arith.constant 0 : index
    %c1152_198 = arith.constant 1152 : index
    %371 = vector.load %arg5[%c2_196, %c0_197, %c1152_198] : memref<4x8x4096xf32, #tpu.memory_space<vmem>>, vector<1x8x128xf32>
    %372 = vector.shape_cast %371 : vector<1x8x128xf32> to vector<8x128xf32>
    %373 = vector.shape_cast %370 : vector<8x128xf32> to vector<1x8x128xf32>
    tpu.vector_store %arg5[%c2_196, %c0_197, %c1152_198], %373 {strides = array<i32>} : memref<4x8x4096xf32, #tpu.memory_space<vmem>>, vector<1x8x128xf32>,
    %374 = vector.extract_strided_slice %77 {offsets = [80, 256], sizes = [8, 128], strides = [1, 1]} : vector<256x512xf32> to vector<8x128xf32>
    %c2_199 = arith.constant 2 : index
    %c0_200 = arith.constant 0 : index
    %c1280_201 = arith.constant 1280 : index
    %375 = vector.load %arg5[%c2_199, %c0_200, %c1280_201] : memref<4x8x4096xf32, #tpu.memory_space<vmem>>, vector<1x8x128xf32>
    %376 = vector.shape_cast %375 : vector<1x8x128xf32> to vector<8x128xf32>
    %377 = vector.shape_cast %374 : vector<8x128xf32> to vector<1x8x128xf32>
    tpu.vector_store %arg5[%c2_199, %c0_200, %c1280_201], %377 {strides = array<i32>} : memref<4x8x4096xf32, #tpu.memory_space<vmem>>, vector<1x8x128xf32>,
    %378 = vector.extract_strided_slice %77 {offsets = [88, 256], sizes = [8, 128], strides = [1, 1]} : vector<256x512xf32> to vector<8x128xf32>
    %c2_202 = arith.constant 2 : index
    %c0_203 = arith.constant 0 : index
    %c1408_204 = arith.constant 1408 : index
    %379 = vector.load %arg5[%c2_202, %c0_203, %c1408_204] : memref<4x8x4096xf32, #tpu.memory_space<vmem>>, vector<1x8x128xf32>
    %380 = vector.shape_cast %379 : vector<1x8x128xf32> to vector<8x128xf32>
    %381 = vector.shape_cast %378 : vector<8x128xf32> to vector<1x8x128xf32>
    tpu.vector_store %arg5[%c2_202, %c0_203, %c1408_204], %381 {strides = array<i32>} : memref<4x8x4096xf32, #tpu.memory_space<vmem>>, vector<1x8x128xf32>,
    %382 = vector.extract_strided_slice %77 {offsets = [96, 256], sizes = [8, 128], strides = [1, 1]} : vector<256x512xf32> to vector<8x128xf32>
    %c2_205 = arith.constant 2 : index
    %c0_206 = arith.constant 0 : index
    %c1536_207 = arith.constant 1536 : index
    %383 = vector.load %arg5[%c2_205, %c0_206, %c1536_207] : memref<4x8x4096xf32, #tpu.memory_space<vmem>>, vector<1x8x128xf32>
    %384 = vector.shape_cast %383 : vector<1x8x128xf32> to vector<8x128xf32>
    %385 = vector.shape_cast %382 : vector<8x128xf32> to vector<1x8x128xf32>
    tpu.vector_store %arg5[%c2_205, %c0_206, %c1536_207], %385 {strides = array<i32>} : memref<4x8x4096xf32, #tpu.memory_space<vmem>>, vector<1x8x128xf32>,
    %386 = vector.extract_strided_slice %77 {offsets = [104, 256], sizes = [8, 128], strides = [1, 1]} : vector<256x512xf32> to vector<8x128xf32>
    %c2_208 = arith.constant 2 : index
    %c0_209 = arith.constant 0 : index
    %c1664_210 = arith.constant 1664 : index
    %387 = vector.load %arg5[%c2_208, %c0_209, %c1664_210] : memref<4x8x4096xf32, #tpu.memory_space<vmem>>, vector<1x8x128xf32>
    %388 = vector.shape_cast %387 : vector<1x8x128xf32> to vector<8x128xf32>
    %389 = vector.shape_cast %386 : vector<8x128xf32> to vector<1x8x128xf32>
    tpu.vector_store %arg5[%c2_208, %c0_209, %c1664_210], %389 {strides = array<i32>} : memref<4x8x4096xf32, #tpu.memory_space<vmem>>, vector<1x8x128xf32>,
    %390 = vector.extract_strided_slice %77 {offsets = [112, 256], sizes = [8, 128], strides = [1, 1]} : vector<256x512xf32> to vector<8x128xf32>
    %c2_211 = arith.constant 2 : index
    %c0_212 = arith.constant 0 : index
    %c1792_213 = arith.constant 1792 : index
    %391 = vector.load %arg5[%c2_211, %c0_212, %c1792_213] : memref<4x8x4096xf32, #tpu.memory_space<vmem>>, vector<1x8x128xf32>
    %392 = vector.shape_cast %391 : vector<1x8x128xf32> to vector<8x128xf32>
    %393 = vector.shape_cast %390 : vector<8x128xf32> to vector<1x8x128xf32>
    tpu.vector_store %arg5[%c2_211, %c0_212, %c1792_213], %393 {strides = array<i32>} : memref<4x8x4096xf32, #tpu.memory_space<vmem>>, vector<1x8x128xf32>,
    %394 = vector.extract_strided_slice %77 {offsets = [120, 256], sizes = [8, 128], strides = [1, 1]} : vector<256x512xf32> to vector<8x128xf32>
    %c2_214 = arith.constant 2 : index
    %c0_215 = arith.constant 0 : index
    %c1920_216 = arith.constant 1920 : index
    %395 = vector.load %arg5[%c2_214, %c0_215, %c1920_216] : memref<4x8x4096xf32, #tpu.memory_space<vmem>>, vector<1x8x128xf32>
    %396 = vector.shape_cast %395 : vector<1x8x128xf32> to vector<8x128xf32>
    %397 = vector.shape_cast %394 : vector<8x128xf32> to vector<1x8x128xf32>
    tpu.vector_store %arg5[%c2_214, %c0_215, %c1920_216], %397 {strides = array<i32>} : memref<4x8x4096xf32, #tpu.memory_space<vmem>>, vector<1x8x128xf32>,
    %398 = vector.extract_strided_slice %77 {offsets = [128, 256], sizes = [8, 128], strides = [1, 1]} : vector<256x512xf32> to vector<8x128xf32>
    %c2_217 = arith.constant 2 : index
    %c0_218 = arith.constant 0 : index
    %c2048_219 = arith.constant 2048 : index
    %399 = vector.load %arg5[%c2_217, %c0_218, %c2048_219] : memref<4x8x4096xf32, #tpu.memory_space<vmem>>, vector<1x8x128xf32>
    %400 = vector.shape_cast %399 : vector<1x8x128xf32> to vector<8x128xf32>
    %401 = vector.shape_cast %398 : vector<8x128xf32> to vector<1x8x128xf32>
    tpu.vector_store %arg5[%c2_217, %c0_218, %c2048_219], %401 {strides = array<i32>} : memref<4x8x4096xf32, #tpu.memory_space<vmem>>, vector<1x8x128xf32>,
    %402 = vector.extract_strided_slice %77 {offsets = [136, 256], sizes = [8, 128], strides = [1, 1]} : vector<256x512xf32> to vector<8x128xf32>
    %c2_220 = arith.constant 2 : index
    %c0_221 = arith.constant 0 : index
    %c2176_222 = arith.constant 2176 : index
    %403 = vector.load %arg5[%c2_220, %c0_221, %c2176_222] : memref<4x8x4096xf32, #tpu.memory_space<vmem>>, vector<1x8x128xf32>
    %404 = vector.shape_cast %403 : vector<1x8x128xf32> to vector<8x128xf32>
    %405 = vector.shape_cast %402 : vector<8x128xf32> to vector<1x8x128xf32>
    tpu.vector_store %arg5[%c2_220, %c0_221, %c2176_222], %405 {strides = array<i32>} : memref<4x8x4096xf32, #tpu.memory_space<vmem>>, vector<1x8x128xf32>,
    %406 = vector.extract_strided_slice %77 {offsets = [144, 256], sizes = [8, 128], strides = [1, 1]} : vector<256x512xf32> to vector<8x128xf32>
    %c2_223 = arith.constant 2 : index
    %c0_224 = arith.constant 0 : index
    %c2304_225 = arith.constant 2304 : index
    %407 = vector.load %arg5[%c2_223, %c0_224, %c2304_225] : memref<4x8x4096xf32, #tpu.memory_space<vmem>>, vector<1x8x128xf32>
    %408 = vector.shape_cast %407 : vector<1x8x128xf32> to vector<8x128xf32>
    %409 = vector.shape_cast %406 : vector<8x128xf32> to vector<1x8x128xf32>
    tpu.vector_store %arg5[%c2_223, %c0_224, %c2304_225], %409 {strides = array<i32>} : memref<4x8x4096xf32, #tpu.memory_space<vmem>>, vector<1x8x128xf32>,
    %410 = vector.extract_strided_slice %77 {offsets = [152, 256], sizes = [8, 128], strides = [1, 1]} : vector<256x512xf32> to vector<8x128xf32>
    %c2_226 = arith.constant 2 : index
    %c0_227 = arith.constant 0 : index
    %c2432_228 = arith.constant 2432 : index
    %411 = vector.load %arg5[%c2_226, %c0_227, %c2432_228] : memref<4x8x4096xf32, #tpu.memory_space<vmem>>, vector<1x8x128xf32>
    %412 = vector.shape_cast %411 : vector<1x8x128xf32> to vector<8x128xf32>
    %413 = vector.shape_cast %410 : vector<8x128xf32> to vector<1x8x128xf32>
    tpu.vector_store %arg5[%c2_226, %c0_227, %c2432_228], %413 {strides = array<i32>} : memref<4x8x4096xf32, #tpu.memory_space<vmem>>, vector<1x8x128xf32>,
    %414 = vector.extract_strided_slice %77 {offsets = [160, 256], sizes = [8, 128], strides = [1, 1]} : vector<256x512xf32> to vector<8x128xf32>
    %c2_229 = arith.constant 2 : index
    %c0_230 = arith.constant 0 : index
    %c2560_231 = arith.constant 2560 : index
    %415 = vector.load %arg5[%c2_229, %c0_230, %c2560_231] : memref<4x8x4096xf32, #tpu.memory_space<vmem>>, vector<1x8x128xf32>
    %416 = vector.shape_cast %415 : vector<1x8x128xf32> to vector<8x128xf32>
    %417 = vector.shape_cast %414 : vector<8x128xf32> to vector<1x8x128xf32>
    tpu.vector_store %arg5[%c2_229, %c0_230, %c2560_231], %417 {strides = array<i32>} : memref<4x8x4096xf32, #tpu.memory_space<vmem>>, vector<1x8x128xf32>,
    %418 = vector.extract_strided_slice %77 {offsets = [168, 256], sizes = [8, 128], strides = [1, 1]} : vector<256x512xf32> to vector<8x128xf32>
    %c2_232 = arith.constant 2 : index
    %c0_233 = arith.constant 0 : index
    %c2688_234 = arith.constant 2688 : index
    %419 = vector.load %arg5[%c2_232, %c0_233, %c2688_234] : memref<4x8x4096xf32, #tpu.memory_space<vmem>>, vector<1x8x128xf32>
    %420 = vector.shape_cast %419 : vector<1x8x128xf32> to vector<8x128xf32>
    %421 = vector.shape_cast %418 : vector<8x128xf32> to vector<1x8x128xf32>
    tpu.vector_store %arg5[%c2_232, %c0_233, %c2688_234], %421 {strides = array<i32>} : memref<4x8x4096xf32, #tpu.memory_space<vmem>>, vector<1x8x128xf32>,
    %422 = vector.extract_strided_slice %77 {offsets = [176, 256], sizes = [8, 128], strides = [1, 1]} : vector<256x512xf32> to vector<8x128xf32>
    %c2_235 = arith.constant 2 : index
    %c0_236 = arith.constant 0 : index
    %c2816_237 = arith.constant 2816 : index
    %423 = vector.load %arg5[%c2_235, %c0_236, %c2816_237] : memref<4x8x4096xf32, #tpu.memory_space<vmem>>, vector<1x8x128xf32>
    %424 = vector.shape_cast %423 : vector<1x8x128xf32> to vector<8x128xf32>
    %425 = vector.shape_cast %422 : vector<8x128xf32> to vector<1x8x128xf32>
    tpu.vector_store %arg5[%c2_235, %c0_236, %c2816_237], %425 {strides = array<i32>} : memref<4x8x4096xf32, #tpu.memory_space<vmem>>, vector<1x8x128xf32>,
    %426 = vector.extract_strided_slice %77 {offsets = [184, 256], sizes = [8, 128], strides = [1, 1]} : vector<256x512xf32> to vector<8x128xf32>
    %c2_238 = arith.constant 2 : index
    %c0_239 = arith.constant 0 : index
    %c2944_240 = arith.constant 2944 : index
    %427 = vector.load %arg5[%c2_238, %c0_239, %c2944_240] : memref<4x8x4096xf32, #tpu.memory_space<vmem>>, vector<1x8x128xf32>
    %428 = vector.shape_cast %427 : vector<1x8x128xf32> to vector<8x128xf32>
    %429 = vector.shape_cast %426 : vector<8x128xf32> to vector<1x8x128xf32>
    tpu.vector_store %arg5[%c2_238, %c0_239, %c2944_240], %429 {strides = array<i32>} : memref<4x8x4096xf32, #tpu.memory_space<vmem>>, vector<1x8x128xf32>,
    %430 = vector.extract_strided_slice %77 {offsets = [192, 256], sizes = [8, 128], strides = [1, 1]} : vector<256x512xf32> to vector<8x128xf32>
    %c2_241 = arith.constant 2 : index
    %c0_242 = arith.constant 0 : index
    %c3072_243 = arith.constant 3072 : index
    %431 = vector.load %arg5[%c2_241, %c0_242, %c3072_243] : memref<4x8x4096xf32, #tpu.memory_space<vmem>>, vector<1x8x128xf32>
    %432 = vector.shape_cast %431 : vector<1x8x128xf32> to vector<8x128xf32>
    %433 = vector.shape_cast %430 : vector<8x128xf32> to vector<1x8x128xf32>
    tpu.vector_store %arg5[%c2_241, %c0_242, %c3072_243], %433 {strides = array<i32>} : memref<4x8x4096xf32, #tpu.memory_space<vmem>>, vector<1x8x128xf32>,
    %434 = vector.extract_strided_slice %77 {offsets = [200, 256], sizes = [8, 128], strides = [1, 1]} : vector<256x512xf32> to vector<8x128xf32>
    %c2_244 = arith.constant 2 : index
    %c0_245 = arith.constant 0 : index
    %c3200_246 = arith.constant 3200 : index
    %435 = vector.load %arg5[%c2_244, %c0_245, %c3200_246] : memref<4x8x4096xf32, #tpu.memory_space<vmem>>, vector<1x8x128xf32>
    %436 = vector.shape_cast %435 : vector<1x8x128xf32> to vector<8x128xf32>
    %437 = vector.shape_cast %434 : vector<8x128xf32> to vector<1x8x128xf32>
    tpu.vector_store %arg5[%c2_244, %c0_245, %c3200_246], %437 {strides = array<i32>} : memref<4x8x4096xf32, #tpu.memory_space<vmem>>, vector<1x8x128xf32>,
    %438 = vector.extract_strided_slice %77 {offsets = [208, 256], sizes = [8, 128], strides = [1, 1]} : vector<256x512xf32> to vector<8x128xf32>
    %c2_247 = arith.constant 2 : index
    %c0_248 = arith.constant 0 : index
    %c3328_249 = arith.constant 3328 : index
    %439 = vector.load %arg5[%c2_247, %c0_248, %c3328_249] : memref<4x8x4096xf32, #tpu.memory_space<vmem>>, vector<1x8x128xf32>
    %440 = vector.shape_cast %439 : vector<1x8x128xf32> to vector<8x128xf32>
    %441 = vector.shape_cast %438 : vector<8x128xf32> to vector<1x8x128xf32>
    tpu.vector_store %arg5[%c2_247, %c0_248, %c3328_249], %441 {strides = array<i32>} : memref<4x8x4096xf32, #tpu.memory_space<vmem>>, vector<1x8x128xf32>,
    %442 = vector.extract_strided_slice %77 {offsets = [216, 256], sizes = [8, 128], strides = [1, 1]} : vector<256x512xf32> to vector<8x128xf32>
    %c2_250 = arith.constant 2 : index
    %c0_251 = arith.constant 0 : index
    %c3456_252 = arith.constant 3456 : index
    %443 = vector.load %arg5[%c2_250, %c0_251, %c3456_252] : memref<4x8x4096xf32, #tpu.memory_space<vmem>>, vector<1x8x128xf32>
    %444 = vector.shape_cast %443 : vector<1x8x128xf32> to vector<8x128xf32>
    %445 = vector.shape_cast %442 : vector<8x128xf32> to vector<1x8x128xf32>
    tpu.vector_store %arg5[%c2_250, %c0_251, %c3456_252], %445 {strides = array<i32>} : memref<4x8x4096xf32, #tpu.memory_space<vmem>>, vector<1x8x128xf32>,
    %446 = vector.extract_strided_slice %77 {offsets = [224, 256], sizes = [8, 128], strides = [1, 1]} : vector<256x512xf32> to vector<8x128xf32>
    %c2_253 = arith.constant 2 : index
    %c0_254 = arith.constant 0 : index
    %c3584_255 = arith.constant 3584 : index
    %447 = vector.load %arg5[%c2_253, %c0_254, %c3584_255] : memref<4x8x4096xf32, #tpu.memory_space<vmem>>, vector<1x8x128xf32>
    %448 = vector.shape_cast %447 : vector<1x8x128xf32> to vector<8x128xf32>
    %449 = vector.shape_cast %446 : vector<8x128xf32> to vector<1x8x128xf32>
    tpu.vector_store %arg5[%c2_253, %c0_254, %c3584_255], %449 {strides = array<i32>} : memref<4x8x4096xf32, #tpu.memory_space<vmem>>, vector<1x8x128xf32>,
    %450 = vector.extract_strided_slice %77 {offsets = [232, 256], sizes = [8, 128], strides = [1, 1]} : vector<256x512xf32> to vector<8x128xf32>
    %c2_256 = arith.constant 2 : index
    %c0_257 = arith.constant 0 : index
    %c3712_258 = arith.constant 3712 : index
    %451 = vector.load %arg5[%c2_256, %c0_257, %c3712_258] : memref<4x8x4096xf32, #tpu.memory_space<vmem>>, vector<1x8x128xf32>
    %452 = vector.shape_cast %451 : vector<1x8x128xf32> to vector<8x128xf32>
    %453 = vector.shape_cast %450 : vector<8x128xf32> to vector<1x8x128xf32>
    tpu.vector_store %arg5[%c2_256, %c0_257, %c3712_258], %453 {strides = array<i32>} : memref<4x8x4096xf32, #tpu.memory_space<vmem>>, vector<1x8x128xf32>,
    %454 = vector.extract_strided_slice %77 {offsets = [240, 256], sizes = [8, 128], strides = [1, 1]} : vector<256x512xf32> to vector<8x128xf32>
    %c2_259 = arith.constant 2 : index
    %c0_260 = arith.constant 0 : index
    %c3840_261 = arith.constant 3840 : index
    %455 = vector.load %arg5[%c2_259, %c0_260, %c3840_261] : memref<4x8x4096xf32, #tpu.memory_space<vmem>>, vector<1x8x128xf32>
    %456 = vector.shape_cast %455 : vector<1x8x128xf32> to vector<8x128xf32>
    %457 = vector.shape_cast %454 : vector<8x128xf32> to vector<1x8x128xf32>
    tpu.vector_store %arg5[%c2_259, %c0_260, %c3840_261], %457 {strides = array<i32>} : memref<4x8x4096xf32, #tpu.memory_space<vmem>>, vector<1x8x128xf32>,
    %458 = vector.extract_strided_slice %77 {offsets = [248, 256], sizes = [8, 128], strides = [1, 1]} : vector<256x512xf32> to vector<8x128xf32>
    %c2_262 = arith.constant 2 : index
    %c0_263 = arith.constant 0 : index
    %c3968_264 = arith.constant 3968 : index
    %459 = vector.load %arg5[%c2_262, %c0_263, %c3968_264] : memref<4x8x4096xf32, #tpu.memory_space<vmem>>, vector<1x8x128xf32>
    %460 = vector.shape_cast %459 : vector<1x8x128xf32> to vector<8x128xf32>
    %461 = vector.shape_cast %458 : vector<8x128xf32> to vector<1x8x128xf32>
    tpu.vector_store %arg5[%c2_262, %c0_263, %c3968_264], %461 {strides = array<i32>} : memref<4x8x4096xf32, #tpu.memory_space<vmem>>, vector<1x8x128xf32>,
    %462 = vector.extract_strided_slice %77 {offsets = [0, 384], sizes = [8, 128], strides = [1, 1]} : vector<256x512xf32> to vector<8x128xf32>
    %c3 = arith.constant 3 : index
    %c0_265 = arith.constant 0 : index
    %c0_266 = arith.constant 0 : index
    %463 = vector.load %arg5[%c3, %c0_265, %c0_266] : memref<4x8x4096xf32, #tpu.memory_space<vmem>>, vector<1x8x128xf32>
    %464 = vector.shape_cast %463 : vector<1x8x128xf32> to vector<8x128xf32>
    %465 = vector.shape_cast %462 : vector<8x128xf32> to vector<1x8x128xf32>
    tpu.vector_store %arg5[%c3, %c0_265, %c0_266], %465 {strides = array<i32>} : memref<4x8x4096xf32, #tpu.memory_space<vmem>>, vector<1x8x128xf32>,
    %466 = vector.extract_strided_slice %77 {offsets = [8, 384], sizes = [8, 128], strides = [1, 1]} : vector<256x512xf32> to vector<8x128xf32>
    %c3_267 = arith.constant 3 : index
    %c0_268 = arith.constant 0 : index
    %c128_269 = arith.constant 128 : index
    %467 = vector.load %arg5[%c3_267, %c0_268, %c128_269] : memref<4x8x4096xf32, #tpu.memory_space<vmem>>, vector<1x8x128xf32>
    %468 = vector.shape_cast %467 : vector<1x8x128xf32> to vector<8x128xf32>
    %469 = vector.shape_cast %466 : vector<8x128xf32> to vector<1x8x128xf32>
    tpu.vector_store %arg5[%c3_267, %c0_268, %c128_269], %469 {strides = array<i32>} : memref<4x8x4096xf32, #tpu.memory_space<vmem>>, vector<1x8x128xf32>,
    %470 = vector.extract_strided_slice %77 {offsets = [16, 384], sizes = [8, 128], strides = [1, 1]} : vector<256x512xf32> to vector<8x128xf32>
    %c3_270 = arith.constant 3 : index
    %c0_271 = arith.constant 0 : index
    %c256_272 = arith.constant 256 : index
    %471 = vector.load %arg5[%c3_270, %c0_271, %c256_272] : memref<4x8x4096xf32, #tpu.memory_space<vmem>>, vector<1x8x128xf32>
    %472 = vector.shape_cast %471 : vector<1x8x128xf32> to vector<8x128xf32>
    %473 = vector.shape_cast %470 : vector<8x128xf32> to vector<1x8x128xf32>
    tpu.vector_store %arg5[%c3_270, %c0_271, %c256_272], %473 {strides = array<i32>} : memref<4x8x4096xf32, #tpu.memory_space<vmem>>, vector<1x8x128xf32>,
    %474 = vector.extract_strided_slice %77 {offsets = [24, 384], sizes = [8, 128], strides = [1, 1]} : vector<256x512xf32> to vector<8x128xf32>
    %c3_273 = arith.constant 3 : index
    %c0_274 = arith.constant 0 : index
    %c384_275 = arith.constant 384 : index
    %475 = vector.load %arg5[%c3_273, %c0_274, %c384_275] : memref<4x8x4096xf32, #tpu.memory_space<vmem>>, vector<1x8x128xf32>
    %476 = vector.shape_cast %475 : vector<1x8x128xf32> to vector<8x128xf32>
    %477 = vector.shape_cast %474 : vector<8x128xf32> to vector<1x8x128xf32>
    tpu.vector_store %arg5[%c3_273, %c0_274, %c384_275], %477 {strides = array<i32>} : memref<4x8x4096xf32, #tpu.memory_space<vmem>>, vector<1x8x128xf32>,
    %478 = vector.extract_strided_slice %77 {offsets = [32, 384], sizes = [8, 128], strides = [1, 1]} : vector<256x512xf32> to vector<8x128xf32>
    %c3_276 = arith.constant 3 : index
    %c0_277 = arith.constant 0 : index
    %c512_278 = arith.constant 512 : index
    %479 = vector.load %arg5[%c3_276, %c0_277, %c512_278] : memref<4x8x4096xf32, #tpu.memory_space<vmem>>, vector<1x8x128xf32>
    %480 = vector.shape_cast %479 : vector<1x8x128xf32> to vector<8x128xf32>
    %481 = vector.shape_cast %478 : vector<8x128xf32> to vector<1x8x128xf32>
    tpu.vector_store %arg5[%c3_276, %c0_277, %c512_278], %481 {strides = array<i32>} : memref<4x8x4096xf32, #tpu.memory_space<vmem>>, vector<1x8x128xf32>,
    %482 = vector.extract_strided_slice %77 {offsets = [40, 384], sizes = [8, 128], strides = [1, 1]} : vector<256x512xf32> to vector<8x128xf32>
    %c3_279 = arith.constant 3 : index
    %c0_280 = arith.constant 0 : index
    %c640_281 = arith.constant 640 : index
    %483 = vector.load %arg5[%c3_279, %c0_280, %c640_281] : memref<4x8x4096xf32, #tpu.memory_space<vmem>>, vector<1x8x128xf32>
    %484 = vector.shape_cast %483 : vector<1x8x128xf32> to vector<8x128xf32>
    %485 = vector.shape_cast %482 : vector<8x128xf32> to vector<1x8x128xf32>
    tpu.vector_store %arg5[%c3_279, %c0_280, %c640_281], %485 {strides = array<i32>} : memref<4x8x4096xf32, #tpu.memory_space<vmem>>, vector<1x8x128xf32>,
    %486 = vector.extract_strided_slice %77 {offsets = [48, 384], sizes = [8, 128], strides = [1, 1]} : vector<256x512xf32> to vector<8x128xf32>
    %c3_282 = arith.constant 3 : index
    %c0_283 = arith.constant 0 : index
    %c768_284 = arith.constant 768 : index
    %487 = vector.load %arg5[%c3_282, %c0_283, %c768_284] : memref<4x8x4096xf32, #tpu.memory_space<vmem>>, vector<1x8x128xf32>
    %488 = vector.shape_cast %487 : vector<1x8x128xf32> to vector<8x128xf32>
    %489 = vector.shape_cast %486 : vector<8x128xf32> to vector<1x8x128xf32>
    tpu.vector_store %arg5[%c3_282, %c0_283, %c768_284], %489 {strides = array<i32>} : memref<4x8x4096xf32, #tpu.memory_space<vmem>>, vector<1x8x128xf32>,
    %490 = vector.extract_strided_slice %77 {offsets = [56, 384], sizes = [8, 128], strides = [1, 1]} : vector<256x512xf32> to vector<8x128xf32>
    %c3_285 = arith.constant 3 : index
    %c0_286 = arith.constant 0 : index
    %c896_287 = arith.constant 896 : index
    %491 = vector.load %arg5[%c3_285, %c0_286, %c896_287] : memref<4x8x4096xf32, #tpu.memory_space<vmem>>, vector<1x8x128xf32>
    %492 = vector.shape_cast %491 : vector<1x8x128xf32> to vector<8x128xf32>
    %493 = vector.shape_cast %490 : vector<8x128xf32> to vector<1x8x128xf32>
    tpu.vector_store %arg5[%c3_285, %c0_286, %c896_287], %493 {strides = array<i32>} : memref<4x8x4096xf32, #tpu.memory_space<vmem>>, vector<1x8x128xf32>,
    %494 = vector.extract_strided_slice %77 {offsets = [64, 384], sizes = [8, 128], strides = [1, 1]} : vector<256x512xf32> to vector<8x128xf32>
    %c3_288 = arith.constant 3 : index
    %c0_289 = arith.constant 0 : index
    %c1024_290 = arith.constant 1024 : index
    %495 = vector.load %arg5[%c3_288, %c0_289, %c1024_290] : memref<4x8x4096xf32, #tpu.memory_space<vmem>>, vector<1x8x128xf32>
    %496 = vector.shape_cast %495 : vector<1x8x128xf32> to vector<8x128xf32>
    %497 = vector.shape_cast %494 : vector<8x128xf32> to vector<1x8x128xf32>
    tpu.vector_store %arg5[%c3_288, %c0_289, %c1024_290], %497 {strides = array<i32>} : memref<4x8x4096xf32, #tpu.memory_space<vmem>>, vector<1x8x128xf32>,
    %498 = vector.extract_strided_slice %77 {offsets = [72, 384], sizes = [8, 128], strides = [1, 1]} : vector<256x512xf32> to vector<8x128xf32>
    %c3_291 = arith.constant 3 : index
    %c0_292 = arith.constant 0 : index
    %c1152_293 = arith.constant 1152 : index
    %499 = vector.load %arg5[%c3_291, %c0_292, %c1152_293] : memref<4x8x4096xf32, #tpu.memory_space<vmem>>, vector<1x8x128xf32>
    %500 = vector.shape_cast %499 : vector<1x8x128xf32> to vector<8x128xf32>
    %501 = vector.shape_cast %498 : vector<8x128xf32> to vector<1x8x128xf32>
    tpu.vector_store %arg5[%c3_291, %c0_292, %c1152_293], %501 {strides = array<i32>} : memref<4x8x4096xf32, #tpu.memory_space<vmem>>, vector<1x8x128xf32>,
    %502 = vector.extract_strided_slice %77 {offsets = [80, 384], sizes = [8, 128], strides = [1, 1]} : vector<256x512xf32> to vector<8x128xf32>
    %c3_294 = arith.constant 3 : index
    %c0_295 = arith.constant 0 : index
    %c1280_296 = arith.constant 1280 : index
    %503 = vector.load %arg5[%c3_294, %c0_295, %c1280_296] : memref<4x8x4096xf32, #tpu.memory_space<vmem>>, vector<1x8x128xf32>
    %504 = vector.shape_cast %503 : vector<1x8x128xf32> to vector<8x128xf32>
    %505 = vector.shape_cast %502 : vector<8x128xf32> to vector<1x8x128xf32>
    tpu.vector_store %arg5[%c3_294, %c0_295, %c1280_296], %505 {strides = array<i32>} : memref<4x8x4096xf32, #tpu.memory_space<vmem>>, vector<1x8x128xf32>,
    %506 = vector.extract_strided_slice %77 {offsets = [88, 384], sizes = [8, 128], strides = [1, 1]} : vector<256x512xf32> to vector<8x128xf32>
    %c3_297 = arith.constant 3 : index
    %c0_298 = arith.constant 0 : index
    %c1408_299 = arith.constant 1408 : index
    %507 = vector.load %arg5[%c3_297, %c0_298, %c1408_299] : memref<4x8x4096xf32, #tpu.memory_space<vmem>>, vector<1x8x128xf32>
    %508 = vector.shape_cast %507 : vector<1x8x128xf32> to vector<8x128xf32>
    %509 = vector.shape_cast %506 : vector<8x128xf32> to vector<1x8x128xf32>
    tpu.vector_store %arg5[%c3_297, %c0_298, %c1408_299], %509 {strides = array<i32>} : memref<4x8x4096xf32, #tpu.memory_space<vmem>>, vector<1x8x128xf32>,
    %510 = vector.extract_strided_slice %77 {offsets = [96, 384], sizes = [8, 128], strides = [1, 1]} : vector<256x512xf32> to vector<8x128xf32>
    %c3_300 = arith.constant 3 : index
    %c0_301 = arith.constant 0 : index
    %c1536_302 = arith.constant 1536 : index
    %511 = vector.load %arg5[%c3_300, %c0_301, %c1536_302] : memref<4x8x4096xf32, #tpu.memory_space<vmem>>, vector<1x8x128xf32>
    %512 = vector.shape_cast %511 : vector<1x8x128xf32> to vector<8x128xf32>
    %513 = vector.shape_cast %510 : vector<8x128xf32> to vector<1x8x128xf32>
    tpu.vector_store %arg5[%c3_300, %c0_301, %c1536_302], %513 {strides = array<i32>} : memref<4x8x4096xf32, #tpu.memory_space<vmem>>, vector<1x8x128xf32>,
    %514 = vector.extract_strided_slice %77 {offsets = [104, 384], sizes = [8, 128], strides = [1, 1]} : vector<256x512xf32> to vector<8x128xf32>
    %c3_303 = arith.constant 3 : index
    %c0_304 = arith.constant 0 : index
    %c1664_305 = arith.constant 1664 : index
    %515 = vector.load %arg5[%c3_303, %c0_304, %c1664_305] : memref<4x8x4096xf32, #tpu.memory_space<vmem>>, vector<1x8x128xf32>
    %516 = vector.shape_cast %515 : vector<1x8x128xf32> to vector<8x128xf32>
    %517 = vector.shape_cast %514 : vector<8x128xf32> to vector<1x8x128xf32>
    tpu.vector_store %arg5[%c3_303, %c0_304, %c1664_305], %517 {strides = array<i32>} : memref<4x8x4096xf32, #tpu.memory_space<vmem>>, vector<1x8x128xf32>,
    %518 = vector.extract_strided_slice %77 {offsets = [112, 384], sizes = [8, 128], strides = [1, 1]} : vector<256x512xf32> to vector<8x128xf32>
    %c3_306 = arith.constant 3 : index
    %c0_307 = arith.constant 0 : index
    %c1792_308 = arith.constant 1792 : index
    %519 = vector.load %arg5[%c3_306, %c0_307, %c1792_308] : memref<4x8x4096xf32, #tpu.memory_space<vmem>>, vector<1x8x128xf32>
    %520 = vector.shape_cast %519 : vector<1x8x128xf32> to vector<8x128xf32>
    %521 = vector.shape_cast %518 : vector<8x128xf32> to vector<1x8x128xf32>
    tpu.vector_store %arg5[%c3_306, %c0_307, %c1792_308], %521 {strides = array<i32>} : memref<4x8x4096xf32, #tpu.memory_space<vmem>>, vector<1x8x128xf32>,
    %522 = vector.extract_strided_slice %77 {offsets = [120, 384], sizes = [8, 128], strides = [1, 1]} : vector<256x512xf32> to vector<8x128xf32>
    %c3_309 = arith.constant 3 : index
    %c0_310 = arith.constant 0 : index
    %c1920_311 = arith.constant 1920 : index
    %523 = vector.load %arg5[%c3_309, %c0_310, %c1920_311] : memref<4x8x4096xf32, #tpu.memory_space<vmem>>, vector<1x8x128xf32>
    %524 = vector.shape_cast %523 : vector<1x8x128xf32> to vector<8x128xf32>
    %525 = vector.shape_cast %522 : vector<8x128xf32> to vector<1x8x128xf32>
    tpu.vector_store %arg5[%c3_309, %c0_310, %c1920_311], %525 {strides = array<i32>} : memref<4x8x4096xf32, #tpu.memory_space<vmem>>, vector<1x8x128xf32>,
    %526 = vector.extract_strided_slice %77 {offsets = [128, 384], sizes = [8, 128], strides = [1, 1]} : vector<256x512xf32> to vector<8x128xf32>
    %c3_312 = arith.constant 3 : index
    %c0_313 = arith.constant 0 : index
    %c2048_314 = arith.constant 2048 : index
    %527 = vector.load %arg5[%c3_312, %c0_313, %c2048_314] : memref<4x8x4096xf32, #tpu.memory_space<vmem>>, vector<1x8x128xf32>
    %528 = vector.shape_cast %527 : vector<1x8x128xf32> to vector<8x128xf32>
    %529 = vector.shape_cast %526 : vector<8x128xf32> to vector<1x8x128xf32>
    tpu.vector_store %arg5[%c3_312, %c0_313, %c2048_314], %529 {strides = array<i32>} : memref<4x8x4096xf32, #tpu.memory_space<vmem>>, vector<1x8x128xf32>,
    %530 = vector.extract_strided_slice %77 {offsets = [136, 384], sizes = [8, 128], strides = [1, 1]} : vector<256x512xf32> to vector<8x128xf32>
    %c3_315 = arith.constant 3 : index
    %c0_316 = arith.constant 0 : index
    %c2176_317 = arith.constant 2176 : index
    %531 = vector.load %arg5[%c3_315, %c0_316, %c2176_317] : memref<4x8x4096xf32, #tpu.memory_space<vmem>>, vector<1x8x128xf32>
    %532 = vector.shape_cast %531 : vector<1x8x128xf32> to vector<8x128xf32>
    %533 = vector.shape_cast %530 : vector<8x128xf32> to vector<1x8x128xf32>
    tpu.vector_store %arg5[%c3_315, %c0_316, %c2176_317], %533 {strides = array<i32>} : memref<4x8x4096xf32, #tpu.memory_space<vmem>>, vector<1x8x128xf32>,
    %534 = vector.extract_strided_slice %77 {offsets = [144, 384], sizes = [8, 128], strides = [1, 1]} : vector<256x512xf32> to vector<8x128xf32>
    %c3_318 = arith.constant 3 : index
    %c0_319 = arith.constant 0 : index
    %c2304_320 = arith.constant 2304 : index
    %535 = vector.load %arg5[%c3_318, %c0_319, %c2304_320] : memref<4x8x4096xf32, #tpu.memory_space<vmem>>, vector<1x8x128xf32>
    %536 = vector.shape_cast %535 : vector<1x8x128xf32> to vector<8x128xf32>
    %537 = vector.shape_cast %534 : vector<8x128xf32> to vector<1x8x128xf32>
    tpu.vector_store %arg5[%c3_318, %c0_319, %c2304_320], %537 {strides = array<i32>} : memref<4x8x4096xf32, #tpu.memory_space<vmem>>, vector<1x8x128xf32>,
    %538 = vector.extract_strided_slice %77 {offsets = [152, 384], sizes = [8, 128], strides = [1, 1]} : vector<256x512xf32> to vector<8x128xf32>
    %c3_321 = arith.constant 3 : index
    %c0_322 = arith.constant 0 : index
    %c2432_323 = arith.constant 2432 : index
    %539 = vector.load %arg5[%c3_321, %c0_322, %c2432_323] : memref<4x8x4096xf32, #tpu.memory_space<vmem>>, vector<1x8x128xf32>
    %540 = vector.shape_cast %539 : vector<1x8x128xf32> to vector<8x128xf32>
    %541 = vector.shape_cast %538 : vector<8x128xf32> to vector<1x8x128xf32>
    tpu.vector_store %arg5[%c3_321, %c0_322, %c2432_323], %541 {strides = array<i32>} : memref<4x8x4096xf32, #tpu.memory_space<vmem>>, vector<1x8x128xf32>,
    %542 = vector.extract_strided_slice %77 {offsets = [160, 384], sizes = [8, 128], strides = [1, 1]} : vector<256x512xf32> to vector<8x128xf32>
    %c3_324 = arith.constant 3 : index
    %c0_325 = arith.constant 0 : index
    %c2560_326 = arith.constant 2560 : index
    %543 = vector.load %arg5[%c3_324, %c0_325, %c2560_326] : memref<4x8x4096xf32, #tpu.memory_space<vmem>>, vector<1x8x128xf32>
    %544 = vector.shape_cast %543 : vector<1x8x128xf32> to vector<8x128xf32>
    %545 = vector.shape_cast %542 : vector<8x128xf32> to vector<1x8x128xf32>
    tpu.vector_store %arg5[%c3_324, %c0_325, %c2560_326], %545 {strides = array<i32>} : memref<4x8x4096xf32, #tpu.memory_space<vmem>>, vector<1x8x128xf32>,
    %546 = vector.extract_strided_slice %77 {offsets = [168, 384], sizes = [8, 128], strides = [1, 1]} : vector<256x512xf32> to vector<8x128xf32>
    %c3_327 = arith.constant 3 : index
    %c0_328 = arith.constant 0 : index
    %c2688_329 = arith.constant 2688 : index
    %547 = vector.load %arg5[%c3_327, %c0_328, %c2688_329] : memref<4x8x4096xf32, #tpu.memory_space<vmem>>, vector<1x8x128xf32>
    %548 = vector.shape_cast %547 : vector<1x8x128xf32> to vector<8x128xf32>
    %549 = vector.shape_cast %546 : vector<8x128xf32> to vector<1x8x128xf32>
    tpu.vector_store %arg5[%c3_327, %c0_328, %c2688_329], %549 {strides = array<i32>} : memref<4x8x4096xf32, #tpu.memory_space<vmem>>, vector<1x8x128xf32>,
    %550 = vector.extract_strided_slice %77 {offsets = [176, 384], sizes = [8, 128], strides = [1, 1]} : vector<256x512xf32> to vector<8x128xf32>
    %c3_330 = arith.constant 3 : index
    %c0_331 = arith.constant 0 : index
    %c2816_332 = arith.constant 2816 : index
    %551 = vector.load %arg5[%c3_330, %c0_331, %c2816_332] : memref<4x8x4096xf32, #tpu.memory_space<vmem>>, vector<1x8x128xf32>
    %552 = vector.shape_cast %551 : vector<1x8x128xf32> to vector<8x128xf32>
    %553 = vector.shape_cast %550 : vector<8x128xf32> to vector<1x8x128xf32>
    tpu.vector_store %arg5[%c3_330, %c0_331, %c2816_332], %553 {strides = array<i32>} : memref<4x8x4096xf32, #tpu.memory_space<vmem>>, vector<1x8x128xf32>,
    %554 = vector.extract_strided_slice %77 {offsets = [184, 384], sizes = [8, 128], strides = [1, 1]} : vector<256x512xf32> to vector<8x128xf32>
    %c3_333 = arith.constant 3 : index
    %c0_334 = arith.constant 0 : index
    %c2944_335 = arith.constant 2944 : index
    %555 = vector.load %arg5[%c3_333, %c0_334, %c2944_335] : memref<4x8x4096xf32, #tpu.memory_space<vmem>>, vector<1x8x128xf32>
    %556 = vector.shape_cast %555 : vector<1x8x128xf32> to vector<8x128xf32>
    %557 = vector.shape_cast %554 : vector<8x128xf32> to vector<1x8x128xf32>
    tpu.vector_store %arg5[%c3_333, %c0_334, %c2944_335], %557 {strides = array<i32>} : memref<4x8x4096xf32, #tpu.memory_space<vmem>>, vector<1x8x128xf32>,
    %558 = vector.extract_strided_slice %77 {offsets = [192, 384], sizes = [8, 128], strides = [1, 1]} : vector<256x512xf32> to vector<8x128xf32>
    %c3_336 = arith.constant 3 : index
    %c0_337 = arith.constant 0 : index
    %c3072_338 = arith.constant 3072 : index
    %559 = vector.load %arg5[%c3_336, %c0_337, %c3072_338] : memref<4x8x4096xf32, #tpu.memory_space<vmem>>, vector<1x8x128xf32>
    %560 = vector.shape_cast %559 : vector<1x8x128xf32> to vector<8x128xf32>
    %561 = vector.shape_cast %558 : vector<8x128xf32> to vector<1x8x128xf32>
    tpu.vector_store %arg5[%c3_336, %c0_337, %c3072_338], %561 {strides = array<i32>} : memref<4x8x4096xf32, #tpu.memory_space<vmem>>, vector<1x8x128xf32>,
    %562 = vector.extract_strided_slice %77 {offsets = [200, 384], sizes = [8, 128], strides = [1, 1]} : vector<256x512xf32> to vector<8x128xf32>
    %c3_339 = arith.constant 3 : index
    %c0_340 = arith.constant 0 : index
    %c3200_341 = arith.constant 3200 : index
    %563 = vector.load %arg5[%c3_339, %c0_340, %c3200_341] : memref<4x8x4096xf32, #tpu.memory_space<vmem>>, vector<1x8x128xf32>
    %564 = vector.shape_cast %563 : vector<1x8x128xf32> to vector<8x128xf32>
    %565 = vector.shape_cast %562 : vector<8x128xf32> to vector<1x8x128xf32>
    tpu.vector_store %arg5[%c3_339, %c0_340, %c3200_341], %565 {strides = array<i32>} : memref<4x8x4096xf32, #tpu.memory_space<vmem>>, vector<1x8x128xf32>,
    %566 = vector.extract_strided_slice %77 {offsets = [208, 384], sizes = [8, 128], strides = [1, 1]} : vector<256x512xf32> to vector<8x128xf32>
    %c3_342 = arith.constant 3 : index
    %c0_343 = arith.constant 0 : index
    %c3328_344 = arith.constant 3328 : index
    %567 = vector.load %arg5[%c3_342, %c0_343, %c3328_344] : memref<4x8x4096xf32, #tpu.memory_space<vmem>>, vector<1x8x128xf32>
    %568 = vector.shape_cast %567 : vector<1x8x128xf32> to vector<8x128xf32>
    %569 = vector.shape_cast %566 : vector<8x128xf32> to vector<1x8x128xf32>
    tpu.vector_store %arg5[%c3_342, %c0_343, %c3328_344], %569 {strides = array<i32>} : memref<4x8x4096xf32, #tpu.memory_space<vmem>>, vector<1x8x128xf32>,
    %570 = vector.extract_strided_slice %77 {offsets = [216, 384], sizes = [8, 128], strides = [1, 1]} : vector<256x512xf32> to vector<8x128xf32>
    %c3_345 = arith.constant 3 : index
    %c0_346 = arith.constant 0 : index
    %c3456_347 = arith.constant 3456 : index
    %571 = vector.load %arg5[%c3_345, %c0_346, %c3456_347] : memref<4x8x4096xf32, #tpu.memory_space<vmem>>, vector<1x8x128xf32>
    %572 = vector.shape_cast %571 : vector<1x8x128xf32> to vector<8x128xf32>
    %573 = vector.shape_cast %570 : vector<8x128xf32> to vector<1x8x128xf32>
    tpu.vector_store %arg5[%c3_345, %c0_346, %c3456_347], %573 {strides = array<i32>} : memref<4x8x4096xf32, #tpu.memory_space<vmem>>, vector<1x8x128xf32>,
    %574 = vector.extract_strided_slice %77 {offsets = [224, 384], sizes = [8, 128], strides = [1, 1]} : vector<256x512xf32> to vector<8x128xf32>
    %c3_348 = arith.constant 3 : index
    %c0_349 = arith.constant 0 : index
    %c3584_350 = arith.constant 3584 : index
    %575 = vector.load %arg5[%c3_348, %c0_349, %c3584_350] : memref<4x8x4096xf32, #tpu.memory_space<vmem>>, vector<1x8x128xf32>
    %576 = vector.shape_cast %575 : vector<1x8x128xf32> to vector<8x128xf32>
    %577 = vector.shape_cast %574 : vector<8x128xf32> to vector<1x8x128xf32>
    tpu.vector_store %arg5[%c3_348, %c0_349, %c3584_350], %577 {strides = array<i32>} : memref<4x8x4096xf32, #tpu.memory_space<vmem>>, vector<1x8x128xf32>,
    %578 = vector.extract_strided_slice %77 {offsets = [232, 384], sizes = [8, 128], strides = [1, 1]} : vector<256x512xf32> to vector<8x128xf32>
    %c3_351 = arith.constant 3 : index
    %c0_352 = arith.constant 0 : index
    %c3712_353 = arith.constant 3712 : index
    %579 = vector.load %arg5[%c3_351, %c0_352, %c3712_353] : memref<4x8x4096xf32, #tpu.memory_space<vmem>>, vector<1x8x128xf32>
    %580 = vector.shape_cast %579 : vector<1x8x128xf32> to vector<8x128xf32>
    %581 = vector.shape_cast %578 : vector<8x128xf32> to vector<1x8x128xf32>
    tpu.vector_store %arg5[%c3_351, %c0_352, %c3712_353], %581 {strides = array<i32>} : memref<4x8x4096xf32, #tpu.memory_space<vmem>>, vector<1x8x128xf32>,
    %582 = vector.extract_strided_slice %77 {offsets = [240, 384], sizes = [8, 128], strides = [1, 1]} : vector<256x512xf32> to vector<8x128xf32>
    %c3_354 = arith.constant 3 : index
    %c0_355 = arith.constant 0 : index
    %c3840_356 = arith.constant 3840 : index
    %583 = vector.load %arg5[%c3_354, %c0_355, %c3840_356] : memref<4x8x4096xf32, #tpu.memory_space<vmem>>, vector<1x8x128xf32>
    %584 = vector.shape_cast %583 : vector<1x8x128xf32> to vector<8x128xf32>
    %585 = vector.shape_cast %582 : vector<8x128xf32> to vector<1x8x128xf32>
    tpu.vector_store %arg5[%c3_354, %c0_355, %c3840_356], %585 {strides = array<i32>} : memref<4x8x4096xf32, #tpu.memory_space<vmem>>, vector<1x8x128xf32>,
    %586 = vector.extract_strided_slice %77 {offsets = [248, 384], sizes = [8, 128], strides = [1, 1]} : vector<256x512xf32> to vector<8x128xf32>
    %c3_357 = arith.constant 3 : index
    %c0_358 = arith.constant 0 : index
    %c3968_359 = arith.constant 3968 : index
    %587 = vector.load %arg5[%c3_357, %c0_358, %c3968_359] : memref<4x8x4096xf32, #tpu.memory_space<vmem>>, vector<1x8x128xf32>
    %588 = vector.shape_cast %587 : vector<1x8x128xf32> to vector<8x128xf32>
    %589 = vector.shape_cast %586 : vector<8x128xf32> to vector<1x8x128xf32>
    tpu.vector_store %arg5[%c3_357, %c0_358, %c3968_359], %589 {strides = array<i32>} : memref<4x8x4096xf32, #tpu.memory_space<vmem>>, vector<1x8x128xf32>,
    return
  }
  func.func @transform_0(%arg0: i32, %arg1: i32) -> (i32, i32) {
    %c0_i32 = arith.constant 0 : i32
    return %arg0, %arg1 : i32, i32
  }
  func.func @transform_1(%arg0: i32, %arg1: i32) -> (i32, i32) {
    %c1_i32 = arith.constant 1 : i32
    %0 = arith.addi %arg1, %c1_i32 : i32
    %c32_i32 = arith.constant 32 : i32
    %1 = arith.muli %0, %c32_i32 : i32
    %c0_i32 = arith.constant 0 : i32
    return %arg0, %1 : i32, i32
  }
  func.func @transform_2(%arg0: i32, %arg1: i32) -> (i32, i32, i32) {
    %c0_i32 = arith.constant 0 : i32
    %c0_i32_0 = arith.constant 0 : i32
    %c0_i32_1 = arith.constant 0 : i32
    %c0_i32_2 = arith.constant 0 : i32
    return %c0_i32, %c0_i32_0, %c0_i32_1 : i32, i32, i32
  }
  func.func @transform_3(%arg0: i32, %arg1: i32) -> (i32, i32, i32) {
    %c0_i32 = arith.constant 0 : i32
    %c0_i32_0 = arith.constant 0 : i32
    return %c0_i32, %arg0, %arg1 : i32, i32, i32
  }
}

</mosaic_0001>

<llo_original>
// kernel: reverse
$region0: #{reverse}
  %s0 = inlined_call_operand.vmem [shape: f32[2,1,8064], index: 0, kind: input, shape index: {}]
  %s1 = inlined_call_operand.vmem [shape: f32[2,1,8064], index: 1, kind: output, shape index: {}]
  %v2 = vlaneseq
  %v3 = vsub.s32 127, %v2
  %4 = vset.pattern.permute.xlu0 %v3
  $region1: #{reverse} parent=0
    #allocation0 [shape = 'u8[4096]{0}', space=vmem, size = 0x1000, scoped, tag = 'operand span for operand 0']
    #allocation1 [shape = 'u8[2048]{0}', space=vmem, size = 0x800, scoped, tag = 'packed  for operand 0']
    #allocation2 [shape = 'u8[4096]{0}', space=vmem, size = 0x1000, scoped, tag = 'operand span for operand 1']
    #allocation3 [shape = 'u8[2048]{0}', space=vmem, size = 0x800, scoped, tag = 'packed  for operand 1']
    loop: start=0, step=1, limit=65
    $region2: #{reverse} parent=1 // loop_pre_header
      _
    $region3: #{reverse} parent=1 // loop_header
      %s6 = sphi 0, %s10
      %p7 = scmp.ge.s32.totalorder %s6, 65
      %s13 = sphi 0, %s32
      %s14 = sphi 0, %s28
      %s15 = sphi 0, %s24
      %s16 = sphi 0, %s13
      %s17 = sphi 0, %s14
      %s18 = sphi 0, %s15
      %s19 = sphi 0, %s16
      %s20 = sphi 0, %s17
      %s21 = sphi 0, %s18
    $region4: #{reverse} parent=1 // loop_header_branch
      %9 = sbr.rel (%p7) target = $region8
    $region5: #{reverse} parent=1 // loop_body
      %s11 = ssub.s32 %s6, 1
      %s12 = ssub.s32 %s6, 2
      %s22 = sadd.s32 1, %s15
      %p23 = scmp.ge.s32.totalorder %s22, 63
      %s24 = scalar_select %p23, 0, %s22
      %s25 = sadd.s32 1, %s14
      %s26 = scalar_select %p23, %s25, %s14
      %p27 = scmp.ge.s32.totalorder %s26, 1
      %s28 = scalar_select %p27, 0, %s26
      %s29 = sadd.s32 1, %s13
      %s30 = scalar_select %p27, %s29, %s13
      %p31 = scmp.ge.s32.totalorder %s30, 1
      %s32 = scalar_select %p31, 0, %s30
      %p33 = scmp.le.s32.totalorder 1, %s6
      %p34 = scmp.lt.s32.totalorder %s6, 64
      %p35 = pnand %p33, %p34
      %p36 = pneg %p35
      // Predicated region
      $region9: #{reverse} parent=5 // pred_check
        _
      $region10: #{reverse} parent=5 // pred_check_branch
        %38 = sbr.rel (%p35) target = $region12
      $region11: #{reverse} parent=5 // pred_region
        %s39 = ssub.s32 %s6, 1
      $region12: #{reverse} parent=5 // pred_fallthru
        _
      %p40 = scmp.lt.s32.totalorder %s6, 63
      // Predicated region
      $region13: #{reverse} parent=5 // pred_check
        %p41 = pneg %p40
      $region14: #{reverse} parent=5 // pred_check_branch
        %43 = sbr.rel (%p41) target = $region16
      $region15: #{reverse} parent=5 // pred_region
        %s44 = sand.u32 %s6, 1
        %s45 = sand.u32 %s6, 1
        %s46 = smul.addr %s45, 2
        %s47 = scalar_lea.vmem [#allocation1], %s46
        %s48 = ssub.s32 62, %s15
        %s49 = smul.addr %s14, 63
        %s50 = sadd.s32 %s48, %s49
        %s51 = smul.addr %s13, 63
        %s52 = sadd.s32 %s50, %s51
        %s53 = smul.addr %s52, 2
        %s54 = scalar_lea.vmem %s0, %s53
        // Predicated region
        $region17: #{reverse} parent=15 // pred_check
          _
        $region18: #{reverse} parent=15 // pred_check_branch
          %56 = sbr.rel (0) target = $region20
        $region19: #{reverse} parent=15 // pred_region
          // Predicated region
          $region21: #{reverse} parent=19 // pred_check
            _
          $region22: #{reverse} parent=19 // pred_check_branch
            %58 = sbr.rel target = $region24
          $region23: #{reverse} parent=19 // pred_region
            // Predicated region
            $region36: #{reverse} parent=23 // pred_check
              _
            $region37: #{reverse} parent=23 // pred_check_branch
              %74 = sbr.rel (0) target = $region39
            $region38: #{reverse} parent=23 // pred_region
              %s76 = ssub.s32 4, 1
              loop: start=0, step=1, limit=1
              $region40: #{reverse} parent=38 // loop_pre_header
                _
              $region41: #{reverse} parent=38 // loop_header
                %s78 = sphi 0, %s82
                %p79 = scmp.ge.s32.totalorder %s78, 1
                %s83 = sphi %s54, %s54
                %s84 = sphi %s47, %s47
              $region42: #{reverse} parent=38 // loop_header_branch
                %81 = sbr.rel (%p79) target = $region46
              $region43: #{reverse} parent=38 // loop_body
                %v85 = vld [vmem:[%s83] sm:%s76]
                %86 = vst [vmem:[%s84] sm:%s76] %v85
              $region44: #{reverse} parent=38 // loop_footer
                %s82 = sadd.s32 1, %s78
              $region45: #{reverse} parent=38 // loop_footer_branch
                %77 = sbr.rel target = $region41
              $region46: #{reverse} parent=38 // loop_exit
                _
            $region39: #{reverse} parent=23 // pred_fallthru
              _
          $region24: #{reverse} parent=19 // pred_fallthru
            _
          // Predicated region
          $region25: #{reverse} parent=19 // pred_check
            _
          $region26: #{reverse} parent=19 // pred_check_branch
            %60 = sbr.rel (0) target = $region28
          $region27: #{reverse} parent=19 // pred_region
            %s62 = ssub.s32 4, 1
            loop: start=0, step=1, limit=1
            $region29: #{reverse} parent=27 // loop_pre_header
              _
            $region30: #{reverse} parent=27 // loop_header
              %s64 = sphi 0, %s68
              %p65 = scmp.ge.s32.totalorder %s64, 1
              %s69 = sphi %s54, %s54
              %s70 = sphi %s47, %s47
            $region31: #{reverse} parent=27 // loop_header_branch
              %67 = sbr.rel (%p65) target = $region35
            $region32: #{reverse} parent=27 // loop_body
              %v71 = vld [vmem:[%s69] sm:%s62]
              %72 = vst [vmem:[%s70] sm:%s62] %v71
            $region33: #{reverse} parent=27 // loop_footer
              %s68 = sadd.s32 1, %s64
            $region34: #{reverse} parent=27 // loop_footer_branch
              %63 = sbr.rel target = $region30
            $region35: #{reverse} parent=27 // loop_exit
              _
          $region28: #{reverse} parent=19 // pred_fallthru
            _
        $region20: #{reverse} parent=15 // pred_fallthru
          _
        %87 = vnop
      $region16: #{reverse} parent=5 // pred_fallthru
        _
      %p88 = scmp.le.s32.totalorder 1, %s6
      %p89 = scmp.lt.s32.totalorder %s6, 64
      %p90 = pnand %p88, %p89
      %p91 = pneg %p90
      // Predicated region
      $region47: #{reverse} parent=5 // pred_check
        _
      $region48: #{reverse} parent=5 // pred_check_branch
        %93 = sbr.rel (%p90) target = $region50
      $region49: #{reverse} parent=5 // pred_region
        %s94 = ssub.s32 %s6, 1
        %s95 = sand.u32 %s11, 1
        %s96 = sand.u32 %s11, 1
        %s97 = smul.addr %s96, 2
        %s98 = scalar_lea.vmem [#allocation1], %s97
        %s99 = sand.u32 %s11, 1
        %s100 = sand.u32 %s11, 1
        %s101 = smul.addr %s100, 2
        %s102 = scalar_lea.vmem [#allocation1], %s101
        %s103 = sand.u32 %s11, 1
        %s104 = sand.u32 %s11, 1
        %s105 = smul.addr %s104, 2
        %s106 = scalar_lea.vmem [#allocation3], %s105
        %s108 = sshll.u32 1, 2
        %s109 = ssub.s32 %s108, 1
        %v110 = vld [vmem:[%s102] sm:%s109]
        %111 = vst [vmem:[#allocation0] sm:%s109] %v110
        %s112 = ssub.s32 62, %s18
        %v113 = vld [vmem:[#allocation0] sm:$0xff]
        %114 = vperm.xlu0 %4, %v113
        %v115 = vpop.permute.xlu0 %114
        %116 = vst [vmem:[#allocation2] sm:$0xff] %v115
        %s118 = sshll.u32 1, 2
        %s119 = ssub.s32 %s118, 1
        %v121 = vld [vmem:[#allocation2] sm:%s119]
        %s122 = sshll.u32 1, 2
        %s123 = ssub.s32 %s122, 1
        %124 = vst [vmem:[%s106] sm:%s123] %v121
        %s125 = sand.u32 %s11, 1
        %s126 = sand.u32 %s11, 1
        %s127 = smul.addr %s126, 2
        %s128 = scalar_lea.vmem [#allocation3], %s127
        %s129 = smul.addr %s17, 63
        %s130 = sadd.s32 %s18, %s129
        %s131 = smul.addr %s16, 63
        %s132 = sadd.s32 %s130, %s131
        %s133 = smul.addr %s132, 2
        %s134 = scalar_lea.vmem %s1, %s133
        // Predicated region
        $region51: #{reverse} parent=49 // pred_check
          _
        $region52: #{reverse} parent=49 // pred_check_branch
          %136 = sbr.rel (0) target = $region54
        $region53: #{reverse} parent=49 // pred_region
          // Predicated region
          $region55: #{reverse} parent=53 // pred_check
            _
          $region56: #{reverse} parent=53 // pred_check_branch
            %138 = sbr.rel target = $region58
          $region57: #{reverse} parent=53 // pred_region
            // Predicated region
            $region70: #{reverse} parent=57 // pred_check
              _
            $region71: #{reverse} parent=57 // pred_check_branch
              %154 = sbr.rel (0) target = $region73
            $region72: #{reverse} parent=57 // pred_region
              %s156 = ssub.s32 4, 1
              loop: start=0, step=1, limit=1
              $region74: #{reverse} parent=72 // loop_pre_header
                _
              $region75: #{reverse} parent=72 // loop_header
                %s158 = sphi 0, %s162
                %p159 = scmp.ge.s32.totalorder %s158, 1
                %s163 = sphi %s128, %s128
                %s164 = sphi %s134, %s134
              $region76: #{reverse} parent=72 // loop_header_branch
                %161 = sbr.rel (%p159) target = $region80
              $region77: #{reverse} parent=72 // loop_body
                %v165 = vld [vmem:[%s163] sm:%s156]
                %166 = vst [vmem:[%s164] sm:%s156] %v165
              $region78: #{reverse} parent=72 // loop_footer
                %s162 = sadd.s32 1, %s158
              $region79: #{reverse} parent=72 // loop_footer_branch
                %157 = sbr.rel target = $region75
              $region80: #{reverse} parent=72 // loop_exit
                _
            $region73: #{reverse} parent=57 // pred_fallthru
              _
          $region58: #{reverse} parent=53 // pred_fallthru
            _
          // Predicated region
          $region59: #{reverse} parent=53 // pred_check
            _
          $region60: #{reverse} parent=53 // pred_check_branch
            %140 = sbr.rel (0) target = $region62
          $region61: #{reverse} parent=53 // pred_region
            %s142 = ssub.s32 4, 1
            loop: start=0, step=1, limit=1
            $region63: #{reverse} parent=61 // loop_pre_header
              _
            $region64: #{reverse} parent=61 // loop_header
              %s144 = sphi 0, %s148
              %p145 = scmp.ge.s32.totalorder %s144, 1
              %s149 = sphi %s128, %s128
              %s150 = sphi %s134, %s134
            $region65: #{reverse} parent=61 // loop_header_branch
              %147 = sbr.rel (%p145) target = $region69
            $region66: #{reverse} parent=61 // loop_body
              %v151 = vld [vmem:[%s149] sm:%s142]
              %152 = vst [vmem:[%s150] sm:%s142] %v151
            $region67: #{reverse} parent=61 // loop_footer
              %s148 = sadd.s32 1, %s144
            $region68: #{reverse} parent=61 // loop_footer_branch
              %143 = sbr.rel target = $region64
            $region69: #{reverse} parent=61 // loop_exit
              _
          $region62: #{reverse} parent=53 // pred_fallthru
            _
        $region54: #{reverse} parent=49 // pred_fallthru
          _
        %167 = vnop
      $region50: #{reverse} parent=5 // pred_fallthru
        _
      %p168 = scmp.le.s32.totalorder 2, %s6
      // Predicated region
      $region81: #{reverse} parent=5 // pred_check
        %p169 = pneg %p168
      $region82: #{reverse} parent=5 // pred_check_branch
        %171 = sbr.rel (%p169) target = $region84
      $region83: #{reverse} parent=5 // pred_region
        %s172 = ssub.s32 %s6, 2
        %s173 = sand.u32 %s12, 1
        %s174 = sand.u32 %s12, 1
        %s175 = smul.addr %s174, 2
        %s176 = scalar_lea.vmem [#allocation3], %s175
      $region84: #{reverse} parent=5 // pred_fallthru
        _
    $region6: #{reverse} parent=1 // loop_footer
      %s10 = sadd.s32 1, %s6
    $region7: #{reverse} parent=1 // loop_footer_branch
      %5 = sbr.rel target = $region3
    $region8: #{reverse} parent=1 // loop_exit
      _

// kernel: _forward.1
$region0: #{_forward.1}
  #allocation0 [shape = 'u32[]', space=smem, size = 0x4, offset = 0x4, fixed_abs, tag = 'smem constant byte address 0x4 - core index']
  #allocation1 [shape = 'u32[144,128]{1,0:T(1,128)}', space=vmem, size = 0x12000, scoped, tag = 'internal scratch']
  %s0 = inlined_call_operand.vmem [shape: f32[8,12288], index: 0, kind: input, shape index: {}, may-alias: {0,1}]
  %s1 = inlined_call_operand.vmem [shape: f32[8,12288], index: 1, kind: input, shape index: {}, may-alias: {0,1}]
  %s2 = inlined_call_operand.vmem [shape: f32[2,128,512], index: 2, kind: input, shape index: {}]
  %s3 = inlined_call_operand.vmem [shape: f32[4,8,8192], index: 3, kind: output, shape index: {}]
  %s4 = sld [smem:[#allocation0]]
  $region64: #{_forward.1} parent=0
    _
  %s6 = ssub.s32 1, %s4
  %s7 = scalar_select 0, %s6, %s4
  $region1: #{_forward.1} parent=0
    #allocation2 [shape = 'u8[1048576]{0}', space=vmem, size = 0x100000, scoped, tag = 'output window, operand 0']
    loop: start=0, step=1, limit=4
    $region2: #{_forward.1} parent=1 // loop_pre_header
      _
    $region3: #{_forward.1} parent=1 // loop_header
      %s9 = sphi 0, %s13
      %p10 = scmp.ge.s32.totalorder %s9, 4
      %s16 = sphi 0, %s28
      %s17 = sphi 0, %s24
      %s18 = sphi 0, %s16
      %s19 = sphi 0, %s17
      %s20 = sphi 0, %s18
      %s21 = sphi 0, %s19
      %s33 = sphi 0, %s35
      %s36 = sphi 0, %s33
      %s37 = sphi 0, %s36
      %s53 = sphi 0, %s37
      %s65 = sphi 0, %s67
      %s68 = sphi 0, %s65
      %s69 = sphi 0, %s68
      %s85 = sphi 0, %s69
      %s89 = sphi 0, %s89
      %s91 = sphi 0, %s89
      %s92 = sphi 0, %s91
      %s106 = sphi 0, %s92
      %s114 = sphi 0, %s116
      %s117 = sphi 0, %s114
      %s118 = sphi 0, %s117
      %s134 = sphi 0, %s118
    $region4: #{_forward.1} parent=1 // loop_header_branch
      %12 = sbr.rel (%p10) target = $region8
    $region5: #{_forward.1} parent=1 // loop_body
      %s14 = ssub.s32 %s9, 1
      %s15 = ssub.s32 %s9, 2
      %s22 = sadd.s32 1, %s17
      %p23 = scmp.ge.s32.totalorder %s22, 2
      %s24 = scalar_select %p23, 0, %s22
      %s25 = sadd.s32 1, %s16
      %s26 = scalar_select %p23, %s25, %s16
      %p27 = scmp.ge.s32.totalorder %s26, 1
      %s28 = scalar_select %p27, 0, %s26
      %s29 = ssub.s32 %s16, %s28
      %s30 = ssub.s32 %s17, %s24
      %s31 = sor.u32 %s29, %s30
      %p32 = scmp.eq.s32.totalorder %s31, 0
      %s34 = sadd.s32 %s33, 1
      %s35 = scalar_select %p32, %s33, %s34
      %p38 = pneg %p32
      %p39 = scmp.eq.s32.totalorder %s9, 1
      %p40 = por %p38, %p39
      %p41 = scmp.ne.s32.totalorder %s33, %s36
      %p42 = scmp.eq.s32.totalorder %s9, 0
      %p43 = por %p41, %p42
      %p44 = scmp.ne.s32.totalorder %s33, %s36
      %p45 = scmp.eq.s32.totalorder %s14, 1
      %p46 = por %p44, %p45
      %p47 = scmp.ne.s32.totalorder %s36, %s37
      %p48 = scmp.eq.s32.totalorder %s14, 0
      %p49 = por %p47, %p48
      %p50 = scmp.ne.s32.totalorder %s36, %s37
      %p51 = scmp.eq.s32.totalorder %s15, 1
      %p52 = por %p50, %p51
      %p54 = scmp.ne.s32.totalorder %s37, %s53
      %p55 = scmp.eq.s32.totalorder %s15, 0
      %p56 = por %p54, %p55
      %s57 = sadd.s32 %s17, 1
      %s58 = smul.u32 %s57, 32
      %s59 = sadd.s32 %s24, 1
      %s60 = smul.u32 %s59, 32
      %s61 = ssub.s32 %s16, %s28
      %s62 = ssub.s32 %s58, %s60
      %s63 = sor.u32 %s61, %s62
      %p64 = scmp.eq.s32.totalorder %s63, 0
      %s66 = sadd.s32 %s65, 1
      %s67 = scalar_select %p64, %s65, %s66
      %p70 = pneg %p64
      %p71 = scmp.eq.s32.totalorder %s9, 1
      %p72 = por %p70, %p71
      %p73 = scmp.ne.s32.totalorder %s65, %s68
      %p74 = scmp.eq.s32.totalorder %s9, 0
      %p75 = por %p73, %p74
      %p76 = scmp.ne.s32.totalorder %s65, %s68
      %p77 = scmp.eq.s32.totalorder %s14, 1
      %p78 = por %p76, %p77
      %p79 = scmp.ne.s32.totalorder %s68, %s69
      %p80 = scmp.eq.s32.totalorder %s14, 0
      %p81 = por %p79, %p80
      %p82 = scmp.ne.s32.totalorder %s68, %s69
      %p83 = scmp.eq.s32.totalorder %s15, 1
      %p84 = por %p82, %p83
      %p86 = scmp.ne.s32.totalorder %s69, %s85
      %p87 = scmp.eq.s32.totalorder %s15, 0
      %p88 = por %p86, %p87
      %s90 = sadd.s32 %s89, 1
      %p93 = scmp.eq.s32.totalorder %s9, 1
      %p94 = scmp.ne.s32.totalorder %s89, %s91
      %p95 = scmp.eq.s32.totalorder %s9, 0
      %p96 = por %p94, %p95
      %p97 = scmp.ne.s32.totalorder %s89, %s91
      %p98 = scmp.eq.s32.totalorder %s14, 1
      %p99 = por %p97, %p98
      %p100 = scmp.ne.s32.totalorder %s91, %s92
      %p101 = scmp.eq.s32.totalorder %s14, 0
      %p102 = por %p100, %p101
      %p103 = scmp.ne.s32.totalorder %s91, %s92
      %p104 = scmp.eq.s32.totalorder %s15, 1
      %p105 = por %p103, %p104
      %p107 = scmp.ne.s32.totalorder %s92, %s106
      %p108 = scmp.eq.s32.totalorder %s15, 0
      %p109 = por %p107, %p108
      %s110 = ssub.s32 %s16, %s28
      %s111 = ssub.s32 %s17, %s24
      %s112 = sor.u32 %s110, %s111
      %p113 = scmp.eq.s32.totalorder %s112, 0
      %s115 = sadd.s32 %s114, 1
      %s116 = scalar_select %p113, %s114, %s115
      %p119 = pneg %p113
      %p120 = scmp.eq.s32.totalorder %s9, 1
      %p121 = por %p119, %p120
      %p122 = scmp.ne.s32.totalorder %s114, %s117
      %p123 = scmp.eq.s32.totalorder %s9, 0
      %p124 = por %p122, %p123
      %p125 = scmp.ne.s32.totalorder %s114, %s117
      %p126 = scmp.eq.s32.totalorder %s14, 1
      %p127 = por %p125, %p126
      %p128 = scmp.ne.s32.totalorder %s117, %s118
      %p129 = scmp.eq.s32.totalorder %s14, 0
      %p130 = por %p128, %p129
      %p131 = scmp.ne.s32.totalorder %s117, %s118
      %p132 = scmp.eq.s32.totalorder %s15, 1
      %p133 = por %p131, %p132
      %p135 = scmp.ne.s32.totalorder %s118, %s134
      %p136 = scmp.eq.s32.totalorder %s15, 0
      %p137 = por %p135, %p136
      %p138 = scmp.le.s32.totalorder 1, %s9
      %p139 = scmp.lt.s32.totalorder %s9, 3
      %p140 = pnand %p138, %p139
      %p141 = pneg %p140
      // Predicated region
      $region9: #{_forward.1} parent=5 // pred_check
        _
      $region10: #{_forward.1} parent=5 // pred_check_branch
        %143 = sbr.rel (%p140) target = $region12
      $region11: #{_forward.1} parent=5 // pred_region
        %s144 = ssub.s32 %s9, 1
        // Predicated region
        $region13: #{_forward.1} parent=11 // pred_check
          %p145 = pneg %p102
        $region14: #{_forward.1} parent=11 // pred_check_branch
          %147 = sbr.rel (%p145) target = $region16
        $region15: #{_forward.1} parent=11 // pred_region
          _
        $region16: #{_forward.1} parent=11 // pred_fallthru
          _
      $region12: #{_forward.1} parent=5 // pred_fallthru
        _
      %p148 = scmp.lt.s32.totalorder %s9, 2
      // Predicated region
      $region17: #{_forward.1} parent=5 // pred_check
        %p149 = pneg %p148
      $region18: #{_forward.1} parent=5 // pred_check_branch
        %151 = sbr.rel (%p149) target = $region20
      $region19: #{_forward.1} parent=5 // pred_region
        // Predicated region
        $region21: #{_forward.1} parent=19 // pred_check
          %p152 = pneg %p43
        $region22: #{_forward.1} parent=19 // pred_check_branch
          %154 = sbr.rel (%p152) target = $region24
        $region23: #{_forward.1} parent=19 // pred_region
          %s155 = smul.u32 32, %s17
          %p156 = scmp.lt.s32.totalorder %s16, 0
          %s157 = scalar_select %p156, %s16, 0
          %p158 = scmp.lt.s32.totalorder %s155, 95
          %s159 = scalar_select %p158, %s155, 95
          %s160 = smul.addr %s157, 96
          %s161 = sadd.s32 %s159, %s160
          %s162 = smul.addr %s161, 8
          %s163 = scalar_lea.vmem %s0, %s162
          %s164 = smul.u32 32, %s17
        $region24: #{_forward.1} parent=19 // pred_fallthru
          _
        // Predicated region
        $region25: #{_forward.1} parent=19 // pred_check
          %p165 = pneg %p75
        $region26: #{_forward.1} parent=19 // pred_check_branch
          %167 = sbr.rel (%p165) target = $region28
        $region27: #{_forward.1} parent=19 // pred_region
          %s168 = sadd.s32 %s17, 1
          %s169 = smul.u32 %s168, 32
          %p170 = scmp.lt.s32.totalorder %s16, 0
          %s171 = scalar_select %p170, %s16, 0
          %p172 = scmp.lt.s32.totalorder %s169, 95
          %s173 = scalar_select %p172, %s169, 95
          %s174 = smul.addr %s171, 96
          %s175 = sadd.s32 %s173, %s174
          %s176 = smul.addr %s175, 8
          %s177 = scalar_lea.vmem %s1, %s176
          %s178 = sadd.s32 %s17, 1
          %s179 = smul.u32 %s178, 32
        $region28: #{_forward.1} parent=19 // pred_fallthru
          _
      $region20: #{_forward.1} parent=5 // pred_fallthru
        _
      %p180 = scmp.le.s32.totalorder 1, %s9
      %p181 = scmp.lt.s32.totalorder %s9, 3
      %p182 = pnand %p180, %p181
      %p183 = pneg %p182
      // Predicated region
      $region29: #{_forward.1} parent=5 // pred_check
        _
      $region30: #{_forward.1} parent=5 // pred_check_branch
        %185 = sbr.rel (%p182) target = $region32
      $region31: #{_forward.1} parent=5 // pred_region
        %s186 = ssub.s32 %s9, 1
        %s187 = smul.u32 32, %s19
        %p188 = scmp.lt.s32.totalorder %s18, 0
        %s189 = scalar_select %p188, %s18, 0
        %p190 = scmp.lt.s32.totalorder %s187, 95
        %s191 = scalar_select %p190, %s187, 95
        %s192 = smul.addr %s189, 96
        %s193 = sadd.s32 %s191, %s192
        %s194 = smul.addr %s193, 8
        %s195 = scalar_lea.vmem %s0, %s194
        %p196 = pneg %p49
        %p197 = pneg %p46
        %s198 = sadd.s32 %s19, 1
        %s199 = smul.u32 %s198, 32
        %p200 = scmp.lt.s32.totalorder %s18, 0
        %s201 = scalar_select %p200, %s18, 0
        %p202 = scmp.lt.s32.totalorder %s199, 95
        %s203 = scalar_select %p202, %s199, 95
        %s204 = smul.addr %s201, 96
        %s205 = sadd.s32 %s203, %s204
        %s206 = smul.addr %s205, 8
        %s207 = scalar_lea.vmem %s1, %s206
        %p208 = pneg %p81
        %p209 = pneg %p78
        %p210 = pneg %p102
        %p211 = pneg %p99
        %p212 = pneg %p130
        %p213 = pneg %p127
        %s214 = sand.u32 %s117, 1
        %s215 = sand.u32 %s117, 1
        %s216 = smul.addr %s215, 1024
        %s217 = scalar_lea.vmem [#allocation2], %s216
        %s218 = smul.u32 32, %s19
        %p219 = scmp.lt.s32.totalorder %s18, 0
        %s220 = scalar_select %p219, %s18, 0
        %p221 = scmp.lt.s32.totalorder %s218, 95
        %s222 = scalar_select %p221, %s218, 95
        %s223 = smul.addr %s220, 96
        %s224 = sadd.s32 %s222, %s223
        %s225 = smul.addr %s224, 8
        %s226 = scalar_lea.vmem %s0, %s225
        %s227 = smul.u32 32, %s19
        %s228 = sadd.s32 %s19, 1
        %s229 = smul.u32 %s228, 32
        %p230 = scmp.lt.s32.totalorder %s18, 0
        %s231 = scalar_select %p230, %s18, 0
        %p232 = scmp.lt.s32.totalorder %s229, 95
        %s233 = scalar_select %p232, %s229, 95
        %s234 = smul.addr %s231, 96
        %s235 = sadd.s32 %s233, %s234
        %s236 = smul.addr %s235, 8
        %s237 = scalar_lea.vmem %s1, %s236
        %s238 = sadd.s32 %s19, 1
        %s239 = smul.u32 %s238, 32
        %s240 = smul.u32 32, %s19
        %v241 = vld [vmem:[%s226] sm:$0xff]
        %v242 = vld [vmem:[%s226 + $0x8] sm:$0xff]
        %v243 = vld [vmem:[%s226 + $0x10] sm:$0xff]
        %v244 = vld [vmem:[%s226 + $0x18] sm:$0xff]
        %v245 = vld [vmem:[%s226 + $0x20] sm:$0xff]
        %v246 = vld [vmem:[%s226 + $0x28] sm:$0xff]
        %v247 = vld [vmem:[%s226 + $0x30] sm:$0xff]
        %v248 = vld [vmem:[%s226 + $0x38] sm:$0xff]
        %v249 = vld [vmem:[%s226 + $0x40] sm:$0xff]
        %v250 = vld [vmem:[%s226 + $0x48] sm:$0xff]
        %v251 = vld [vmem:[%s226 + $0x50] sm:$0xff]
        %v252 = vld [vmem:[%s226 + $0x58] sm:$0xff]
        %v253 = vld [vmem:[%s226 + $0x60] sm:$0xff]
        %v254 = vld [vmem:[%s226 + $0x68] sm:$0xff]
        %v255 = vld [vmem:[%s226 + $0x70] sm:$0xff]
        %v256 = vld [vmem:[%s226 + $0x78] sm:$0xff]
        %v257 = vld [vmem:[%s226 + $0x80] sm:$0xff]
        %v258 = vld [vmem:[%s226 + $0x88] sm:$0xff]
        %v259 = vld [vmem:[%s226 + $0x90] sm:$0xff]
        %v260 = vld [vmem:[%s226 + $0x98] sm:$0xff]
        %v261 = vld [vmem:[%s226 + $0xa0] sm:$0xff]
        %v262 = vld [vmem:[%s226 + $0xa8] sm:$0xff]
        %v263 = vld [vmem:[%s226 + $0xb0] sm:$0xff]
        %v264 = vld [vmem:[%s226 + $0xb8] sm:$0xff]
        %v265 = vld [vmem:[%s226 + $0xc0] sm:$0xff]
        %v266 = vld [vmem:[%s226 + $0xc8] sm:$0xff]
        %v267 = vld [vmem:[%s226 + $0xd0] sm:$0xff]
        %v268 = vld [vmem:[%s226 + $0xd8] sm:$0xff]
        %v269 = vld [vmem:[%s226 + $0xe0] sm:$0xff]
        %v270 = vld [vmem:[%s226 + $0xe8] sm:$0xff]
        %v271 = vld [vmem:[%s226 + $0xf0] sm:$0xff]
        %v272 = vld [vmem:[%s226 + $0xf8] sm:$0xff]
        %v273 = vld [vmem:[%s237] sm:$0xff]
        %v274 = vld [vmem:[%s2] sm:$0xff]
        %v275 = vld [vmem:[%s2 + $0x8] sm:$0xff]
        %v276 = vld [vmem:[%s2 + $0x10] sm:$0xff]
        %v277 = vld [vmem:[%s2 + $0x18] sm:$0xff]
        %v278 = vld [vmem:[%s2 + $0x20] sm:$0xff]
        %v279 = vld [vmem:[%s2 + $0x28] sm:$0xff]
        %v280 = vld [vmem:[%s2 + $0x30] sm:$0xff]
        %v281 = vld [vmem:[%s2 + $0x38] sm:$0xff]
        %v282 = vld [vmem:[%s2 + $0x40] sm:$0xff]
        %v283 = vld [vmem:[%s2 + $0x48] sm:$0xff]
        %v284 = vld [vmem:[%s2 + $0x50] sm:$0xff]
        %v285 = vld [vmem:[%s2 + $0x58] sm:$0xff]
        %v286 = vld [vmem:[%s2 + $0x60] sm:$0xff]
        %v287 = vld [vmem:[%s2 + $0x68] sm:$0xff]
        %v288 = vld [vmem:[%s2 + $0x70] sm:$0xff]
        %v289 = vld [vmem:[%s2 + $0x78] sm:$0xff]
        %v290 = vld [vmem:[%s2 + $0x80] sm:$0xff]
        %v291 = vld [vmem:[%s2 + $0x88] sm:$0xff]
        %v292 = vld [vmem:[%s2 + $0x90] sm:$0xff]
        %v293 = vld [vmem:[%s2 + $0x98] sm:$0xff]
        %v294 = vld [vmem:[%s2 + $0xa0] sm:$0xff]
        %v295 = vld [vmem:[%s2 + $0xa8] sm:$0xff]
        %v296 = vld [vmem:[%s2 + $0xb0] sm:$0xff]
        %v297 = vld [vmem:[%s2 + $0xb8] sm:$0xff]
        %v298 = vld [vmem:[%s2 + $0xc0] sm:$0xff]
        %v299 = vld [vmem:[%s2 + $0xc8] sm:$0xff]
        %v300 = vld [vmem:[%s2 + $0xd0] sm:$0xff]
        %v301 = vld [vmem:[%s2 + $0xd8] sm:$0xff]
        %v302 = vld [vmem:[%s2 + $0xe0] sm:$0xff]
        %v303 = vld [vmem:[%s2 + $0xe8] sm:$0xff]
        %v304 = vld [vmem:[%s2 + $0xf0] sm:$0xff]
        %v305 = vld [vmem:[%s2 + $0xf8] sm:$0xff]
        %v306 = vld [vmem:[%s2 + $0x100] sm:$0xff]
        %v307 = vld [vmem:[%s2 + $0x108] sm:$0xff]
        %v308 = vld [vmem:[%s2 + $0x110] sm:$0xff]
        %v309 = vld [vmem:[%s2 + $0x118] sm:$0xff]
        %v310 = vld [vmem:[%s2 + $0x120] sm:$0xff]
        %v311 = vld [vmem:[%s2 + $0x128] sm:$0xff]
        %v312 = vld [vmem:[%s2 + $0x130] sm:$0xff]
        %v313 = vld [vmem:[%s2 + $0x138] sm:$0xff]
        %v314 = vld [vmem:[%s2 + $0x140] sm:$0xff]
        %v315 = vld [vmem:[%s2 + $0x148] sm:$0xff]
        %v316 = vld [vmem:[%s2 + $0x150] sm:$0xff]
        %v317 = vld [vmem:[%s2 + $0x158] sm:$0xff]
        %v318 = vld [vmem:[%s2 + $0x160] sm:$0xff]
        %v319 = vld [vmem:[%s2 + $0x168] sm:$0xff]
        %v320 = vld [vmem:[%s2 + $0x170] sm:$0xff]
        %v321 = vld [vmem:[%s2 + $0x178] sm:$0xff]
        %v322 = vld [vmem:[%s2 + $0x180] sm:$0xff]
        %v323 = vld [vmem:[%s2 + $0x188] sm:$0xff]
        %v324 = vld [vmem:[%s2 + $0x190] sm:$0xff]
        %v325 = vld [vmem:[%s2 + $0x198] sm:$0xff]
        %v326 = vld [vmem:[%s2 + $0x1a0] sm:$0xff]
        %v327 = vld [vmem:[%s2 + $0x1a8] sm:$0xff]
        %v328 = vld [vmem:[%s2 + $0x1b0] sm:$0xff]
        %v329 = vld [vmem:[%s2 + $0x1b8] sm:$0xff]
        %v330 = vld [vmem:[%s2 + $0x1c0] sm:$0xff]
        %v331 = vld [vmem:[%s2 + $0x1c8] sm:$0xff]
        %v332 = vld [vmem:[%s2 + $0x1d0] sm:$0xff]
        %v333 = vld [vmem:[%s2 + $0x1d8] sm:$0xff]
        %v334 = vld [vmem:[%s2 + $0x1e0] sm:$0xff]
        %v335 = vld [vmem:[%s2 + $0x1e8] sm:$0xff]
        %v336 = vld [vmem:[%s2 + $0x1f0] sm:$0xff]
        %v337 = vld [vmem:[%s2 + $0x1f8] sm:$0xff]
        %s338 = scalar_lea.vmem %s2, 512
        %v339 = vld [vmem:[%s338] sm:$0xff]
        %v340 = vld [vmem:[%s338 + $0x8] sm:$0xff]
        %v341 = vld [vmem:[%s338 + $0x10] sm:$0xff]
        %v342 = vld [vmem:[%s338 + $0x18] sm:$0xff]
        %v343 = vld [vmem:[%s338 + $0x20] sm:$0xff]
        %v344 = vld [vmem:[%s338 + $0x28] sm:$0xff]
        %v345 = vld [vmem:[%s338 + $0x30] sm:$0xff]
        %v346 = vld [vmem:[%s338 + $0x38] sm:$0xff]
        %v347 = vld [vmem:[%s338 + $0x40] sm:$0xff]
        %v348 = vld [vmem:[%s338 + $0x48] sm:$0xff]
        %v349 = vld [vmem:[%s338 + $0x50] sm:$0xff]
        %v350 = vld [vmem:[%s338 + $0x58] sm:$0xff]
        %v351 = vld [vmem:[%s338 + $0x60] sm:$0xff]
        %v352 = vld [vmem:[%s338 + $0x68] sm:$0xff]
        %v353 = vld [vmem:[%s338 + $0x70] sm:$0xff]
        %v354 = vld [vmem:[%s338 + $0x78] sm:$0xff]
        %v355 = vld [vmem:[%s338 + $0x80] sm:$0xff]
        %v356 = vld [vmem:[%s338 + $0x88] sm:$0xff]
        %v357 = vld [vmem:[%s338 + $0x90] sm:$0xff]
        %v358 = vld [vmem:[%s338 + $0x98] sm:$0xff]
        %v359 = vld [vmem:[%s338 + $0xa0] sm:$0xff]
        %v360 = vld [vmem:[%s338 + $0xa8] sm:$0xff]
        %v361 = vld [vmem:[%s338 + $0xb0] sm:$0xff]
        %v362 = vld [vmem:[%s338 + $0xb8] sm:$0xff]
        %v363 = vld [vmem:[%s338 + $0xc0] sm:$0xff]
        %v364 = vld [vmem:[%s338 + $0xc8] sm:$0xff]
        %v365 = vld [vmem:[%s338 + $0xd0] sm:$0xff]
        %v366 = vld [vmem:[%s338 + $0xd8] sm:$0xff]
        %v367 = vld [vmem:[%s338 + $0xe0] sm:$0xff]
        %v368 = vld [vmem:[%s338 + $0xe8] sm:$0xff]
        %v369 = vld [vmem:[%s338 + $0xf0] sm:$0xff]
        %v370 = vld [vmem:[%s338 + $0xf8] sm:$0xff]
        %v371 = vld [vmem:[%s338 + $0x100] sm:$0xff]
        %v372 = vld [vmem:[%s338 + $0x108] sm:$0xff]
        %v373 = vld [vmem:[%s338 + $0x110] sm:$0xff]
        %v374 = vld [vmem:[%s338 + $0x118] sm:$0xff]
        %v375 = vld [vmem:[%s338 + $0x120] sm:$0xff]
        %v376 = vld [vmem:[%s338 + $0x128] sm:$0xff]
        %v377 = vld [vmem:[%s338 + $0x130] sm:$0xff]
        %v378 = vld [vmem:[%s338 + $0x138] sm:$0xff]
        %v379 = vld [vmem:[%s338 + $0x140] sm:$0xff]
        %v380 = vld [vmem:[%s338 + $0x148] sm:$0xff]
        %v381 = vld [vmem:[%s338 + $0x150] sm:$0xff]
        %v382 = vld [vmem:[%s338 + $0x158] sm:$0xff]
        %v383 = vld [vmem:[%s338 + $0x160] sm:$0xff]
        %v384 = vld [vmem:[%s338 + $0x168] sm:$0xff]
        %v385 = vld [vmem:[%s338 + $0x170] sm:$0xff]
        %v386 = vld [vmem:[%s338 + $0x178] sm:$0xff]
        %v387 = vld [vmem:[%s338 + $0x180] sm:$0xff]
        %v388 = vld [vmem:[%s338 + $0x188] sm:$0xff]
        %v389 = vld [vmem:[%s338 + $0x190] sm:$0xff]
        %v390 = vld [vmem:[%s338 + $0x198] sm:$0xff]
        %v391 = vld [vmem:[%s338 + $0x1a0] sm:$0xff]
        %v392 = vld [vmem:[%s338 + $0x1a8] sm:$0xff]
        %v393 = vld [vmem:[%s338 + $0x1b0] sm:$0xff]
        %v394 = vld [vmem:[%s338 + $0x1b8] sm:$0xff]
        %v395 = vld [vmem:[%s338 + $0x1c0] sm:$0xff]
        %v396 = vld [vmem:[%s338 + $0x1c8] sm:$0xff]
        %v397 = vld [vmem:[%s338 + $0x1d0] sm:$0xff]
        %v398 = vld [vmem:[%s338 + $0x1d8] sm:$0xff]
        %v399 = vld [vmem:[%s338 + $0x1e0] sm:$0xff]
        %v400 = vld [vmem:[%s338 + $0x1e8] sm:$0xff]
        %v401 = vld [vmem:[%s338 + $0x1f0] sm:$0xff]
        %v402 = vld [vmem:[%s338 + $0x1f8] sm:$0xff]
        %403 = vmatprep.subr.mxu0 %v400
        %404 = vmatpush1.msra.mxu0 %v399
        %405 = vmatprep.subr.mxu0 %v396
        %406 = vmatpush1.msra.mxu0 %v395
        %407 = vmatprep.subr.mxu0 %v392
        %408 = vmatpush1.msra.mxu0 %v391
        %409 = vmatprep.subr.mxu0 %v388
        %410 = vmatpush1.msra.mxu0 %v387
        %411 = vmatprep.subr.mxu0 %v384
        %412 = vmatpush1.msra.mxu0 %v383
        %413 = vmatprep.subr.mxu0 %v380
        %414 = vmatpush1.msra.mxu0 %v379
        %415 = vmatprep.subr.mxu0 %v376
        %416 = vmatpush1.msra.mxu0 %v375
        %417 = vmatprep.subr.mxu0 %v372
        %418 = vmatpush1.msra.mxu0 %v371
        %419 = vmatprep.subr.mxu0 %v368
        %420 = vmatpush1.msra.mxu0 %v367
        %421 = vmatprep.subr.mxu0 %v364
        %422 = vmatpush1.msra.mxu0 %v363
        %423 = vmatprep.subr.mxu0 %v360
        %424 = vmatpush1.msra.mxu0 %v359
        %425 = vmatprep.subr.mxu0 %v356
        %426 = vmatpush1.msra.mxu0 %v355
        %427 = vmatprep.subr.mxu0 %v352
        %428 = vmatpush1.msra.mxu0 %v351
        %429 = vmatprep.subr.mxu0 %v348
        %430 = vmatpush1.msra.mxu0 %v347
        %431 = vmatprep.subr.mxu0 %v344
        %432 = vmatpush1.msra.mxu0 %v343
        %433 = vmatprep.subr.mxu0 %v340
        %434 = vmatpush1.msra.mxu0 %v339
        %435 = vmatprep.subr.mxu0 0.0
        %436 = vmatpush2.msra.mxu0 0.0
        %437 = vmatprep.subr.mxu0 0.0
        %438 = vmatpush2.msra.mxu0 0.0
        %439 = vmatprep.subr.mxu0 0.0
        %440 = vmatpush2.msra.mxu0 0.0
        %441 = vmatprep.subr.mxu0 0.0
        %442 = vmatpush2.msra.mxu0 0.0
        %443 = vmatprep.subr.mxu0 0.0
        %444 = vmatpush2.msra.mxu0 0.0
        %445 = vmatprep.subr.mxu0 0.0
        %446 = vmatpush2.msra.mxu0 0.0
        %447 = vmatprep.subr.mxu0 0.0
        %448 = vmatpush2.msra.mxu0 0.0
        %449 = vmatprep.subr.mxu0 0.0
        %450 = vmatpush2.msra.mxu0 0.0
        %451 = vmatprep.subr.mxu0 0.0
        %452 = vmatpush2.msra.mxu0 0.0
        %453 = vmatprep.subr.mxu0 0.0
        %454 = vmatpush2.msra.mxu0 0.0
        %455 = vmatprep.subr.mxu0 0.0
        %456 = vmatpush2.msra.mxu0 0.0
        %457 = vmatprep.subr.mxu0 0.0
        %458 = vmatpush2.msra.mxu0 0.0
        %459 = vmatprep.subr.mxu0 0.0
        %460 = vmatpush2.msra.mxu0 0.0
        %461 = vmatprep.subr.mxu0 0.0
        %462 = vmatpush2.msra.mxu0 0.0
        %463 = vmatprep.subr.mxu0 0.0
        %464 = vmatpush2.msra.mxu0 0.0
        %465 = vmatprep.subr.mxu0 0.0
        %466 = vmatpush2.msra.mxu0 0.0
        %467 = vmatprep.mubr.f32.mxu0 0.0
        %468 = vmatmul.mubr.f32.gmra.mxu0 %v242
        %v469 = vpop.f32.mrf.mxu0
        %v470 = vadd.f32 0.0, %v469
        %v471 = vpop.f32.mrf.mxu0
        %v472 = vadd.f32 0.0, %v471
        %473 = vmatprep.mubr.f32.mxu0 0.0
        %474 = vmatmul.mubr.f32.gmra.mxu0 %v243
        %v475 = vpop.f32.mrf.mxu0
        %v476 = vadd.f32 0.0, %v475
        %v477 = vpop.f32.mrf.mxu0
        %v478 = vadd.f32 0.0, %v477
        %479 = vmatprep.mubr.f32.mxu0 0.0
        %480 = vmatmul.mubr.f32.gmra.mxu0 %v244
        %v481 = vpop.f32.mrf.mxu0
        %v482 = vadd.f32 0.0, %v481
        %v483 = vpop.f32.mrf.mxu0
        %v484 = vadd.f32 0.0, %v483
        %485 = vmatprep.mubr.f32.mxu0 0.0
        %486 = vmatmul.mubr.f32.gmra.mxu0 %v245
        %v487 = vpop.f32.mrf.mxu0
        %v488 = vadd.f32 0.0, %v487
        %v489 = vpop.f32.mrf.mxu0
        %v490 = vadd.f32 0.0, %v489
        %491 = vmatprep.mubr.f32.mxu0 0.0
        %492 = vmatmul.mubr.f32.gmra.mxu0 %v246
        %v493 = vpop.f32.mrf.mxu0
        %v494 = vadd.f32 0.0, %v493
        %v495 = vpop.f32.mrf.mxu0
        %v496 = vadd.f32 0.0, %v495
        %497 = vmatprep.mubr.f32.mxu0 0.0
        %498 = vmatmul.mubr.f32.gmra.mxu0 %v247
        %v499 = vpop.f32.mrf.mxu0
        %v500 = vadd.f32 0.0, %v499
        %v501 = vpop.f32.mrf.mxu0
        %v502 = vadd.f32 0.0, %v501
        %503 = vmatprep.mubr.f32.mxu0 0.0
        %504 = vmatmul.mubr.f32.gmra.mxu0 %v248
        %v505 = vpop.f32.mrf.mxu0
        %v506 = vadd.f32 0.0, %v505
        %v507 = vpop.f32.mrf.mxu0
        %v508 = vadd.f32 0.0, %v507
        %509 = vmatprep.mubr.f32.mxu0 0.0
        %510 = vmatmul.mubr.f32.gmra.mxu0 %v249
        %v511 = vpop.f32.mrf.mxu0
        %v512 = vadd.f32 0.0, %v511
        %v513 = vpop.f32.mrf.mxu0
        %v514 = vadd.f32 0.0, %v513
        %515 = vmatprep.mubr.f32.mxu0 0.0
        %516 = vmatmul.mubr.f32.gmra.mxu0 %v250
        %v517 = vpop.f32.mrf.mxu0
        %v518 = vadd.f32 0.0, %v517
        %v519 = vpop.f32.mrf.mxu0
        %v520 = vadd.f32 0.0, %v519
        %521 = vmatprep.mubr.f32.mxu0 0.0
        %522 = vmatmul.mubr.f32.gmra.mxu0 %v251
        %v523 = vpop.f32.mrf.mxu0
        %v524 = vadd.f32 0.0, %v523
        %v525 = vpop.f32.mrf.mxu0
        %v526 = vadd.f32 0.0, %v525
        %527 = vmatprep.mubr.f32.mxu0 0.0
        %528 = vmatmul.mubr.f32.gmra.mxu0 %v252
        %v529 = vpop.f32.mrf.mxu0
        %v530 = vadd.f32 0.0, %v529
        %v531 = vpop.f32.mrf.mxu0
        %v532 = vadd.f32 0.0, %v531
        %533 = vmatprep.mubr.f32.mxu0 0.0
        %534 = vmatmul.mubr.f32.gmra.mxu0 %v253
        %v535 = vpop.f32.mrf.mxu0
        %v536 = vadd.f32 0.0, %v535
        %v537 = vpop.f32.mrf.mxu0
        %v538 = vadd.f32 0.0, %v537
        %539 = vmatprep.mubr.f32.mxu0 0.0
        %540 = vmatmul.mubr.f32.gmra.mxu0 %v254
        %v541 = vpop.f32.mrf.mxu0
        %v542 = vadd.f32 0.0, %v541
        %v543 = vpop.f32.mrf.mxu0
        %v544 = vadd.f32 0.0, %v543
        %545 = vmatprep.mubr.f32.mxu0 0.0
        %546 = vmatmul.mubr.f32.gmra.mxu0 %v255
        %v547 = vpop.f32.mrf.mxu0
        %v548 = vadd.f32 0.0, %v547
        %v549 = vpop.f32.mrf.mxu0
        %v550 = vadd.f32 0.0, %v549
        %551 = vmatprep.mubr.f32.mxu0 0.0
        %552 = vmatmul.mubr.f32.gmra.mxu0 %v256
        %v553 = vpop.f32.mrf.mxu0
        %v554 = vadd.f32 0.0, %v553
        %v555 = vpop.f32.mrf.mxu0
        %v556 = vadd.f32 0.0, %v555
        %557 = vmatprep.mubr.f32.mxu0 0.0
        %558 = vmatmul.mubr.f32.gmra.mxu0 %v257
        %v559 = vpop.f32.mrf.mxu0
        %v560 = vadd.f32 0.0, %v559
        %v561 = vpop.f32.mrf.mxu0
        %v562 = vadd.f32 0.0, %v561
        %563 = vmatprep.mubr.f32.mxu0 0.0
        %564 = vmatmul.mubr.f32.gmra.mxu0 %v258
        %v565 = vpop.f32.mrf.mxu0
        %v566 = vadd.f32 0.0, %v565
        %v567 = vpop.f32.mrf.mxu0
        %v568 = vadd.f32 0.0, %v567
        %569 = vmatprep.mubr.f32.mxu0 0.0
        %570 = vmatmul.mubr.f32.gmra.mxu0 %v259
        %v571 = vpop.f32.mrf.mxu0
        %v572 = vadd.f32 0.0, %v571
        %v573 = vpop.f32.mrf.mxu0
        %v574 = vadd.f32 0.0, %v573
        %575 = vmatprep.mubr.f32.mxu0 0.0
        %576 = vmatmul.mubr.f32.gmra.mxu0 %v260
        %v577 = vpop.f32.mrf.mxu0
        %v578 = vadd.f32 0.0, %v577
        %v579 = vpop.f32.mrf.mxu0
        %v580 = vadd.f32 0.0, %v579
        %581 = vmatprep.mubr.f32.mxu0 0.0
        %582 = vmatmul.mubr.f32.gmra.mxu0 %v261
        %v583 = vpop.f32.mrf.mxu0
        %v584 = vadd.f32 0.0, %v583
        %v585 = vpop.f32.mrf.mxu0
        %v586 = vadd.f32 0.0, %v585
        %587 = vmatprep.mubr.f32.mxu0 0.0
        %588 = vmatmul.mubr.f32.gmra.mxu0 %v262
        %v589 = vpop.f32.mrf.mxu0
        %v590 = vadd.f32 0.0, %v589
        %v591 = vpop.f32.mrf.mxu0
        %v592 = vadd.f32 0.0, %v591
        %593 = vmatprep.mubr.f32.mxu0 0.0
        %594 = vmatmul.mubr.f32.gmra.mxu0 %v263
        %v595 = vpop.f32.mrf.mxu0
        %v596 = vadd.f32 0.0, %v595
        %v597 = vpop.f32.mrf.mxu0
        %v598 = vadd.f32 0.0, %v597
        %599 = vmatprep.mubr.f32.mxu0 0.0
        %600 = vmatmul.mubr.f32.gmra.mxu0 %v264
        %v601 = vpop.f32.mrf.mxu0
        %v602 = vadd.f32 0.0, %v601
        %v603 = vpop.f32.mrf.mxu0
        %v604 = vadd.f32 0.0, %v603
        %605 = vmatprep.mubr.f32.mxu0 0.0
        %606 = vmatmul.mubr.f32.gmra.mxu0 %v265
        %v607 = vpop.f32.mrf.mxu0
        %v608 = vadd.f32 0.0, %v607
        %v609 = vpop.f32.mrf.mxu0
        %v610 = vadd.f32 0.0, %v609
        %611 = vmatprep.mubr.f32.mxu0 0.0
        %612 = vmatmul.mubr.f32.gmra.mxu0 %v266
        %v613 = vpop.f32.mrf.mxu0
        %v614 = vadd.f32 0.0, %v613
        %v615 = vpop.f32.mrf.mxu0
        %v616 = vadd.f32 0.0, %v615
        %617 = vmatprep.mubr.f32.mxu0 0.0
        %618 = vmatmul.mubr.f32.gmra.mxu0 %v267
        %v619 = vpop.f32.mrf.mxu0
        %v620 = vadd.f32 0.0, %v619
        %v621 = vpop.f32.mrf.mxu0
        %v622 = vadd.f32 0.0, %v621
        %623 = vmatprep.mubr.f32.mxu0 0.0
        %624 = vmatmul.mubr.f32.gmra.mxu0 %v268
        %v625 = vpop.f32.mrf.mxu0
        %v626 = vadd.f32 0.0, %v625
        %v627 = vpop.f32.mrf.mxu0
        %v628 = vadd.f32 0.0, %v627
        %629 = vmatprep.mubr.f32.mxu0 0.0
        %630 = vmatmul.mubr.f32.gmra.mxu0 %v269
        %v631 = vpop.f32.mrf.mxu0
        %v632 = vadd.f32 0.0, %v631
        %v633 = vpop.f32.mrf.mxu0
        %v634 = vadd.f32 0.0, %v633
        %635 = vmatprep.mubr.f32.mxu0 0.0
        %636 = vmatmul.mubr.f32.gmra.mxu0 %v270
        %v637 = vpop.f32.mrf.mxu0
        %v638 = vadd.f32 0.0, %v637
        %v639 = vpop.f32.mrf.mxu0
        %v640 = vadd.f32 0.0, %v639
        %641 = vmatprep.mubr.f32.mxu0 0.0
        %642 = vmatmul.mubr.f32.gmra.mxu0 %v271
        %v643 = vpop.f32.mrf.mxu0
        %v644 = vadd.f32 0.0, %v643
        %v645 = vpop.f32.mrf.mxu0
        %v646 = vadd.f32 0.0, %v645
        %647 = vmatprep.mubr.f32.mxu0 0.0
        %648 = vmatmul.mubr.f32.gmra.mxu0 %v272
        %v649 = vpop.f32.mrf.mxu0
        %v650 = vadd.f32 0.0, %v649
        %v651 = vpop.f32.mrf.mxu0
        %v652 = vadd.f32 0.0, %v651
        %653 = vmatprep.mubr.f32.mxu0 0.0
        %654 = vmatmul.mubr.f32.gmra.mxu0 %v273
        %v655 = vpop.f32.mrf.mxu0
        %v656 = vadd.f32 0.0, %v655
        %v657 = vpop.f32.mrf.mxu0
        %v658 = vadd.f32 0.0, %v657
        %659 = vdwg.mxu0
        %660 = vmatprep.subr.mxu0 %v402
        %661 = vmatpush1.msra.mxu0 %v401
        %662 = vmatprep.subr.mxu0 %v398
        %663 = vmatpush1.msra.mxu0 %v397
        %664 = vmatprep.subr.mxu0 %v394
        %665 = vmatpush1.msra.mxu0 %v393
        %666 = vmatprep.subr.mxu0 %v390
        %667 = vmatpush1.msra.mxu0 %v389
        %668 = vmatprep.subr.mxu0 %v386
        %669 = vmatpush1.msra.mxu0 %v385
        %670 = vmatprep.subr.mxu0 %v382
        %671 = vmatpush1.msra.mxu0 %v381
        %672 = vmatprep.subr.mxu0 %v378
        %673 = vmatpush1.msra.mxu0 %v377
        %674 = vmatprep.subr.mxu0 %v374
        %675 = vmatpush1.msra.mxu0 %v373
        %676 = vmatprep.subr.mxu0 %v370
        %677 = vmatpush1.msra.mxu0 %v369
        %678 = vmatprep.subr.mxu0 %v366
        %679 = vmatpush1.msra.mxu0 %v365
        %680 = vmatprep.subr.mxu0 %v362
        %681 = vmatpush1.msra.mxu0 %v361
        %682 = vmatprep.subr.mxu0 %v358
        %683 = vmatpush1.msra.mxu0 %v357
        %684 = vmatprep.subr.mxu0 %v354
        %685 = vmatpush1.msra.mxu0 %v353
        %686 = vmatprep.subr.mxu0 %v350
        %687 = vmatpush1.msra.mxu0 %v349
        %688 = vmatprep.subr.mxu0 %v346
        %689 = vmatpush1.msra.mxu0 %v345
        %690 = vmatprep.subr.mxu0 %v342
        %691 = vmatpush1.msra.mxu0 %v341
        %692 = vmatprep.subr.mxu0 0.0
        %693 = vmatpush2.msra.mxu0 0.0
        %694 = vmatprep.subr.mxu0 0.0
        %695 = vmatpush2.msra.mxu0 0.0
        %696 = vmatprep.subr.mxu0 0.0
        %697 = vmatpush2.msra.mxu0 0.0
        %698 = vmatprep.subr.mxu0 0.0
        %699 = vmatpush2.msra.mxu0 0.0
        %700 = vmatprep.subr.mxu0 0.0
        %701 = vmatpush2.msra.mxu0 0.0
        %702 = vmatprep.subr.mxu0 0.0
        %703 = vmatpush2.msra.mxu0 0.0
        %704 = vmatprep.subr.mxu0 0.0
        %705 = vmatpush2.msra.mxu0 0.0
        %706 = vmatprep.subr.mxu0 0.0
        %707 = vmatpush2.msra.mxu0 0.0
        %708 = vmatprep.subr.mxu0 0.0
        %709 = vmatpush2.msra.mxu0 0.0
        %710 = vmatprep.subr.mxu0 0.0
        %711 = vmatpush2.msra.mxu0 0.0
        %712 = vmatprep.subr.mxu0 0.0
        %713 = vmatpush2.msra.mxu0 0.0
        %714 = vmatprep.subr.mxu0 0.0
        %715 = vmatpush2.msra.mxu0 0.0
        %716 = vmatprep.subr.mxu0 0.0
        %717 = vmatpush2.msra.mxu0 0.0
        %718 = vmatprep.subr.mxu0 0.0
        %719 = vmatpush2.msra.mxu0 0.0
        %720 = vmatprep.subr.mxu0 0.0
        %721 = vmatpush2.msra.mxu0 0.0
        %722 = vmatprep.subr.mxu0 0.0
        %723 = vmatpush2.msra.mxu0 0.0
        %724 = vmatprep.mubr.f32.mxu0 0.0
        %725 = vmatmul.mubr.f32.gmra.mxu0 %v242
        %v726 = vpop.f32.mrf.mxu0
        %v727 = vadd.f32 0.0, %v726
        %v728 = vpop.f32.mrf.mxu0
        %v729 = vadd.f32 0.0, %v728
        %730 = vmatprep.mubr.f32.mxu0 0.0
        %731 = vmatmul.mubr.f32.gmra.mxu0 %v243
        %v732 = vpop.f32.mrf.mxu0
        %v733 = vadd.f32 0.0, %v732
        %v734 = vpop.f32.mrf.mxu0
        %v735 = vadd.f32 0.0, %v734
        %736 = vmatprep.mubr.f32.mxu0 0.0
        %737 = vmatmul.mubr.f32.gmra.mxu0 %v244
        %v738 = vpop.f32.mrf.mxu0
        %v739 = vadd.f32 0.0, %v738
        %v740 = vpop.f32.mrf.mxu0
        %v741 = vadd.f32 0.0, %v740
        %742 = vmatprep.mubr.f32.mxu0 0.0
        %743 = vmatmul.mubr.f32.gmra.mxu0 %v245
        %v744 = vpop.f32.mrf.mxu0
        %v745 = vadd.f32 0.0, %v744
        %v746 = vpop.f32.mrf.mxu0
        %v747 = vadd.f32 0.0, %v746
        %748 = vmatprep.mubr.f32.mxu0 0.0
        %749 = vmatmul.mubr.f32.gmra.mxu0 %v246
        %v750 = vpop.f32.mrf.mxu0
        %v751 = vadd.f32 0.0, %v750
        %v752 = vpop.f32.mrf.mxu0
        %v753 = vadd.f32 0.0, %v752
        %754 = vmatprep.mubr.f32.mxu0 0.0
        %755 = vmatmul.mubr.f32.gmra.mxu0 %v247
        %v756 = vpop.f32.mrf.mxu0
        %v757 = vadd.f32 0.0, %v756
        %v758 = vpop.f32.mrf.mxu0
        %v759 = vadd.f32 0.0, %v758
        %760 = vmatprep.mubr.f32.mxu0 0.0
        %761 = vmatmul.mubr.f32.gmra.mxu0 %v248
        %v762 = vpop.f32.mrf.mxu0
        %v763 = vadd.f32 0.0, %v762
        %v764 = vpop.f32.mrf.mxu0
        %v765 = vadd.f32 0.0, %v764
        %766 = vmatprep.mubr.f32.mxu0 0.0
        %767 = vmatmul.mubr.f32.gmra.mxu0 %v249
        %v768 = vpop.f32.mrf.mxu0
        %v769 = vadd.f32 0.0, %v768
        %v770 = vpop.f32.mrf.mxu0
        %v771 = vadd.f32 0.0, %v770
        %772 = vmatprep.mubr.f32.mxu0 0.0
        %773 = vmatmul.mubr.f32.gmra.mxu0 %v250
        %v774 = vpop.f32.mrf.mxu0
        %v775 = vadd.f32 0.0, %v774
        %v776 = vpop.f32.mrf.mxu0
        %v777 = vadd.f32 0.0, %v776
        %778 = vmatprep.mubr.f32.mxu0 0.0
        %779 = vmatmul.mubr.f32.gmra.mxu0 %v251
        %v780 = vpop.f32.mrf.mxu0
        %v781 = vadd.f32 0.0, %v780
        %v782 = vpop.f32.mrf.mxu0
        %v783 = vadd.f32 0.0, %v782
        %784 = vmatprep.mubr.f32.mxu0 0.0
        %785 = vmatmul.mubr.f32.gmra.mxu0 %v252
        %v786 = vpop.f32.mrf.mxu0
        %v787 = vadd.f32 0.0, %v786
        %v788 = vpop.f32.mrf.mxu0
        %v789 = vadd.f32 0.0, %v788
        %790 = vmatprep.mubr.f32.mxu0 0.0
        %791 = vmatmul.mubr.f32.gmra.mxu0 %v253
        %v792 = vpop.f32.mrf.mxu0
        %v793 = vadd.f32 0.0, %v792
        %v794 = vpop.f32.mrf.mxu0
        %v795 = vadd.f32 0.0, %v794
        %796 = vmatprep.mubr.f32.mxu0 0.0
        %797 = vmatmul.mubr.f32.gmra.mxu0 %v254
        %v798 = vpop.f32.mrf.mxu0
        %v799 = vadd.f32 0.0, %v798
        %v800 = vpop.f32.mrf.mxu0
        %v801 = vadd.f32 0.0, %v800
        %802 = vmatprep.mubr.f32.mxu0 0.0
        %803 = vmatmul.mubr.f32.gmra.mxu0 %v255
        %v804 = vpop.f32.mrf.mxu0
        %v805 = vadd.f32 0.0, %v804
        %v806 = vpop.f32.mrf.mxu0
        %v807 = vadd.f32 0.0, %v806
        %808 = vmatprep.mubr.f32.mxu0 0.0
        %809 = vmatmul.mubr.f32.gmra.mxu0 %v256
        %v810 = vpop.f32.mrf.mxu0
        %v811 = vadd.f32 0.0, %v810
        %v812 = vpop.f32.mrf.mxu0
        %v813 = vadd.f32 0.0, %v812
        %814 = vmatprep.mubr.f32.mxu0 0.0
        %815 = vmatmul.mubr.f32.gmra.mxu0 %v257
        %v816 = vpop.f32.mrf.mxu0
        %v817 = vadd.f32 0.0, %v816
        %v818 = vpop.f32.mrf.mxu0
        %v819 = vadd.f32 0.0, %v818
        %820 = vmatprep.mubr.f32.mxu0 0.0
        %821 = vmatmul.mubr.f32.gmra.mxu0 %v258
        %v822 = vpop.f32.mrf.mxu0
        %v823 = vadd.f32 0.0, %v822
        %v824 = vpop.f32.mrf.mxu0
        %v825 = vadd.f32 0.0, %v824
        %826 = vmatprep.mubr.f32.mxu0 0.0
        %827 = vmatmul.mubr.f32.gmra.mxu0 %v259
        %v828 = vpop.f32.mrf.mxu0
        %v829 = vadd.f32 0.0, %v828
        %v830 = vpop.f32.mrf.mxu0
        %v831 = vadd.f32 0.0, %v830
        %832 = vmatprep.mubr.f32.mxu0 0.0
        %833 = vmatmul.mubr.f32.gmra.mxu0 %v260
        %v834 = vpop.f32.mrf.mxu0
        %v835 = vadd.f32 0.0, %v834
        %v836 = vpop.f32.mrf.mxu0
        %v837 = vadd.f32 0.0, %v836
        %838 = vmatprep.mubr.f32.mxu0 0.0
        %839 = vmatmul.mubr.f32.gmra.mxu0 %v261
        %v840 = vpop.f32.mrf.mxu0
        %v841 = vadd.f32 0.0, %v840
        %v842 = vpop.f32.mrf.mxu0
        %v843 = vadd.f32 0.0, %v842
        %844 = vmatprep.mubr.f32.mxu0 0.0
        %845 = vmatmul.mubr.f32.gmra.mxu0 %v262
        %v846 = vpop.f32.mrf.mxu0
        %v847 = vadd.f32 0.0, %v846
        %v848 = vpop.f32.mrf.mxu0
        %v849 = vadd.f32 0.0, %v848
        %850 = vmatprep.mubr.f32.mxu0 0.0
        %851 = vmatmul.mubr.f32.gmra.mxu0 %v263
        %v852 = vpop.f32.mrf.mxu0
        %v853 = vadd.f32 0.0, %v852
        %v854 = vpop.f32.mrf.mxu0
        %v855 = vadd.f32 0.0, %v854
        %856 = vmatprep.mubr.f32.mxu0 0.0
        %857 = vmatmul.mubr.f32.gmra.mxu0 %v264
        %v858 = vpop.f32.mrf.mxu0
        %v859 = vadd.f32 0.0, %v858
        %v860 = vpop.f32.mrf.mxu0
        %v861 = vadd.f32 0.0, %v860
        %862 = vmatprep.mubr.f32.mxu0 0.0
        %863 = vmatmul.mubr.f32.gmra.mxu0 %v265
        %v864 = vpop.f32.mrf.mxu0
        %v865 = vadd.f32 0.0, %v864
        %v866 = vpop.f32.mrf.mxu0
        %v867 = vadd.f32 0.0, %v866
        %868 = vmatprep.mubr.f32.mxu0 0.0
        %869 = vmatmul.mubr.f32.gmra.mxu0 %v266
        %v870 = vpop.f32.mrf.mxu0
        %v871 = vadd.f32 0.0, %v870
        %v872 = vpop.f32.mrf.mxu0
        %v873 = vadd.f32 0.0, %v872
        %874 = vmatprep.mubr.f32.mxu0 0.0
        %875 = vmatmul.mubr.f32.gmra.mxu0 %v267
        %v876 = vpop.f32.mrf.mxu0
        %v877 = vadd.f32 0.0, %v876
        %v878 = vpop.f32.mrf.mxu0
        %v879 = vadd.f32 0.0, %v878
        %880 = vmatprep.mubr.f32.mxu0 0.0
        %881 = vmatmul.mubr.f32.gmra.mxu0 %v268
        %v882 = vpop.f32.mrf.mxu0
        %v883 = vadd.f32 0.0, %v882
        %v884 = vpop.f32.mrf.mxu0
        %v885 = vadd.f32 0.0, %v884
        %886 = vmatprep.mubr.f32.mxu0 0.0
        %887 = vmatmul.mubr.f32.gmra.mxu0 %v269
        %v888 = vpop.f32.mrf.mxu0
        %v889 = vadd.f32 0.0, %v888
        %v890 = vpop.f32.mrf.mxu0
        %v891 = vadd.f32 0.0, %v890
        %892 = vmatprep.mubr.f32.mxu0 0.0
        %893 = vmatmul.mubr.f32.gmra.mxu0 %v270
        %v894 = vpop.f32.mrf.mxu0
        %v895 = vadd.f32 0.0, %v894
        %v896 = vpop.f32.mrf.mxu0
        %v897 = vadd.f32 0.0, %v896
        %898 = vmatprep.mubr.f32.mxu0 0.0
        %899 = vmatmul.mubr.f32.gmra.mxu0 %v271
        %v900 = vpop.f32.mrf.mxu0
        %v901 = vadd.f32 0.0, %v900
        %v902 = vpop.f32.mrf.mxu0
        %v903 = vadd.f32 0.0, %v902
        %904 = vmatprep.mubr.f32.mxu0 0.0
        %905 = vmatmul.mubr.f32.gmra.mxu0 %v272
        %v906 = vpop.f32.mrf.mxu0
        %v907 = vadd.f32 0.0, %v906
        %v908 = vpop.f32.mrf.mxu0
        %v909 = vadd.f32 0.0, %v908
        %910 = vmatprep.mubr.f32.mxu0 0.0
        %911 = vmatmul.mubr.f32.gmra.mxu0 %v273
        %v912 = vpop.f32.mrf.mxu0
        %v913 = vadd.f32 0.0, %v912
        %v914 = vpop.f32.mrf.mxu0
        %v915 = vadd.f32 0.0, %v914
        %916 = vdwg.mxu0
        %917 = vmatprep.subr.mxu0 %v335
        %918 = vmatpush1.msra.mxu0 %v334
        %919 = vmatprep.subr.mxu0 %v331
        %920 = vmatpush1.msra.mxu0 %v330
        %921 = vmatprep.subr.mxu0 %v327
        %922 = vmatpush1.msra.mxu0 %v326
        %923 = vmatprep.subr.mxu0 %v323
        %924 = vmatpush1.msra.mxu0 %v322
        %925 = vmatprep.subr.mxu0 %v319
        %926 = vmatpush1.msra.mxu0 %v318
        %927 = vmatprep.subr.mxu0 %v315
        %928 = vmatpush1.msra.mxu0 %v314
        %929 = vmatprep.subr.mxu0 %v311
        %930 = vmatpush1.msra.mxu0 %v310
        %931 = vmatprep.subr.mxu0 %v307
        %932 = vmatpush1.msra.mxu0 %v306
        %933 = vmatprep.subr.mxu0 %v303
        %934 = vmatpush1.msra.mxu0 %v302
        %935 = vmatprep.subr.mxu0 %v299
        %936 = vmatpush1.msra.mxu0 %v298
        %937 = vmatprep.subr.mxu0 %v295
        %938 = vmatpush1.msra.mxu0 %v294
        %939 = vmatprep.subr.mxu0 %v291
        %940 = vmatpush1.msra.mxu0 %v290
        %941 = vmatprep.subr.mxu0 %v287
        %942 = vmatpush1.msra.mxu0 %v286
        %943 = vmatprep.subr.mxu0 %v283
        %944 = vmatpush1.msra.mxu0 %v282
        %945 = vmatprep.subr.mxu0 %v279
        %946 = vmatpush1.msra.mxu0 %v278
        %947 = vmatprep.subr.mxu0 %v275
        %948 = vmatpush1.msra.mxu0 %v274
        %949 = vmatprep.subr.mxu0 0.0
        %950 = vmatpush2.msra.mxu0 0.0
        %951 = vmatprep.subr.mxu0 0.0
        %952 = vmatpush2.msra.mxu0 0.0
        %953 = vmatprep.subr.mxu0 0.0
        %954 = vmatpush2.msra.mxu0 0.0
        %955 = vmatprep.subr.mxu0 0.0
        %956 = vmatpush2.msra.mxu0 0.0
        %957 = vmatprep.subr.mxu0 0.0
        %958 = vmatpush2.msra.mxu0 0.0
        %959 = vmatprep.subr.mxu0 0.0
        %960 = vmatpush2.msra.mxu0 0.0
        %961 = vmatprep.subr.mxu0 0.0
        %962 = vmatpush2.msra.mxu0 0.0
        %963 = vmatprep.subr.mxu0 0.0
        %964 = vmatpush2.msra.mxu0 0.0
        %965 = vmatprep.subr.mxu0 0.0
        %966 = vmatpush2.msra.mxu0 0.0
        %967 = vmatprep.subr.mxu0 0.0
        %968 = vmatpush2.msra.mxu0 0.0
        %969 = vmatprep.subr.mxu0 0.0
        %970 = vmatpush2.msra.mxu0 0.0
        %971 = vmatprep.subr.mxu0 0.0
        %972 = vmatpush2.msra.mxu0 0.0
        %973 = vmatprep.subr.mxu0 0.0
        %974 = vmatpush2.msra.mxu0 0.0
        %975 = vmatprep.subr.mxu0 0.0
        %976 = vmatpush2.msra.mxu0 0.0
        %977 = vmatprep.subr.mxu0 0.0
        %978 = vmatpush2.msra.mxu0 0.0
        %979 = vmatprep.subr.mxu0 0.0
        %980 = vmatpush2.msra.mxu0 0.0
        %981 = vmatprep.mubr.f32.mxu0 0.0
        %982 = vmatmul.mubr.f32.gmra.mxu0 %v241
        %v983 = vpop.f32.mrf.mxu0
        %v984 = vadd.f32 %v470, %v983
        %v985 = vpop.f32.mrf.mxu0
        %v986 = vadd.f32 %v472, %v985
        %987 = vmatprep.mubr.f32.mxu0 0.0
        %988 = vmatmul.mubr.f32.gmra.mxu0 %v242
        %v989 = vpop.f32.mrf.mxu0
        %v990 = vadd.f32 %v476, %v989
        %v991 = vpop.f32.mrf.mxu0
        %v992 = vadd.f32 %v478, %v991
        %993 = vmatprep.mubr.f32.mxu0 0.0
        %994 = vmatmul.mubr.f32.gmra.mxu0 %v243
        %v995 = vpop.f32.mrf.mxu0
        %v996 = vadd.f32 %v482, %v995
        %v997 = vpop.f32.mrf.mxu0
        %v998 = vadd.f32 %v484, %v997
        %999 = vmatprep.mubr.f32.mxu0 0.0
        %1000 = vmatmul.mubr.f32.gmra.mxu0 %v244
        %v1001 = vpop.f32.mrf.mxu0
        %v1002 = vadd.f32 %v488, %v1001
        %v1003 = vpop.f32.mrf.mxu0
        %v1004 = vadd.f32 %v490, %v1003
        %1005 = vmatprep.mubr.f32.mxu0 0.0
        %1006 = vmatmul.mubr.f32.gmra.mxu0 %v245
        %v1007 = vpop.f32.mrf.mxu0
        %v1008 = vadd.f32 %v494, %v1007
        %v1009 = vpop.f32.mrf.mxu0
        %v1010 = vadd.f32 %v496, %v1009
        %1011 = vmatprep.mubr.f32.mxu0 0.0
        %1012 = vmatmul.mubr.f32.gmra.mxu0 %v246
        %v1013 = vpop.f32.mrf.mxu0
        %v1014 = vadd.f32 %v500, %v1013
        %v1015 = vpop.f32.mrf.mxu0
        %v1016 = vadd.f32 %v502, %v1015
        %1017 = vmatprep.mubr.f32.mxu0 0.0
        %1018 = vmatmul.mubr.f32.gmra.mxu0 %v247
        %v1019 = vpop.f32.mrf.mxu0
        %v1020 = vadd.f32 %v506, %v1019
        %v1021 = vpop.f32.mrf.mxu0
        %v1022 = vadd.f32 %v508, %v1021
        %1023 = vmatprep.mubr.f32.mxu0 0.0
        %1024 = vmatmul.mubr.f32.gmra.mxu0 %v248
        %v1025 = vpop.f32.mrf.mxu0
        %v1026 = vadd.f32 %v512, %v1025
        %v1027 = vpop.f32.mrf.mxu0
        %v1028 = vadd.f32 %v514, %v1027
        %1029 = vmatprep.mubr.f32.mxu0 0.0
        %1030 = vmatmul.mubr.f32.gmra.mxu0 %v249
        %v1031 = vpop.f32.mrf.mxu0
        %v1032 = vadd.f32 %v518, %v1031
        %v1033 = vpop.f32.mrf.mxu0
        %v1034 = vadd.f32 %v520, %v1033
        %1035 = vmatprep.mubr.f32.mxu0 0.0
        %1036 = vmatmul.mubr.f32.gmra.mxu0 %v250
        %v1037 = vpop.f32.mrf.mxu0
        %v1038 = vadd.f32 %v524, %v1037
        %v1039 = vpop.f32.mrf.mxu0
        %v1040 = vadd.f32 %v526, %v1039
        %1041 = vmatprep.mubr.f32.mxu0 0.0
        %1042 = vmatmul.mubr.f32.gmra.mxu0 %v251
        %v1043 = vpop.f32.mrf.mxu0
        %v1044 = vadd.f32 %v530, %v1043
        %v1045 = vpop.f32.mrf.mxu0
        %v1046 = vadd.f32 %v532, %v1045
        %1047 = vmatprep.mubr.f32.mxu0 0.0
        %1048 = vmatmul.mubr.f32.gmra.mxu0 %v252
        %v1049 = vpop.f32.mrf.mxu0
        %v1050 = vadd.f32 %v536, %v1049
        %v1051 = vpop.f32.mrf.mxu0
        %v1052 = vadd.f32 %v538, %v1051
        %1053 = vmatprep.mubr.f32.mxu0 0.0
        %1054 = vmatmul.mubr.f32.gmra.mxu0 %v253
        %v1055 = vpop.f32.mrf.mxu0
        %v1056 = vadd.f32 %v542, %v1055
        %v1057 = vpop.f32.mrf.mxu0
        %v1058 = vadd.f32 %v544, %v1057
        %1059 = vmatprep.mubr.f32.mxu0 0.0
        %1060 = vmatmul.mubr.f32.gmra.mxu0 %v254
        %v1061 = vpop.f32.mrf.mxu0
        %v1062 = vadd.f32 %v548, %v1061
        %v1063 = vpop.f32.mrf.mxu0
        %v1064 = vadd.f32 %v550, %v1063
        %1065 = vmatprep.mubr.f32.mxu0 0.0
        %1066 = vmatmul.mubr.f32.gmra.mxu0 %v255
        %v1067 = vpop.f32.mrf.mxu0
        %v1068 = vadd.f32 %v554, %v1067
        %v1069 = vpop.f32.mrf.mxu0
        %v1070 = vadd.f32 %v556, %v1069
        %1071 = vmatprep.mubr.f32.mxu0 0.0
        %1072 = vmatmul.mubr.f32.gmra.mxu0 %v256
        %v1073 = vpop.f32.mrf.mxu0
        %v1074 = vadd.f32 %v560, %v1073
        %v1075 = vpop.f32.mrf.mxu0
        %v1076 = vadd.f32 %v562, %v1075
        %1077 = vmatprep.mubr.f32.mxu0 0.0
        %1078 = vmatmul.mubr.f32.gmra.mxu0 %v257
        %v1079 = vpop.f32.mrf.mxu0
        %v1080 = vadd.f32 %v566, %v1079
        %v1081 = vpop.f32.mrf.mxu0
        %v1082 = vadd.f32 %v568, %v1081
        %1083 = vmatprep.mubr.f32.mxu0 0.0
        %1084 = vmatmul.mubr.f32.gmra.mxu0 %v258
        %v1085 = vpop.f32.mrf.mxu0
        %v1086 = vadd.f32 %v572, %v1085
        %v1087 = vpop.f32.mrf.mxu0
        %v1088 = vadd.f32 %v574, %v1087
        %1089 = vmatprep.mubr.f32.mxu0 0.0
        %1090 = vmatmul.mubr.f32.gmra.mxu0 %v259
        %v1091 = vpop.f32.mrf.mxu0
        %v1092 = vadd.f32 %v578, %v1091
        %v1093 = vpop.f32.mrf.mxu0
        %v1094 = vadd.f32 %v580, %v1093
        %1095 = vmatprep.mubr.f32.mxu0 0.0
        %1096 = vmatmul.mubr.f32.gmra.mxu0 %v260
        %v1097 = vpop.f32.mrf.mxu0
        %v1098 = vadd.f32 %v584, %v1097
        %v1099 = vpop.f32.mrf.mxu0
        %v1100 = vadd.f32 %v586, %v1099
        %1101 = vmatprep.mubr.f32.mxu0 0.0
        %1102 = vmatmul.mubr.f32.gmra.mxu0 %v261
        %v1103 = vpop.f32.mrf.mxu0
        %v1104 = vadd.f32 %v590, %v1103
        %v1105 = vpop.f32.mrf.mxu0
        %v1106 = vadd.f32 %v592, %v1105
        %1107 = vmatprep.mubr.f32.mxu0 0.0
        %1108 = vmatmul.mubr.f32.gmra.mxu0 %v262
        %v1109 = vpop.f32.mrf.mxu0
        %v1110 = vadd.f32 %v596, %v1109
        %v1111 = vpop.f32.mrf.mxu0
        %v1112 = vadd.f32 %v598, %v1111
        %1113 = vmatprep.mubr.f32.mxu0 0.0
        %1114 = vmatmul.mubr.f32.gmra.mxu0 %v263
        %v1115 = vpop.f32.mrf.mxu0
        %v1116 = vadd.f32 %v602, %v1115
        %v1117 = vpop.f32.mrf.mxu0
        %v1118 = vadd.f32 %v604, %v1117
        %1119 = vmatprep.mubr.f32.mxu0 0.0
        %1120 = vmatmul.mubr.f32.gmra.mxu0 %v264
        %v1121 = vpop.f32.mrf.mxu0
        %v1122 = vadd.f32 %v608, %v1121
        %v1123 = vpop.f32.mrf.mxu0
        %v1124 = vadd.f32 %v610, %v1123
        %1125 = vmatprep.mubr.f32.mxu0 0.0
        %1126 = vmatmul.mubr.f32.gmra.mxu0 %v265
        %v1127 = vpop.f32.mrf.mxu0
        %v1128 = vadd.f32 %v614, %v1127
        %v1129 = vpop.f32.mrf.mxu0
        %v1130 = vadd.f32 %v616, %v1129
        %1131 = vmatprep.mubr.f32.mxu0 0.0
        %1132 = vmatmul.mubr.f32.gmra.mxu0 %v266
        %v1133 = vpop.f32.mrf.mxu0
        %v1134 = vadd.f32 %v620, %v1133
        %v1135 = vpop.f32.mrf.mxu0
        %v1136 = vadd.f32 %v622, %v1135
        %1137 = vmatprep.mubr.f32.mxu0 0.0
        %1138 = vmatmul.mubr.f32.gmra.mxu0 %v267
        %v1139 = vpop.f32.mrf.mxu0
        %v1140 = vadd.f32 %v626, %v1139
        %v1141 = vpop.f32.mrf.mxu0
        %v1142 = vadd.f32 %v628, %v1141
        %1143 = vmatprep.mubr.f32.mxu0 0.0
        %1144 = vmatmul.mubr.f32.gmra.mxu0 %v268
        %v1145 = vpop.f32.mrf.mxu0
        %v1146 = vadd.f32 %v632, %v1145
        %v1147 = vpop.f32.mrf.mxu0
        %v1148 = vadd.f32 %v634, %v1147
        %1149 = vmatprep.mubr.f32.mxu0 0.0
        %1150 = vmatmul.mubr.f32.gmra.mxu0 %v269
        %v1151 = vpop.f32.mrf.mxu0
        %v1152 = vadd.f32 %v638, %v1151
        %v1153 = vpop.f32.mrf.mxu0
        %v1154 = vadd.f32 %v640, %v1153
        %1155 = vmatprep.mubr.f32.mxu0 0.0
        %1156 = vmatmul.mubr.f32.gmra.mxu0 %v270
        %v1157 = vpop.f32.mrf.mxu0
        %v1158 = vadd.f32 %v644, %v1157
        %v1159 = vpop.f32.mrf.mxu0
        %v1160 = vadd.f32 %v646, %v1159
        %1161 = vmatprep.mubr.f32.mxu0 0.0
        %1162 = vmatmul.mubr.f32.gmra.mxu0 %v271
        %v1163 = vpop.f32.mrf.mxu0
        %v1164 = vadd.f32 %v650, %v1163
        %v1165 = vpop.f32.mrf.mxu0
        %v1166 = vadd.f32 %v652, %v1165
        %1167 = vmatprep.mubr.f32.mxu0 0.0
        %1168 = vmatmul.mubr.f32.gmra.mxu0 %v272
        %v1169 = vpop.f32.mrf.mxu0
        %v1170 = vadd.f32 %v656, %v1169
        %v1171 = vpop.f32.mrf.mxu0
        %v1172 = vadd.f32 %v658, %v1171
        %1173 = vdwg.mxu0
        %1174 = vmatprep.subr.mxu0 %v337
        %1175 = vmatpush1.msra.mxu0 %v336
        %1176 = vmatprep.subr.mxu0 %v333
        %1177 = vmatpush1.msra.mxu0 %v332
        %1178 = vmatprep.subr.mxu0 %v329
        %1179 = vmatpush1.msra.mxu0 %v328
        %1180 = vmatprep.subr.mxu0 %v325
        %1181 = vmatpush1.msra.mxu0 %v324
        %1182 = vmatprep.subr.mxu0 %v321
        %1183 = vmatpush1.msra.mxu0 %v320
        %1184 = vmatprep.subr.mxu0 %v317
        %1185 = vmatpush1.msra.mxu0 %v316
        %1186 = vmatprep.subr.mxu0 %v313
        %1187 = vmatpush1.msra.mxu0 %v312
        %1188 = vmatprep.subr.mxu0 %v309
        %1189 = vmatpush1.msra.mxu0 %v308
        %1190 = vmatprep.subr.mxu0 %v305
        %1191 = vmatpush1.msra.mxu0 %v304
        %1192 = vmatprep.subr.mxu0 %v301
        %1193 = vmatpush1.msra.mxu0 %v300
        %1194 = vmatprep.subr.mxu0 %v297
        %1195 = vmatpush1.msra.mxu0 %v296
        %1196 = vmatprep.subr.mxu0 %v293
        %1197 = vmatpush1.msra.mxu0 %v292
        %1198 = vmatprep.subr.mxu0 %v289
        %1199 = vmatpush1.msra.mxu0 %v288
        %1200 = vmatprep.subr.mxu0 %v285
        %1201 = vmatpush1.msra.mxu0 %v284
        %1202 = vmatprep.subr.mxu0 %v281
        %1203 = vmatpush1.msra.mxu0 %v280
        %1204 = vmatprep.subr.mxu0 %v277
        %1205 = vmatpush1.msra.mxu0 %v276
        %1206 = vmatprep.subr.mxu0 0.0
        %1207 = vmatpush2.msra.mxu0 0.0
        %1208 = vmatprep.subr.mxu0 0.0
        %1209 = vmatpush2.msra.mxu0 0.0
        %1210 = vmatprep.subr.mxu0 0.0
        %1211 = vmatpush2.msra.mxu0 0.0
        %1212 = vmatprep.subr.mxu0 0.0
        %1213 = vmatpush2.msra.mxu0 0.0
        %1214 = vmatprep.subr.mxu0 0.0
        %1215 = vmatpush2.msra.mxu0 0.0
        %1216 = vmatprep.subr.mxu0 0.0
        %1217 = vmatpush2.msra.mxu0 0.0
        %1218 = vmatprep.subr.mxu0 0.0
        %1219 = vmatpush2.msra.mxu0 0.0
        %1220 = vmatprep.subr.mxu0 0.0
        %1221 = vmatpush2.msra.mxu0 0.0
        %1222 = vmatprep.subr.mxu0 0.0
        %1223 = vmatpush2.msra.mxu0 0.0
        %1224 = vmatprep.subr.mxu0 0.0
        %1225 = vmatpush2.msra.mxu0 0.0
        %1226 = vmatprep.subr.mxu0 0.0
        %1227 = vmatpush2.msra.mxu0 0.0
        %1228 = vmatprep.subr.mxu0 0.0
        %1229 = vmatpush2.msra.mxu0 0.0
        %1230 = vmatprep.subr.mxu0 0.0
        %1231 = vmatpush2.msra.mxu0 0.0
        %1232 = vmatprep.subr.mxu0 0.0
        %1233 = vmatpush2.msra.mxu0 0.0
        %1234 = vmatprep.subr.mxu0 0.0
        %1235 = vmatpush2.msra.mxu0 0.0
        %1236 = vmatprep.subr.mxu0 0.0
        %1237 = vmatpush2.msra.mxu0 0.0
        %1238 = vmatprep.mubr.f32.mxu0 0.0
        %1239 = vmatmul.mubr.f32.gmra.mxu0 %v241
        %v1240 = vpop.f32.mrf.mxu0
        %v1241 = vadd.f32 %v727, %v1240
        %v1242 = vpop.f32.mrf.mxu0
        %v1243 = vadd.f32 %v729, %v1242
        %1244 = vmatprep.mubr.f32.mxu0 0.0
        %1245 = vmatmul.mubr.f32.gmra.mxu0 %v242
        %v1246 = vpop.f32.mrf.mxu0
        %v1247 = vadd.f32 %v733, %v1246
        %v1248 = vpop.f32.mrf.mxu0
        %v1249 = vadd.f32 %v735, %v1248
        %1250 = vmatprep.mubr.f32.mxu0 0.0
        %1251 = vmatmul.mubr.f32.gmra.mxu0 %v243
        %v1252 = vpop.f32.mrf.mxu0
        %v1253 = vadd.f32 %v739, %v1252
        %v1254 = vpop.f32.mrf.mxu0
        %v1255 = vadd.f32 %v741, %v1254
        %1256 = vmatprep.mubr.f32.mxu0 0.0
        %1257 = vmatmul.mubr.f32.gmra.mxu0 %v244
        %v1258 = vpop.f32.mrf.mxu0
        %v1259 = vadd.f32 %v745, %v1258
        %v1260 = vpop.f32.mrf.mxu0
        %v1261 = vadd.f32 %v747, %v1260
        %1262 = vmatprep.mubr.f32.mxu0 0.0
        %1263 = vmatmul.mubr.f32.gmra.mxu0 %v245
        %v1264 = vpop.f32.mrf.mxu0
        %v1265 = vadd.f32 %v751, %v1264
        %v1266 = vpop.f32.mrf.mxu0
        %v1267 = vadd.f32 %v753, %v1266
        %1268 = vmatprep.mubr.f32.mxu0 0.0
        %1269 = vmatmul.mubr.f32.gmra.mxu0 %v246
        %v1270 = vpop.f32.mrf.mxu0
        %v1271 = vadd.f32 %v757, %v1270
        %v1272 = vpop.f32.mrf.mxu0
        %v1273 = vadd.f32 %v759, %v1272
        %1274 = vmatprep.mubr.f32.mxu0 0.0
        %1275 = vmatmul.mubr.f32.gmra.mxu0 %v247
        %v1276 = vpop.f32.mrf.mxu0
        %v1277 = vadd.f32 %v763, %v1276
        %v1278 = vpop.f32.mrf.mxu0
        %v1279 = vadd.f32 %v765, %v1278
        %1280 = vmatprep.mubr.f32.mxu0 0.0
        %1281 = vmatmul.mubr.f32.gmra.mxu0 %v248
        %v1282 = vpop.f32.mrf.mxu0
        %v1283 = vadd.f32 %v769, %v1282
        %v1284 = vpop.f32.mrf.mxu0
        %v1285 = vadd.f32 %v771, %v1284
        %1286 = vmatprep.mubr.f32.mxu0 0.0
        %1287 = vmatmul.mubr.f32.gmra.mxu0 %v249
        %v1288 = vpop.f32.mrf.mxu0
        %v1289 = vadd.f32 %v775, %v1288
        %v1290 = vpop.f32.mrf.mxu0
        %v1291 = vadd.f32 %v777, %v1290
        %1292 = vmatprep.mubr.f32.mxu0 0.0
        %1293 = vmatmul.mubr.f32.gmra.mxu0 %v250
        %v1294 = vpop.f32.mrf.mxu0
        %v1295 = vadd.f32 %v781, %v1294
        %v1296 = vpop.f32.mrf.mxu0
        %v1297 = vadd.f32 %v783, %v1296
        %1298 = vmatprep.mubr.f32.mxu0 0.0
        %1299 = vmatmul.mubr.f32.gmra.mxu0 %v251
        %v1300 = vpop.f32.mrf.mxu0
        %v1301 = vadd.f32 %v787, %v1300
        %v1302 = vpop.f32.mrf.mxu0
        %v1303 = vadd.f32 %v789, %v1302
        %1304 = vmatprep.mubr.f32.mxu0 0.0
        %1305 = vmatmul.mubr.f32.gmra.mxu0 %v252
        %v1306 = vpop.f32.mrf.mxu0
        %v1307 = vadd.f32 %v793, %v1306
        %v1308 = vpop.f32.mrf.mxu0
        %v1309 = vadd.f32 %v795, %v1308
        %1310 = vmatprep.mubr.f32.mxu0 0.0
        %1311 = vmatmul.mubr.f32.gmra.mxu0 %v253
        %v1312 = vpop.f32.mrf.mxu0
        %v1313 = vadd.f32 %v799, %v1312
        %v1314 = vpop.f32.mrf.mxu0
        %v1315 = vadd.f32 %v801, %v1314
        %1316 = vmatprep.mubr.f32.mxu0 0.0
        %1317 = vmatmul.mubr.f32.gmra.mxu0 %v254
        %v1318 = vpop.f32.mrf.mxu0
        %v1319 = vadd.f32 %v805, %v1318
        %v1320 = vpop.f32.mrf.mxu0
        %v1321 = vadd.f32 %v807, %v1320
        %1322 = vmatprep.mubr.f32.mxu0 0.0
        %1323 = vmatmul.mubr.f32.gmra.mxu0 %v255
        %v1324 = vpop.f32.mrf.mxu0
        %v1325 = vadd.f32 %v811, %v1324
        %v1326 = vpop.f32.mrf.mxu0
        %v1327 = vadd.f32 %v813, %v1326
        %1328 = vmatprep.mubr.f32.mxu0 0.0
        %1329 = vmatmul.mubr.f32.gmra.mxu0 %v256
        %v1330 = vpop.f32.mrf.mxu0
        %v1331 = vadd.f32 %v817, %v1330
        %v1332 = vpop.f32.mrf.mxu0
        %v1333 = vadd.f32 %v819, %v1332
        %1334 = vmatprep.mubr.f32.mxu0 0.0
        %1335 = vmatmul.mubr.f32.gmra.mxu0 %v257
        %v1336 = vpop.f32.mrf.mxu0
        %v1337 = vadd.f32 %v823, %v1336
        %v1338 = vpop.f32.mrf.mxu0
        %v1339 = vadd.f32 %v825, %v1338
        %1340 = vmatprep.mubr.f32.mxu0 0.0
        %1341 = vmatmul.mubr.f32.gmra.mxu0 %v258
        %v1342 = vpop.f32.mrf.mxu0
        %v1343 = vadd.f32 %v829, %v1342
        %v1344 = vpop.f32.mrf.mxu0
        %v1345 = vadd.f32 %v831, %v1344
        %1346 = vmatprep.mubr.f32.mxu0 0.0
        %1347 = vmatmul.mubr.f32.gmra.mxu0 %v259
        %v1348 = vpop.f32.mrf.mxu0
        %v1349 = vadd.f32 %v835, %v1348
        %v1350 = vpop.f32.mrf.mxu0
        %v1351 = vadd.f32 %v837, %v1350
        %1352 = vmatprep.mubr.f32.mxu0 0.0
        %1353 = vmatmul.mubr.f32.gmra.mxu0 %v260
        %v1354 = vpop.f32.mrf.mxu0
        %v1355 = vadd.f32 %v841, %v1354
        %v1356 = vpop.f32.mrf.mxu0
        %v1357 = vadd.f32 %v843, %v1356
        %1358 = vmatprep.mubr.f32.mxu0 0.0
        %1359 = vmatmul.mubr.f32.gmra.mxu0 %v261
        %v1360 = vpop.f32.mrf.mxu0
        %v1361 = vadd.f32 %v847, %v1360
        %v1362 = vpop.f32.mrf.mxu0
        %v1363 = vadd.f32 %v849, %v1362
        %1364 = vmatprep.mubr.f32.mxu0 0.0
        %1365 = vmatmul.mubr.f32.gmra.mxu0 %v262
        %v1366 = vpop.f32.mrf.mxu0
        %v1367 = vadd.f32 %v853, %v1366
        %v1368 = vpop.f32.mrf.mxu0
        %v1369 = vadd.f32 %v855, %v1368
        %1370 = vmatprep.mubr.f32.mxu0 0.0
        %1371 = vmatmul.mubr.f32.gmra.mxu0 %v263
        %v1372 = vpop.f32.mrf.mxu0
        %v1373 = vadd.f32 %v859, %v1372
        %v1374 = vpop.f32.mrf.mxu0
        %v1375 = vadd.f32 %v861, %v1374
        %1376 = vmatprep.mubr.f32.mxu0 0.0
        %1377 = vmatmul.mubr.f32.gmra.mxu0 %v264
        %v1378 = vpop.f32.mrf.mxu0
        %v1379 = vadd.f32 %v865, %v1378
        %v1380 = vpop.f32.mrf.mxu0
        %v1381 = vadd.f32 %v867, %v1380
        %1382 = vmatprep.mubr.f32.mxu0 0.0
        %1383 = vmatmul.mubr.f32.gmra.mxu0 %v265
        %v1384 = vpop.f32.mrf.mxu0
        %v1385 = vadd.f32 %v871, %v1384
        %v1386 = vpop.f32.mrf.mxu0
        %v1387 = vadd.f32 %v873, %v1386
        %1388 = vmatprep.mubr.f32.mxu0 0.0
        %1389 = vmatmul.mubr.f32.gmra.mxu0 %v266
        %v1390 = vpop.f32.mrf.mxu0
        %v1391 = vadd.f32 %v877, %v1390
        %v1392 = vpop.f32.mrf.mxu0
        %v1393 = vadd.f32 %v879, %v1392
        %1394 = vmatprep.mubr.f32.mxu0 0.0
        %1395 = vmatmul.mubr.f32.gmra.mxu0 %v267
        %v1396 = vpop.f32.mrf.mxu0
        %v1397 = vadd.f32 %v883, %v1396
        %v1398 = vpop.f32.mrf.mxu0
        %v1399 = vadd.f32 %v885, %v1398
        %1400 = vmatprep.mubr.f32.mxu0 0.0
        %1401 = vmatmul.mubr.f32.gmra.mxu0 %v268
        %v1402 = vpop.f32.mrf.mxu0
        %v1403 = vadd.f32 %v889, %v1402
        %v1404 = vpop.f32.mrf.mxu0
        %v1405 = vadd.f32 %v891, %v1404
        %1406 = vmatprep.mubr.f32.mxu0 0.0
        %1407 = vmatmul.mubr.f32.gmra.mxu0 %v269
        %v1408 = vpop.f32.mrf.mxu0
        %v1409 = vadd.f32 %v895, %v1408
        %v1410 = vpop.f32.mrf.mxu0
        %v1411 = vadd.f32 %v897, %v1410
        %1412 = vmatprep.mubr.f32.mxu0 0.0
        %1413 = vmatmul.mubr.f32.gmra.mxu0 %v270
        %v1414 = vpop.f32.mrf.mxu0
        %v1415 = vadd.f32 %v901, %v1414
        %v1416 = vpop.f32.mrf.mxu0
        %v1417 = vadd.f32 %v903, %v1416
        %1418 = vmatprep.mubr.f32.mxu0 0.0
        %1419 = vmatmul.mubr.f32.gmra.mxu0 %v271
        %v1420 = vpop.f32.mrf.mxu0
        %v1421 = vadd.f32 %v907, %v1420
        %v1422 = vpop.f32.mrf.mxu0
        %v1423 = vadd.f32 %v909, %v1422
        %1424 = vmatprep.mubr.f32.mxu0 0.0
        %1425 = vmatmul.mubr.f32.gmra.mxu0 %v272
        %v1426 = vpop.f32.mrf.mxu0
        %v1427 = vadd.f32 %v913, %v1426
        %v1428 = vpop.f32.mrf.mxu0
        %v1429 = vadd.f32 %v915, %v1428
        %1430 = vdwg.mxu0
        %1431 = vst [vmem:[%s217] sm:$0xff] %v984
        %1432 = vst [vmem:[%s217 + $0x8] sm:$0xff] %v990
        %1433 = vst [vmem:[%s217 + $0x10] sm:$0xff] %v996
        %1434 = vst [vmem:[%s217 + $0x18] sm:$0xff] %v1002
        %1435 = vst [vmem:[%s217 + $0x20] sm:$0xff] %v1008
        %1436 = vst [vmem:[%s217 + $0x28] sm:$0xff] %v1014
        %1437 = vst [vmem:[%s217 + $0x30] sm:$0xff] %v1020
        %1438 = vst [vmem:[%s217 + $0x38] sm:$0xff] %v1026
        %1439 = vst [vmem:[%s217 + $0x40] sm:$0xff] %v1032
        %1440 = vst [vmem:[%s217 + $0x48] sm:$0xff] %v1038
        %1441 = vst [vmem:[%s217 + $0x50] sm:$0xff] %v1044
        %1442 = vst [vmem:[%s217 + $0x58] sm:$0xff] %v1050
        %1443 = vst [vmem:[%s217 + $0x60] sm:$0xff] %v1056
        %1444 = vst [vmem:[%s217 + $0x68] sm:$0xff] %v1062
        %1445 = vst [vmem:[%s217 + $0x70] sm:$0xff] %v1068
        %1446 = vst [vmem:[%s217 + $0x78] sm:$0xff] %v1074
        %1447 = vst [vmem:[%s217 + $0x80] sm:$0xff] %v1080
        %1448 = vst [vmem:[%s217 + $0x88] sm:$0xff] %v1086
        %1449 = vst [vmem:[%s217 + $0x90] sm:$0xff] %v1092
        %1450 = vst [vmem:[%s217 + $0x98] sm:$0xff] %v1098
        %1451 = vst [vmem:[%s217 + $0xa0] sm:$0xff] %v1104
        %1452 = vst [vmem:[%s217 + $0xa8] sm:$0xff] %v1110
        %1453 = vst [vmem:[%s217 + $0xb0] sm:$0xff] %v1116
        %1454 = vst [vmem:[%s217 + $0xb8] sm:$0xff] %v1122
        %1455 = vst [vmem:[%s217 + $0xc0] sm:$0xff] %v1128
        %1456 = vst [vmem:[%s217 + $0xc8] sm:$0xff] %v1134
        %1457 = vst [vmem:[%s217 + $0xd0] sm:$0xff] %v1140
        %1458 = vst [vmem:[%s217 + $0xd8] sm:$0xff] %v1146
        %1459 = vst [vmem:[%s217 + $0xe0] sm:$0xff] %v1152
        %1460 = vst [vmem:[%s217 + $0xe8] sm:$0xff] %v1158
        %1461 = vst [vmem:[%s217 + $0xf0] sm:$0xff] %v1164
        %1462 = vst [vmem:[%s217 + $0xf8] sm:$0xff] %v1170
        %s1463 = scalar_lea.vmem %s217, 256 [#allocation2]
        %1464 = vst [vmem:[%s1463] sm:$0xff] %v986
        %1465 = vst [vmem:[%s1463 + $0x8] sm:$0xff] %v992
        %1466 = vst [vmem:[%s1463 + $0x10] sm:$0xff] %v998
        %1467 = vst [vmem:[%s1463 + $0x18] sm:$0xff] %v1004
        %1468 = vst [vmem:[%s1463 + $0x20] sm:$0xff] %v1010
        %1469 = vst [vmem:[%s1463 + $0x28] sm:$0xff] %v1016
        %1470 = vst [vmem:[%s1463 + $0x30] sm:$0xff] %v1022
        %1471 = vst [vmem:[%s1463 + $0x38] sm:$0xff] %v1028
        %1472 = vst [vmem:[%s1463 + $0x40] sm:$0xff] %v1034
        %1473 = vst [vmem:[%s1463 + $0x48] sm:$0xff] %v1040
        %1474 = vst [vmem:[%s1463 + $0x50] sm:$0xff] %v1046
        %1475 = vst [vmem:[%s1463 + $0x58] sm:$0xff] %v1052
        %1476 = vst [vmem:[%s1463 + $0x60] sm:$0xff] %v1058
        %1477 = vst [vmem:[%s1463 + $0x68] sm:$0xff] %v1064
        %1478 = vst [vmem:[%s1463 + $0x70] sm:$0xff] %v1070
        %1479 = vst [vmem:[%s1463 + $0x78] sm:$0xff] %v1076
        %1480 = vst [vmem:[%s1463 + $0x80] sm:$0xff] %v1082
        %1481 = vst [vmem:[%s1463 + $0x88] sm:$0xff] %v1088
        %1482 = vst [vmem:[%s1463 + $0x90] sm:$0xff] %v1094
        %1483 = vst [vmem:[%s1463 + $0x98] sm:$0xff] %v1100
        %1484 = vst [vmem:[%s1463 + $0xa0] sm:$0xff] %v1106
        %1485 = vst [vmem:[%s1463 + $0xa8] sm:$0xff] %v1112
        %1486 = vst [vmem:[%s1463 + $0xb0] sm:$0xff] %v1118
        %1487 = vst [vmem:[%s1463 + $0xb8] sm:$0xff] %v1124
        %1488 = vst [vmem:[%s1463 + $0xc0] sm:$0xff] %v1130
        %1489 = vst [vmem:[%s1463 + $0xc8] sm:$0xff] %v1136
        %1490 = vst [vmem:[%s1463 + $0xd0] sm:$0xff] %v1142
        %1491 = vst [vmem:[%s1463 + $0xd8] sm:$0xff] %v1148
        %1492 = vst [vmem:[%s1463 + $0xe0] sm:$0xff] %v1154
        %1493 = vst [vmem:[%s1463 + $0xe8] sm:$0xff] %v1160
        %1494 = vst [vmem:[%s1463 + $0xf0] sm:$0xff] %v1166
        %1495 = vst [vmem:[%s1463 + $0xf8] sm:$0xff] %v1172
        %s1496 = scalar_lea.vmem %s217, 512 [#allocation2]
        %1497 = vst [vmem:[%s1496] sm:$0xff] %v1241
        %1498 = vst [vmem:[%s1496 + $0x8] sm:$0xff] %v1247
        %1499 = vst [vmem:[%s1496 + $0x10] sm:$0xff] %v1253
        %1500 = vst [vmem:[%s1496 + $0x18] sm:$0xff] %v1259
        %1501 = vst [vmem:[%s1496 + $0x20] sm:$0xff] %v1265
        %1502 = vst [vmem:[%s1496 + $0x28] sm:$0xff] %v1271
        %1503 = vst [vmem:[%s1496 + $0x30] sm:$0xff] %v1277
        %1504 = vst [vmem:[%s1496 + $0x38] sm:$0xff] %v1283
        %1505 = vst [vmem:[%s1496 + $0x40] sm:$0xff] %v1289
        %1506 = vst [vmem:[%s1496 + $0x48] sm:$0xff] %v1295
        %1507 = vst [vmem:[%s1496 + $0x50] sm:$0xff] %v1301
        %1508 = vst [vmem:[%s1496 + $0x58] sm:$0xff] %v1307
        %1509 = vst [vmem:[%s1496 + $0x60] sm:$0xff] %v1313
        %1510 = vst [vmem:[%s1496 + $0x68] sm:$0xff] %v1319
        %1511 = vst [vmem:[%s1496 + $0x70] sm:$0xff] %v1325
        %1512 = vst [vmem:[%s1496 + $0x78] sm:$0xff] %v1331
        %1513 = vst [vmem:[%s1496 + $0x80] sm:$0xff] %v1337
        %1514 = vst [vmem:[%s1496 + $0x88] sm:$0xff] %v1343
        %1515 = vst [vmem:[%s1496 + $0x90] sm:$0xff] %v1349
        %1516 = vst [vmem:[%s1496 + $0x98] sm:$0xff] %v1355
        %1517 = vst [vmem:[%s1496 + $0xa0] sm:$0xff] %v1361
        %1518 = vst [vmem:[%s1496 + $0xa8] sm:$0xff] %v1367
        %1519 = vst [vmem:[%s1496 + $0xb0] sm:$0xff] %v1373
        %1520 = vst [vmem:[%s1496 + $0xb8] sm:$0xff] %v1379
        %1521 = vst [vmem:[%s1496 + $0xc0] sm:$0xff] %v1385
        %1522 = vst [vmem:[%s1496 + $0xc8] sm:$0xff] %v1391
        %1523 = vst [vmem:[%s1496 + $0xd0] sm:$0xff] %v1397
        %1524 = vst [vmem:[%s1496 + $0xd8] sm:$0xff] %v1403
        %1525 = vst [vmem:[%s1496 + $0xe0] sm:$0xff] %v1409
        %1526 = vst [vmem:[%s1496 + $0xe8] sm:$0xff] %v1415
        %1527 = vst [vmem:[%s1496 + $0xf0] sm:$0xff] %v1421
        %1528 = vst [vmem:[%s1496 + $0xf8] sm:$0xff] %v1427
        %s1529 = scalar_lea.vmem %s217, 768 [#allocation2]
        %1530 = vst [vmem:[%s1529] sm:$0xff] %v1243
        %1531 = vst [vmem:[%s1529 + $0x8] sm:$0xff] %v1249
        %1532 = vst [vmem:[%s1529 + $0x10] sm:$0xff] %v1255
        %1533 = vst [vmem:[%s1529 + $0x18] sm:$0xff] %v1261
        %1534 = vst [vmem:[%s1529 + $0x20] sm:$0xff] %v1267
        %1535 = vst [vmem:[%s1529 + $0x28] sm:$0xff] %v1273
        %1536 = vst [vmem:[%s1529 + $0x30] sm:$0xff] %v1279
        %1537 = vst [vmem:[%s1529 + $0x38] sm:$0xff] %v1285
        %1538 = vst [vmem:[%s1529 + $0x40] sm:$0xff] %v1291
        %1539 = vst [vmem:[%s1529 + $0x48] sm:$0xff] %v1297
        %1540 = vst [vmem:[%s1529 + $0x50] sm:$0xff] %v1303
        %1541 = vst [vmem:[%s1529 + $0x58] sm:$0xff] %v1309
        %1542 = vst [vmem:[%s1529 + $0x60] sm:$0xff] %v1315
        %1543 = vst [vmem:[%s1529 + $0x68] sm:$0xff] %v1321
        %1544 = vst [vmem:[%s1529 + $0x70] sm:$0xff] %v1327
        %1545 = vst [vmem:[%s1529 + $0x78] sm:$0xff] %v1333
        %1546 = vst [vmem:[%s1529 + $0x80] sm:$0xff] %v1339
        %1547 = vst [vmem:[%s1529 + $0x88] sm:$0xff] %v1345
        %1548 = vst [vmem:[%s1529 + $0x90] sm:$0xff] %v1351
        %1549 = vst [vmem:[%s1529 + $0x98] sm:$0xff] %v1357
        %1550 = vst [vmem:[%s1529 + $0xa0] sm:$0xff] %v1363
        %1551 = vst [vmem:[%s1529 + $0xa8] sm:$0xff] %v1369
        %1552 = vst [vmem:[%s1529 + $0xb0] sm:$0xff] %v1375
        %1553 = vst [vmem:[%s1529 + $0xb8] sm:$0xff] %v1381
        %1554 = vst [vmem:[%s1529 + $0xc0] sm:$0xff] %v1387
        %1555 = vst [vmem:[%s1529 + $0xc8] sm:$0xff] %v1393
        %1556 = vst [vmem:[%s1529 + $0xd0] sm:$0xff] %v1399
        %1557 = vst [vmem:[%s1529 + $0xd8] sm:$0xff] %v1405
        %1558 = vst [vmem:[%s1529 + $0xe0] sm:$0xff] %v1411
        %1559 = vst [vmem:[%s1529 + $0xe8] sm:$0xff] %v1417
        %1560 = vst [vmem:[%s1529 + $0xf0] sm:$0xff] %v1423
        %1561 = vst [vmem:[%s1529 + $0xf8] sm:$0xff] %v1429
        %s1562 = sand.u32 %s117, 1
        %s1563 = sand.u32 %s117, 1
        %s1564 = smul.addr %s1563, 1024
        %s1565 = scalar_lea.vmem [#allocation2], %s1564
        // Predicated region
        $region33: #{_forward.1} parent=31 // pred_check
          %p1566 = pneg %p127
        $region34: #{_forward.1} parent=31 // pred_check_branch
          %1568 = sbr.rel (%p1566) target = $region36
        $region35: #{_forward.1} parent=31 // pred_region
          %s1569 = smul.u32 32, %s19
          %s1570 = smul.addr %s18, 64
          %s1571 = sadd.s32 %s1569, %s1570
          %s1572 = smul.addr %s1571, 8
          %s1573 = scalar_lea.vmem %s3, %s1572
          // Predicated region
          $region37: #{_forward.1} parent=35 // pred_check
            _
          $region38: #{_forward.1} parent=35 // pred_check_branch
            %1575 = sbr.rel (0) target = $region40
          $region39: #{_forward.1} parent=35 // pred_region
            // Predicated region
            $region41: #{_forward.1} parent=39 // pred_check
              _
            $region42: #{_forward.1} parent=39 // pred_check_branch
              %1577 = sbr.rel (0) target = $region44
            $region43: #{_forward.1} parent=39 // pred_region
              loop: start=0, step=1, limit=1
              $region45: #{_forward.1} parent=43 // loop_pre_header
                _
              $region46: #{_forward.1} parent=43 // loop_header
                %s1579 = sphi 0, %s1583
                %p1580 = scmp.ge.s32.totalorder %s1579, 1
                %s1584 = sphi %s1565, %s1565
                %s1585 = sphi %s1573, %s1573
              $region47: #{_forward.1} parent=43 // loop_header_branch
                %1582 = sbr.rel (%p1580) target = $region51
              $region48: #{_forward.1} parent=43 // loop_body
                %v1586 = vld [vmem:[%s1584] sm:$0xff]
                %1587 = vst [vmem:[%s1585] sm:$0xff] %v1586
                %v1588 = vld [vmem:[%s1584 + $0x8] sm:$0xff]
                %1589 = vst [vmem:[%s1585 + $0x8] sm:$0xff] %v1588
                %v1590 = vld [vmem:[%s1584 + $0x10] sm:$0xff]
                %1591 = vst [vmem:[%s1585 + $0x10] sm:$0xff] %v1590
                %v1592 = vld [vmem:[%s1584 + $0x18] sm:$0xff]
                %1593 = vst [vmem:[%s1585 + $0x18] sm:$0xff] %v1592
                %v1594 = vld [vmem:[%s1584 + $0x20] sm:$0xff]
                %1595 = vst [vmem:[%s1585 + $0x20] sm:$0xff] %v1594
                %v1596 = vld [vmem:[%s1584 + $0x28] sm:$0xff]
                %1597 = vst [vmem:[%s1585 + $0x28] sm:$0xff] %v1596
                %v1598 = vld [vmem:[%s1584 + $0x30] sm:$0xff]
                %1599 = vst [vmem:[%s1585 + $0x30] sm:$0xff] %v1598
                %v1600 = vld [vmem:[%s1584 + $0x38] sm:$0xff]
                %1601 = vst [vmem:[%s1585 + $0x38] sm:$0xff] %v1600
                %v1602 = vld [vmem:[%s1584 + $0x40] sm:$0xff]
                %1603 = vst [vmem:[%s1585 + $0x40] sm:$0xff] %v1602
                %v1604 = vld [vmem:[%s1584 + $0x48] sm:$0xff]
                %1605 = vst [vmem:[%s1585 + $0x48] sm:$0xff] %v1604
                %v1606 = vld [vmem:[%s1584 + $0x50] sm:$0xff]
                %1607 = vst [vmem:[%s1585 + $0x50] sm:$0xff] %v1606
                %v1608 = vld [vmem:[%s1584 + $0x58] sm:$0xff]
                %1609 = vst [vmem:[%s1585 + $0x58] sm:$0xff] %v1608
                %v1610 = vld [vmem:[%s1584 + $0x60] sm:$0xff]
                %1611 = vst [vmem:[%s1585 + $0x60] sm:$0xff] %v1610
                %v1612 = vld [vmem:[%s1584 + $0x68] sm:$0xff]
                %1613 = vst [vmem:[%s1585 + $0x68] sm:$0xff] %v1612
                %v1614 = vld [vmem:[%s1584 + $0x70] sm:$0xff]
                %1615 = vst [vmem:[%s1585 + $0x70] sm:$0xff] %v1614
                %v1616 = vld [vmem:[%s1584 + $0x78] sm:$0xff]
                %1617 = vst [vmem:[%s1585 + $0x78] sm:$0xff] %v1616
                %v1618 = vld [vmem:[%s1584 + $0x80] sm:$0xff]
                %1619 = vst [vmem:[%s1585 + $0x80] sm:$0xff] %v1618
                %v1620 = vld [vmem:[%s1584 + $0x88] sm:$0xff]
                %1621 = vst [vmem:[%s1585 + $0x88] sm:$0xff] %v1620
                %v1622 = vld [vmem:[%s1584 + $0x90] sm:$0xff]
                %1623 = vst [vmem:[%s1585 + $0x90] sm:$0xff] %v1622
                %v1624 = vld [vmem:[%s1584 + $0x98] sm:$0xff]
                %1625 = vst [vmem:[%s1585 + $0x98] sm:$0xff] %v1624
                %v1626 = vld [vmem:[%s1584 + $0xa0] sm:$0xff]
                %1627 = vst [vmem:[%s1585 + $0xa0] sm:$0xff] %v1626
                %v1628 = vld [vmem:[%s1584 + $0xa8] sm:$0xff]
                %1629 = vst [vmem:[%s1585 + $0xa8] sm:$0xff] %v1628
                %v1630 = vld [vmem:[%s1584 + $0xb0] sm:$0xff]
                %1631 = vst [vmem:[%s1585 + $0xb0] sm:$0xff] %v1630
                %v1632 = vld [vmem:[%s1584 + $0xb8] sm:$0xff]
                %1633 = vst [vmem:[%s1585 + $0xb8] sm:$0xff] %v1632
                %v1634 = vld [vmem:[%s1584 + $0xc0] sm:$0xff]
                %1635 = vst [vmem:[%s1585 + $0xc0] sm:$0xff] %v1634
                %v1636 = vld [vmem:[%s1584 + $0xc8] sm:$0xff]
                %1637 = vst [vmem:[%s1585 + $0xc8] sm:$0xff] %v1636
                %v1638 = vld [vmem:[%s1584 + $0xd0] sm:$0xff]
                %1639 = vst [vmem:[%s1585 + $0xd0] sm:$0xff] %v1638
                %v1640 = vld [vmem:[%s1584 + $0xd8] sm:$0xff]
                %1641 = vst [vmem:[%s1585 + $0xd8] sm:$0xff] %v1640
                %v1642 = vld [vmem:[%s1584 + $0xe0] sm:$0xff]
                %1643 = vst [vmem:[%s1585 + $0xe0] sm:$0xff] %v1642
                %v1644 = vld [vmem:[%s1584 + $0xe8] sm:$0xff]
                %1645 = vst [vmem:[%s1585 + $0xe8] sm:$0xff] %v1644
                %v1646 = vld [vmem:[%s1584 + $0xf0] sm:$0xff]
                %1647 = vst [vmem:[%s1585 + $0xf0] sm:$0xff] %v1646
                %v1648 = vld [vmem:[%s1584 + $0xf8] sm:$0xff]
                %1649 = vst [vmem:[%s1585 + $0xf8] sm:$0xff] %v1648
                %v1650 = vld [vmem:[%s1584 + $0x100] sm:$0xff]
                %1651 = vst [vmem:[%s1585 + $0x200] sm:$0xff] %v1650
                %v1652 = vld [vmem:[%s1584 + $0x108] sm:$0xff]
                %1653 = vst [vmem:[%s1585 + $0x208] sm:$0xff] %v1652
                %v1654 = vld [vmem:[%s1584 + $0x110] sm:$0xff]
                %1655 = vst [vmem:[%s1585 + $0x210] sm:$0xff] %v1654
                %v1656 = vld [vmem:[%s1584 + $0x118] sm:$0xff]
                %1657 = vst [vmem:[%s1585 + $0x218] sm:$0xff] %v1656
                %v1658 = vld [vmem:[%s1584 + $0x120] sm:$0xff]
                %1659 = vst [vmem:[%s1585 + $0x220] sm:$0xff] %v1658
                %v1660 = vld [vmem:[%s1584 + $0x128] sm:$0xff]
                %1661 = vst [vmem:[%s1585 + $0x228] sm:$0xff] %v1660
                %v1662 = vld [vmem:[%s1584 + $0x130] sm:$0xff]
                %1663 = vst [vmem:[%s1585 + $0x230] sm:$0xff] %v1662
                %v1664 = vld [vmem:[%s1584 + $0x138] sm:$0xff]
                %1665 = vst [vmem:[%s1585 + $0x238] sm:$0xff] %v1664
                %v1666 = vld [vmem:[%s1584 + $0x140] sm:$0xff]
                %1667 = vst [vmem:[%s1585 + $0x240] sm:$0xff] %v1666
                %v1668 = vld [vmem:[%s1584 + $0x148] sm:$0xff]
                %1669 = vst [vmem:[%s1585 + $0x248] sm:$0xff] %v1668
                %v1670 = vld [vmem:[%s1584 + $0x150] sm:$0xff]
                %1671 = vst [vmem:[%s1585 + $0x250] sm:$0xff] %v1670
                %v1672 = vld [vmem:[%s1584 + $0x158] sm:$0xff]
                %1673 = vst [vmem:[%s1585 + $0x258] sm:$0xff] %v1672
                %v1674 = vld [vmem:[%s1584 + $0x160] sm:$0xff]
                %1675 = vst [vmem:[%s1585 + $0x260] sm:$0xff] %v1674
                %v1676 = vld [vmem:[%s1584 + $0x168] sm:$0xff]
                %1677 = vst [vmem:[%s1585 + $0x268] sm:$0xff] %v1676
                %v1678 = vld [vmem:[%s1584 + $0x170] sm:$0xff]
                %1679 = vst [vmem:[%s1585 + $0x270] sm:$0xff] %v1678
                %v1680 = vld [vmem:[%s1584 + $0x178] sm:$0xff]
                %1681 = vst [vmem:[%s1585 + $0x278] sm:$0xff] %v1680
                %v1682 = vld [vmem:[%s1584 + $0x180] sm:$0xff]
                %1683 = vst [vmem:[%s1585 + $0x280] sm:$0xff] %v1682
                %v1684 = vld [vmem:[%s1584 + $0x188] sm:$0xff]
                %1685 = vst [vmem:[%s1585 + $0x288] sm:$0xff] %v1684
                %v1686 = vld [vmem:[%s1584 + $0x190] sm:$0xff]
                %1687 = vst [vmem:[%s1585 + $0x290] sm:$0xff] %v1686
                %v1688 = vld [vmem:[%s1584 + $0x198] sm:$0xff]
                %1689 = vst [vmem:[%s1585 + $0x298] sm:$0xff] %v1688
                %v1690 = vld [vmem:[%s1584 + $0x1a0] sm:$0xff]
                %1691 = vst [vmem:[%s1585 + $0x2a0] sm:$0xff] %v1690
                %v1692 = vld [vmem:[%s1584 + $0x1a8] sm:$0xff]
                %1693 = vst [vmem:[%s1585 + $0x2a8] sm:$0xff] %v1692
                %v1694 = vld [vmem:[%s1584 + $0x1b0] sm:$0xff]
                %1695 = vst [vmem:[%s1585 + $0x2b0] sm:$0xff] %v1694
                %v1696 = vld [vmem:[%s1584 + $0x1b8] sm:$0xff]
                %1697 = vst [vmem:[%s1585 + $0x2b8] sm:$0xff] %v1696
                %v1698 = vld [vmem:[%s1584 + $0x1c0] sm:$0xff]
                %1699 = vst [vmem:[%s1585 + $0x2c0] sm:$0xff] %v1698
                %v1700 = vld [vmem:[%s1584 + $0x1c8] sm:$0xff]
                %1701 = vst [vmem:[%s1585 + $0x2c8] sm:$0xff] %v1700
                %v1702 = vld [vmem:[%s1584 + $0x1d0] sm:$0xff]
                %1703 = vst [vmem:[%s1585 + $0x2d0] sm:$0xff] %v1702
                %v1704 = vld [vmem:[%s1584 + $0x1d8] sm:$0xff]
                %1705 = vst [vmem:[%s1585 + $0x2d8] sm:$0xff] %v1704
                %v1706 = vld [vmem:[%s1584 + $0x1e0] sm:$0xff]
                %1707 = vst [vmem:[%s1585 + $0x2e0] sm:$0xff] %v1706
                %v1708 = vld [vmem:[%s1584 + $0x1e8] sm:$0xff]
                %1709 = vst [vmem:[%s1585 + $0x2e8] sm:$0xff] %v1708
                %v1710 = vld [vmem:[%s1584 + $0x1f0] sm:$0xff]
                %1711 = vst [vmem:[%s1585 + $0x2f0] sm:$0xff] %v1710
                %v1712 = vld [vmem:[%s1584 + $0x1f8] sm:$0xff]
                %1713 = vst [vmem:[%s1585 + $0x2f8] sm:$0xff] %v1712
                %v1714 = vld [vmem:[%s1584 + $0x200] sm:$0xff]
                %1715 = vst [vmem:[%s1585 + $0x400] sm:$0xff] %v1714
                %v1716 = vld [vmem:[%s1584 + $0x208] sm:$0xff]
                %1717 = vst [vmem:[%s1585 + $0x408] sm:$0xff] %v1716
                %v1718 = vld [vmem:[%s1584 + $0x210] sm:$0xff]
                %1719 = vst [vmem:[%s1585 + $0x410] sm:$0xff] %v1718
                %v1720 = vld [vmem:[%s1584 + $0x218] sm:$0xff]
                %1721 = vst [vmem:[%s1585 + $0x418] sm:$0xff] %v1720
                %v1722 = vld [vmem:[%s1584 + $0x220] sm:$0xff]
                %1723 = vst [vmem:[%s1585 + $0x420] sm:$0xff] %v1722
                %v1724 = vld [vmem:[%s1584 + $0x228] sm:$0xff]
                %1725 = vst [vmem:[%s1585 + $0x428] sm:$0xff] %v1724
                %v1726 = vld [vmem:[%s1584 + $0x230] sm:$0xff]
                %1727 = vst [vmem:[%s1585 + $0x430] sm:$0xff] %v1726
                %v1728 = vld [vmem:[%s1584 + $0x238] sm:$0xff]
                %1729 = vst [vmem:[%s1585 + $0x438] sm:$0xff] %v1728
                %v1730 = vld [vmem:[%s1584 + $0x240] sm:$0xff]
                %1731 = vst [vmem:[%s1585 + $0x440] sm:$0xff] %v1730
                %v1732 = vld [vmem:[%s1584 + $0x248] sm:$0xff]
                %1733 = vst [vmem:[%s1585 + $0x448] sm:$0xff] %v1732
                %v1734 = vld [vmem:[%s1584 + $0x250] sm:$0xff]
                %1735 = vst [vmem:[%s1585 + $0x450] sm:$0xff] %v1734
                %v1736 = vld [vmem:[%s1584 + $0x258] sm:$0xff]
                %1737 = vst [vmem:[%s1585 + $0x458] sm:$0xff] %v1736
                %v1738 = vld [vmem:[%s1584 + $0x260] sm:$0xff]
                %1739 = vst [vmem:[%s1585 + $0x460] sm:$0xff] %v1738
                %v1740 = vld [vmem:[%s1584 + $0x268] sm:$0xff]
                %1741 = vst [vmem:[%s1585 + $0x468] sm:$0xff] %v1740
                %v1742 = vld [vmem:[%s1584 + $0x270] sm:$0xff]
                %1743 = vst [vmem:[%s1585 + $0x470] sm:$0xff] %v1742
                %v1744 = vld [vmem:[%s1584 + $0x278] sm:$0xff]
                %1745 = vst [vmem:[%s1585 + $0x478] sm:$0xff] %v1744
                %v1746 = vld [vmem:[%s1584 + $0x280] sm:$0xff]
                %1747 = vst [vmem:[%s1585 + $0x480] sm:$0xff] %v1746
                %v1748 = vld [vmem:[%s1584 + $0x288] sm:$0xff]
                %1749 = vst [vmem:[%s1585 + $0x488] sm:$0xff] %v1748
                %v1750 = vld [vmem:[%s1584 + $0x290] sm:$0xff]
                %1751 = vst [vmem:[%s1585 + $0x490] sm:$0xff] %v1750
                %v1752 = vld [vmem:[%s1584 + $0x298] sm:$0xff]
                %1753 = vst [vmem:[%s1585 + $0x498] sm:$0xff] %v1752
                %v1754 = vld [vmem:[%s1584 + $0x2a0] sm:$0xff]
                %1755 = vst [vmem:[%s1585 + $0x4a0] sm:$0xff] %v1754
                %v1756 = vld [vmem:[%s1584 + $0x2a8] sm:$0xff]
                %1757 = vst [vmem:[%s1585 + $0x4a8] sm:$0xff] %v1756
                %v1758 = vld [vmem:[%s1584 + $0x2b0] sm:$0xff]
                %1759 = vst [vmem:[%s1585 + $0x4b0] sm:$0xff] %v1758
                %v1760 = vld [vmem:[%s1584 + $0x2b8] sm:$0xff]
                %1761 = vst [vmem:[%s1585 + $0x4b8] sm:$0xff] %v1760
                %v1762 = vld [vmem:[%s1584 + $0x2c0] sm:$0xff]
                %1763 = vst [vmem:[%s1585 + $0x4c0] sm:$0xff] %v1762
                %v1764 = vld [vmem:[%s1584 + $0x2c8] sm:$0xff]
                %1765 = vst [vmem:[%s1585 + $0x4c8] sm:$0xff] %v1764
                %v1766 = vld [vmem:[%s1584 + $0x2d0] sm:$0xff]
                %1767 = vst [vmem:[%s1585 + $0x4d0] sm:$0xff] %v1766
                %v1768 = vld [vmem:[%s1584 + $0x2d8] sm:$0xff]
                %1769 = vst [vmem:[%s1585 + $0x4d8] sm:$0xff] %v1768
                %v1770 = vld [vmem:[%s1584 + $0x2e0] sm:$0xff]
                %1771 = vst [vmem:[%s1585 + $0x4e0] sm:$0xff] %v1770
                %v1772 = vld [vmem:[%s1584 + $0x2e8] sm:$0xff]
                %1773 = vst [vmem:[%s1585 + $0x4e8] sm:$0xff] %v1772
                %v1774 = vld [vmem:[%s1584 + $0x2f0] sm:$0xff]
                %1775 = vst [vmem:[%s1585 + $0x4f0] sm:$0xff] %v1774
                %v1776 = vld [vmem:[%s1584 + $0x2f8] sm:$0xff]
                %1777 = vst [vmem:[%s1585 + $0x4f8] sm:$0xff] %v1776
                %v1778 = vld [vmem:[%s1584 + $0x300] sm:$0xff]
                %1779 = vst [vmem:[%s1585 + $0x600] sm:$0xff] %v1778
                %v1780 = vld [vmem:[%s1584 + $0x308] sm:$0xff]
                %1781 = vst [vmem:[%s1585 + $0x608] sm:$0xff] %v1780
                %v1782 = vld [vmem:[%s1584 + $0x310] sm:$0xff]
                %1783 = vst [vmem:[%s1585 + $0x610] sm:$0xff] %v1782
                %v1784 = vld [vmem:[%s1584 + $0x318] sm:$0xff]
                %1785 = vst [vmem:[%s1585 + $0x618] sm:$0xff] %v1784
                %v1786 = vld [vmem:[%s1584 + $0x320] sm:$0xff]
                %1787 = vst [vmem:[%s1585 + $0x620] sm:$0xff] %v1786
                %v1788 = vld [vmem:[%s1584 + $0x328] sm:$0xff]
                %1789 = vst [vmem:[%s1585 + $0x628] sm:$0xff] %v1788
                %v1790 = vld [vmem:[%s1584 + $0x330] sm:$0xff]
                %1791 = vst [vmem:[%s1585 + $0x630] sm:$0xff] %v1790
                %v1792 = vld [vmem:[%s1584 + $0x338] sm:$0xff]
                %1793 = vst [vmem:[%s1585 + $0x638] sm:$0xff] %v1792
                %v1794 = vld [vmem:[%s1584 + $0x340] sm:$0xff]
                %1795 = vst [vmem:[%s1585 + $0x640] sm:$0xff] %v1794
                %v1796 = vld [vmem:[%s1584 + $0x348] sm:$0xff]
                %1797 = vst [vmem:[%s1585 + $0x648] sm:$0xff] %v1796
                %v1798 = vld [vmem:[%s1584 + $0x350] sm:$0xff]
                %1799 = vst [vmem:[%s1585 + $0x650] sm:$0xff] %v1798
                %v1800 = vld [vmem:[%s1584 + $0x358] sm:$0xff]
                %1801 = vst [vmem:[%s1585 + $0x658] sm:$0xff] %v1800
                %v1802 = vld [vmem:[%s1584 + $0x360] sm:$0xff]
                %1803 = vst [vmem:[%s1585 + $0x660] sm:$0xff] %v1802
                %v1804 = vld [vmem:[%s1584 + $0x368] sm:$0xff]
                %1805 = vst [vmem:[%s1585 + $0x668] sm:$0xff] %v1804
                %v1806 = vld [vmem:[%s1584 + $0x370] sm:$0xff]
                %1807 = vst [vmem:[%s1585 + $0x670] sm:$0xff] %v1806
                %v1808 = vld [vmem:[%s1584 + $0x378] sm:$0xff]
                %1809 = vst [vmem:[%s1585 + $0x678] sm:$0xff] %v1808
                %v1810 = vld [vmem:[%s1584 + $0x380] sm:$0xff]
                %1811 = vst [vmem:[%s1585 + $0x680] sm:$0xff] %v1810
                %v1812 = vld [vmem:[%s1584 + $0x388] sm:$0xff]
                %1813 = vst [vmem:[%s1585 + $0x688] sm:$0xff] %v1812
                %v1814 = vld [vmem:[%s1584 + $0x390] sm:$0xff]
                %1815 = vst [vmem:[%s1585 + $0x690] sm:$0xff] %v1814
                %v1816 = vld [vmem:[%s1584 + $0x398] sm:$0xff]
                %1817 = vst [vmem:[%s1585 + $0x698] sm:$0xff] %v1816
                %v1818 = vld [vmem:[%s1584 + $0x3a0] sm:$0xff]
                %1819 = vst [vmem:[%s1585 + $0x6a0] sm:$0xff] %v1818
                %v1820 = vld [vmem:[%s1584 + $0x3a8] sm:$0xff]
                %1821 = vst [vmem:[%s1585 + $0x6a8] sm:$0xff] %v1820
                %v1822 = vld [vmem:[%s1584 + $0x3b0] sm:$0xff]
                %1823 = vst [vmem:[%s1585 + $0x6b0] sm:$0xff] %v1822
                %v1824 = vld [vmem:[%s1584 + $0x3b8] sm:$0xff]
                %1825 = vst [vmem:[%s1585 + $0x6b8] sm:$0xff] %v1824
                %v1826 = vld [vmem:[%s1584 + $0x3c0] sm:$0xff]
                %1827 = vst [vmem:[%s1585 + $0x6c0] sm:$0xff] %v1826
                %v1828 = vld [vmem:[%s1584 + $0x3c8] sm:$0xff]
                %1829 = vst [vmem:[%s1585 + $0x6c8] sm:$0xff] %v1828
                %v1830 = vld [vmem:[%s1584 + $0x3d0] sm:$0xff]
                %1831 = vst [vmem:[%s1585 + $0x6d0] sm:$0xff] %v1830
                %v1832 = vld [vmem:[%s1584 + $0x3d8] sm:$0xff]
                %1833 = vst [vmem:[%s1585 + $0x6d8] sm:$0xff] %v1832
                %v1834 = vld [vmem:[%s1584 + $0x3e0] sm:$0xff]
                %1835 = vst [vmem:[%s1585 + $0x6e0] sm:$0xff] %v1834
                %v1836 = vld [vmem:[%s1584 + $0x3e8] sm:$0xff]
                %1837 = vst [vmem:[%s1585 + $0x6e8] sm:$0xff] %v1836
                %v1838 = vld [vmem:[%s1584 + $0x3f0] sm:$0xff]
                %1839 = vst [vmem:[%s1585 + $0x6f0] sm:$0xff] %v1838
                %v1840 = vld [vmem:[%s1584 + $0x3f8] sm:$0xff]
                %1841 = vst [vmem:[%s1585 + $0x6f8] sm:$0xff] %v1840
              $region49: #{_forward.1} parent=43 // loop_footer
                %s1583 = sadd.s32 1, %s1579
              $region50: #{_forward.1} parent=43 // loop_footer_branch
                %1578 = sbr.rel target = $region46
              $region51: #{_forward.1} parent=43 // loop_exit
                _
            $region44: #{_forward.1} parent=39 // pred_fallthru
              _
            // Predicated region
            $region52: #{_forward.1} parent=39 // pred_check
              _
            $region53: #{_forward.1} parent=39 // pred_check_branch
              %1843 = sbr.rel target = $region55
            $region54: #{_forward.1} parent=39 // pred_region
              _
            $region55: #{_forward.1} parent=39 // pred_fallthru
              _
          $region40: #{_forward.1} parent=35 // pred_fallthru
            _
          %1844 = vnop
        $region36: #{_forward.1} parent=31 // pred_fallthru
          _
      $region32: #{_forward.1} parent=5 // pred_fallthru
        _
      %p1845 = scmp.le.s32.totalorder 2, %s9
      // Predicated region
      $region56: #{_forward.1} parent=5 // pred_check
        %p1846 = pneg %p1845
      $region57: #{_forward.1} parent=5 // pred_check_branch
        %1848 = sbr.rel (%p1846) target = $region59
      $region58: #{_forward.1} parent=5 // pred_region
        %s1849 = ssub.s32 %s9, 2
        // Predicated region
        $region60: #{_forward.1} parent=58 // pred_check
          %p1850 = pneg %p133
        $region61: #{_forward.1} parent=58 // pred_check_branch
          %1852 = sbr.rel (%p1850) target = $region63
        $region62: #{_forward.1} parent=58 // pred_region
          %s1853 = sand.u32 %s118, 1
          %s1854 = sand.u32 %s118, 1
          %s1855 = smul.addr %s1854, 1024
          %s1856 = scalar_lea.vmem [#allocation2], %s1855
        $region63: #{_forward.1} parent=58 // pred_fallthru
          _
      $region59: #{_forward.1} parent=5 // pred_fallthru
        _
    $region6: #{_forward.1} parent=1 // loop_footer
      %s13 = sadd.s32 1, %s9
    $region7: #{_forward.1} parent=1 // loop_footer_branch
      %8 = sbr.rel target = $region3
    $region8: #{_forward.1} parent=1 // loop_exit
      _

// kernel: reverse
$region0: #{reverse}
  %s0 = inlined_call_operand.vmem [shape: f32[2,1,8064], index: 0, kind: input, shape index: {}]
  %s1 = inlined_call_operand.vmem [shape: f32[2,1,8064], index: 1, kind: output, shape index: {}]
  %v2 = vlaneseq
  %v3 = vsub.s32 127, %v2
  %4 = vset.pattern.permute.xlu0 %v3
  $region1: #{reverse} parent=0
    #allocation0 [shape = 'u8[4096]{0}', space=vmem, size = 0x1000, scoped, tag = 'operand span for operand 0']
    #allocation1 [shape = 'u8[2048]{0}', space=vmem, size = 0x800, scoped, tag = 'packed  for operand 0']
    #allocation2 [shape = 'u8[4096]{0}', space=vmem, size = 0x1000, scoped, tag = 'operand span for operand 1']
    #allocation3 [shape = 'u8[2048]{0}', space=vmem, size = 0x800, scoped, tag = 'packed  for operand 1']
    loop: start=0, step=1, limit=65
    $region2: #{reverse} parent=1 // loop_pre_header
      _
    $region3: #{reverse} parent=1 // loop_header
      %s6 = sphi 0, %s10
      %p7 = scmp.ge.s32.totalorder %s6, 65
      %s13 = sphi 0, %s32
      %s14 = sphi 0, %s28
      %s15 = sphi 0, %s24
      %s16 = sphi 0, %s13
      %s17 = sphi 0, %s14
      %s18 = sphi 0, %s15
      %s19 = sphi 0, %s16
      %s20 = sphi 0, %s17
      %s21 = sphi 0, %s18
    $region4: #{reverse} parent=1 // loop_header_branch
      %9 = sbr.rel (%p7) target = $region8
    $region5: #{reverse} parent=1 // loop_body
      %s11 = ssub.s32 %s6, 1
      %s12 = ssub.s32 %s6, 2
      %s22 = sadd.s32 1, %s15
      %p23 = scmp.ge.s32.totalorder %s22, 63
      %s24 = scalar_select %p23, 0, %s22
      %s25 = sadd.s32 1, %s14
      %s26 = scalar_select %p23, %s25, %s14
      %p27 = scmp.ge.s32.totalorder %s26, 1
      %s28 = scalar_select %p27, 0, %s26
      %s29 = sadd.s32 1, %s13
      %s30 = scalar_select %p27, %s29, %s13
      %p31 = scmp.ge.s32.totalorder %s30, 1
      %s32 = scalar_select %p31, 0, %s30
      %p33 = scmp.le.s32.totalorder 1, %s6
      %p34 = scmp.lt.s32.totalorder %s6, 64
      %p35 = pnand %p33, %p34
      %p36 = pneg %p35
      // Predicated region
      $region9: #{reverse} parent=5 // pred_check
        _
      $region10: #{reverse} parent=5 // pred_check_branch
        %38 = sbr.rel (%p35) target = $region12
      $region11: #{reverse} parent=5 // pred_region
        %s39 = ssub.s32 %s6, 1
      $region12: #{reverse} parent=5 // pred_fallthru
        _
      %p40 = scmp.lt.s32.totalorder %s6, 63
      // Predicated region
      $region13: #{reverse} parent=5 // pred_check
        %p41 = pneg %p40
      $region14: #{reverse} parent=5 // pred_check_branch
        %43 = sbr.rel (%p41) target = $region16
      $region15: #{reverse} parent=5 // pred_region
        %s44 = sand.u32 %s6, 1
        %s45 = sand.u32 %s6, 1
        %s46 = smul.addr %s45, 2
        %s47 = scalar_lea.vmem [#allocation1], %s46
        %s48 = ssub.s32 62, %s15
        %s49 = smul.addr %s14, 63
        %s50 = sadd.s32 %s48, %s49
        %s51 = smul.addr %s13, 63
        %s52 = sadd.s32 %s50, %s51
        %s53 = smul.addr %s52, 2
        %s54 = scalar_lea.vmem %s0, %s53
        // Predicated region
        $region17: #{reverse} parent=15 // pred_check
          _
        $region18: #{reverse} parent=15 // pred_check_branch
          %56 = sbr.rel (0) target = $region20
        $region19: #{reverse} parent=15 // pred_region
          // Predicated region
          $region21: #{reverse} parent=19 // pred_check
            _
          $region22: #{reverse} parent=19 // pred_check_branch
            %58 = sbr.rel target = $region24
          $region23: #{reverse} parent=19 // pred_region
            // Predicated region
            $region36: #{reverse} parent=23 // pred_check
              _
            $region37: #{reverse} parent=23 // pred_check_branch
              %74 = sbr.rel (0) target = $region39
            $region38: #{reverse} parent=23 // pred_region
              %s76 = ssub.s32 4, 1
              loop: start=0, step=1, limit=1
              $region40: #{reverse} parent=38 // loop_pre_header
                _
              $region41: #{reverse} parent=38 // loop_header
                %s78 = sphi 0, %s82
                %p79 = scmp.ge.s32.totalorder %s78, 1
                %s83 = sphi %s54, %s54
                %s84 = sphi %s47, %s47
              $region42: #{reverse} parent=38 // loop_header_branch
                %81 = sbr.rel (%p79) target = $region46
              $region43: #{reverse} parent=38 // loop_body
                %v85 = vld [vmem:[%s83] sm:%s76]
                %86 = vst [vmem:[%s84] sm:%s76] %v85
              $region44: #{reverse} parent=38 // loop_footer
                %s82 = sadd.s32 1, %s78
              $region45: #{reverse} parent=38 // loop_footer_branch
                %77 = sbr.rel target = $region41
              $region46: #{reverse} parent=38 // loop_exit
                _
            $region39: #{reverse} parent=23 // pred_fallthru
              _
          $region24: #{reverse} parent=19 // pred_fallthru
            _
          // Predicated region
          $region25: #{reverse} parent=19 // pred_check
            _
          $region26: #{reverse} parent=19 // pred_check_branch
            %60 = sbr.rel (0) target = $region28
          $region27: #{reverse} parent=19 // pred_region
            %s62 = ssub.s32 4, 1
            loop: start=0, step=1, limit=1
            $region29: #{reverse} parent=27 // loop_pre_header
              _
            $region30: #{reverse} parent=27 // loop_header
              %s64 = sphi 0, %s68
              %p65 = scmp.ge.s32.totalorder %s64, 1
              %s69 = sphi %s54, %s54
              %s70 = sphi %s47, %s47
            $region31: #{reverse} parent=27 // loop_header_branch
              %67 = sbr.rel (%p65) target = $region35
            $region32: #{reverse} parent=27 // loop_body
              %v71 = vld [vmem:[%s69] sm:%s62]
              %72 = vst [vmem:[%s70] sm:%s62] %v71
            $region33: #{reverse} parent=27 // loop_footer
              %s68 = sadd.s32 1, %s64
            $region34: #{reverse} parent=27 // loop_footer_branch
              %63 = sbr.rel target = $region30
            $region35: #{reverse} parent=27 // loop_exit
              _
          $region28: #{reverse} parent=19 // pred_fallthru
            _
        $region20: #{reverse} parent=15 // pred_fallthru
          _
        %87 = vnop
      $region16: #{reverse} parent=5 // pred_fallthru
        _
      %p88 = scmp.le.s32.totalorder 1, %s6
      %p89 = scmp.lt.s32.totalorder %s6, 64
      %p90 = pnand %p88, %p89
      %p91 = pneg %p90
      // Predicated region
      $region47: #{reverse} parent=5 // pred_check
        _
      $region48: #{reverse} parent=5 // pred_check_branch
        %93 = sbr.rel (%p90) target = $region50
      $region49: #{reverse} parent=5 // pred_region
        %s94 = ssub.s32 %s6, 1
        %s95 = sand.u32 %s11, 1
        %s96 = sand.u32 %s11, 1
        %s97 = smul.addr %s96, 2
        %s98 = scalar_lea.vmem [#allocation1], %s97
        %s99 = sand.u32 %s11, 1
        %s100 = sand.u32 %s11, 1
        %s101 = smul.addr %s100, 2
        %s102 = scalar_lea.vmem [#allocation1], %s101
        %s103 = sand.u32 %s11, 1
        %s104 = sand.u32 %s11, 1
        %s105 = smul.addr %s104, 2
        %s106 = scalar_lea.vmem [#allocation3], %s105
        %s108 = sshll.u32 1, 2
        %s109 = ssub.s32 %s108, 1
        %v110 = vld [vmem:[%s102] sm:%s109]
        %111 = vst [vmem:[#allocation0] sm:%s109] %v110
        %s112 = ssub.s32 62, %s18
        %v113 = vld [vmem:[#allocation0] sm:$0xff]
        %114 = vperm.xlu0 %4, %v113
        %v115 = vpop.permute.xlu0 %114
        %116 = vst [vmem:[#allocation2] sm:$0xff] %v115
        %s118 = sshll.u32 1, 2
        %s119 = ssub.s32 %s118, 1
        %v121 = vld [vmem:[#allocation2] sm:%s119]
        %s122 = sshll.u32 1, 2
        %s123 = ssub.s32 %s122, 1
        %124 = vst [vmem:[%s106] sm:%s123] %v121
        %s125 = sand.u32 %s11, 1
        %s126 = sand.u32 %s11, 1
        %s127 = smul.addr %s126, 2
        %s128 = scalar_lea.vmem [#allocation3], %s127
        %s129 = smul.addr %s17, 63
        %s130 = sadd.s32 %s18, %s129
        %s131 = smul.addr %s16, 63
        %s132 = sadd.s32 %s130, %s131
        %s133 = smul.addr %s132, 2
        %s134 = scalar_lea.vmem %s1, %s133
        // Predicated region
        $region51: #{reverse} parent=49 // pred_check
          _
        $region52: #{reverse} parent=49 // pred_check_branch
          %136 = sbr.rel (0) target = $region54
        $region53: #{reverse} parent=49 // pred_region
          // Predicated region
          $region55: #{reverse} parent=53 // pred_check
            _
          $region56: #{reverse} parent=53 // pred_check_branch
            %138 = sbr.rel target = $region58
          $region57: #{reverse} parent=53 // pred_region
            // Predicated region
            $region70: #{reverse} parent=57 // pred_check
              _
            $region71: #{reverse} parent=57 // pred_check_branch
              %154 = sbr.rel (0) target = $region73
            $region72: #{reverse} parent=57 // pred_region
              %s156 = ssub.s32 4, 1
              loop: start=0, step=1, limit=1
              $region74: #{reverse} parent=72 // loop_pre_header
                _
              $region75: #{reverse} parent=72 // loop_header
                %s158 = sphi 0, %s162
                %p159 = scmp.ge.s32.totalorder %s158, 1
                %s163 = sphi %s128, %s128
                %s164 = sphi %s134, %s134
              $region76: #{reverse} parent=72 // loop_header_branch
                %161 = sbr.rel (%p159) target = $region80
              $region77: #{reverse} parent=72 // loop_body
                %v165 = vld [vmem:[%s163] sm:%s156]
                %166 = vst [vmem:[%s164] sm:%s156] %v165
              $region78: #{reverse} parent=72 // loop_footer
                %s162 = sadd.s32 1, %s158
              $region79: #{reverse} parent=72 // loop_footer_branch
                %157 = sbr.rel target = $region75
              $region80: #{reverse} parent=72 // loop_exit
                _
            $region73: #{reverse} parent=57 // pred_fallthru
              _
          $region58: #{reverse} parent=53 // pred_fallthru
            _
          // Predicated region
          $region59: #{reverse} parent=53 // pred_check
            _
          $region60: #{reverse} parent=53 // pred_check_branch
            %140 = sbr.rel (0) target = $region62
          $region61: #{reverse} parent=53 // pred_region
            %s142 = ssub.s32 4, 1
            loop: start=0, step=1, limit=1
            $region63: #{reverse} parent=61 // loop_pre_header
              _
            $region64: #{reverse} parent=61 // loop_header
              %s144 = sphi 0, %s148
              %p145 = scmp.ge.s32.totalorder %s144, 1
              %s149 = sphi %s128, %s128
              %s150 = sphi %s134, %s134
            $region65: #{reverse} parent=61 // loop_header_branch
              %147 = sbr.rel (%p145) target = $region69
            $region66: #{reverse} parent=61 // loop_body
              %v151 = vld [vmem:[%s149] sm:%s142]
              %152 = vst [vmem:[%s150] sm:%s142] %v151
            $region67: #{reverse} parent=61 // loop_footer
              %s148 = sadd.s32 1, %s144
            $region68: #{reverse} parent=61 // loop_footer_branch
              %143 = sbr.rel target = $region64
            $region69: #{reverse} parent=61 // loop_exit
              _
          $region62: #{reverse} parent=53 // pred_fallthru
            _
        $region54: #{reverse} parent=49 // pred_fallthru
          _
        %167 = vnop
      $region50: #{reverse} parent=5 // pred_fallthru
        _
      %p168 = scmp.le.s32.totalorder 2, %s6
      // Predicated region
      $region81: #{reverse} parent=5 // pred_check
        %p169 = pneg %p168
      $region82: #{reverse} parent=5 // pred_check_branch
        %171 = sbr.rel (%p169) target = $region84
      $region83: #{reverse} parent=5 // pred_region
        %s172 = ssub.s32 %s6, 2
        %s173 = sand.u32 %s12, 1
        %s174 = sand.u32 %s12, 1
        %s175 = smul.addr %s174, 2
        %s176 = scalar_lea.vmem [#allocation3], %s175
      $region84: #{reverse} parent=5 // pred_fallthru
        _
    $region6: #{reverse} parent=1 // loop_footer
      %s10 = sadd.s32 1, %s6
    $region7: #{reverse} parent=1 // loop_footer_branch
      %5 = sbr.rel target = $region3
    $region8: #{reverse} parent=1 // loop_exit
      _

// kernel: _forward.1
$region0: #{_forward.1}
  #allocation0 [shape = 'u32[]', space=smem, size = 0x4, offset = 0x4, fixed_abs, tag = 'smem constant byte address 0x4 - core index']
  #allocation1 [shape = 'u32[144,128]{1,0:T(1,128)}', space=vmem, size = 0x12000, scoped, tag = 'internal scratch']
  %s0 = inlined_call_operand.vmem [shape: f32[8,12288], index: 0, kind: input, shape index: {}, may-alias: {0,1}]
  %s1 = inlined_call_operand.vmem [shape: f32[8,12288], index: 1, kind: input, shape index: {}, may-alias: {0,1}]
  %s2 = inlined_call_operand.vmem [shape: f32[2,128,512], index: 2, kind: input, shape index: {}]
  %s3 = inlined_call_operand.vmem [shape: f32[4,8,8192], index: 3, kind: output, shape index: {}]
  %s4 = sld [smem:[#allocation0]]
  $region64: #{_forward.1} parent=0
    _
  %s6 = ssub.s32 1, %s4
  %s7 = scalar_select 0, %s6, %s4
  $region1: #{_forward.1} parent=0
    #allocation2 [shape = 'u8[1048576]{0}', space=vmem, size = 0x100000, scoped, tag = 'output window, operand 0']
    loop: start=0, step=1, limit=4
    $region2: #{_forward.1} parent=1 // loop_pre_header
      _
    $region3: #{_forward.1} parent=1 // loop_header
      %s9 = sphi 0, %s13
      %p10 = scmp.ge.s32.totalorder %s9, 4
      %s16 = sphi 0, %s28
      %s17 = sphi 0, %s24
      %s18 = sphi 0, %s16
      %s19 = sphi 0, %s17
      %s20 = sphi 0, %s18
      %s21 = sphi 0, %s19
      %s33 = sphi 0, %s35
      %s36 = sphi 0, %s33
      %s37 = sphi 0, %s36
      %s53 = sphi 0, %s37
      %s65 = sphi 0, %s67
      %s68 = sphi 0, %s65
      %s69 = sphi 0, %s68
      %s85 = sphi 0, %s69
      %s89 = sphi 0, %s89
      %s91 = sphi 0, %s89
      %s92 = sphi 0, %s91
      %s106 = sphi 0, %s92
      %s114 = sphi 0, %s116
      %s117 = sphi 0, %s114
      %s118 = sphi 0, %s117
      %s134 = sphi 0, %s118
    $region4: #{_forward.1} parent=1 // loop_header_branch
      %12 = sbr.rel (%p10) target = $region8
    $region5: #{_forward.1} parent=1 // loop_body
      %s14 = ssub.s32 %s9, 1
      %s15 = ssub.s32 %s9, 2
      %s22 = sadd.s32 1, %s17
      %p23 = scmp.ge.s32.totalorder %s22, 2
      %s24 = scalar_select %p23, 0, %s22
      %s25 = sadd.s32 1, %s16
      %s26 = scalar_select %p23, %s25, %s16
      %p27 = scmp.ge.s32.totalorder %s26, 1
      %s28 = scalar_select %p27, 0, %s26
      %s29 = ssub.s32 %s16, %s28
      %s30 = ssub.s32 %s17, %s24
      %s31 = sor.u32 %s29, %s30
      %p32 = scmp.eq.s32.totalorder %s31, 0
      %s34 = sadd.s32 %s33, 1
      %s35 = scalar_select %p32, %s33, %s34
      %p38 = pneg %p32
      %p39 = scmp.eq.s32.totalorder %s9, 1
      %p40 = por %p38, %p39
      %p41 = scmp.ne.s32.totalorder %s33, %s36
      %p42 = scmp.eq.s32.totalorder %s9, 0
      %p43 = por %p41, %p42
      %p44 = scmp.ne.s32.totalorder %s33, %s36
      %p45 = scmp.eq.s32.totalorder %s14, 1
      %p46 = por %p44, %p45
      %p47 = scmp.ne.s32.totalorder %s36, %s37
      %p48 = scmp.eq.s32.totalorder %s14, 0
      %p49 = por %p47, %p48
      %p50 = scmp.ne.s32.totalorder %s36, %s37
      %p51 = scmp.eq.s32.totalorder %s15, 1
      %p52 = por %p50, %p51
      %p54 = scmp.ne.s32.totalorder %s37, %s53
      %p55 = scmp.eq.s32.totalorder %s15, 0
      %p56 = por %p54, %p55
      %s57 = sadd.s32 %s17, 1
      %s58 = smul.u32 %s57, 32
      %s59 = sadd.s32 %s24, 1
      %s60 = smul.u32 %s59, 32
      %s61 = ssub.s32 %s16, %s28
      %s62 = ssub.s32 %s58, %s60
      %s63 = sor.u32 %s61, %s62
      %p64 = scmp.eq.s32.totalorder %s63, 0
      %s66 = sadd.s32 %s65, 1
      %s67 = scalar_select %p64, %s65, %s66
      %p70 = pneg %p64
      %p71 = scmp.eq.s32.totalorder %s9, 1
      %p72 = por %p70, %p71
      %p73 = scmp.ne.s32.totalorder %s65, %s68
      %p74 = scmp.eq.s32.totalorder %s9, 0
      %p75 = por %p73, %p74
      %p76 = scmp.ne.s32.totalorder %s65, %s68
      %p77 = scmp.eq.s32.totalorder %s14, 1
      %p78 = por %p76, %p77
      %p79 = scmp.ne.s32.totalorder %s68, %s69
      %p80 = scmp.eq.s32.totalorder %s14, 0
      %p81 = por %p79, %p80
      %p82 = scmp.ne.s32.totalorder %s68, %s69
      %p83 = scmp.eq.s32.totalorder %s15, 1
      %p84 = por %p82, %p83
      %p86 = scmp.ne.s32.totalorder %s69, %s85
      %p87 = scmp.eq.s32.totalorder %s15, 0
      %p88 = por %p86, %p87
      %s90 = sadd.s32 %s89, 1
      %p93 = scmp.eq.s32.totalorder %s9, 1
      %p94 = scmp.ne.s32.totalorder %s89, %s91
      %p95 = scmp.eq.s32.totalorder %s9, 0
      %p96 = por %p94, %p95
      %p97 = scmp.ne.s32.totalorder %s89, %s91
      %p98 = scmp.eq.s32.totalorder %s14, 1
      %p99 = por %p97, %p98
      %p100 = scmp.ne.s32.totalorder %s91, %s92
      %p101 = scmp.eq.s32.totalorder %s14, 0
      %p102 = por %p100, %p101
      %p103 = scmp.ne.s32.totalorder %s91, %s92
      %p104 = scmp.eq.s32.totalorder %s15, 1
      %p105 = por %p103, %p104
      %p107 = scmp.ne.s32.totalorder %s92, %s106
      %p108 = scmp.eq.s32.totalorder %s15, 0
      %p109 = por %p107, %p108
      %s110 = ssub.s32 %s16, %s28
      %s111 = ssub.s32 %s17, %s24
      %s112 = sor.u32 %s110, %s111
      %p113 = scmp.eq.s32.totalorder %s112, 0
      %s115 = sadd.s32 %s114, 1
      %s116 = scalar_select %p113, %s114, %s115
      %p119 = pneg %p113
      %p120 = scmp.eq.s32.totalorder %s9, 1
      %p121 = por %p119, %p120
      %p122 = scmp.ne.s32.totalorder %s114, %s117
      %p123 = scmp.eq.s32.totalorder %s9, 0
      %p124 = por %p122, %p123
      %p125 = scmp.ne.s32.totalorder %s114, %s117
      %p126 = scmp.eq.s32.totalorder %s14, 1
      %p127 = por %p125, %p126
      %p128 = scmp.ne.s32.totalorder %s117, %s118
      %p129 = scmp.eq.s32.totalorder %s14, 0
      %p130 = por %p128, %p129
      %p131 = scmp.ne.s32.totalorder %s117, %s118
      %p132 = scmp.eq.s32.totalorder %s15, 1
      %p133 = por %p131, %p132
      %p135 = scmp.ne.s32.totalorder %s118, %s134
      %p136 = scmp.eq.s32.totalorder %s15, 0
      %p137 = por %p135, %p136
      %p138 = scmp.le.s32.totalorder 1, %s9
      %p139 = scmp.lt.s32.totalorder %s9, 3
      %p140 = pnand %p138, %p139
      %p141 = pneg %p140
      // Predicated region
      $region9: #{_forward.1} parent=5 // pred_check
        _
      $region10: #{_forward.1} parent=5 // pred_check_branch
        %143 = sbr.rel (%p140) target = $region12
      $region11: #{_forward.1} parent=5 // pred_region
        %s144 = ssub.s32 %s9, 1
        // Predicated region
        $region13: #{_forward.1} parent=11 // pred_check
          %p145 = pneg %p102
        $region14: #{_forward.1} parent=11 // pred_check_branch
          %147 = sbr.rel (%p145) target = $region16
        $region15: #{_forward.1} parent=11 // pred_region
          _
        $region16: #{_forward.1} parent=11 // pred_fallthru
          _
      $region12: #{_forward.1} parent=5 // pred_fallthru
        _
      %p148 = scmp.lt.s32.totalorder %s9, 2
      // Predicated region
      $region17: #{_forward.1} parent=5 // pred_check
        %p149 = pneg %p148
      $region18: #{_forward.1} parent=5 // pred_check_branch
        %151 = sbr.rel (%p149) target = $region20
      $region19: #{_forward.1} parent=5 // pred_region
        // Predicated region
        $region21: #{_forward.1} parent=19 // pred_check
          %p152 = pneg %p43
        $region22: #{_forward.1} parent=19 // pred_check_branch
          %154 = sbr.rel (%p152) target = $region24
        $region23: #{_forward.1} parent=19 // pred_region
          %s155 = smul.u32 32, %s17
          %p156 = scmp.lt.s32.totalorder %s16, 0
          %s157 = scalar_select %p156, %s16, 0
          %p158 = scmp.lt.s32.totalorder %s155, 95
          %s159 = scalar_select %p158, %s155, 95
          %s160 = smul.addr %s157, 96
          %s161 = sadd.s32 %s159, %s160
          %s162 = smul.addr %s161, 8
          %s163 = scalar_lea.vmem %s0, %s162
          %s164 = smul.u32 32, %s17
        $region24: #{_forward.1} parent=19 // pred_fallthru
          _
        // Predicated region
        $region25: #{_forward.1} parent=19 // pred_check
          %p165 = pneg %p75
        $region26: #{_forward.1} parent=19 // pred_check_branch
          %167 = sbr.rel (%p165) target = $region28
        $region27: #{_forward.1} parent=19 // pred_region
          %s168 = sadd.s32 %s17, 1
          %s169 = smul.u32 %s168, 32
          %p170 = scmp.lt.s32.totalorder %s16, 0
          %s171 = scalar_select %p170, %s16, 0
          %p172 = scmp.lt.s32.totalorder %s169, 95
          %s173 = scalar_select %p172, %s169, 95
          %s174 = smul.addr %s171, 96
          %s175 = sadd.s32 %s173, %s174
          %s176 = smul.addr %s175, 8
          %s177 = scalar_lea.vmem %s1, %s176
          %s178 = sadd.s32 %s17, 1
          %s179 = smul.u32 %s178, 32
        $region28: #{_forward.1} parent=19 // pred_fallthru
          _
      $region20: #{_forward.1} parent=5 // pred_fallthru
        _
      %p180 = scmp.le.s32.totalorder 1, %s9
      %p181 = scmp.lt.s32.totalorder %s9, 3
      %p182 = pnand %p180, %p181
      %p183 = pneg %p182
      // Predicated region
      $region29: #{_forward.1} parent=5 // pred_check
        _
      $region30: #{_forward.1} parent=5 // pred_check_branch
        %185 = sbr.rel (%p182) target = $region32
      $region31: #{_forward.1} parent=5 // pred_region
        %s186 = ssub.s32 %s9, 1
        %s187 = smul.u32 32, %s19
        %p188 = scmp.lt.s32.totalorder %s18, 0
        %s189 = scalar_select %p188, %s18, 0
        %p190 = scmp.lt.s32.totalorder %s187, 95
        %s191 = scalar_select %p190, %s187, 95
        %s192 = smul.addr %s189, 96
        %s193 = sadd.s32 %s191, %s192
        %s194 = smul.addr %s193, 8
        %s195 = scalar_lea.vmem %s0, %s194
        %p196 = pneg %p49
        %p197 = pneg %p46
        %s198 = sadd.s32 %s19, 1
        %s199 = smul.u32 %s198, 32
        %p200 = scmp.lt.s32.totalorder %s18, 0
        %s201 = scalar_select %p200, %s18, 0
        %p202 = scmp.lt.s32.totalorder %s199, 95
        %s203 = scalar_select %p202, %s199, 95
        %s204 = smul.addr %s201, 96
        %s205 = sadd.s32 %s203, %s204
        %s206 = smul.addr %s205, 8
        %s207 = scalar_lea.vmem %s1, %s206
        %p208 = pneg %p81
        %p209 = pneg %p78
        %p210 = pneg %p102
        %p211 = pneg %p99
        %p212 = pneg %p130
        %p213 = pneg %p127
        %s214 = sand.u32 %s117, 1
        %s215 = sand.u32 %s117, 1
        %s216 = smul.addr %s215, 1024
        %s217 = scalar_lea.vmem [#allocation2], %s216
        %s218 = smul.u32 32, %s19
        %p219 = scmp.lt.s32.totalorder %s18, 0
        %s220 = scalar_select %p219, %s18, 0
        %p221 = scmp.lt.s32.totalorder %s218, 95
        %s222 = scalar_select %p221, %s218, 95
        %s223 = smul.addr %s220, 96
        %s224 = sadd.s32 %s222, %s223
        %s225 = smul.addr %s224, 8
        %s226 = scalar_lea.vmem %s0, %s225
        %s227 = smul.u32 32, %s19
        %s228 = sadd.s32 %s19, 1
        %s229 = smul.u32 %s228, 32
        %p230 = scmp.lt.s32.totalorder %s18, 0
        %s231 = scalar_select %p230, %s18, 0
        %p232 = scmp.lt.s32.totalorder %s229, 95
        %s233 = scalar_select %p232, %s229, 95
        %s234 = smul.addr %s231, 96
        %s235 = sadd.s32 %s233, %s234
        %s236 = smul.addr %s235, 8
        %s237 = scalar_lea.vmem %s1, %s236
        %s238 = sadd.s32 %s19, 1
        %s239 = smul.u32 %s238, 32
        %s240 = smul.u32 32, %s19
        %v241 = vld [vmem:[%s226] sm:$0xff]
        %v242 = vld [vmem:[%s226 + $0x8] sm:$0xff]
        %v243 = vld [vmem:[%s226 + $0x10] sm:$0xff]
        %v244 = vld [vmem:[%s226 + $0x18] sm:$0xff]
        %v245 = vld [vmem:[%s226 + $0x20] sm:$0xff]
        %v246 = vld [vmem:[%s226 + $0x28] sm:$0xff]
        %v247 = vld [vmem:[%s226 + $0x30] sm:$0xff]
        %v248 = vld [vmem:[%s226 + $0x38] sm:$0xff]
        %v249 = vld [vmem:[%s226 + $0x40] sm:$0xff]
        %v250 = vld [vmem:[%s226 + $0x48] sm:$0xff]
        %v251 = vld [vmem:[%s226 + $0x50] sm:$0xff]
        %v252 = vld [vmem:[%s226 + $0x58] sm:$0xff]
        %v253 = vld [vmem:[%s226 + $0x60] sm:$0xff]
        %v254 = vld [vmem:[%s226 + $0x68] sm:$0xff]
        %v255 = vld [vmem:[%s226 + $0x70] sm:$0xff]
        %v256 = vld [vmem:[%s226 + $0x78] sm:$0xff]
        %v257 = vld [vmem:[%s226 + $0x80] sm:$0xff]
        %v258 = vld [vmem:[%s226 + $0x88] sm:$0xff]
        %v259 = vld [vmem:[%s226 + $0x90] sm:$0xff]
        %v260 = vld [vmem:[%s226 + $0x98] sm:$0xff]
        %v261 = vld [vmem:[%s226 + $0xa0] sm:$0xff]
        %v262 = vld [vmem:[%s226 + $0xa8] sm:$0xff]
        %v263 = vld [vmem:[%s226 + $0xb0] sm:$0xff]
        %v264 = vld [vmem:[%s226 + $0xb8] sm:$0xff]
        %v265 = vld [vmem:[%s226 + $0xc0] sm:$0xff]
        %v266 = vld [vmem:[%s226 + $0xc8] sm:$0xff]
        %v267 = vld [vmem:[%s226 + $0xd0] sm:$0xff]
        %v268 = vld [vmem:[%s226 + $0xd8] sm:$0xff]
        %v269 = vld [vmem:[%s226 + $0xe0] sm:$0xff]
        %v270 = vld [vmem:[%s226 + $0xe8] sm:$0xff]
        %v271 = vld [vmem:[%s226 + $0xf0] sm:$0xff]
        %v272 = vld [vmem:[%s226 + $0xf8] sm:$0xff]
        %v273 = vld [vmem:[%s237] sm:$0xff]
        %v274 = vld [vmem:[%s2] sm:$0xff]
        %v275 = vld [vmem:[%s2 + $0x8] sm:$0xff]
        %v276 = vld [vmem:[%s2 + $0x10] sm:$0xff]
        %v277 = vld [vmem:[%s2 + $0x18] sm:$0xff]
        %v278 = vld [vmem:[%s2 + $0x20] sm:$0xff]
        %v279 = vld [vmem:[%s2 + $0x28] sm:$0xff]
        %v280 = vld [vmem:[%s2 + $0x30] sm:$0xff]
        %v281 = vld [vmem:[%s2 + $0x38] sm:$0xff]
        %v282 = vld [vmem:[%s2 + $0x40] sm:$0xff]
        %v283 = vld [vmem:[%s2 + $0x48] sm:$0xff]
        %v284 = vld [vmem:[%s2 + $0x50] sm:$0xff]
        %v285 = vld [vmem:[%s2 + $0x58] sm:$0xff]
        %v286 = vld [vmem:[%s2 + $0x60] sm:$0xff]
        %v287 = vld [vmem:[%s2 + $0x68] sm:$0xff]
        %v288 = vld [vmem:[%s2 + $0x70] sm:$0xff]
        %v289 = vld [vmem:[%s2 + $0x78] sm:$0xff]
        %v290 = vld [vmem:[%s2 + $0x80] sm:$0xff]
        %v291 = vld [vmem:[%s2 + $0x88] sm:$0xff]
        %v292 = vld [vmem:[%s2 + $0x90] sm:$0xff]
        %v293 = vld [vmem:[%s2 + $0x98] sm:$0xff]
        %v294 = vld [vmem:[%s2 + $0xa0] sm:$0xff]
        %v295 = vld [vmem:[%s2 + $0xa8] sm:$0xff]
        %v296 = vld [vmem:[%s2 + $0xb0] sm:$0xff]
        %v297 = vld [vmem:[%s2 + $0xb8] sm:$0xff]
        %v298 = vld [vmem:[%s2 + $0xc0] sm:$0xff]
        %v299 = vld [vmem:[%s2 + $0xc8] sm:$0xff]
        %v300 = vld [vmem:[%s2 + $0xd0] sm:$0xff]
        %v301 = vld [vmem:[%s2 + $0xd8] sm:$0xff]
        %v302 = vld [vmem:[%s2 + $0xe0] sm:$0xff]
        %v303 = vld [vmem:[%s2 + $0xe8] sm:$0xff]
        %v304 = vld [vmem:[%s2 + $0xf0] sm:$0xff]
        %v305 = vld [vmem:[%s2 + $0xf8] sm:$0xff]
        %v306 = vld [vmem:[%s2 + $0x100] sm:$0xff]
        %v307 = vld [vmem:[%s2 + $0x108] sm:$0xff]
        %v308 = vld [vmem:[%s2 + $0x110] sm:$0xff]
        %v309 = vld [vmem:[%s2 + $0x118] sm:$0xff]
        %v310 = vld [vmem:[%s2 + $0x120] sm:$0xff]
        %v311 = vld [vmem:[%s2 + $0x128] sm:$0xff]
        %v312 = vld [vmem:[%s2 + $0x130] sm:$0xff]
        %v313 = vld [vmem:[%s2 + $0x138] sm:$0xff]
        %v314 = vld [vmem:[%s2 + $0x140] sm:$0xff]
        %v315 = vld [vmem:[%s2 + $0x148] sm:$0xff]
        %v316 = vld [vmem:[%s2 + $0x150] sm:$0xff]
        %v317 = vld [vmem:[%s2 + $0x158] sm:$0xff]
        %v318 = vld [vmem:[%s2 + $0x160] sm:$0xff]
        %v319 = vld [vmem:[%s2 + $0x168] sm:$0xff]
        %v320 = vld [vmem:[%s2 + $0x170] sm:$0xff]
        %v321 = vld [vmem:[%s2 + $0x178] sm:$0xff]
        %v322 = vld [vmem:[%s2 + $0x180] sm:$0xff]
        %v323 = vld [vmem:[%s2 + $0x188] sm:$0xff]
        %v324 = vld [vmem:[%s2 + $0x190] sm:$0xff]
        %v325 = vld [vmem:[%s2 + $0x198] sm:$0xff]
        %v326 = vld [vmem:[%s2 + $0x1a0] sm:$0xff]
        %v327 = vld [vmem:[%s2 + $0x1a8] sm:$0xff]
        %v328 = vld [vmem:[%s2 + $0x1b0] sm:$0xff]
        %v329 = vld [vmem:[%s2 + $0x1b8] sm:$0xff]
        %v330 = vld [vmem:[%s2 + $0x1c0] sm:$0xff]
        %v331 = vld [vmem:[%s2 + $0x1c8] sm:$0xff]
        %v332 = vld [vmem:[%s2 + $0x1d0] sm:$0xff]
        %v333 = vld [vmem:[%s2 + $0x1d8] sm:$0xff]
        %v334 = vld [vmem:[%s2 + $0x1e0] sm:$0xff]
        %v335 = vld [vmem:[%s2 + $0x1e8] sm:$0xff]
        %v336 = vld [vmem:[%s2 + $0x1f0] sm:$0xff]
        %v337 = vld [vmem:[%s2 + $0x1f8] sm:$0xff]
        %s338 = scalar_lea.vmem %s2, 512
        %v339 = vld [vmem:[%s338] sm:$0xff]
        %v340 = vld [vmem:[%s338 + $0x8] sm:$0xff]
        %v341 = vld [vmem:[%s338 + $0x10] sm:$0xff]
        %v342 = vld [vmem:[%s338 + $0x18] sm:$0xff]
        %v343 = vld [vmem:[%s338 + $0x20] sm:$0xff]
        %v344 = vld [vmem:[%s338 + $0x28] sm:$0xff]
        %v345 = vld [vmem:[%s338 + $0x30] sm:$0xff]
        %v346 = vld [vmem:[%s338 + $0x38] sm:$0xff]
        %v347 = vld [vmem:[%s338 + $0x40] sm:$0xff]
        %v348 = vld [vmem:[%s338 + $0x48] sm:$0xff]
        %v349 = vld [vmem:[%s338 + $0x50] sm:$0xff]
        %v350 = vld [vmem:[%s338 + $0x58] sm:$0xff]
        %v351 = vld [vmem:[%s338 + $0x60] sm:$0xff]
        %v352 = vld [vmem:[%s338 + $0x68] sm:$0xff]
        %v353 = vld [vmem:[%s338 + $0x70] sm:$0xff]
        %v354 = vld [vmem:[%s338 + $0x78] sm:$0xff]
        %v355 = vld [vmem:[%s338 + $0x80] sm:$0xff]
        %v356 = vld [vmem:[%s338 + $0x88] sm:$0xff]
        %v357 = vld [vmem:[%s338 + $0x90] sm:$0xff]
        %v358 = vld [vmem:[%s338 + $0x98] sm:$0xff]
        %v359 = vld [vmem:[%s338 + $0xa0] sm:$0xff]
        %v360 = vld [vmem:[%s338 + $0xa8] sm:$0xff]
        %v361 = vld [vmem:[%s338 + $0xb0] sm:$0xff]
        %v362 = vld [vmem:[%s338 + $0xb8] sm:$0xff]
        %v363 = vld [vmem:[%s338 + $0xc0] sm:$0xff]
        %v364 = vld [vmem:[%s338 + $0xc8] sm:$0xff]
        %v365 = vld [vmem:[%s338 + $0xd0] sm:$0xff]
        %v366 = vld [vmem:[%s338 + $0xd8] sm:$0xff]
        %v367 = vld [vmem:[%s338 + $0xe0] sm:$0xff]
        %v368 = vld [vmem:[%s338 + $0xe8] sm:$0xff]
        %v369 = vld [vmem:[%s338 + $0xf0] sm:$0xff]
        %v370 = vld [vmem:[%s338 + $0xf8] sm:$0xff]
        %v371 = vld [vmem:[%s338 + $0x100] sm:$0xff]
        %v372 = vld [vmem:[%s338 + $0x108] sm:$0xff]
        %v373 = vld [vmem:[%s338 + $0x110] sm:$0xff]
        %v374 = vld [vmem:[%s338 + $0x118] sm:$0xff]
        %v375 = vld [vmem:[%s338 + $0x120] sm:$0xff]
        %v376 = vld [vmem:[%s338 + $0x128] sm:$0xff]
        %v377 = vld [vmem:[%s338 + $0x130] sm:$0xff]
        %v378 = vld [vmem:[%s338 + $0x138] sm:$0xff]
        %v379 = vld [vmem:[%s338 + $0x140] sm:$0xff]
        %v380 = vld [vmem:[%s338 + $0x148] sm:$0xff]
        %v381 = vld [vmem:[%s338 + $0x150] sm:$0xff]
        %v382 = vld [vmem:[%s338 + $0x158] sm:$0xff]
        %v383 = vld [vmem:[%s338 + $0x160] sm:$0xff]
        %v384 = vld [vmem:[%s338 + $0x168] sm:$0xff]
        %v385 = vld [vmem:[%s338 + $0x170] sm:$0xff]
        %v386 = vld [vmem:[%s338 + $0x178] sm:$0xff]
        %v387 = vld [vmem:[%s338 + $0x180] sm:$0xff]
        %v388 = vld [vmem:[%s338 + $0x188] sm:$0xff]
        %v389 = vld [vmem:[%s338 + $0x190] sm:$0xff]
        %v390 = vld [vmem:[%s338 + $0x198] sm:$0xff]
        %v391 = vld [vmem:[%s338 + $0x1a0] sm:$0xff]
        %v392 = vld [vmem:[%s338 + $0x1a8] sm:$0xff]
        %v393 = vld [vmem:[%s338 + $0x1b0] sm:$0xff]
        %v394 = vld [vmem:[%s338 + $0x1b8] sm:$0xff]
        %v395 = vld [vmem:[%s338 + $0x1c0] sm:$0xff]
        %v396 = vld [vmem:[%s338 + $0x1c8] sm:$0xff]
        %v397 = vld [vmem:[%s338 + $0x1d0] sm:$0xff]
        %v398 = vld [vmem:[%s338 + $0x1d8] sm:$0xff]
        %v399 = vld [vmem:[%s338 + $0x1e0] sm:$0xff]
        %v400 = vld [vmem:[%s338 + $0x1e8] sm:$0xff]
        %v401 = vld [vmem:[%s338 + $0x1f0] sm:$0xff]
        %v402 = vld [vmem:[%s338 + $0x1f8] sm:$0xff]
        %403 = vmatprep.subr.mxu0 %v400
        %404 = vmatpush1.msra.mxu0 %v399
        %405 = vmatprep.subr.mxu0 %v396
        %406 = vmatpush1.msra.mxu0 %v395
        %407 = vmatprep.subr.mxu0 %v392
        %408 = vmatpush1.msra.mxu0 %v391
        %409 = vmatprep.subr.mxu0 %v388
        %410 = vmatpush1.msra.mxu0 %v387
        %411 = vmatprep.subr.mxu0 %v384
        %412 = vmatpush1.msra.mxu0 %v383
        %413 = vmatprep.subr.mxu0 %v380
        %414 = vmatpush1.msra.mxu0 %v379
        %415 = vmatprep.subr.mxu0 %v376
        %416 = vmatpush1.msra.mxu0 %v375
        %417 = vmatprep.subr.mxu0 %v372
        %418 = vmatpush1.msra.mxu0 %v371
        %419 = vmatprep.subr.mxu0 %v368
        %420 = vmatpush1.msra.mxu0 %v367
        %421 = vmatprep.subr.mxu0 %v364
        %422 = vmatpush1.msra.mxu0 %v363
        %423 = vmatprep.subr.mxu0 %v360
        %424 = vmatpush1.msra.mxu0 %v359
        %425 = vmatprep.subr.mxu0 %v356
        %426 = vmatpush1.msra.mxu0 %v355
        %427 = vmatprep.subr.mxu0 %v352
        %428 = vmatpush1.msra.mxu0 %v351
        %429 = vmatprep.subr.mxu0 %v348
        %430 = vmatpush1.msra.mxu0 %v347
        %431 = vmatprep.subr.mxu0 %v344
        %432 = vmatpush1.msra.mxu0 %v343
        %433 = vmatprep.subr.mxu0 %v340
        %434 = vmatpush1.msra.mxu0 %v339
        %435 = vmatprep.subr.mxu0 0.0
        %436 = vmatpush2.msra.mxu0 0.0
        %437 = vmatprep.subr.mxu0 0.0
        %438 = vmatpush2.msra.mxu0 0.0
        %439 = vmatprep.subr.mxu0 0.0
        %440 = vmatpush2.msra.mxu0 0.0
        %441 = vmatprep.subr.mxu0 0.0
        %442 = vmatpush2.msra.mxu0 0.0
        %443 = vmatprep.subr.mxu0 0.0
        %444 = vmatpush2.msra.mxu0 0.0
        %445 = vmatprep.subr.mxu0 0.0
        %446 = vmatpush2.msra.mxu0 0.0
        %447 = vmatprep.subr.mxu0 0.0
        %448 = vmatpush2.msra.mxu0 0.0
        %449 = vmatprep.subr.mxu0 0.0
        %450 = vmatpush2.msra.mxu0 0.0
        %451 = vmatprep.subr.mxu0 0.0
        %452 = vmatpush2.msra.mxu0 0.0
        %453 = vmatprep.subr.mxu0 0.0
        %454 = vmatpush2.msra.mxu0 0.0
        %455 = vmatprep.subr.mxu0 0.0
        %456 = vmatpush2.msra.mxu0 0.0
        %457 = vmatprep.subr.mxu0 0.0
        %458 = vmatpush2.msra.mxu0 0.0
        %459 = vmatprep.subr.mxu0 0.0
        %460 = vmatpush2.msra.mxu0 0.0
        %461 = vmatprep.subr.mxu0 0.0
        %462 = vmatpush2.msra.mxu0 0.0
        %463 = vmatprep.subr.mxu0 0.0
        %464 = vmatpush2.msra.mxu0 0.0
        %465 = vmatprep.subr.mxu0 0.0
        %466 = vmatpush2.msra.mxu0 0.0
        %467 = vmatprep.mubr.f32.mxu0 0.0
        %468 = vmatmul.mubr.f32.gmra.mxu0 %v242
        %v469 = vpop.f32.mrf.mxu0
        %v470 = vadd.f32 0.0, %v469
        %v471 = vpop.f32.mrf.mxu0
        %v472 = vadd.f32 0.0, %v471
        %473 = vmatprep.mubr.f32.mxu0 0.0
        %474 = vmatmul.mubr.f32.gmra.mxu0 %v243
        %v475 = vpop.f32.mrf.mxu0
        %v476 = vadd.f32 0.0, %v475
        %v477 = vpop.f32.mrf.mxu0
        %v478 = vadd.f32 0.0, %v477
        %479 = vmatprep.mubr.f32.mxu0 0.0
        %480 = vmatmul.mubr.f32.gmra.mxu0 %v244
        %v481 = vpop.f32.mrf.mxu0
        %v482 = vadd.f32 0.0, %v481
        %v483 = vpop.f32.mrf.mxu0
        %v484 = vadd.f32 0.0, %v483
        %485 = vmatprep.mubr.f32.mxu0 0.0
        %486 = vmatmul.mubr.f32.gmra.mxu0 %v245
        %v487 = vpop.f32.mrf.mxu0
        %v488 = vadd.f32 0.0, %v487
        %v489 = vpop.f32.mrf.mxu0
        %v490 = vadd.f32 0.0, %v489
        %491 = vmatprep.mubr.f32.mxu0 0.0
        %492 = vmatmul.mubr.f32.gmra.mxu0 %v246
        %v493 = vpop.f32.mrf.mxu0
        %v494 = vadd.f32 0.0, %v493
        %v495 = vpop.f32.mrf.mxu0
        %v496 = vadd.f32 0.0, %v495
        %497 = vmatprep.mubr.f32.mxu0 0.0
        %498 = vmatmul.mubr.f32.gmra.mxu0 %v247
        %v499 = vpop.f32.mrf.mxu0
        %v500 = vadd.f32 0.0, %v499
        %v501 = vpop.f32.mrf.mxu0
        %v502 = vadd.f32 0.0, %v501
        %503 = vmatprep.mubr.f32.mxu0 0.0
        %504 = vmatmul.mubr.f32.gmra.mxu0 %v248
        %v505 = vpop.f32.mrf.mxu0
        %v506 = vadd.f32 0.0, %v505
        %v507 = vpop.f32.mrf.mxu0
        %v508 = vadd.f32 0.0, %v507
        %509 = vmatprep.mubr.f32.mxu0 0.0
        %510 = vmatmul.mubr.f32.gmra.mxu0 %v249
        %v511 = vpop.f32.mrf.mxu0
        %v512 = vadd.f32 0.0, %v511
        %v513 = vpop.f32.mrf.mxu0
        %v514 = vadd.f32 0.0, %v513
        %515 = vmatprep.mubr.f32.mxu0 0.0
        %516 = vmatmul.mubr.f32.gmra.mxu0 %v250
        %v517 = vpop.f32.mrf.mxu0
        %v518 = vadd.f32 0.0, %v517
        %v519 = vpop.f32.mrf.mxu0
        %v520 = vadd.f32 0.0, %v519
        %521 = vmatprep.mubr.f32.mxu0 0.0
        %522 = vmatmul.mubr.f32.gmra.mxu0 %v251
        %v523 = vpop.f32.mrf.mxu0
        %v524 = vadd.f32 0.0, %v523
        %v525 = vpop.f32.mrf.mxu0
        %v526 = vadd.f32 0.0, %v525
        %527 = vmatprep.mubr.f32.mxu0 0.0
        %528 = vmatmul.mubr.f32.gmra.mxu0 %v252
        %v529 = vpop.f32.mrf.mxu0
        %v530 = vadd.f32 0.0, %v529
        %v531 = vpop.f32.mrf.mxu0
        %v532 = vadd.f32 0.0, %v531
        %533 = vmatprep.mubr.f32.mxu0 0.0
        %534 = vmatmul.mubr.f32.gmra.mxu0 %v253
        %v535 = vpop.f32.mrf.mxu0
        %v536 = vadd.f32 0.0, %v535
        %v537 = vpop.f32.mrf.mxu0
        %v538 = vadd.f32 0.0, %v537
        %539 = vmatprep.mubr.f32.mxu0 0.0
        %540 = vmatmul.mubr.f32.gmra.mxu0 %v254
        %v541 = vpop.f32.mrf.mxu0
        %v542 = vadd.f32 0.0, %v541
        %v543 = vpop.f32.mrf.mxu0
        %v544 = vadd.f32 0.0, %v543
        %545 = vmatprep.mubr.f32.mxu0 0.0
        %546 = vmatmul.mubr.f32.gmra.mxu0 %v255
        %v547 = vpop.f32.mrf.mxu0
        %v548 = vadd.f32 0.0, %v547
        %v549 = vpop.f32.mrf.mxu0
        %v550 = vadd.f32 0.0, %v549
        %551 = vmatprep.mubr.f32.mxu0 0.0
        %552 = vmatmul.mubr.f32.gmra.mxu0 %v256
        %v553 = vpop.f32.mrf.mxu0
        %v554 = vadd.f32 0.0, %v553
        %v555 = vpop.f32.mrf.mxu0
        %v556 = vadd.f32 0.0, %v555
        %557 = vmatprep.mubr.f32.mxu0 0.0
        %558 = vmatmul.mubr.f32.gmra.mxu0 %v257
        %v559 = vpop.f32.mrf.mxu0
        %v560 = vadd.f32 0.0, %v559
        %v561 = vpop.f32.mrf.mxu0
        %v562 = vadd.f32 0.0, %v561
        %563 = vmatprep.mubr.f32.mxu0 0.0
        %564 = vmatmul.mubr.f32.gmra.mxu0 %v258
        %v565 = vpop.f32.mrf.mxu0
        %v566 = vadd.f32 0.0, %v565
        %v567 = vpop.f32.mrf.mxu0
        %v568 = vadd.f32 0.0, %v567
        %569 = vmatprep.mubr.f32.mxu0 0.0
        %570 = vmatmul.mubr.f32.gmra.mxu0 %v259
        %v571 = vpop.f32.mrf.mxu0
        %v572 = vadd.f32 0.0, %v571
        %v573 = vpop.f32.mrf.mxu0
        %v574 = vadd.f32 0.0, %v573
        %575 = vmatprep.mubr.f32.mxu0 0.0
        %576 = vmatmul.mubr.f32.gmra.mxu0 %v260
        %v577 = vpop.f32.mrf.mxu0
        %v578 = vadd.f32 0.0, %v577
        %v579 = vpop.f32.mrf.mxu0
        %v580 = vadd.f32 0.0, %v579
        %581 = vmatprep.mubr.f32.mxu0 0.0
        %582 = vmatmul.mubr.f32.gmra.mxu0 %v261
        %v583 = vpop.f32.mrf.mxu0
        %v584 = vadd.f32 0.0, %v583
        %v585 = vpop.f32.mrf.mxu0
        %v586 = vadd.f32 0.0, %v585
        %587 = vmatprep.mubr.f32.mxu0 0.0
        %588 = vmatmul.mubr.f32.gmra.mxu0 %v262
        %v589 = vpop.f32.mrf.mxu0
        %v590 = vadd.f32 0.0, %v589
        %v591 = vpop.f32.mrf.mxu0
        %v592 = vadd.f32 0.0, %v591
        %593 = vmatprep.mubr.f32.mxu0 0.0
        %594 = vmatmul.mubr.f32.gmra.mxu0 %v263
        %v595 = vpop.f32.mrf.mxu0
        %v596 = vadd.f32 0.0, %v595
        %v597 = vpop.f32.mrf.mxu0
        %v598 = vadd.f32 0.0, %v597
        %599 = vmatprep.mubr.f32.mxu0 0.0
        %600 = vmatmul.mubr.f32.gmra.mxu0 %v264
        %v601 = vpop.f32.mrf.mxu0
        %v602 = vadd.f32 0.0, %v601
        %v603 = vpop.f32.mrf.mxu0
        %v604 = vadd.f32 0.0, %v603
        %605 = vmatprep.mubr.f32.mxu0 0.0
        %606 = vmatmul.mubr.f32.gmra.mxu0 %v265
        %v607 = vpop.f32.mrf.mxu0
        %v608 = vadd.f32 0.0, %v607
        %v609 = vpop.f32.mrf.mxu0
        %v610 = vadd.f32 0.0, %v609
        %611 = vmatprep.mubr.f32.mxu0 0.0
        %612 = vmatmul.mubr.f32.gmra.mxu0 %v266
        %v613 = vpop.f32.mrf.mxu0
        %v614 = vadd.f32 0.0, %v613
        %v615 = vpop.f32.mrf.mxu0
        %v616 = vadd.f32 0.0, %v615
        %617 = vmatprep.mubr.f32.mxu0 0.0
        %618 = vmatmul.mubr.f32.gmra.mxu0 %v267
        %v619 = vpop.f32.mrf.mxu0
        %v620 = vadd.f32 0.0, %v619
        %v621 = vpop.f32.mrf.mxu0
        %v622 = vadd.f32 0.0, %v621
        %623 = vmatprep.mubr.f32.mxu0 0.0
        %624 = vmatmul.mubr.f32.gmra.mxu0 %v268
        %v625 = vpop.f32.mrf.mxu0
        %v626 = vadd.f32 0.0, %v625
        %v627 = vpop.f32.mrf.mxu0
        %v628 = vadd.f32 0.0, %v627
        %629 = vmatprep.mubr.f32.mxu0 0.0
        %630 = vmatmul.mubr.f32.gmra.mxu0 %v269
        %v631 = vpop.f32.mrf.mxu0
        %v632 = vadd.f32 0.0, %v631
        %v633 = vpop.f32.mrf.mxu0
        %v634 = vadd.f32 0.0, %v633
        %635 = vmatprep.mubr.f32.mxu0 0.0
        %636 = vmatmul.mubr.f32.gmra.mxu0 %v270
        %v637 = vpop.f32.mrf.mxu0
        %v638 = vadd.f32 0.0, %v637
        %v639 = vpop.f32.mrf.mxu0
        %v640 = vadd.f32 0.0, %v639
        %641 = vmatprep.mubr.f32.mxu0 0.0
        %642 = vmatmul.mubr.f32.gmra.mxu0 %v271
        %v643 = vpop.f32.mrf.mxu0
        %v644 = vadd.f32 0.0, %v643
        %v645 = vpop.f32.mrf.mxu0
        %v646 = vadd.f32 0.0, %v645
        %647 = vmatprep.mubr.f32.mxu0 0.0
        %648 = vmatmul.mubr.f32.gmra.mxu0 %v272
        %v649 = vpop.f32.mrf.mxu0
        %v650 = vadd.f32 0.0, %v649
        %v651 = vpop.f32.mrf.mxu0
        %v652 = vadd.f32 0.0, %v651
        %653 = vmatprep.mubr.f32.mxu0 0.0
        %654 = vmatmul.mubr.f32.gmra.mxu0 %v273
        %v655 = vpop.f32.mrf.mxu0
        %v656 = vadd.f32 0.0, %v655
        %v657 = vpop.f32.mrf.mxu0
        %v658 = vadd.f32 0.0, %v657
        %659 = vdwg.mxu0
        %660 = vmatprep.subr.mxu0 %v402
        %661 = vmatpush1.msra.mxu0 %v401
        %662 = vmatprep.subr.mxu0 %v398
        %663 = vmatpush1.msra.mxu0 %v397
        %664 = vmatprep.subr.mxu0 %v394
        %665 = vmatpush1.msra.mxu0 %v393
        %666 = vmatprep.subr.mxu0 %v390
        %667 = vmatpush1.msra.mxu0 %v389
        %668 = vmatprep.subr.mxu0 %v386
        %669 = vmatpush1.msra.mxu0 %v385
        %670 = vmatprep.subr.mxu0 %v382
        %671 = vmatpush1.msra.mxu0 %v381
        %672 = vmatprep.subr.mxu0 %v378
        %673 = vmatpush1.msra.mxu0 %v377
        %674 = vmatprep.subr.mxu0 %v374
        %675 = vmatpush1.msra.mxu0 %v373
        %676 = vmatprep.subr.mxu0 %v370
        %677 = vmatpush1.msra.mxu0 %v369
        %678 = vmatprep.subr.mxu0 %v366
        %679 = vmatpush1.msra.mxu0 %v365
        %680 = vmatprep.subr.mxu0 %v362
        %681 = vmatpush1.msra.mxu0 %v361
        %682 = vmatprep.subr.mxu0 %v358
        %683 = vmatpush1.msra.mxu0 %v357
        %684 = vmatprep.subr.mxu0 %v354
        %685 = vmatpush1.msra.mxu0 %v353
        %686 = vmatprep.subr.mxu0 %v350
        %687 = vmatpush1.msra.mxu0 %v349
        %688 = vmatprep.subr.mxu0 %v346
        %689 = vmatpush1.msra.mxu0 %v345
        %690 = vmatprep.subr.mxu0 %v342
        %691 = vmatpush1.msra.mxu0 %v341
        %692 = vmatprep.subr.mxu0 0.0
        %693 = vmatpush2.msra.mxu0 0.0
        %694 = vmatprep.subr.mxu0 0.0
        %695 = vmatpush2.msra.mxu0 0.0
        %696 = vmatprep.subr.mxu0 0.0
        %697 = vmatpush2.msra.mxu0 0.0
        %698 = vmatprep.subr.mxu0 0.0
        %699 = vmatpush2.msra.mxu0 0.0
        %700 = vmatprep.subr.mxu0 0.0
        %701 = vmatpush2.msra.mxu0 0.0
        %702 = vmatprep.subr.mxu0 0.0
        %703 = vmatpush2.msra.mxu0 0.0
        %704 = vmatprep.subr.mxu0 0.0
        %705 = vmatpush2.msra.mxu0 0.0
        %706 = vmatprep.subr.mxu0 0.0
        %707 = vmatpush2.msra.mxu0 0.0
        %708 = vmatprep.subr.mxu0 0.0
        %709 = vmatpush2.msra.mxu0 0.0
        %710 = vmatprep.subr.mxu0 0.0
        %711 = vmatpush2.msra.mxu0 0.0
        %712 = vmatprep.subr.mxu0 0.0
        %713 = vmatpush2.msra.mxu0 0.0
        %714 = vmatprep.subr.mxu0 0.0
        %715 = vmatpush2.msra.mxu0 0.0
        %716 = vmatprep.subr.mxu0 0.0
        %717 = vmatpush2.msra.mxu0 0.0
        %718 = vmatprep.subr.mxu0 0.0
        %719 = vmatpush2.msra.mxu0 0.0
        %720 = vmatprep.subr.mxu0 0.0
        %721 = vmatpush2.msra.mxu0 0.0
        %722 = vmatprep.subr.mxu0 0.0
        %723 = vmatpush2.msra.mxu0 0.0
        %724 = vmatprep.mubr.f32.mxu0 0.0
        %725 = vmatmul.mubr.f32.gmra.mxu0 %v242
        %v726 = vpop.f32.mrf.mxu0
        %v727 = vadd.f32 0.0, %v726
        %v728 = vpop.f32.mrf.mxu0
        %v729 = vadd.f32 0.0, %v728
        %730 = vmatprep.mubr.f32.mxu0 0.0
        %731 = vmatmul.mubr.f32.gmra.mxu0 %v243
        %v732 = vpop.f32.mrf.mxu0
        %v733 = vadd.f32 0.0, %v732
        %v734 = vpop.f32.mrf.mxu0
        %v735 = vadd.f32 0.0, %v734
        %736 = vmatprep.mubr.f32.mxu0 0.0
        %737 = vmatmul.mubr.f32.gmra.mxu0 %v244
        %v738 = vpop.f32.mrf.mxu0
        %v739 = vadd.f32 0.0, %v738
        %v740 = vpop.f32.mrf.mxu0
        %v741 = vadd.f32 0.0, %v740
        %742 = vmatprep.mubr.f32.mxu0 0.0
        %743 = vmatmul.mubr.f32.gmra.mxu0 %v245
        %v744 = vpop.f32.mrf.mxu0
        %v745 = vadd.f32 0.0, %v744
        %v746 = vpop.f32.mrf.mxu0
        %v747 = vadd.f32 0.0, %v746
        %748 = vmatprep.mubr.f32.mxu0 0.0
        %749 = vmatmul.mubr.f32.gmra.mxu0 %v246
        %v750 = vpop.f32.mrf.mxu0
        %v751 = vadd.f32 0.0, %v750
        %v752 = vpop.f32.mrf.mxu0
        %v753 = vadd.f32 0.0, %v752
        %754 = vmatprep.mubr.f32.mxu0 0.0
        %755 = vmatmul.mubr.f32.gmra.mxu0 %v247
        %v756 = vpop.f32.mrf.mxu0
        %v757 = vadd.f32 0.0, %v756
        %v758 = vpop.f32.mrf.mxu0
        %v759 = vadd.f32 0.0, %v758
        %760 = vmatprep.mubr.f32.mxu0 0.0
        %761 = vmatmul.mubr.f32.gmra.mxu0 %v248
        %v762 = vpop.f32.mrf.mxu0
        %v763 = vadd.f32 0.0, %v762
        %v764 = vpop.f32.mrf.mxu0
        %v765 = vadd.f32 0.0, %v764
        %766 = vmatprep.mubr.f32.mxu0 0.0
        %767 = vmatmul.mubr.f32.gmra.mxu0 %v249
        %v768 = vpop.f32.mrf.mxu0
        %v769 = vadd.f32 0.0, %v768
        %v770 = vpop.f32.mrf.mxu0
        %v771 = vadd.f32 0.0, %v770
        %772 = vmatprep.mubr.f32.mxu0 0.0
        %773 = vmatmul.mubr.f32.gmra.mxu0 %v250
        %v774 = vpop.f32.mrf.mxu0
        %v775 = vadd.f32 0.0, %v774
        %v776 = vpop.f32.mrf.mxu0
        %v777 = vadd.f32 0.0, %v776
        %778 = vmatprep.mubr.f32.mxu0 0.0
        %779 = vmatmul.mubr.f32.gmra.mxu0 %v251
        %v780 = vpop.f32.mrf.mxu0
        %v781 = vadd.f32 0.0, %v780
        %v782 = vpop.f32.mrf.mxu0
        %v783 = vadd.f32 0.0, %v782
        %784 = vmatprep.mubr.f32.mxu0 0.0
        %785 = vmatmul.mubr.f32.gmra.mxu0 %v252
        %v786 = vpop.f32.mrf.mxu0
        %v787 = vadd.f32 0.0, %v786
        %v788 = vpop.f32.mrf.mxu0
        %v789 = vadd.f32 0.0, %v788
        %790 = vmatprep.mubr.f32.mxu0 0.0
        %791 = vmatmul.mubr.f32.gmra.mxu0 %v253
        %v792 = vpop.f32.mrf.mxu0
        %v793 = vadd.f32 0.0, %v792
        %v794 = vpop.f32.mrf.mxu0
        %v795 = vadd.f32 0.0, %v794
        %796 = vmatprep.mubr.f32.mxu0 0.0
        %797 = vmatmul.mubr.f32.gmra.mxu0 %v254
        %v798 = vpop.f32.mrf.mxu0
        %v799 = vadd.f32 0.0, %v798
        %v800 = vpop.f32.mrf.mxu0
        %v801 = vadd.f32 0.0, %v800
        %802 = vmatprep.mubr.f32.mxu0 0.0
        %803 = vmatmul.mubr.f32.gmra.mxu0 %v255
        %v804 = vpop.f32.mrf.mxu0
        %v805 = vadd.f32 0.0, %v804
        %v806 = vpop.f32.mrf.mxu0
        %v807 = vadd.f32 0.0, %v806
        %808 = vmatprep.mubr.f32.mxu0 0.0
        %809 = vmatmul.mubr.f32.gmra.mxu0 %v256
        %v810 = vpop.f32.mrf.mxu0
        %v811 = vadd.f32 0.0, %v810
        %v812 = vpop.f32.mrf.mxu0
        %v813 = vadd.f32 0.0, %v812
        %814 = vmatprep.mubr.f32.mxu0 0.0
        %815 = vmatmul.mubr.f32.gmra.mxu0 %v257
        %v816 = vpop.f32.mrf.mxu0
        %v817 = vadd.f32 0.0, %v816
        %v818 = vpop.f32.mrf.mxu0
        %v819 = vadd.f32 0.0, %v818
        %820 = vmatprep.mubr.f32.mxu0 0.0
        %821 = vmatmul.mubr.f32.gmra.mxu0 %v258
        %v822 = vpop.f32.mrf.mxu0
        %v823 = vadd.f32 0.0, %v822
        %v824 = vpop.f32.mrf.mxu0
        %v825 = vadd.f32 0.0, %v824
        %826 = vmatprep.mubr.f32.mxu0 0.0
        %827 = vmatmul.mubr.f32.gmra.mxu0 %v259
        %v828 = vpop.f32.mrf.mxu0
        %v829 = vadd.f32 0.0, %v828
        %v830 = vpop.f32.mrf.mxu0
        %v831 = vadd.f32 0.0, %v830
        %832 = vmatprep.mubr.f32.mxu0 0.0
        %833 = vmatmul.mubr.f32.gmra.mxu0 %v260
        %v834 = vpop.f32.mrf.mxu0
        %v835 = vadd.f32 0.0, %v834
        %v836 = vpop.f32.mrf.mxu0
        %v837 = vadd.f32 0.0, %v836
        %838 = vmatprep.mubr.f32.mxu0 0.0
        %839 = vmatmul.mubr.f32.gmra.mxu0 %v261
        %v840 = vpop.f32.mrf.mxu0
        %v841 = vadd.f32 0.0, %v840
        %v842 = vpop.f32.mrf.mxu0
        %v843 = vadd.f32 0.0, %v842
        %844 = vmatprep.mubr.f32.mxu0 0.0
        %845 = vmatmul.mubr.f32.gmra.mxu0 %v262
        %v846 = vpop.f32.mrf.mxu0
        %v847 = vadd.f32 0.0, %v846
        %v848 = vpop.f32.mrf.mxu0
        %v849 = vadd.f32 0.0, %v848
        %850 = vmatprep.mubr.f32.mxu0 0.0
        %851 = vmatmul.mubr.f32.gmra.mxu0 %v263
        %v852 = vpop.f32.mrf.mxu0
        %v853 = vadd.f32 0.0, %v852
        %v854 = vpop.f32.mrf.mxu0
        %v855 = vadd.f32 0.0, %v854
        %856 = vmatprep.mubr.f32.mxu0 0.0
        %857 = vmatmul.mubr.f32.gmra.mxu0 %v264
        %v858 = vpop.f32.mrf.mxu0
        %v859 = vadd.f32 0.0, %v858
        %v860 = vpop.f32.mrf.mxu0
        %v861 = vadd.f32 0.0, %v860
        %862 = vmatprep.mubr.f32.mxu0 0.0
        %863 = vmatmul.mubr.f32.gmra.mxu0 %v265
        %v864 = vpop.f32.mrf.mxu0
        %v865 = vadd.f32 0.0, %v864
        %v866 = vpop.f32.mrf.mxu0
        %v867 = vadd.f32 0.0, %v866
        %868 = vmatprep.mubr.f32.mxu0 0.0
        %869 = vmatmul.mubr.f32.gmra.mxu0 %v266
        %v870 = vpop.f32.mrf.mxu0
        %v871 = vadd.f32 0.0, %v870
        %v872 = vpop.f32.mrf.mxu0
        %v873 = vadd.f32 0.0, %v872
        %874 = vmatprep.mubr.f32.mxu0 0.0
        %875 = vmatmul.mubr.f32.gmra.mxu0 %v267
        %v876 = vpop.f32.mrf.mxu0
        %v877 = vadd.f32 0.0, %v876
        %v878 = vpop.f32.mrf.mxu0
        %v879 = vadd.f32 0.0, %v878
        %880 = vmatprep.mubr.f32.mxu0 0.0
        %881 = vmatmul.mubr.f32.gmra.mxu0 %v268
        %v882 = vpop.f32.mrf.mxu0
        %v883 = vadd.f32 0.0, %v882
        %v884 = vpop.f32.mrf.mxu0
        %v885 = vadd.f32 0.0, %v884
        %886 = vmatprep.mubr.f32.mxu0 0.0
        %887 = vmatmul.mubr.f32.gmra.mxu0 %v269
        %v888 = vpop.f32.mrf.mxu0
        %v889 = vadd.f32 0.0, %v888
        %v890 = vpop.f32.mrf.mxu0
        %v891 = vadd.f32 0.0, %v890
        %892 = vmatprep.mubr.f32.mxu0 0.0
        %893 = vmatmul.mubr.f32.gmra.mxu0 %v270
        %v894 = vpop.f32.mrf.mxu0
        %v895 = vadd.f32 0.0, %v894
        %v896 = vpop.f32.mrf.mxu0
        %v897 = vadd.f32 0.0, %v896
        %898 = vmatprep.mubr.f32.mxu0 0.0
        %899 = vmatmul.mubr.f32.gmra.mxu0 %v271
        %v900 = vpop.f32.mrf.mxu0
        %v901 = vadd.f32 0.0, %v900
        %v902 = vpop.f32.mrf.mxu0
        %v903 = vadd.f32 0.0, %v902
        %904 = vmatprep.mubr.f32.mxu0 0.0
        %905 = vmatmul.mubr.f32.gmra.mxu0 %v272
        %v906 = vpop.f32.mrf.mxu0
        %v907 = vadd.f32 0.0, %v906
        %v908 = vpop.f32.mrf.mxu0
        %v909 = vadd.f32 0.0, %v908
        %910 = vmatprep.mubr.f32.mxu0 0.0
        %911 = vmatmul.mubr.f32.gmra.mxu0 %v273
        %v912 = vpop.f32.mrf.mxu0
        %v913 = vadd.f32 0.0, %v912
        %v914 = vpop.f32.mrf.mxu0
        %v915 = vadd.f32 0.0, %v914
        %916 = vdwg.mxu0
        %917 = vmatprep.subr.mxu0 %v335
        %918 = vmatpush1.msra.mxu0 %v334
        %919 = vmatprep.subr.mxu0 %v331
        %920 = vmatpush1.msra.mxu0 %v330
        %921 = vmatprep.subr.mxu0 %v327
        %922 = vmatpush1.msra.mxu0 %v326
        %923 = vmatprep.subr.mxu0 %v323
        %924 = vmatpush1.msra.mxu0 %v322
        %925 = vmatprep.subr.mxu0 %v319
        %926 = vmatpush1.msra.mxu0 %v318
        %927 = vmatprep.subr.mxu0 %v315
        %928 = vmatpush1.msra.mxu0 %v314
        %929 = vmatprep.subr.mxu0 %v311
        %930 = vmatpush1.msra.mxu0 %v310
        %931 = vmatprep.subr.mxu0 %v307
        %932 = vmatpush1.msra.mxu0 %v306
        %933 = vmatprep.subr.mxu0 %v303
        %934 = vmatpush1.msra.mxu0 %v302
        %935 = vmatprep.subr.mxu0 %v299
        %936 = vmatpush1.msra.mxu0 %v298
        %937 = vmatprep.subr.mxu0 %v295
        %938 = vmatpush1.msra.mxu0 %v294
        %939 = vmatprep.subr.mxu0 %v291
        %940 = vmatpush1.msra.mxu0 %v290
        %941 = vmatprep.subr.mxu0 %v287
        %942 = vmatpush1.msra.mxu0 %v286
        %943 = vmatprep.subr.mxu0 %v283
        %944 = vmatpush1.msra.mxu0 %v282
        %945 = vmatprep.subr.mxu0 %v279
        %946 = vmatpush1.msra.mxu0 %v278
        %947 = vmatprep.subr.mxu0 %v275
        %948 = vmatpush1.msra.mxu0 %v274
        %949 = vmatprep.subr.mxu0 0.0
        %950 = vmatpush2.msra.mxu0 0.0
        %951 = vmatprep.subr.mxu0 0.0
        %952 = vmatpush2.msra.mxu0 0.0
        %953 = vmatprep.subr.mxu0 0.0
        %954 = vmatpush2.msra.mxu0 0.0
        %955 = vmatprep.subr.mxu0 0.0
        %956 = vmatpush2.msra.mxu0 0.0
        %957 = vmatprep.subr.mxu0 0.0
        %958 = vmatpush2.msra.mxu0 0.0
        %959 = vmatprep.subr.mxu0 0.0
        %960 = vmatpush2.msra.mxu0 0.0
        %961 = vmatprep.subr.mxu0 0.0
        %962 = vmatpush2.msra.mxu0 0.0
        %963 = vmatprep.subr.mxu0 0.0
        %964 = vmatpush2.msra.mxu0 0.0
        %965 = vmatprep.subr.mxu0 0.0
        %966 = vmatpush2.msra.mxu0 0.0
        %967 = vmatprep.subr.mxu0 0.0
        %968 = vmatpush2.msra.mxu0 0.0
        %969 = vmatprep.subr.mxu0 0.0
        %970 = vmatpush2.msra.mxu0 0.0
        %971 = vmatprep.subr.mxu0 0.0
        %972 = vmatpush2.msra.mxu0 0.0
        %973 = vmatprep.subr.mxu0 0.0
        %974 = vmatpush2.msra.mxu0 0.0
        %975 = vmatprep.subr.mxu0 0.0
        %976 = vmatpush2.msra.mxu0 0.0
        %977 = vmatprep.subr.mxu0 0.0
        %978 = vmatpush2.msra.mxu0 0.0
        %979 = vmatprep.subr.mxu0 0.0
        %980 = vmatpush2.msra.mxu0 0.0
        %981 = vmatprep.mubr.f32.mxu0 0.0
        %982 = vmatmul.mubr.f32.gmra.mxu0 %v241
        %v983 = vpop.f32.mrf.mxu0
        %v984 = vadd.f32 %v470, %v983
        %v985 = vpop.f32.mrf.mxu0
        %v986 = vadd.f32 %v472, %v985
        %987 = vmatprep.mubr.f32.mxu0 0.0
        %988 = vmatmul.mubr.f32.gmra.mxu0 %v242
        %v989 = vpop.f32.mrf.mxu0
        %v990 = vadd.f32 %v476, %v989
        %v991 = vpop.f32.mrf.mxu0
        %v992 = vadd.f32 %v478, %v991
        %993 = vmatprep.mubr.f32.mxu0 0.0
        %994 = vmatmul.mubr.f32.gmra.mxu0 %v243
        %v995 = vpop.f32.mrf.mxu0
        %v996 = vadd.f32 %v482, %v995
        %v997 = vpop.f32.mrf.mxu0
        %v998 = vadd.f32 %v484, %v997
        %999 = vmatprep.mubr.f32.mxu0 0.0
        %1000 = vmatmul.mubr.f32.gmra.mxu0 %v244
        %v1001 = vpop.f32.mrf.mxu0
        %v1002 = vadd.f32 %v488, %v1001
        %v1003 = vpop.f32.mrf.mxu0
        %v1004 = vadd.f32 %v490, %v1003
        %1005 = vmatprep.mubr.f32.mxu0 0.0
        %1006 = vmatmul.mubr.f32.gmra.mxu0 %v245
        %v1007 = vpop.f32.mrf.mxu0
        %v1008 = vadd.f32 %v494, %v1007
        %v1009 = vpop.f32.mrf.mxu0
        %v1010 = vadd.f32 %v496, %v1009
        %1011 = vmatprep.mubr.f32.mxu0 0.0
        %1012 = vmatmul.mubr.f32.gmra.mxu0 %v246
        %v1013 = vpop.f32.mrf.mxu0
        %v1014 = vadd.f32 %v500, %v1013
        %v1015 = vpop.f32.mrf.mxu0
        %v1016 = vadd.f32 %v502, %v1015
        %1017 = vmatprep.mubr.f32.mxu0 0.0
        %1018 = vmatmul.mubr.f32.gmra.mxu0 %v247
        %v1019 = vpop.f32.mrf.mxu0
        %v1020 = vadd.f32 %v506, %v1019
        %v1021 = vpop.f32.mrf.mxu0
        %v1022 = vadd.f32 %v508, %v1021
        %1023 = vmatprep.mubr.f32.mxu0 0.0
        %1024 = vmatmul.mubr.f32.gmra.mxu0 %v248
        %v1025 = vpop.f32.mrf.mxu0
        %v1026 = vadd.f32 %v512, %v1025
        %v1027 = vpop.f32.mrf.mxu0
        %v1028 = vadd.f32 %v514, %v1027
        %1029 = vmatprep.mubr.f32.mxu0 0.0
        %1030 = vmatmul.mubr.f32.gmra.mxu0 %v249
        %v1031 = vpop.f32.mrf.mxu0
        %v1032 = vadd.f32 %v518, %v1031
        %v1033 = vpop.f32.mrf.mxu0
        %v1034 = vadd.f32 %v520, %v1033
        %1035 = vmatprep.mubr.f32.mxu0 0.0
        %1036 = vmatmul.mubr.f32.gmra.mxu0 %v250
        %v1037 = vpop.f32.mrf.mxu0
        %v1038 = vadd.f32 %v524, %v1037
        %v1039 = vpop.f32.mrf.mxu0
        %v1040 = vadd.f32 %v526, %v1039
        %1041 = vmatprep.mubr.f32.mxu0 0.0
        %1042 = vmatmul.mubr.f32.gmra.mxu0 %v251
        %v1043 = vpop.f32.mrf.mxu0
        %v1044 = vadd.f32 %v530, %v1043
        %v1045 = vpop.f32.mrf.mxu0
        %v1046 = vadd.f32 %v532, %v1045
        %1047 = vmatprep.mubr.f32.mxu0 0.0
        %1048 = vmatmul.mubr.f32.gmra.mxu0 %v252
        %v1049 = vpop.f32.mrf.mxu0
        %v1050 = vadd.f32 %v536, %v1049
        %v1051 = vpop.f32.mrf.mxu0
        %v1052 = vadd.f32 %v538, %v1051
        %1053 = vmatprep.mubr.f32.mxu0 0.0
        %1054 = vmatmul.mubr.f32.gmra.mxu0 %v253
        %v1055 = vpop.f32.mrf.mxu0
        %v1056 = vadd.f32 %v542, %v1055
        %v1057 = vpop.f32.mrf.mxu0
        %v1058 = vadd.f32 %v544, %v1057
        %1059 = vmatprep.mubr.f32.mxu0 0.0
        %1060 = vmatmul.mubr.f32.gmra.mxu0 %v254
        %v1061 = vpop.f32.mrf.mxu0
        %v1062 = vadd.f32 %v548, %v1061
        %v1063 = vpop.f32.mrf.mxu0
        %v1064 = vadd.f32 %v550, %v1063
        %1065 = vmatprep.mubr.f32.mxu0 0.0
        %1066 = vmatmul.mubr.f32.gmra.mxu0 %v255
        %v1067 = vpop.f32.mrf.mxu0
        %v1068 = vadd.f32 %v554, %v1067
        %v1069 = vpop.f32.mrf.mxu0
        %v1070 = vadd.f32 %v556, %v1069
        %1071 = vmatprep.mubr.f32.mxu0 0.0
        %1072 = vmatmul.mubr.f32.gmra.mxu0 %v256
        %v1073 = vpop.f32.mrf.mxu0
        %v1074 = vadd.f32 %v560, %v1073
        %v1075 = vpop.f32.mrf.mxu0
        %v1076 = vadd.f32 %v562, %v1075
        %1077 = vmatprep.mubr.f32.mxu0 0.0
        %1078 = vmatmul.mubr.f32.gmra.mxu0 %v257
        %v1079 = vpop.f32.mrf.mxu0
        %v1080 = vadd.f32 %v566, %v1079
        %v1081 = vpop.f32.mrf.mxu0
        %v1082 = vadd.f32 %v568, %v1081
        %1083 = vmatprep.mubr.f32.mxu0 0.0
        %1084 = vmatmul.mubr.f32.gmra.mxu0 %v258
        %v1085 = vpop.f32.mrf.mxu0
        %v1086 = vadd.f32 %v572, %v1085
        %v1087 = vpop.f32.mrf.mxu0
        %v1088 = vadd.f32 %v574, %v1087
        %1089 = vmatprep.mubr.f32.mxu0 0.0
        %1090 = vmatmul.mubr.f32.gmra.mxu0 %v259
        %v1091 = vpop.f32.mrf.mxu0
        %v1092 = vadd.f32 %v578, %v1091
        %v1093 = vpop.f32.mrf.mxu0
        %v1094 = vadd.f32 %v580, %v1093
        %1095 = vmatprep.mubr.f32.mxu0 0.0
        %1096 = vmatmul.mubr.f32.gmra.mxu0 %v260
        %v1097 = vpop.f32.mrf.mxu0
        %v1098 = vadd.f32 %v584, %v1097
        %v1099 = vpop.f32.mrf.mxu0
        %v1100 = vadd.f32 %v586, %v1099
        %1101 = vmatprep.mubr.f32.mxu0 0.0
        %1102 = vmatmul.mubr.f32.gmra.mxu0 %v261
        %v1103 = vpop.f32.mrf.mxu0
        %v1104 = vadd.f32 %v590, %v1103
        %v1105 = vpop.f32.mrf.mxu0
        %v1106 = vadd.f32 %v592, %v1105
        %1107 = vmatprep.mubr.f32.mxu0 0.0
        %1108 = vmatmul.mubr.f32.gmra.mxu0 %v262
        %v1109 = vpop.f32.mrf.mxu0
        %v1110 = vadd.f32 %v596, %v1109
        %v1111 = vpop.f32.mrf.mxu0
        %v1112 = vadd.f32 %v598, %v1111
        %1113 = vmatprep.mubr.f32.mxu0 0.0
        %1114 = vmatmul.mubr.f32.gmra.mxu0 %v263
        %v1115 = vpop.f32.mrf.mxu0
        %v1116 = vadd.f32 %v602, %v1115
        %v1117 = vpop.f32.mrf.mxu0
        %v1118 = vadd.f32 %v604, %v1117
        %1119 = vmatprep.mubr.f32.mxu0 0.0
        %1120 = vmatmul.mubr.f32.gmra.mxu0 %v264
        %v1121 = vpop.f32.mrf.mxu0
        %v1122 = vadd.f32 %v608, %v1121
        %v1123 = vpop.f32.mrf.mxu0
        %v1124 = vadd.f32 %v610, %v1123
        %1125 = vmatprep.mubr.f32.mxu0 0.0
        %1126 = vmatmul.mubr.f32.gmra.mxu0 %v265
        %v1127 = vpop.f32.mrf.mxu0
        %v1128 = vadd.f32 %v614, %v1127
        %v1129 = vpop.f32.mrf.mxu0
        %v1130 = vadd.f32 %v616, %v1129
        %1131 = vmatprep.mubr.f32.mxu0 0.0
        %1132 = vmatmul.mubr.f32.gmra.mxu0 %v266
        %v1133 = vpop.f32.mrf.mxu0
        %v1134 = vadd.f32 %v620, %v1133
        %v1135 = vpop.f32.mrf.mxu0
        %v1136 = vadd.f32 %v622, %v1135
        %1137 = vmatprep.mubr.f32.mxu0 0.0
        %1138 = vmatmul.mubr.f32.gmra.mxu0 %v267
        %v1139 = vpop.f32.mrf.mxu0
        %v1140 = vadd.f32 %v626, %v1139
        %v1141 = vpop.f32.mrf.mxu0
        %v1142 = vadd.f32 %v628, %v1141
        %1143 = vmatprep.mubr.f32.mxu0 0.0
        %1144 = vmatmul.mubr.f32.gmra.mxu0 %v268
        %v1145 = vpop.f32.mrf.mxu0
        %v1146 = vadd.f32 %v632, %v1145
        %v1147 = vpop.f32.mrf.mxu0
        %v1148 = vadd.f32 %v634, %v1147
        %1149 = vmatprep.mubr.f32.mxu0 0.0
        %1150 = vmatmul.mubr.f32.gmra.mxu0 %v269
        %v1151 = vpop.f32.mrf.mxu0
        %v1152 = vadd.f32 %v638, %v1151
        %v1153 = vpop.f32.mrf.mxu0
        %v1154 = vadd.f32 %v640, %v1153
        %1155 = vmatprep.mubr.f32.mxu0 0.0
        %1156 = vmatmul.mubr.f32.gmra.mxu0 %v270
        %v1157 = vpop.f32.mrf.mxu0
        %v1158 = vadd.f32 %v644, %v1157
        %v1159 = vpop.f32.mrf.mxu0
        %v1160 = vadd.f32 %v646, %v1159
        %1161 = vmatprep.mubr.f32.mxu0 0.0
        %1162 = vmatmul.mubr.f32.gmra.mxu0 %v271
        %v1163 = vpop.f32.mrf.mxu0
        %v1164 = vadd.f32 %v650, %v1163
        %v1165 = vpop.f32.mrf.mxu0
        %v1166 = vadd.f32 %v652, %v1165
        %1167 = vmatprep.mubr.f32.mxu0 0.0
        %1168 = vmatmul.mubr.f32.gmra.mxu0 %v272
        %v1169 = vpop.f32.mrf.mxu0
        %v1170 = vadd.f32 %v656, %v1169
        %v1171 = vpop.f32.mrf.mxu0
        %v1172 = vadd.f32 %v658, %v1171
        %1173 = vdwg.mxu0
        %1174 = vmatprep.subr.mxu0 %v337
        %1175 = vmatpush1.msra.mxu0 %v336
        %1176 = vmatprep.subr.mxu0 %v333
        %1177 = vmatpush1.msra.mxu0 %v332
        %1178 = vmatprep.subr.mxu0 %v329
        %1179 = vmatpush1.msra.mxu0 %v328
        %1180 = vmatprep.subr.mxu0 %v325
        %1181 = vmatpush1.msra.mxu0 %v324
        %1182 = vmatprep.subr.mxu0 %v321
        %1183 = vmatpush1.msra.mxu0 %v320
        %1184 = vmatprep.subr.mxu0 %v317
        %1185 = vmatpush1.msra.mxu0 %v316
        %1186 = vmatprep.subr.mxu0 %v313
        %1187 = vmatpush1.msra.mxu0 %v312
        %1188 = vmatprep.subr.mxu0 %v309
        %1189 = vmatpush1.msra.mxu0 %v308
        %1190 = vmatprep.subr.mxu0 %v305
        %1191 = vmatpush1.msra.mxu0 %v304
        %1192 = vmatprep.subr.mxu0 %v301
        %1193 = vmatpush1.msra.mxu0 %v300
        %1194 = vmatprep.subr.mxu0 %v297
        %1195 = vmatpush1.msra.mxu0 %v296
        %1196 = vmatprep.subr.mxu0 %v293
        %1197 = vmatpush1.msra.mxu0 %v292
        %1198 = vmatprep.subr.mxu0 %v289
        %1199 = vmatpush1.msra.mxu0 %v288
        %1200 = vmatprep.subr.mxu0 %v285
        %1201 = vmatpush1.msra.mxu0 %v284
        %1202 = vmatprep.subr.mxu0 %v281
        %1203 = vmatpush1.msra.mxu0 %v280
        %1204 = vmatprep.subr.mxu0 %v277
        %1205 = vmatpush1.msra.mxu0 %v276
        %1206 = vmatprep.subr.mxu0 0.0
        %1207 = vmatpush2.msra.mxu0 0.0
        %1208 = vmatprep.subr.mxu0 0.0
        %1209 = vmatpush2.msra.mxu0 0.0
        %1210 = vmatprep.subr.mxu0 0.0
        %1211 = vmatpush2.msra.mxu0 0.0
        %1212 = vmatprep.subr.mxu0 0.0
        %1213 = vmatpush2.msra.mxu0 0.0
        %1214 = vmatprep.subr.mxu0 0.0
        %1215 = vmatpush2.msra.mxu0 0.0
        %1216 = vmatprep.subr.mxu0 0.0
        %1217 = vmatpush2.msra.mxu0 0.0
        %1218 = vmatprep.subr.mxu0 0.0
        %1219 = vmatpush2.msra.mxu0 0.0
        %1220 = vmatprep.subr.mxu0 0.0
        %1221 = vmatpush2.msra.mxu0 0.0
        %1222 = vmatprep.subr.mxu0 0.0
        %1223 = vmatpush2.msra.mxu0 0.0
        %1224 = vmatprep.subr.mxu0 0.0
        %1225 = vmatpush2.msra.mxu0 0.0
        %1226 = vmatprep.subr.mxu0 0.0
        %1227 = vmatpush2.msra.mxu0 0.0
        %1228 = vmatprep.subr.mxu0 0.0
        %1229 = vmatpush2.msra.mxu0 0.0
        %1230 = vmatprep.subr.mxu0 0.0
        %1231 = vmatpush2.msra.mxu0 0.0
        %1232 = vmatprep.subr.mxu0 0.0
        %1233 = vmatpush2.msra.mxu0 0.0
        %1234 = vmatprep.subr.mxu0 0.0
        %1235 = vmatpush2.msra.mxu0 0.0
        %1236 = vmatprep.subr.mxu0 0.0
        %1237 = vmatpush2.msra.mxu0 0.0
        %1238 = vmatprep.mubr.f32.mxu0 0.0
        %1239 = vmatmul.mubr.f32.gmra.mxu0 %v241
        %v1240 = vpop.f32.mrf.mxu0
        %v1241 = vadd.f32 %v727, %v1240
        %v1242 = vpop.f32.mrf.mxu0
        %v1243 = vadd.f32 %v729, %v1242
        %1244 = vmatprep.mubr.f32.mxu0 0.0
        %1245 = vmatmul.mubr.f32.gmra.mxu0 %v242
        %v1246 = vpop.f32.mrf.mxu0
        %v1247 = vadd.f32 %v733, %v1246
        %v1248 = vpop.f32.mrf.mxu0
        %v1249 = vadd.f32 %v735, %v1248
        %1250 = vmatprep.mubr.f32.mxu0 0.0
        %1251 = vmatmul.mubr.f32.gmra.mxu0 %v243
        %v1252 = vpop.f32.mrf.mxu0
        %v1253 = vadd.f32 %v739, %v1252
        %v1254 = vpop.f32.mrf.mxu0
        %v1255 = vadd.f32 %v741, %v1254
        %1256 = vmatprep.mubr.f32.mxu0 0.0
        %1257 = vmatmul.mubr.f32.gmra.mxu0 %v244
        %v1258 = vpop.f32.mrf.mxu0
        %v1259 = vadd.f32 %v745, %v1258
        %v1260 = vpop.f32.mrf.mxu0
        %v1261 = vadd.f32 %v747, %v1260
        %1262 = vmatprep.mubr.f32.mxu0 0.0
        %1263 = vmatmul.mubr.f32.gmra.mxu0 %v245
        %v1264 = vpop.f32.mrf.mxu0
        %v1265 = vadd.f32 %v751, %v1264
        %v1266 = vpop.f32.mrf.mxu0
        %v1267 = vadd.f32 %v753, %v1266
        %1268 = vmatprep.mubr.f32.mxu0 0.0
        %1269 = vmatmul.mubr.f32.gmra.mxu0 %v246
        %v1270 = vpop.f32.mrf.mxu0
        %v1271 = vadd.f32 %v757, %v1270
        %v1272 = vpop.f32.mrf.mxu0
        %v1273 = vadd.f32 %v759, %v1272
        %1274 = vmatprep.mubr.f32.mxu0 0.0
        %1275 = vmatmul.mubr.f32.gmra.mxu0 %v247
        %v1276 = vpop.f32.mrf.mxu0
        %v1277 = vadd.f32 %v763, %v1276
        %v1278 = vpop.f32.mrf.mxu0
        %v1279 = vadd.f32 %v765, %v1278
        %1280 = vmatprep.mubr.f32.mxu0 0.0
        %1281 = vmatmul.mubr.f32.gmra.mxu0 %v248
        %v1282 = vpop.f32.mrf.mxu0
        %v1283 = vadd.f32 %v769, %v1282
        %v1284 = vpop.f32.mrf.mxu0
        %v1285 = vadd.f32 %v771, %v1284
        %1286 = vmatprep.mubr.f32.mxu0 0.0
        %1287 = vmatmul.mubr.f32.gmra.mxu0 %v249
        %v1288 = vpop.f32.mrf.mxu0
        %v1289 = vadd.f32 %v775, %v1288
        %v1290 = vpop.f32.mrf.mxu0
        %v1291 = vadd.f32 %v777, %v1290
        %1292 = vmatprep.mubr.f32.mxu0 0.0
        %1293 = vmatmul.mubr.f32.gmra.mxu0 %v250
        %v1294 = vpop.f32.mrf.mxu0
        %v1295 = vadd.f32 %v781, %v1294
        %v1296 = vpop.f32.mrf.mxu0
        %v1297 = vadd.f32 %v783, %v1296
        %1298 = vmatprep.mubr.f32.mxu0 0.0
        %1299 = vmatmul.mubr.f32.gmra.mxu0 %v251
        %v1300 = vpop.f32.mrf.mxu0
        %v1301 = vadd.f32 %v787, %v1300
        %v1302 = vpop.f32.mrf.mxu0
        %v1303 = vadd.f32 %v789, %v1302
        %1304 = vmatprep.mubr.f32.mxu0 0.0
        %1305 = vmatmul.mubr.f32.gmra.mxu0 %v252
        %v1306 = vpop.f32.mrf.mxu0
        %v1307 = vadd.f32 %v793, %v1306
        %v1308 = vpop.f32.mrf.mxu0
        %v1309 = vadd.f32 %v795, %v1308
        %1310 = vmatprep.mubr.f32.mxu0 0.0
        %1311 = vmatmul.mubr.f32.gmra.mxu0 %v253
        %v1312 = vpop.f32.mrf.mxu0
        %v1313 = vadd.f32 %v799, %v1312
        %v1314 = vpop.f32.mrf.mxu0
        %v1315 = vadd.f32 %v801, %v1314
        %1316 = vmatprep.mubr.f32.mxu0 0.0
        %1317 = vmatmul.mubr.f32.gmra.mxu0 %v254
        %v1318 = vpop.f32.mrf.mxu0
        %v1319 = vadd.f32 %v805, %v1318
        %v1320 = vpop.f32.mrf.mxu0
        %v1321 = vadd.f32 %v807, %v1320
        %1322 = vmatprep.mubr.f32.mxu0 0.0
        %1323 = vmatmul.mubr.f32.gmra.mxu0 %v255
        %v1324 = vpop.f32.mrf.mxu0
        %v1325 = vadd.f32 %v811, %v1324
        %v1326 = vpop.f32.mrf.mxu0
        %v1327 = vadd.f32 %v813, %v1326
        %1328 = vmatprep.mubr.f32.mxu0 0.0
        %1329 = vmatmul.mubr.f32.gmra.mxu0 %v256
        %v1330 = vpop.f32.mrf.mxu0
        %v1331 = vadd.f32 %v817, %v1330
        %v1332 = vpop.f32.mrf.mxu0
        %v1333 = vadd.f32 %v819, %v1332
        %1334 = vmatprep.mubr.f32.mxu0 0.0
        %1335 = vmatmul.mubr.f32.gmra.mxu0 %v257
        %v1336 = vpop.f32.mrf.mxu0
        %v1337 = vadd.f32 %v823, %v1336
        %v1338 = vpop.f32.mrf.mxu0
        %v1339 = vadd.f32 %v825, %v1338
        %1340 = vmatprep.mubr.f32.mxu0 0.0
        %1341 = vmatmul.mubr.f32.gmra.mxu0 %v258
        %v1342 = vpop.f32.mrf.mxu0
        %v1343 = vadd.f32 %v829, %v1342
        %v1344 = vpop.f32.mrf.mxu0
        %v1345 = vadd.f32 %v831, %v1344
        %1346 = vmatprep.mubr.f32.mxu0 0.0
        %1347 = vmatmul.mubr.f32.gmra.mxu0 %v259
        %v1348 = vpop.f32.mrf.mxu0
        %v1349 = vadd.f32 %v835, %v1348
        %v1350 = vpop.f32.mrf.mxu0
        %v1351 = vadd.f32 %v837, %v1350
        %1352 = vmatprep.mubr.f32.mxu0 0.0
        %1353 = vmatmul.mubr.f32.gmra.mxu0 %v260
        %v1354 = vpop.f32.mrf.mxu0
        %v1355 = vadd.f32 %v841, %v1354
        %v1356 = vpop.f32.mrf.mxu0
        %v1357 = vadd.f32 %v843, %v1356
        %1358 = vmatprep.mubr.f32.mxu0 0.0
        %1359 = vmatmul.mubr.f32.gmra.mxu0 %v261
        %v1360 = vpop.f32.mrf.mxu0
        %v1361 = vadd.f32 %v847, %v1360
        %v1362 = vpop.f32.mrf.mxu0
        %v1363 = vadd.f32 %v849, %v1362
        %1364 = vmatprep.mubr.f32.mxu0 0.0
        %1365 = vmatmul.mubr.f32.gmra.mxu0 %v262
        %v1366 = vpop.f32.mrf.mxu0
        %v1367 = vadd.f32 %v853, %v1366
        %v1368 = vpop.f32.mrf.mxu0
        %v1369 = vadd.f32 %v855, %v1368
        %1370 = vmatprep.mubr.f32.mxu0 0.0
        %1371 = vmatmul.mubr.f32.gmra.mxu0 %v263
        %v1372 = vpop.f32.mrf.mxu0
        %v1373 = vadd.f32 %v859, %v1372
        %v1374 = vpop.f32.mrf.mxu0
        %v1375 = vadd.f32 %v861, %v1374
        %1376 = vmatprep.mubr.f32.mxu0 0.0
        %1377 = vmatmul.mubr.f32.gmra.mxu0 %v264
        %v1378 = vpop.f32.mrf.mxu0
        %v1379 = vadd.f32 %v865, %v1378
        %v1380 = vpop.f32.mrf.mxu0
        %v1381 = vadd.f32 %v867, %v1380
        %1382 = vmatprep.mubr.f32.mxu0 0.0
        %1383 = vmatmul.mubr.f32.gmra.mxu0 %v265
        %v1384 = vpop.f32.mrf.mxu0
        %v1385 = vadd.f32 %v871, %v1384
        %v1386 = vpop.f32.mrf.mxu0
        %v1387 = vadd.f32 %v873, %v1386
        %1388 = vmatprep.mubr.f32.mxu0 0.0
        %1389 = vmatmul.mubr.f32.gmra.mxu0 %v266
        %v1390 = vpop.f32.mrf.mxu0
        %v1391 = vadd.f32 %v877, %v1390
        %v1392 = vpop.f32.mrf.mxu0
        %v1393 = vadd.f32 %v879, %v1392
        %1394 = vmatprep.mubr.f32.mxu0 0.0
        %1395 = vmatmul.mubr.f32.gmra.mxu0 %v267
        %v1396 = vpop.f32.mrf.mxu0
        %v1397 = vadd.f32 %v883, %v1396
        %v1398 = vpop.f32.mrf.mxu0
        %v1399 = vadd.f32 %v885, %v1398
        %1400 = vmatprep.mubr.f32.mxu0 0.0
        %1401 = vmatmul.mubr.f32.gmra.mxu0 %v268
        %v1402 = vpop.f32.mrf.mxu0
        %v1403 = vadd.f32 %v889, %v1402
        %v1404 = vpop.f32.mrf.mxu0
        %v1405 = vadd.f32 %v891, %v1404
        %1406 = vmatprep.mubr.f32.mxu0 0.0
        %1407 = vmatmul.mubr.f32.gmra.mxu0 %v269
        %v1408 = vpop.f32.mrf.mxu0
        %v1409 = vadd.f32 %v895, %v1408
        %v1410 = vpop.f32.mrf.mxu0
        %v1411 = vadd.f32 %v897, %v1410
        %1412 = vmatprep.mubr.f32.mxu0 0.0
        %1413 = vmatmul.mubr.f32.gmra.mxu0 %v270
        %v1414 = vpop.f32.mrf.mxu0
        %v1415 = vadd.f32 %v901, %v1414
        %v1416 = vpop.f32.mrf.mxu0
        %v1417 = vadd.f32 %v903, %v1416
        %1418 = vmatprep.mubr.f32.mxu0 0.0
        %1419 = vmatmul.mubr.f32.gmra.mxu0 %v271
        %v1420 = vpop.f32.mrf.mxu0
        %v1421 = vadd.f32 %v907, %v1420
        %v1422 = vpop.f32.mrf.mxu0
        %v1423 = vadd.f32 %v909, %v1422
        %1424 = vmatprep.mubr.f32.mxu0 0.0
        %1425 = vmatmul.mubr.f32.gmra.mxu0 %v272
        %v1426 = vpop.f32.mrf.mxu0
        %v1427 = vadd.f32 %v913, %v1426
        %v1428 = vpop.f32.mrf.mxu0
        %v1429 = vadd.f32 %v915, %v1428
        %1430 = vdwg.mxu0
        %1431 = vst [vmem:[%s217] sm:$0xff] %v984
        %1432 = vst [vmem:[%s217 + $0x8] sm:$0xff] %v990
        %1433 = vst [vmem:[%s217 + $0x10] sm:$0xff] %v996
        %1434 = vst [vmem:[%s217 + $0x18] sm:$0xff] %v1002
        %1435 = vst [vmem:[%s217 + $0x20] sm:$0xff] %v1008
        %1436 = vst [vmem:[%s217 + $0x28] sm:$0xff] %v1014
        %1437 = vst [vmem:[%s217 + $0x30] sm:$0xff] %v1020
        %1438 = vst [vmem:[%s217 + $0x38] sm:$0xff] %v1026
        %1439 = vst [vmem:[%s217 + $0x40] sm:$0xff] %v1032
        %1440 = vst [vmem:[%s217 + $0x48] sm:$0xff] %v1038
        %1441 = vst [vmem:[%s217 + $0x50] sm:$0xff] %v1044
        %1442 = vst [vmem:[%s217 + $0x58] sm:$0xff] %v1050
        %1443 = vst [vmem:[%s217 + $0x60] sm:$0xff] %v1056
        %1444 = vst [vmem:[%s217 + $0x68] sm:$0xff] %v1062
        %1445 = vst [vmem:[%s217 + $0x70] sm:$0xff] %v1068
        %1446 = vst [vmem:[%s217 + $0x78] sm:$0xff] %v1074
        %1447 = vst [vmem:[%s217 + $0x80] sm:$0xff] %v1080
        %1448 = vst [vmem:[%s217 + $0x88] sm:$0xff] %v1086
        %1449 = vst [vmem:[%s217 + $0x90] sm:$0xff] %v1092
        %1450 = vst [vmem:[%s217 + $0x98] sm:$0xff] %v1098
        %1451 = vst [vmem:[%s217 + $0xa0] sm:$0xff] %v1104
        %1452 = vst [vmem:[%s217 + $0xa8] sm:$0xff] %v1110
        %1453 = vst [vmem:[%s217 + $0xb0] sm:$0xff] %v1116
        %1454 = vst [vmem:[%s217 + $0xb8] sm:$0xff] %v1122
        %1455 = vst [vmem:[%s217 + $0xc0] sm:$0xff] %v1128
        %1456 = vst [vmem:[%s217 + $0xc8] sm:$0xff] %v1134
        %1457 = vst [vmem:[%s217 + $0xd0] sm:$0xff] %v1140
        %1458 = vst [vmem:[%s217 + $0xd8] sm:$0xff] %v1146
        %1459 = vst [vmem:[%s217 + $0xe0] sm:$0xff] %v1152
        %1460 = vst [vmem:[%s217 + $0xe8] sm:$0xff] %v1158
        %1461 = vst [vmem:[%s217 + $0xf0] sm:$0xff] %v1164
        %1462 = vst [vmem:[%s217 + $0xf8] sm:$0xff] %v1170
        %s1463 = scalar_lea.vmem %s217, 256 [#allocation2]
        %1464 = vst [vmem:[%s1463] sm:$0xff] %v986
        %1465 = vst [vmem:[%s1463 + $0x8] sm:$0xff] %v992
        %1466 = vst [vmem:[%s1463 + $0x10] sm:$0xff] %v998
        %1467 = vst [vmem:[%s1463 + $0x18] sm:$0xff] %v1004
        %1468 = vst [vmem:[%s1463 + $0x20] sm:$0xff] %v1010
        %1469 = vst [vmem:[%s1463 + $0x28] sm:$0xff] %v1016
        %1470 = vst [vmem:[%s1463 + $0x30] sm:$0xff] %v1022
        %1471 = vst [vmem:[%s1463 + $0x38] sm:$0xff] %v1028
        %1472 = vst [vmem:[%s1463 + $0x40] sm:$0xff] %v1034
        %1473 = vst [vmem:[%s1463 + $0x48] sm:$0xff] %v1040
        %1474 = vst [vmem:[%s1463 + $0x50] sm:$0xff] %v1046
        %1475 = vst [vmem:[%s1463 + $0x58] sm:$0xff] %v1052
        %1476 = vst [vmem:[%s1463 + $0x60] sm:$0xff] %v1058
        %1477 = vst [vmem:[%s1463 + $0x68] sm:$0xff] %v1064
        %1478 = vst [vmem:[%s1463 + $0x70] sm:$0xff] %v1070
        %1479 = vst [vmem:[%s1463 + $0x78] sm:$0xff] %v1076
        %1480 = vst [vmem:[%s1463 + $0x80] sm:$0xff] %v1082
        %1481 = vst [vmem:[%s1463 + $0x88] sm:$0xff] %v1088
        %1482 = vst [vmem:[%s1463 + $0x90] sm:$0xff] %v1094
        %1483 = vst [vmem:[%s1463 + $0x98] sm:$0xff] %v1100
        %1484 = vst [vmem:[%s1463 + $0xa0] sm:$0xff] %v1106
        %1485 = vst [vmem:[%s1463 + $0xa8] sm:$0xff] %v1112
        %1486 = vst [vmem:[%s1463 + $0xb0] sm:$0xff] %v1118
        %1487 = vst [vmem:[%s1463 + $0xb8] sm:$0xff] %v1124
        %1488 = vst [vmem:[%s1463 + $0xc0] sm:$0xff] %v1130
        %1489 = vst [vmem:[%s1463 + $0xc8] sm:$0xff] %v1136
        %1490 = vst [vmem:[%s1463 + $0xd0] sm:$0xff] %v1142
        %1491 = vst [vmem:[%s1463 + $0xd8] sm:$0xff] %v1148
        %1492 = vst [vmem:[%s1463 + $0xe0] sm:$0xff] %v1154
        %1493 = vst [vmem:[%s1463 + $0xe8] sm:$0xff] %v1160
        %1494 = vst [vmem:[%s1463 + $0xf0] sm:$0xff] %v1166
        %1495 = vst [vmem:[%s1463 + $0xf8] sm:$0xff] %v1172
        %s1496 = scalar_lea.vmem %s217, 512 [#allocation2]
        %1497 = vst [vmem:[%s1496] sm:$0xff] %v1241
        %1498 = vst [vmem:[%s1496 + $0x8] sm:$0xff] %v1247
        %1499 = vst [vmem:[%s1496 + $0x10] sm:$0xff] %v1253
        %1500 = vst [vmem:[%s1496 + $0x18] sm:$0xff] %v1259
        %1501 = vst [vmem:[%s1496 + $0x20] sm:$0xff] %v1265
        %1502 = vst [vmem:[%s1496 + $0x28] sm:$0xff] %v1271
        %1503 = vst [vmem:[%s1496 + $0x30] sm:$0xff] %v1277
        %1504 = vst [vmem:[%s1496 + $0x38] sm:$0xff] %v1283
        %1505 = vst [vmem:[%s1496 + $0x40] sm:$0xff] %v1289
        %1506 = vst [vmem:[%s1496 + $0x48] sm:$0xff] %v1295
        %1507 = vst [vmem:[%s1496 + $0x50] sm:$0xff] %v1301
        %1508 = vst [vmem:[%s1496 + $0x58] sm:$0xff] %v1307
        %1509 = vst [vmem:[%s1496 + $0x60] sm:$0xff] %v1313
        %1510 = vst [vmem:[%s1496 + $0x68] sm:$0xff] %v1319
        %1511 = vst [vmem:[%s1496 + $0x70] sm:$0xff] %v1325
        %1512 = vst [vmem:[%s1496 + $0x78] sm:$0xff] %v1331
        %1513 = vst [vmem:[%s1496 + $0x80] sm:$0xff] %v1337
        %1514 = vst [vmem:[%s1496 + $0x88] sm:$0xff] %v1343
        %1515 = vst [vmem:[%s1496 + $0x90] sm:$0xff] %v1349
        %1516 = vst [vmem:[%s1496 + $0x98] sm:$0xff] %v1355
        %1517 = vst [vmem:[%s1496 + $0xa0] sm:$0xff] %v1361
        %1518 = vst [vmem:[%s1496 + $0xa8] sm:$0xff] %v1367
        %1519 = vst [vmem:[%s1496 + $0xb0] sm:$0xff] %v1373
        %1520 = vst [vmem:[%s1496 + $0xb8] sm:$0xff] %v1379
        %1521 = vst [vmem:[%s1496 + $0xc0] sm:$0xff] %v1385
        %1522 = vst [vmem:[%s1496 + $0xc8] sm:$0xff] %v1391
        %1523 = vst [vmem:[%s1496 + $0xd0] sm:$0xff] %v1397
        %1524 = vst [vmem:[%s1496 + $0xd8] sm:$0xff] %v1403
        %1525 = vst [vmem:[%s1496 + $0xe0] sm:$0xff] %v1409
        %1526 = vst [vmem:[%s1496 + $0xe8] sm:$0xff] %v1415
        %1527 = vst [vmem:[%s1496 + $0xf0] sm:$0xff] %v1421
        %1528 = vst [vmem:[%s1496 + $0xf8] sm:$0xff] %v1427
        %s1529 = scalar_lea.vmem %s217, 768 [#allocation2]
        %1530 = vst [vmem:[%s1529] sm:$0xff] %v1243
        %1531 = vst [vmem:[%s1529 + $0x8] sm:$0xff] %v1249
        %1532 = vst [vmem:[%s1529 + $0x10] sm:$0xff] %v1255
        %1533 = vst [vmem:[%s1529 + $0x18] sm:$0xff] %v1261
        %1534 = vst [vmem:[%s1529 + $0x20] sm:$0xff] %v1267
        %1535 = vst [vmem:[%s1529 + $0x28] sm:$0xff] %v1273
        %1536 = vst [vmem:[%s1529 + $0x30] sm:$0xff] %v1279
        %1537 = vst [vmem:[%s1529 + $0x38] sm:$0xff] %v1285
        %1538 = vst [vmem:[%s1529 + $0x40] sm:$0xff] %v1291
        %1539 = vst [vmem:[%s1529 + $0x48] sm:$0xff] %v1297
        %1540 = vst [vmem:[%s1529 + $0x50] sm:$0xff] %v1303
        %1541 = vst [vmem:[%s1529 + $0x58] sm:$0xff] %v1309
        %1542 = vst [vmem:[%s1529 + $0x60] sm:$0xff] %v1315
        %1543 = vst [vmem:[%s1529 + $0x68] sm:$0xff] %v1321
        %1544 = vst [vmem:[%s1529 + $0x70] sm:$0xff] %v1327
        %1545 = vst [vmem:[%s1529 + $0x78] sm:$0xff] %v1333
        %1546 = vst [vmem:[%s1529 + $0x80] sm:$0xff] %v1339
        %1547 = vst [vmem:[%s1529 + $0x88] sm:$0xff] %v1345
        %1548 = vst [vmem:[%s1529 + $0x90] sm:$0xff] %v1351
        %1549 = vst [vmem:[%s1529 + $0x98] sm:$0xff] %v1357
        %1550 = vst [vmem:[%s1529 + $0xa0] sm:$0xff] %v1363
        %1551 = vst [vmem:[%s1529 + $0xa8] sm:$0xff] %v1369
        %1552 = vst [vmem:[%s1529 + $0xb0] sm:$0xff] %v1375
        %1553 = vst [vmem:[%s1529 + $0xb8] sm:$0xff] %v1381
        %1554 = vst [vmem:[%s1529 + $0xc0] sm:$0xff] %v1387
        %1555 = vst [vmem:[%s1529 + $0xc8] sm:$0xff] %v1393
        %1556 = vst [vmem:[%s1529 + $0xd0] sm:$0xff] %v1399
        %1557 = vst [vmem:[%s1529 + $0xd8] sm:$0xff] %v1405
        %1558 = vst [vmem:[%s1529 + $0xe0] sm:$0xff] %v1411
        %1559 = vst [vmem:[%s1529 + $0xe8] sm:$0xff] %v1417
        %1560 = vst [vmem:[%s1529 + $0xf0] sm:$0xff] %v1423
        %1561 = vst [vmem:[%s1529 + $0xf8] sm:$0xff] %v1429
        %s1562 = sand.u32 %s117, 1
        %s1563 = sand.u32 %s117, 1
        %s1564 = smul.addr %s1563, 1024
        %s1565 = scalar_lea.vmem [#allocation2], %s1564
        // Predicated region
        $region33: #{_forward.1} parent=31 // pred_check
          %p1566 = pneg %p127
        $region34: #{_forward.1} parent=31 // pred_check_branch
          %1568 = sbr.rel (%p1566) target = $region36
        $region35: #{_forward.1} parent=31 // pred_region
          %s1569 = smul.u32 32, %s19
          %s1570 = smul.addr %s18, 64
          %s1571 = sadd.s32 %s1569, %s1570
          %s1572 = smul.addr %s1571, 8
          %s1573 = scalar_lea.vmem %s3, %s1572
          // Predicated region
          $region37: #{_forward.1} parent=35 // pred_check
            _
          $region38: #{_forward.1} parent=35 // pred_check_branch
            %1575 = sbr.rel (0) target = $region40
          $region39: #{_forward.1} parent=35 // pred_region
            // Predicated region
            $region41: #{_forward.1} parent=39 // pred_check
              _
            $region42: #{_forward.1} parent=39 // pred_check_branch
              %1577 = sbr.rel (0) target = $region44
            $region43: #{_forward.1} parent=39 // pred_region
              loop: start=0, step=1, limit=1
              $region45: #{_forward.1} parent=43 // loop_pre_header
                _
              $region46: #{_forward.1} parent=43 // loop_header
                %s1579 = sphi 0, %s1583
                %p1580 = scmp.ge.s32.totalorder %s1579, 1
                %s1584 = sphi %s1565, %s1565
                %s1585 = sphi %s1573, %s1573
              $region47: #{_forward.1} parent=43 // loop_header_branch
                %1582 = sbr.rel (%p1580) target = $region51
              $region48: #{_forward.1} parent=43 // loop_body
                %v1586 = vld [vmem:[%s1584] sm:$0xff]
                %1587 = vst [vmem:[%s1585] sm:$0xff] %v1586
                %v1588 = vld [vmem:[%s1584 + $0x8] sm:$0xff]
                %1589 = vst [vmem:[%s1585 + $0x8] sm:$0xff] %v1588
                %v1590 = vld [vmem:[%s1584 + $0x10] sm:$0xff]
                %1591 = vst [vmem:[%s1585 + $0x10] sm:$0xff] %v1590
                %v1592 = vld [vmem:[%s1584 + $0x18] sm:$0xff]
                %1593 = vst [vmem:[%s1585 + $0x18] sm:$0xff] %v1592
                %v1594 = vld [vmem:[%s1584 + $0x20] sm:$0xff]
                %1595 = vst [vmem:[%s1585 + $0x20] sm:$0xff] %v1594
                %v1596 = vld [vmem:[%s1584 + $0x28] sm:$0xff]
                %1597 = vst [vmem:[%s1585 + $0x28] sm:$0xff] %v1596
                %v1598 = vld [vmem:[%s1584 + $0x30] sm:$0xff]
                %1599 = vst [vmem:[%s1585 + $0x30] sm:$0xff] %v1598
                %v1600 = vld [vmem:[%s1584 + $0x38] sm:$0xff]
                %1601 = vst [vmem:[%s1585 + $0x38] sm:$0xff] %v1600
                %v1602 = vld [vmem:[%s1584 + $0x40] sm:$0xff]
                %1603 = vst [vmem:[%s1585 + $0x40] sm:$0xff] %v1602
                %v1604 = vld [vmem:[%s1584 + $0x48] sm:$0xff]
                %1605 = vst [vmem:[%s1585 + $0x48] sm:$0xff] %v1604
                %v1606 = vld [vmem:[%s1584 + $0x50] sm:$0xff]
                %1607 = vst [vmem:[%s1585 + $0x50] sm:$0xff] %v1606
                %v1608 = vld [vmem:[%s1584 + $0x58] sm:$0xff]
                %1609 = vst [vmem:[%s1585 + $0x58] sm:$0xff] %v1608
                %v1610 = vld [vmem:[%s1584 + $0x60] sm:$0xff]
                %1611 = vst [vmem:[%s1585 + $0x60] sm:$0xff] %v1610
                %v1612 = vld [vmem:[%s1584 + $0x68] sm:$0xff]
                %1613 = vst [vmem:[%s1585 + $0x68] sm:$0xff] %v1612
                %v1614 = vld [vmem:[%s1584 + $0x70] sm:$0xff]
                %1615 = vst [vmem:[%s1585 + $0x70] sm:$0xff] %v1614
                %v1616 = vld [vmem:[%s1584 + $0x78] sm:$0xff]
                %1617 = vst [vmem:[%s1585 + $0x78] sm:$0xff] %v1616
                %v1618 = vld [vmem:[%s1584 + $0x80] sm:$0xff]
                %1619 = vst [vmem:[%s1585 + $0x80] sm:$0xff] %v1618
                %v1620 = vld [vmem:[%s1584 + $0x88] sm:$0xff]
                %1621 = vst [vmem:[%s1585 + $0x88] sm:$0xff] %v1620
                %v1622 = vld [vmem:[%s1584 + $0x90] sm:$0xff]
                %1623 = vst [vmem:[%s1585 + $0x90] sm:$0xff] %v1622
                %v1624 = vld [vmem:[%s1584 + $0x98] sm:$0xff]
                %1625 = vst [vmem:[%s1585 + $0x98] sm:$0xff] %v1624
                %v1626 = vld [vmem:[%s1584 + $0xa0] sm:$0xff]
                %1627 = vst [vmem:[%s1585 + $0xa0] sm:$0xff] %v1626
                %v1628 = vld [vmem:[%s1584 + $0xa8] sm:$0xff]
                %1629 = vst [vmem:[%s1585 + $0xa8] sm:$0xff] %v1628
                %v1630 = vld [vmem:[%s1584 + $0xb0] sm:$0xff]
                %1631 = vst [vmem:[%s1585 + $0xb0] sm:$0xff] %v1630
                %v1632 = vld [vmem:[%s1584 + $0xb8] sm:$0xff]
                %1633 = vst [vmem:[%s1585 + $0xb8] sm:$0xff] %v1632
                %v1634 = vld [vmem:[%s1584 + $0xc0] sm:$0xff]
                %1635 = vst [vmem:[%s1585 + $0xc0] sm:$0xff] %v1634
                %v1636 = vld [vmem:[%s1584 + $0xc8] sm:$0xff]
                %1637 = vst [vmem:[%s1585 + $0xc8] sm:$0xff] %v1636
                %v1638 = vld [vmem:[%s1584 + $0xd0] sm:$0xff]
                %1639 = vst [vmem:[%s1585 + $0xd0] sm:$0xff] %v1638
                %v1640 = vld [vmem:[%s1584 + $0xd8] sm:$0xff]
                %1641 = vst [vmem:[%s1585 + $0xd8] sm:$0xff] %v1640
                %v1642 = vld [vmem:[%s1584 + $0xe0] sm:$0xff]
                %1643 = vst [vmem:[%s1585 + $0xe0] sm:$0xff] %v1642
                %v1644 = vld [vmem:[%s1584 + $0xe8] sm:$0xff]
                %1645 = vst [vmem:[%s1585 + $0xe8] sm:$0xff] %v1644
                %v1646 = vld [vmem:[%s1584 + $0xf0] sm:$0xff]
                %1647 = vst [vmem:[%s1585 + $0xf0] sm:$0xff] %v1646
                %v1648 = vld [vmem:[%s1584 + $0xf8] sm:$0xff]
                %1649 = vst [vmem:[%s1585 + $0xf8] sm:$0xff] %v1648
                %v1650 = vld [vmem:[%s1584 + $0x100] sm:$0xff]
                %1651 = vst [vmem:[%s1585 + $0x200] sm:$0xff] %v1650
                %v1652 = vld [vmem:[%s1584 + $0x108] sm:$0xff]
                %1653 = vst [vmem:[%s1585 + $0x208] sm:$0xff] %v1652
                %v1654 = vld [vmem:[%s1584 + $0x110] sm:$0xff]
                %1655 = vst [vmem:[%s1585 + $0x210] sm:$0xff] %v1654
                %v1656 = vld [vmem:[%s1584 + $0x118] sm:$0xff]
                %1657 = vst [vmem:[%s1585 + $0x218] sm:$0xff] %v1656
                %v1658 = vld [vmem:[%s1584 + $0x120] sm:$0xff]
                %1659 = vst [vmem:[%s1585 + $0x220] sm:$0xff] %v1658
                %v1660 = vld [vmem:[%s1584 + $0x128] sm:$0xff]
                %1661 = vst [vmem:[%s1585 + $0x228] sm:$0xff] %v1660
                %v1662 = vld [vmem:[%s1584 + $0x130] sm:$0xff]
                %1663 = vst [vmem:[%s1585 + $0x230] sm:$0xff] %v1662
                %v1664 = vld [vmem:[%s1584 + $0x138] sm:$0xff]
                %1665 = vst [vmem:[%s1585 + $0x238] sm:$0xff] %v1664
                %v1666 = vld [vmem:[%s1584 + $0x140] sm:$0xff]
                %1667 = vst [vmem:[%s1585 + $0x240] sm:$0xff] %v1666
                %v1668 = vld [vmem:[%s1584 + $0x148] sm:$0xff]
                %1669 = vst [vmem:[%s1585 + $0x248] sm:$0xff] %v1668
                %v1670 = vld [vmem:[%s1584 + $0x150] sm:$0xff]
                %1671 = vst [vmem:[%s1585 + $0x250] sm:$0xff] %v1670
                %v1672 = vld [vmem:[%s1584 + $0x158] sm:$0xff]
                %1673 = vst [vmem:[%s1585 + $0x258] sm:$0xff] %v1672
                %v1674 = vld [vmem:[%s1584 + $0x160] sm:$0xff]
                %1675 = vst [vmem:[%s1585 + $0x260] sm:$0xff] %v1674
                %v1676 = vld [vmem:[%s1584 + $0x168] sm:$0xff]
                %1677 = vst [vmem:[%s1585 + $0x268] sm:$0xff] %v1676
                %v1678 = vld [vmem:[%s1584 + $0x170] sm:$0xff]
                %1679 = vst [vmem:[%s1585 + $0x270] sm:$0xff] %v1678
                %v1680 = vld [vmem:[%s1584 + $0x178] sm:$0xff]
                %1681 = vst [vmem:[%s1585 + $0x278] sm:$0xff] %v1680
                %v1682 = vld [vmem:[%s1584 + $0x180] sm:$0xff]
                %1683 = vst [vmem:[%s1585 + $0x280] sm:$0xff] %v1682
                %v1684 = vld [vmem:[%s1584 + $0x188] sm:$0xff]
                %1685 = vst [vmem:[%s1585 + $0x288] sm:$0xff] %v1684
                %v1686 = vld [vmem:[%s1584 + $0x190] sm:$0xff]
                %1687 = vst [vmem:[%s1585 + $0x290] sm:$0xff] %v1686
                %v1688 = vld [vmem:[%s1584 + $0x198] sm:$0xff]
                %1689 = vst [vmem:[%s1585 + $0x298] sm:$0xff] %v1688
                %v1690 = vld [vmem:[%s1584 + $0x1a0] sm:$0xff]
                %1691 = vst [vmem:[%s1585 + $0x2a0] sm:$0xff] %v1690
                %v1692 = vld [vmem:[%s1584 + $0x1a8] sm:$0xff]
                %1693 = vst [vmem:[%s1585 + $0x2a8] sm:$0xff] %v1692
                %v1694 = vld [vmem:[%s1584 + $0x1b0] sm:$0xff]
                %1695 = vst [vmem:[%s1585 + $0x2b0] sm:$0xff] %v1694
                %v1696 = vld [vmem:[%s1584 + $0x1b8] sm:$0xff]
                %1697 = vst [vmem:[%s1585 + $0x2b8] sm:$0xff] %v1696
                %v1698 = vld [vmem:[%s1584 + $0x1c0] sm:$0xff]
                %1699 = vst [vmem:[%s1585 + $0x2c0] sm:$0xff] %v1698
                %v1700 = vld [vmem:[%s1584 + $0x1c8] sm:$0xff]
                %1701 = vst [vmem:[%s1585 + $0x2c8] sm:$0xff] %v1700
                %v1702 = vld [vmem:[%s1584 + $0x1d0] sm:$0xff]
                %1703 = vst [vmem:[%s1585 + $0x2d0] sm:$0xff] %v1702
                %v1704 = vld [vmem:[%s1584 + $0x1d8] sm:$0xff]
                %1705 = vst [vmem:[%s1585 + $0x2d8] sm:$0xff] %v1704
                %v1706 = vld [vmem:[%s1584 + $0x1e0] sm:$0xff]
                %1707 = vst [vmem:[%s1585 + $0x2e0] sm:$0xff] %v1706
                %v1708 = vld [vmem:[%s1584 + $0x1e8] sm:$0xff]
                %1709 = vst [vmem:[%s1585 + $0x2e8] sm:$0xff] %v1708
                %v1710 = vld [vmem:[%s1584 + $0x1f0] sm:$0xff]
                %1711 = vst [vmem:[%s1585 + $0x2f0] sm:$0xff] %v1710
                %v1712 = vld [vmem:[%s1584 + $0x1f8] sm:$0xff]
                %1713 = vst [vmem:[%s1585 + $0x2f8] sm:$0xff] %v1712
                %v1714 = vld [vmem:[%s1584 + $0x200] sm:$0xff]
                %1715 = vst [vmem:[%s1585 + $0x400] sm:$0xff] %v1714
                %v1716 = vld [vmem:[%s1584 + $0x208] sm:$0xff]
                %1717 = vst [vmem:[%s1585 + $0x408] sm:$0xff] %v1716
                %v1718 = vld [vmem:[%s1584 + $0x210] sm:$0xff]
                %1719 = vst [vmem:[%s1585 + $0x410] sm:$0xff] %v1718
                %v1720 = vld [vmem:[%s1584 + $0x218] sm:$0xff]
                %1721 = vst [vmem:[%s1585 + $0x418] sm:$0xff] %v1720
                %v1722 = vld [vmem:[%s1584 + $0x220] sm:$0xff]
                %1723 = vst [vmem:[%s1585 + $0x420] sm:$0xff] %v1722
                %v1724 = vld [vmem:[%s1584 + $0x228] sm:$0xff]
                %1725 = vst [vmem:[%s1585 + $0x428] sm:$0xff] %v1724
                %v1726 = vld [vmem:[%s1584 + $0x230] sm:$0xff]
                %1727 = vst [vmem:[%s1585 + $0x430] sm:$0xff] %v1726
                %v1728 = vld [vmem:[%s1584 + $0x238] sm:$0xff]
                %1729 = vst [vmem:[%s1585 + $0x438] sm:$0xff] %v1728
                %v1730 = vld [vmem:[%s1584 + $0x240] sm:$0xff]
                %1731 = vst [vmem:[%s1585 + $0x440] sm:$0xff] %v1730
                %v1732 = vld [vmem:[%s1584 + $0x248] sm:$0xff]
                %1733 = vst [vmem:[%s1585 + $0x448] sm:$0xff] %v1732
                %v1734 = vld [vmem:[%s1584 + $0x250] sm:$0xff]
                %1735 = vst [vmem:[%s1585 + $0x450] sm:$0xff] %v1734
                %v1736 = vld [vmem:[%s1584 + $0x258] sm:$0xff]
                %1737 = vst [vmem:[%s1585 + $0x458] sm:$0xff] %v1736
                %v1738 = vld [vmem:[%s1584 + $0x260] sm:$0xff]
                %1739 = vst [vmem:[%s1585 + $0x460] sm:$0xff] %v1738
                %v1740 = vld [vmem:[%s1584 + $0x268] sm:$0xff]
                %1741 = vst [vmem:[%s1585 + $0x468] sm:$0xff] %v1740
                %v1742 = vld [vmem:[%s1584 + $0x270] sm:$0xff]
                %1743 = vst [vmem:[%s1585 + $0x470] sm:$0xff] %v1742
                %v1744 = vld [vmem:[%s1584 + $0x278] sm:$0xff]
                %1745 = vst [vmem:[%s1585 + $0x478] sm:$0xff] %v1744
                %v1746 = vld [vmem:[%s1584 + $0x280] sm:$0xff]
                %1747 = vst [vmem:[%s1585 + $0x480] sm:$0xff] %v1746
                %v1748 = vld [vmem:[%s1584 + $0x288] sm:$0xff]
                %1749 = vst [vmem:[%s1585 + $0x488] sm:$0xff] %v1748
                %v1750 = vld [vmem:[%s1584 + $0x290] sm:$0xff]
                %1751 = vst [vmem:[%s1585 + $0x490] sm:$0xff] %v1750
                %v1752 = vld [vmem:[%s1584 + $0x298] sm:$0xff]
                %1753 = vst [vmem:[%s1585 + $0x498] sm:$0xff] %v1752
                %v1754 = vld [vmem:[%s1584 + $0x2a0] sm:$0xff]
                %1755 = vst [vmem:[%s1585 + $0x4a0] sm:$0xff] %v1754
                %v1756 = vld [vmem:[%s1584 + $0x2a8] sm:$0xff]
                %1757 = vst [vmem:[%s1585 + $0x4a8] sm:$0xff] %v1756
                %v1758 = vld [vmem:[%s1584 + $0x2b0] sm:$0xff]
                %1759 = vst [vmem:[%s1585 + $0x4b0] sm:$0xff] %v1758
                %v1760 = vld [vmem:[%s1584 + $0x2b8] sm:$0xff]
                %1761 = vst [vmem:[%s1585 + $0x4b8] sm:$0xff] %v1760
                %v1762 = vld [vmem:[%s1584 + $0x2c0] sm:$0xff]
                %1763 = vst [vmem:[%s1585 + $0x4c0] sm:$0xff] %v1762
                %v1764 = vld [vmem:[%s1584 + $0x2c8] sm:$0xff]
                %1765 = vst [vmem:[%s1585 + $0x4c8] sm:$0xff] %v1764
                %v1766 = vld [vmem:[%s1584 + $0x2d0] sm:$0xff]
                %1767 = vst [vmem:[%s1585 + $0x4d0] sm:$0xff] %v1766
                %v1768 = vld [vmem:[%s1584 + $0x2d8] sm:$0xff]
                %1769 = vst [vmem:[%s1585 + $0x4d8] sm:$0xff] %v1768
                %v1770 = vld [vmem:[%s1584 + $0x2e0] sm:$0xff]
                %1771 = vst [vmem:[%s1585 + $0x4e0] sm:$0xff] %v1770
                %v1772 = vld [vmem:[%s1584 + $0x2e8] sm:$0xff]
                %1773 = vst [vmem:[%s1585 + $0x4e8] sm:$0xff] %v1772
                %v1774 = vld [vmem:[%s1584 + $0x2f0] sm:$0xff]
                %1775 = vst [vmem:[%s1585 + $0x4f0] sm:$0xff] %v1774
                %v1776 = vld [vmem:[%s1584 + $0x2f8] sm:$0xff]
                %1777 = vst [vmem:[%s1585 + $0x4f8] sm:$0xff] %v1776
                %v1778 = vld [vmem:[%s1584 + $0x300] sm:$0xff]
                %1779 = vst [vmem:[%s1585 + $0x600] sm:$0xff] %v1778
                %v1780 = vld [vmem:[%s1584 + $0x308] sm:$0xff]
                %1781 = vst [vmem:[%s1585 + $0x608] sm:$0xff] %v1780
                %v1782 = vld [vmem:[%s1584 + $0x310] sm:$0xff]
                %1783 = vst [vmem:[%s1585 + $0x610] sm:$0xff] %v1782
                %v1784 = vld [vmem:[%s1584 + $0x318] sm:$0xff]
                %1785 = vst [vmem:[%s1585 + $0x618] sm:$0xff] %v1784
                %v1786 = vld [vmem:[%s1584 + $0x320] sm:$0xff]
                %1787 = vst [vmem:[%s1585 + $0x620] sm:$0xff] %v1786
                %v1788 = vld [vmem:[%s1584 + $0x328] sm:$0xff]
                %1789 = vst [vmem:[%s1585 + $0x628] sm:$0xff] %v1788
                %v1790 = vld [vmem:[%s1584 + $0x330] sm:$0xff]
                %1791 = vst [vmem:[%s1585 + $0x630] sm:$0xff] %v1790
                %v1792 = vld [vmem:[%s1584 + $0x338] sm:$0xff]
                %1793 = vst [vmem:[%s1585 + $0x638] sm:$0xff] %v1792
                %v1794 = vld [vmem:[%s1584 + $0x340] sm:$0xff]
                %1795 = vst [vmem:[%s1585 + $0x640] sm:$0xff] %v1794
                %v1796 = vld [vmem:[%s1584 + $0x348] sm:$0xff]
                %1797 = vst [vmem:[%s1585 + $0x648] sm:$0xff] %v1796
                %v1798 = vld [vmem:[%s1584 + $0x350] sm:$0xff]
                %1799 = vst [vmem:[%s1585 + $0x650] sm:$0xff] %v1798
                %v1800 = vld [vmem:[%s1584 + $0x358] sm:$0xff]
                %1801 = vst [vmem:[%s1585 + $0x658] sm:$0xff] %v1800
                %v1802 = vld [vmem:[%s1584 + $0x360] sm:$0xff]
                %1803 = vst [vmem:[%s1585 + $0x660] sm:$0xff] %v1802
                %v1804 = vld [vmem:[%s1584 + $0x368] sm:$0xff]
                %1805 = vst [vmem:[%s1585 + $0x668] sm:$0xff] %v1804
                %v1806 = vld [vmem:[%s1584 + $0x370] sm:$0xff]
                %1807 = vst [vmem:[%s1585 + $0x670] sm:$0xff] %v1806
                %v1808 = vld [vmem:[%s1584 + $0x378] sm:$0xff]
                %1809 = vst [vmem:[%s1585 + $0x678] sm:$0xff] %v1808
                %v1810 = vld [vmem:[%s1584 + $0x380] sm:$0xff]
                %1811 = vst [vmem:[%s1585 + $0x680] sm:$0xff] %v1810
                %v1812 = vld [vmem:[%s1584 + $0x388] sm:$0xff]
                %1813 = vst [vmem:[%s1585 + $0x688] sm:$0xff] %v1812
                %v1814 = vld [vmem:[%s1584 + $0x390] sm:$0xff]
                %1815 = vst [vmem:[%s1585 + $0x690] sm:$0xff] %v1814
                %v1816 = vld [vmem:[%s1584 + $0x398] sm:$0xff]
                %1817 = vst [vmem:[%s1585 + $0x698] sm:$0xff] %v1816
                %v1818 = vld [vmem:[%s1584 + $0x3a0] sm:$0xff]
                %1819 = vst [vmem:[%s1585 + $0x6a0] sm:$0xff] %v1818
                %v1820 = vld [vmem:[%s1584 + $0x3a8] sm:$0xff]
                %1821 = vst [vmem:[%s1585 + $0x6a8] sm:$0xff] %v1820
                %v1822 = vld [vmem:[%s1584 + $0x3b0] sm:$0xff]
                %1823 = vst [vmem:[%s1585 + $0x6b0] sm:$0xff] %v1822
                %v1824 = vld [vmem:[%s1584 + $0x3b8] sm:$0xff]
                %1825 = vst [vmem:[%s1585 + $0x6b8] sm:$0xff] %v1824
                %v1826 = vld [vmem:[%s1584 + $0x3c0] sm:$0xff]
                %1827 = vst [vmem:[%s1585 + $0x6c0] sm:$0xff] %v1826
                %v1828 = vld [vmem:[%s1584 + $0x3c8] sm:$0xff]
                %1829 = vst [vmem:[%s1585 + $0x6c8] sm:$0xff] %v1828
                %v1830 = vld [vmem:[%s1584 + $0x3d0] sm:$0xff]
                %1831 = vst [vmem:[%s1585 + $0x6d0] sm:$0xff] %v1830
                %v1832 = vld [vmem:[%s1584 + $0x3d8] sm:$0xff]
                %1833 = vst [vmem:[%s1585 + $0x6d8] sm:$0xff] %v1832
                %v1834 = vld [vmem:[%s1584 + $0x3e0] sm:$0xff]
                %1835 = vst [vmem:[%s1585 + $0x6e0] sm:$0xff] %v1834
                %v1836 = vld [vmem:[%s1584 + $0x3e8] sm:$0xff]
                %1837 = vst [vmem:[%s1585 + $0x6e8] sm:$0xff] %v1836
                %v1838 = vld [vmem:[%s1584 + $0x3f0] sm:$0xff]
                %1839 = vst [vmem:[%s1585 + $0x6f0] sm:$0xff] %v1838
                %v1840 = vld [vmem:[%s1584 + $0x3f8] sm:$0xff]
                %1841 = vst [vmem:[%s1585 + $0x6f8] sm:$0xff] %v1840
              $region49: #{_forward.1} parent=43 // loop_footer
                %s1583 = sadd.s32 1, %s1579
              $region50: #{_forward.1} parent=43 // loop_footer_branch
                %1578 = sbr.rel target = $region46
              $region51: #{_forward.1} parent=43 // loop_exit
                _
            $region44: #{_forward.1} parent=39 // pred_fallthru
              _
            // Predicated region
            $region52: #{_forward.1} parent=39 // pred_check
              _
            $region53: #{_forward.1} parent=39 // pred_check_branch
              %1843 = sbr.rel target = $region55
            $region54: #{_forward.1} parent=39 // pred_region
              _
            $region55: #{_forward.1} parent=39 // pred_fallthru
              _
          $region40: #{_forward.1} parent=35 // pred_fallthru
            _
          %1844 = vnop
        $region36: #{_forward.1} parent=31 // pred_fallthru
          _
      $region32: #{_forward.1} parent=5 // pred_fallthru
        _
      %p1845 = scmp.le.s32.totalorder 2, %s9
      // Predicated region
      $region56: #{_forward.1} parent=5 // pred_check
        %p1846 = pneg %p1845
      $region57: #{_forward.1} parent=5 // pred_check_branch
        %1848 = sbr.rel (%p1846) target = $region59
      $region58: #{_forward.1} parent=5 // pred_region
        %s1849 = ssub.s32 %s9, 2
        // Predicated region
        $region60: #{_forward.1} parent=58 // pred_check
          %p1850 = pneg %p133
        $region61: #{_forward.1} parent=58 // pred_check_branch
          %1852 = sbr.rel (%p1850) target = $region63
        $region62: #{_forward.1} parent=58 // pred_region
          %s1853 = sand.u32 %s118, 1
          %s1854 = sand.u32 %s118, 1
          %s1855 = smul.addr %s1854, 1024
          %s1856 = scalar_lea.vmem [#allocation2], %s1855
        $region63: #{_forward.1} parent=58 // pred_fallthru
          _
      $region59: #{_forward.1} parent=5 // pred_fallthru
        _
    $region6: #{_forward.1} parent=1 // loop_footer
      %s13 = sadd.s32 1, %s9
    $region7: #{_forward.1} parent=1 // loop_footer_branch
      %8 = sbr.rel target = $region3
    $region8: #{_forward.1} parent=1 // loop_exit
      _

</llo_original>
